<compile_context>
chip_gen: v7x
topology: tpu7x:2x2x1
jax: 0.10.0
libtpu: 0.0.40
codegen_flags: <defaults>
</compile_context>

<pallas_src>
import functools

import jax
import jax.numpy as jnp
from jax.experimental import pallas as pl
from jax.experimental.pallas import tpu as pltpu

# ----------------------------- configuration --------------------------------
BATCH = 2
CONTEXT_LEN = 16          # context_length  (L)
PRED_LEN = 8              # prediction_length (H)
TARGET_DIM = 1
TIME_DIM = 4              # time_dim
D_MODEL = 32              # d_model (layer_size)
NUM_LAYERS = 3            # num_layers (INR layers), must be >= 2 here
NUM_FOURIER = 64          # num_fourier_feats
SCALES = [0.01, 0.1, 1.0, 5.0, 10.0, 20.0, 50.0, 100.0]
MIN_SCALE = 1e-5          # gluonts StdScaler minimum_scale
LN_EPS = 1e-5             # nn.LayerNorm default eps

_HI = jax.lax.Precision.HIGHEST   # scoped per-dot instead of a global override


# ------------------------------- kernels -------------------------------------
def _layer_norm(x, g, b):
    mu = jnp.mean(x, axis=-1, keepdims=True)
    var = jnp.mean((x - mu) ** 2, axis=-1, keepdims=True)
    return (x - mu) * jax.lax.rsqrt(var + LN_EPS) * g + b


def fused_fwd_kernel(x_ref, obs_ref, coords_ref, fB_ref, w0_ref, b0_ref,
                     g0_ref, be0_ref, ws_ref, bs_ref, gs_ref, bes_ref, lam_ref,
                     scaled_ref, loc_ref, scale_ref, gram_ref, reprs_ref,
                     *, batch, lookback, fin, num_hidden):
    """Scaler + INR (all rows at once) + per-batch ridge Gram, fully fused."""
    # ---- gluonts StdScaler over the time axis (lanes) ------------------------
    x = x_ref[...]                                     # (B, L)
    w = obs_ref[...]                                   # (B, L)
    denom = jnp.maximum(jnp.sum(w, axis=1, keepdims=True), 1.0)       # (B, 1)
    loc = jnp.sum(x * w, axis=1, keepdims=True) / denom               # (B, 1)
    var = jnp.sum(((x - loc) * w) ** 2, axis=1, keepdims=True) / denom
    scale = jnp.sqrt(var + MIN_SCALE)
    scaled_ref[...] = (x - loc) / scale
    loc_ref[...] = loc
    scale_ref[...] = scale

    # ---- INR: Fourier features + MLP over all B*(L+H) rows in one matmul ----
    c = coords_ref[...]                                # (B*T, fin)
    fB = fB_ref[...]                                   # (fin, NF/2)
    # Fourier projection stays on the VPU (exact f32): sin/cos arguments can be
    # O(100) because of the large scales, so bf16 MXU passes are not acceptable.
    proj = c[:, 0:1] * fB[0:1, :]
    for k in range(1, fin):
        proj = proj + c[:, k:k + 1] * fB[k:k + 1, :]   # (B*T, NF/2)
    feats = jnp.concatenate([jnp.sin(proj), jnp.cos(proj)], axis=-1)  # (B*T, NF)
    h = jnp.dot(feats, w0_ref[...], preferred_element_type=jnp.float32,
                precision=_HI) + b0_ref[...]
    h = _layer_norm(jnp.maximum(h, 0.0), g0_ref[...], be0_ref[...])
    for l in range(num_hidden):                        # static unroll
        h = jnp.dot(h, ws_ref[l], preferred_element_type=jnp.float32,
                    precision=_HI) + bs_ref[l]
        h = _layer_norm(jnp.maximum(h, 0.0), gs_ref[l], bes_ref[l])
    reprs_ref[...] = h                                 # (B*T, D)

    # ---- ridge Gram (Woodbury branch):  X X^T + softplus(lambda) I -----------
    # X = [lookback_reprs | 1]  =>  X X^T = lb lb^T + 1 (ones outer product).
    lam = lam_ref[...]                                 # (1, 1)
    r = jax.lax.broadcasted_iota(jnp.int32, (lookback, lookback), 0)
    cix = jax.lax.broadcasted_iota(jnp.int32, (lookback, lookback), 1)
    eye = jnp.where(r == cix, 1.0, 0.0)
    for b in range(batch):                             # B=2 static unroll
        lb = h[b * lookback:(b + 1) * lookback, :]     # (L, D), 8-aligned slice
        g = jax.lax.dot_general(lb, lb, (((1,), (1,)), ((), ())),
                                preferred_element_type=jnp.float32,
                                precision=_HI)         # (L, L) = lb @ lb^T
        gram_ref[b, :, :] = g + 1.0 + lam * eye


def forecast_kernel(reprs_ref, z_ref, loc_ref, scale_ref, out_ref,
                    *, batch, lookback, horizon):
    """weights = X^T z ; preds = horizon @ w + bias ; un-scale -> (B, H)."""
    z = z_ref[...]                                     # (B, L)
    loc = loc_ref[...]                                 # (B, 1)
    scale = scale_ref[...]                             # (B, 1)
    for b in range(batch):                             # static unroll
        lb = reprs_ref[pl.ds(b * lookback, lookback), :]                   # (L, D)
        hz = reprs_ref[pl.ds(batch * lookback + b * horizon, horizon), :]  # (H, D)
        zb = z[b:b + 1, :]                                                 # (1, L)
        w_row = jnp.dot(zb, lb, preferred_element_type=jnp.float32,
                        precision=_HI)                 # (1, D) = (lb^T z)^T
        bias = jnp.sum(zb, axis=1, keepdims=True)      # (1, 1) = ones^T z
        p = jax.lax.dot_general(w_row, hz, (((1,), (1,)), ((), ())),
                                preferred_element_type=jnp.float32,
                                precision=_HI)         # (1, H) lane-major
        out_ref[pl.ds(b, 1), :] = loc[b:b + 1, :] + (p + bias) * scale[b:b + 1, :]


# ------------------------------ model forward --------------------------------
def deep_time_forward(params, past_target, past_observed_values,
                      past_time_feat, future_time_feat):
    B, L = past_target.shape
    H = future_time_feat.shape[1]
    T = L + H
    FIN = params["fB"].shape[0]
    D = params["w0"].shape[1]
    NH = params["ws"].shape[0]

    # coords = [linspace(0,1,T) | datetime feats], flattened so that all
    # lookback rows come first, then all horizon rows -> every per-batch slice
    # inside the kernels starts at a multiple of 8 sublanes.
    tgrid = jnp.broadcast_to(
        jnp.linspace(0.0, 1.0, T, dtype=jnp.float32)[None, :, None], (B, T, 1))
    tfeat = jnp.concatenate([past_time_feat, future_time_feat], axis=1)
    coords = jnp.concatenate([tgrid, tfeat], axis=-1)                  # (B, T, FIN)
    coords_flat = jnp.concatenate(
        [coords[:, :L, :].reshape(B * L, FIN),
         coords[:, L:, :].reshape(B * H, FIN)], axis=0)                # (B*T, FIN)

    lam = jax.nn.softplus(params["ridge_lambda"]).reshape(1, 1).astype(jnp.float32)

    vmem = pl.BlockSpec(memory_space=pltpu.MemorySpace.VMEM)           # whole array
    scaled, loc, scale, gram, reprs = pl.pallas_call(
        functools.partial(fused_fwd_kernel, batch=B, lookback=L, fin=FIN,
                          num_hidden=NH),
        out_shape=(jax.ShapeDtypeStruct((B, L), jnp.float32),
                   jax.ShapeDtypeStruct((B, 1), jnp.float32),
                   jax.ShapeDtypeStruct((B, 1), jnp.float32),
                   jax.ShapeDtypeStruct((B, L, L), jnp.float32),
                   jax.ShapeDtypeStruct((B * T, D), jnp.float32)),
        in_specs=[vmem] * 13,
        out_specs=(vmem, vmem, vmem, vmem, vmem),
    )(past_target, past_observed_values, coords_flat,
      params["fB"], params["w0"], params["b0"], params["g0"], params["be0"],
      params["ws"], params["bs"], params["gs"], params["bes"], lam)

    # TODO(synk): torch.linalg.solve has no Pallas equivalent; the tiny batched
    # (L, L) SPD solve stays in XLA between the two fused kernels.
    z = jnp.linalg.solve(gram, scaled[..., None])[..., 0]              # (B, L)

    preds = pl.pallas_call(
        functools.partial(forecast_kernel, batch=B, lookback=L, horizon=H),
        out_shape=jax.ShapeDtypeStruct((B, H), jnp.float32),
        in_specs=[vmem] * 4,
        out_specs=vmem,
    )(reprs, z, loc, scale)                                            # (B, H)

    return preds[:, None, :]                                           # (B, 1, H)


# --------------------------- pure-JAX reference -------------------------------
def _layer_norm_ref(x, g, b):
    mu = jnp.mean(x, -1, keepdims=True)
    var = jnp.mean((x - mu) ** 2, -1, keepdims=True)
    return (x - mu) * jax.lax.rsqrt(var + LN_EPS) * g + b


def reference_forward(p, past_target, past_obs, past_tf, future_tf):
    x = past_target[..., None]
    obs = past_obs[..., None]
    denom = jnp.maximum(jnp.sum(obs, 1, keepdims=True), 1.0)
    loc = jnp.sum(x * obs, 1, keepdims=True) / denom
    var = jnp.sum(((x - loc) * obs) ** 2, 1, keepdims=True) / denom
    scale = jnp.sqrt(var + MIN_SCALE)
    scaled = (x - loc) / scale
    B, L, _ = x.shape
    H = future_tf.shape[1]
    T = L + H
    coords = jnp.broadcast_to(
        jnp.linspace(0.0, 1.0, T, dtype=jnp.float32)[None, :, None], (B, T, 1))
    coords = jnp.concatenate([coords, jnp.concatenate([past_tf, future_tf], 1)], -1)
    fB = p["fB"]
    proj = coords[..., 0:1] * fB[0:1, :]
    for k in range(1, coords.shape[-1]):
        proj = proj + coords[..., k:k + 1] * fB[k:k + 1, :]
    feats = jnp.concatenate([jnp.sin(proj), jnp.cos(proj)], -1)
    h = jnp.matmul(feats, p["w0"], precision=_HI) + p["b0"]
    h = _layer_norm_ref(jax.nn.relu(h), p["g0"], p["be0"])
    for l in range(p["ws"].shape[0]):
        h = jnp.matmul(h, p["ws"][l], precision=_HI) + p["bs"][l]
        h = _layer_norm_ref(jax.nn.relu(h), p["gs"][l], p["bes"][l])
    lookback, horizon = h[:, :L], h[:, L:]
    lam = jax.nn.softplus(p["ridge_lambda"])
    X = jnp.concatenate([lookback, jnp.ones((B, L, 1), jnp.float32)], -1)
    Xt = jnp.swapaxes(X, 1, 2)
    D1 = X.shape[-1]
    if L >= D1:
        A = jnp.matmul(Xt, X, precision=_HI) + lam * jnp.eye(D1, dtype=jnp.float32)
        weights = jnp.linalg.solve(A, jnp.matmul(Xt, scaled, precision=_HI))
    else:  # Woodbury branch (n_samples < n_dim) — same ridge solution
        A = jnp.matmul(X, Xt, precision=_HI) + lam * jnp.eye(L, dtype=jnp.float32)
        weights = jnp.matmul(Xt, jnp.linalg.solve(A, scaled), precision=_HI)
    w, bb = weights[:, :-1], weights[:, -1:]
    preds = jnp.einsum("bhd,bdo->bho", horizon, w, precision=_HI) + bb
    preds = loc + preds * scale
    return preds[..., 0][:, None, :]


# -------------------------------- params --------------------------------------
def init_params(key):
    in_feats = TIME_DIM + 1
    n_scale_feats = NUM_FOURIER // (2 * len(SCALES))
    assert n_scale_feats * 2 * len(SCALES) == NUM_FOURIER
    keys = jax.random.split(key, NUM_LAYERS + 2)
    fB = jnp.concatenate(
        [jax.random.normal(k, (in_feats, n_scale_feats), jnp.float32) * s
         for k, s in zip(jax.random.split(keys[0], len(SCALES)), SCALES)], axis=1)

    def linear(k, fan_in, fan_out):
        kw, kb = jax.random.split(k)
        bound = 1.0 / float(fan_in) ** 0.5
        w = jax.random.uniform(kw, (fan_in, fan_out), jnp.float32, -bound, bound)
        b = jax.random.uniform(kb, (1, fan_out), jnp.float32, -bound, bound)
        return w, b

    w0, b0 = linear(keys[1], NUM_FOURIER, D_MODEL)
    ws, bs = [], []
    for l in range(NUM_LAYERS - 1):
        w, b = linear(keys[2 + l], D_MODEL, D_MODEL)
        ws.append(w)
        bs.append(b)
    return dict(
        fB=fB, w0=w0, b0=b0,
        g0=jnp.ones((1, D_MODEL), jnp.float32),
        be0=jnp.zeros((1, D_MODEL), jnp.float32),
        ws=jnp.stack(ws), bs=jnp.stack(bs),
        gs=jnp.ones((NUM_LAYERS - 1, 1, D_MODEL), jnp.float32),
        bes=jnp.zeros((NUM_LAYERS - 1, 1, D_MODEL), jnp.float32),
        ridge_lambda=jnp.float32(0.0),   # lambda_init = 0.0 -> reg = softplus(0)
    )


# --------------------------------- main ----------------------------------------
if __name__ == "__main__":
    key = jax.random.PRNGKey(0)
    kp, k1, k2, k3 = jax.random.split(key, 4)
    params = init_params(kp)

    past_target = jax.random.normal(k1, (BATCH, CONTEXT_LEN), jnp.float32)
    past_observed_values = jnp.ones((BATCH, CONTEXT_LEN), jnp.float32)
    past_time_feat = 0.5 * jax.random.normal(k2, (BATCH, CONTEXT_LEN, TIME_DIM), jnp.float32)
    future_time_feat = 0.5 * jax.random.normal(k3, (BATCH, PRED_LEN, TIME_DIM), jnp.float32)

    out = jax.jit(deep_time_forward)(params, past_target, past_observed_values,
                                     past_time_feat, future_time_feat)
    out = jax.block_until_ready(out)

    ref = reference_forward(params, past_target, past_observed_values,
                            past_time_feat, future_time_feat)

    assert out.shape == (BATCH, 1, PRED_LEN), out.shape
    assert bool(jnp.all(jnp.isfinite(out)))
    max_err = float(jnp.max(jnp.abs(out - ref)))
    # tightened from 5e-2: everything runs at f32/HIGHEST on both sides, only
    # sin/cos ULP + MXU-vs-XLA rounding differences remain.
    assert max_err < 2e-2, f"max abs error vs reference: {max_err}"
    print("KERNEL_OK")
</pallas_src>

<mosaic_0001>
module attributes {stable_mosaic.version = 11 : i64} {
  func.func @fused_fwd_kernel(%arg0: memref<2x16xf32, #tpu.memory_space<vmem>>, %arg1: memref<2x16xf32, #tpu.memory_space<vmem>>, %arg2: memref<48x5xf32, #tpu.memory_space<vmem>>, %arg3: memref<5x32xf32, #tpu.memory_space<vmem>>, %arg4: memref<64x32xf32, #tpu.memory_space<vmem>>, %arg5: memref<1x32xf32, #tpu.memory_space<vmem>>, %arg6: memref<1x32xf32, #tpu.memory_space<vmem>>, %arg7: memref<1x32xf32, #tpu.memory_space<vmem>>, %arg8: memref<2x32x32xf32, #tpu.memory_space<vmem>>, %arg9: memref<2x1x32xf32, #tpu.memory_space<vmem>>, %arg10: memref<2x1x32xf32, #tpu.memory_space<vmem>>, %arg11: memref<2x1x32xf32, #tpu.memory_space<vmem>>, %arg12: memref<1x1xf32, #tpu.memory_space<vmem>>, %arg13: memref<2x16xf32, #tpu.memory_space<vmem>>, %arg14: memref<2x1xf32, #tpu.memory_space<vmem>>, %arg15: memref<2x1xf32, #tpu.memory_space<vmem>>, %arg16: memref<2x16x16xf32, #tpu.memory_space<vmem>>, %arg17: memref<48x32xf32, #tpu.memory_space<vmem>>) attributes {dimension_semantics = [], scalar_prefetch = 0 : i64, scratch_operands = 0 : i64, tpu.core_type = #tpu.core_type<tc>} {
    %c0 = arith.constant 0 : index
    %c0_0 = arith.constant 0 : index
    %0 = vector.load %arg0[%c0, %c0_0] : memref<2x16xf32, #tpu.memory_space<vmem>>, vector<2x16xf32>
    %c0_1 = arith.constant 0 : index
    %c0_2 = arith.constant 0 : index
    %1 = vector.load %arg1[%c0_1, %c0_2] : memref<2x16xf32, #tpu.memory_space<vmem>>, vector<2x16xf32>
    %cst = arith.constant dense<0.000000e+00> : vector<2xf32>
    %2 = vector.multi_reduction <add>, %1, %cst [1] : vector<2x16xf32> to vector<2xf32>
    %3 = vector.shape_cast %2 : vector<2xf32> to vector<2x1xf32>
    %cst_3 = arith.constant 1.000000e+00 : f32
    %4 = vector.broadcast %cst_3 : f32 to vector<2x1xf32>
    %5 = arith.maximumf %3, %4 : vector<2x1xf32>
    %6 = arith.mulf %0, %1 : vector<2x16xf32>
    %cst_4 = arith.constant dense<0.000000e+00> : vector<2xf32>
    %7 = vector.multi_reduction <add>, %6, %cst_4 [1] : vector<2x16xf32> to vector<2xf32>
    %8 = vector.shape_cast %7 : vector<2xf32> to vector<2x1xf32>
    %9 = arith.divf %8, %5 : vector<2x1xf32>
    %10 = vector.broadcast %9 : vector<2x1xf32> to vector<2x16xf32>
    %11 = arith.subf %0, %10 : vector<2x16xf32>
    %12 = arith.mulf %11, %1 : vector<2x16xf32>
    %13 = arith.mulf %12, %12 : vector<2x16xf32>
    %cst_5 = arith.constant dense<0.000000e+00> : vector<2xf32>
    %14 = vector.multi_reduction <add>, %13, %cst_5 [1] : vector<2x16xf32> to vector<2xf32>
    %15 = vector.shape_cast %14 : vector<2xf32> to vector<2x1xf32>
    %16 = arith.divf %15, %5 : vector<2x1xf32>
    %cst_6 = arith.constant 9.99999974E-6 : f32
    %17 = vector.broadcast %cst_6 : f32 to vector<2x1xf32>
    %18 = arith.addf %16, %17 : vector<2x1xf32>
    %19 = math.sqrt %18 : vector<2x1xf32>
    %20 = vector.broadcast %9 : vector<2x1xf32> to vector<2x16xf32>
    %21 = arith.subf %0, %20 : vector<2x16xf32>
    %22 = vector.broadcast %19 : vector<2x1xf32> to vector<2x16xf32>
    %23 = arith.divf %21, %22 : vector<2x16xf32>
    %c0_7 = arith.constant 0 : index
    %c0_8 = arith.constant 0 : index
    %24 = vector.load %arg13[%c0_7, %c0_8] : memref<2x16xf32, #tpu.memory_space<vmem>>, vector<2x16xf32>
    tpu.vector_store %arg13[%c0_7, %c0_8], %23 {strides = array<i32>} : memref<2x16xf32, #tpu.memory_space<vmem>>, vector<2x16xf32>,
    %c0_9 = arith.constant 0 : index
    %c0_10 = arith.constant 0 : index
    %25 = vector.load %arg14[%c0_9, %c0_10] : memref<2x1xf32, #tpu.memory_space<vmem>>, vector<2x1xf32>
    tpu.vector_store %arg14[%c0_9, %c0_10], %9 {strides = array<i32>} : memref<2x1xf32, #tpu.memory_space<vmem>>, vector<2x1xf32>,
    %c0_11 = arith.constant 0 : index
    %c0_12 = arith.constant 0 : index
    %26 = vector.load %arg15[%c0_11, %c0_12] : memref<2x1xf32, #tpu.memory_space<vmem>>, vector<2x1xf32>
    tpu.vector_store %arg15[%c0_11, %c0_12], %19 {strides = array<i32>} : memref<2x1xf32, #tpu.memory_space<vmem>>, vector<2x1xf32>,
    %c0_13 = arith.constant 0 : index
    %c0_14 = arith.constant 0 : index
    %27 = vector.load %arg2[%c0_13, %c0_14] : memref<48x5xf32, #tpu.memory_space<vmem>>, vector<48x5xf32>
    %c0_15 = arith.constant 0 : index
    %c0_16 = arith.constant 0 : index
    %28 = vector.load %arg3[%c0_15, %c0_16] : memref<5x32xf32, #tpu.memory_space<vmem>>, vector<5x32xf32>
    %29 = vector.extract_strided_slice %27 {offsets = [0, 0], sizes = [48, 1], strides = [1, 1]} : vector<48x5xf32> to vector<48x1xf32>
    %30 = vector.extract_strided_slice %28 {offsets = [0, 0], sizes = [1, 32], strides = [1, 1]} : vector<5x32xf32> to vector<1x32xf32>
    %31 = vector.broadcast %29 : vector<48x1xf32> to vector<48x32xf32>
    %32 = vector.broadcast %30 : vector<1x32xf32> to vector<48x32xf32>
    %33 = arith.mulf %31, %32 : vector<48x32xf32>
    %34 = vector.extract_strided_slice %27 {offsets = [0, 1], sizes = [48, 1], strides = [1, 1]} : vector<48x5xf32> to vector<48x1xf32>
    %35 = vector.extract_strided_slice %28 {offsets = [1, 0], sizes = [1, 32], strides = [1, 1]} : vector<5x32xf32> to vector<1x32xf32>
    %36 = vector.broadcast %34 : vector<48x1xf32> to vector<48x32xf32>
    %37 = vector.broadcast %35 : vector<1x32xf32> to vector<48x32xf32>
    %38 = arith.mulf %36, %37 : vector<48x32xf32>
    %39 = arith.addf %33, %38 : vector<48x32xf32>
    %40 = vector.extract_strided_slice %27 {offsets = [0, 2], sizes = [48, 1], strides = [1, 1]} : vector<48x5xf32> to vector<48x1xf32>
    %41 = vector.extract_strided_slice %28 {offsets = [2, 0], sizes = [1, 32], strides = [1, 1]} : vector<5x32xf32> to vector<1x32xf32>
    %42 = vector.broadcast %40 : vector<48x1xf32> to vector<48x32xf32>
    %43 = vector.broadcast %41 : vector<1x32xf32> to vector<48x32xf32>
    %44 = arith.mulf %42, %43 : vector<48x32xf32>
    %45 = arith.addf %39, %44 : vector<48x32xf32>
    %46 = vector.extract_strided_slice %27 {offsets = [0, 3], sizes = [48, 1], strides = [1, 1]} : vector<48x5xf32> to vector<48x1xf32>
    %47 = vector.extract_strided_slice %28 {offsets = [3, 0], sizes = [1, 32], strides = [1, 1]} : vector<5x32xf32> to vector<1x32xf32>
    %48 = vector.broadcast %46 : vector<48x1xf32> to vector<48x32xf32>
    %49 = vector.broadcast %47 : vector<1x32xf32> to vector<48x32xf32>
    %50 = arith.mulf %48, %49 : vector<48x32xf32>
    %51 = arith.addf %45, %50 : vector<48x32xf32>
    %52 = vector.extract_strided_slice %27 {offsets = [0, 4], sizes = [48, 1], strides = [1, 1]} : vector<48x5xf32> to vector<48x1xf32>
    %53 = vector.extract_strided_slice %28 {offsets = [4, 0], sizes = [1, 32], strides = [1, 1]} : vector<5x32xf32> to vector<1x32xf32>
    %54 = vector.broadcast %52 : vector<48x1xf32> to vector<48x32xf32>
    %55 = vector.broadcast %53 : vector<1x32xf32> to vector<48x32xf32>
    %56 = arith.mulf %54, %55 : vector<48x32xf32>
    %57 = arith.addf %51, %56 : vector<48x32xf32>
    %58 = math.sin %57 : vector<48x32xf32>
    %59 = math.cos %57 : vector<48x32xf32>
    %60 = tpu.concatenate %58, %59 in 1 : vector<48x32xf32>, vector<48x32xf32> -> vector<48x64xf32>
    %c0_17 = arith.constant 0 : index
    %c0_18 = arith.constant 0 : index
    %61 = vector.load %arg4[%c0_17, %c0_18] : memref<64x32xf32, #tpu.memory_space<vmem>>, vector<64x32xf32>
    %cst_19 = arith.constant dense<0.000000e+00> : vector<48x32xf32>
    %62 = tpu.matmul %60, %61, %cst_19 {dimension_numbers = #tpu.dot_dimension_numbers<[1], [0], [0], [1], [0, 0, 1, 1], [], []>, precision = #tpu.contract_precision<fp32>} : vector<48x64xf32>, vector<64x32xf32>, vector<48x32xf32> -> vector<48x32xf32>
    %c0_20 = arith.constant 0 : index
    %c0_21 = arith.constant 0 : index
    %63 = vector.load %arg5[%c0_20, %c0_21] : memref<1x32xf32, #tpu.memory_space<vmem>>, vector<1x32xf32>
    %64 = vector.broadcast %63 : vector<1x32xf32> to vector<48x32xf32>
    %65 = arith.addf %62, %64 : vector<48x32xf32>
    %cst_22 = arith.constant 0.000000e+00 : f32
    %66 = vector.broadcast %cst_22 : f32 to vector<48x32xf32>
    %67 = arith.maximumf %65, %66 : vector<48x32xf32>
    %c0_23 = arith.constant 0 : index
    %c0_24 = arith.constant 0 : index
    %68 = vector.load %arg6[%c0_23, %c0_24] : memref<1x32xf32, #tpu.memory_space<vmem>>, vector<1x32xf32>
    %c0_25 = arith.constant 0 : index
    %c0_26 = arith.constant 0 : index
    %69 = vector.load %arg7[%c0_25, %c0_26] : memref<1x32xf32, #tpu.memory_space<vmem>>, vector<1x32xf32>
    %cst_27 = arith.constant dense<0.000000e+00> : vector<48xf32>
    %70 = vector.multi_reduction <add>, %67, %cst_27 [1] : vector<48x32xf32> to vector<48xf32>
    %71 = vector.shape_cast %70 : vector<48xf32> to vector<48x1xf32>
    %cst_28 = arith.constant 3.200000e+01 : f32
    %72 = vector.broadcast %cst_28 : f32 to vector<48x1xf32>
    %73 = arith.divf %71, %72 : vector<48x1xf32>
    %74 = vector.broadcast %73 : vector<48x1xf32> to vector<48x32xf32>
    %75 = arith.subf %67, %74 : vector<48x32xf32>
    %76 = arith.mulf %75, %75 : vector<48x32xf32>
    %cst_29 = arith.constant dense<0.000000e+00> : vector<48xf32>
    %77 = vector.multi_reduction <add>, %76, %cst_29 [1] : vector<48x32xf32> to vector<48xf32>
    %78 = vector.shape_cast %77 : vector<48xf32> to vector<48x1xf32>
    %cst_30 = arith.constant 3.200000e+01 : f32
    %79 = vector.broadcast %cst_30 : f32 to vector<48x1xf32>
    %80 = arith.divf %78, %79 : vector<48x1xf32>
    %81 = vector.broadcast %73 : vector<48x1xf32> to vector<48x32xf32>
    %82 = arith.subf %67, %81 : vector<48x32xf32>
    %cst_31 = arith.constant 9.99999974E-6 : f32
    %83 = vector.broadcast %cst_31 : f32 to vector<48x1xf32>
    %84 = arith.addf %80, %83 : vector<48x1xf32>
    %85 = math.rsqrt %84 : vector<48x1xf32>
    %86 = vector.broadcast %85 : vector<48x1xf32> to vector<48x32xf32>
    %87 = arith.mulf %82, %86 : vector<48x32xf32>
    %88 = vector.broadcast %68 : vector<1x32xf32> to vector<48x32xf32>
    %89 = arith.mulf %87, %88 : vector<48x32xf32>
    %90 = vector.broadcast %69 : vector<1x32xf32> to vector<48x32xf32>
    %91 = arith.addf %89, %90 : vector<48x32xf32>
    %c0_32 = arith.constant 0 : index
    %c0_33 = arith.constant 0 : index
    %c0_34 = arith.constant 0 : index
    %92 = vector.load %arg8[%c0_32, %c0_33, %c0_34] : memref<2x32x32xf32, #tpu.memory_space<vmem>>, vector<1x32x32xf32>
    %93 = vector.shape_cast %92 : vector<1x32x32xf32> to vector<32x32xf32>
    %cst_35 = arith.constant dense<0.000000e+00> : vector<48x32xf32>
    %94 = tpu.matmul %91, %93, %cst_35 {dimension_numbers = #tpu.dot_dimension_numbers<[1], [0], [0], [1], [0, 0, 1, 1], [], []>, precision = #tpu.contract_precision<fp32>} : vector<48x32xf32>, vector<32x32xf32>, vector<48x32xf32> -> vector<48x32xf32>
    %c0_36 = arith.constant 0 : index
    %c0_37 = arith.constant 0 : index
    %c0_38 = arith.constant 0 : index
    %95 = vector.load %arg9[%c0_36, %c0_37, %c0_38] : memref<2x1x32xf32, #tpu.memory_space<vmem>>, vector<1x1x32xf32>
    %96 = vector.shape_cast %95 : vector<1x1x32xf32> to vector<1x32xf32>
    %97 = vector.broadcast %96 : vector<1x32xf32> to vector<48x32xf32>
    %98 = arith.addf %94, %97 : vector<48x32xf32>
    %cst_39 = arith.constant 0.000000e+00 : f32
    %99 = vector.broadcast %cst_39 : f32 to vector<48x32xf32>
    %100 = arith.maximumf %98, %99 : vector<48x32xf32>
    %c0_40 = arith.constant 0 : index
    %c0_41 = arith.constant 0 : index
    %c0_42 = arith.constant 0 : index
    %101 = vector.load %arg10[%c0_40, %c0_41, %c0_42] : memref<2x1x32xf32, #tpu.memory_space<vmem>>, vector<1x1x32xf32>
    %102 = vector.shape_cast %101 : vector<1x1x32xf32> to vector<1x32xf32>
    %c0_43 = arith.constant 0 : index
    %c0_44 = arith.constant 0 : index
    %c0_45 = arith.constant 0 : index
    %103 = vector.load %arg11[%c0_43, %c0_44, %c0_45] : memref<2x1x32xf32, #tpu.memory_space<vmem>>, vector<1x1x32xf32>
    %104 = vector.shape_cast %103 : vector<1x1x32xf32> to vector<1x32xf32>
    %cst_46 = arith.constant dense<0.000000e+00> : vector<48xf32>
    %105 = vector.multi_reduction <add>, %100, %cst_46 [1] : vector<48x32xf32> to vector<48xf32>
    %106 = vector.shape_cast %105 : vector<48xf32> to vector<48x1xf32>
    %cst_47 = arith.constant 3.200000e+01 : f32
    %107 = vector.broadcast %cst_47 : f32 to vector<48x1xf32>
    %108 = arith.divf %106, %107 : vector<48x1xf32>
    %109 = vector.broadcast %108 : vector<48x1xf32> to vector<48x32xf32>
    %110 = arith.subf %100, %109 : vector<48x32xf32>
    %111 = arith.mulf %110, %110 : vector<48x32xf32>
    %cst_48 = arith.constant dense<0.000000e+00> : vector<48xf32>
    %112 = vector.multi_reduction <add>, %111, %cst_48 [1] : vector<48x32xf32> to vector<48xf32>
    %113 = vector.shape_cast %112 : vector<48xf32> to vector<48x1xf32>
    %cst_49 = arith.constant 3.200000e+01 : f32
    %114 = vector.broadcast %cst_49 : f32 to vector<48x1xf32>
    %115 = arith.divf %113, %114 : vector<48x1xf32>
    %116 = vector.broadcast %108 : vector<48x1xf32> to vector<48x32xf32>
    %117 = arith.subf %100, %116 : vector<48x32xf32>
    %cst_50 = arith.constant 9.99999974E-6 : f32
    %118 = vector.broadcast %cst_50 : f32 to vector<48x1xf32>
    %119 = arith.addf %115, %118 : vector<48x1xf32>
    %120 = math.rsqrt %119 : vector<48x1xf32>
    %121 = vector.broadcast %120 : vector<48x1xf32> to vector<48x32xf32>
    %122 = arith.mulf %117, %121 : vector<48x32xf32>
    %123 = vector.broadcast %102 : vector<1x32xf32> to vector<48x32xf32>
    %124 = arith.mulf %122, %123 : vector<48x32xf32>
    %125 = vector.broadcast %104 : vector<1x32xf32> to vector<48x32xf32>
    %126 = arith.addf %124, %125 : vector<48x32xf32>
    %c1 = arith.constant 1 : index
    %c0_51 = arith.constant 0 : index
    %c0_52 = arith.constant 0 : index
    %127 = vector.load %arg8[%c1, %c0_51, %c0_52] : memref<2x32x32xf32, #tpu.memory_space<vmem>>, vector<1x32x32xf32>
    %128 = vector.shape_cast %127 : vector<1x32x32xf32> to vector<32x32xf32>
    %cst_53 = arith.constant dense<0.000000e+00> : vector<48x32xf32>
    %129 = tpu.matmul %126, %128, %cst_53 {dimension_numbers = #tpu.dot_dimension_numbers<[1], [0], [0], [1], [0, 0, 1, 1], [], []>, precision = #tpu.contract_precision<fp32>} : vector<48x32xf32>, vector<32x32xf32>, vector<48x32xf32> -> vector<48x32xf32>
    %c1_54 = arith.constant 1 : index
    %c0_55 = arith.constant 0 : index
    %c0_56 = arith.constant 0 : index
    %130 = vector.load %arg9[%c1_54, %c0_55, %c0_56] : memref<2x1x32xf32, #tpu.memory_space<vmem>>, vector<1x1x32xf32>
    %131 = vector.shape_cast %130 : vector<1x1x32xf32> to vector<1x32xf32>
    %132 = vector.broadcast %131 : vector<1x32xf32> to vector<48x32xf32>
    %133 = arith.addf %129, %132 : vector<48x32xf32>
    %cst_57 = arith.constant 0.000000e+00 : f32
    %134 = vector.broadcast %cst_57 : f32 to vector<48x32xf32>
    %135 = arith.maximumf %133, %134 : vector<48x32xf32>
    %c1_58 = arith.constant 1 : index
    %c0_59 = arith.constant 0 : index
    %c0_60 = arith.constant 0 : index
    %136 = vector.load %arg10[%c1_58, %c0_59, %c0_60] : memref<2x1x32xf32, #tpu.memory_space<vmem>>, vector<1x1x32xf32>
    %137 = vector.shape_cast %136 : vector<1x1x32xf32> to vector<1x32xf32>
    %c1_61 = arith.constant 1 : index
    %c0_62 = arith.constant 0 : index
    %c0_63 = arith.constant 0 : index
    %138 = vector.load %arg11[%c1_61, %c0_62, %c0_63] : memref<2x1x32xf32, #tpu.memory_space<vmem>>, vector<1x1x32xf32>
    %139 = vector.shape_cast %138 : vector<1x1x32xf32> to vector<1x32xf32>
    %cst_64 = arith.constant dense<0.000000e+00> : vector<48xf32>
    %140 = vector.multi_reduction <add>, %135, %cst_64 [1] : vector<48x32xf32> to vector<48xf32>
    %141 = vector.shape_cast %140 : vector<48xf32> to vector<48x1xf32>
    %cst_65 = arith.constant 3.200000e+01 : f32
    %142 = vector.broadcast %cst_65 : f32 to vector<48x1xf32>
    %143 = arith.divf %141, %142 : vector<48x1xf32>
    %144 = vector.broadcast %143 : vector<48x1xf32> to vector<48x32xf32>
    %145 = arith.subf %135, %144 : vector<48x32xf32>
    %146 = arith.mulf %145, %145 : vector<48x32xf32>
    %cst_66 = arith.constant dense<0.000000e+00> : vector<48xf32>
    %147 = vector.multi_reduction <add>, %146, %cst_66 [1] : vector<48x32xf32> to vector<48xf32>
    %148 = vector.shape_cast %147 : vector<48xf32> to vector<48x1xf32>
    %cst_67 = arith.constant 3.200000e+01 : f32
    %149 = vector.broadcast %cst_67 : f32 to vector<48x1xf32>
    %150 = arith.divf %148, %149 : vector<48x1xf32>
    %151 = vector.broadcast %143 : vector<48x1xf32> to vector<48x32xf32>
    %152 = arith.subf %135, %151 : vector<48x32xf32>
    %cst_68 = arith.constant 9.99999974E-6 : f32
    %153 = vector.broadcast %cst_68 : f32 to vector<48x1xf32>
    %154 = arith.addf %150, %153 : vector<48x1xf32>
    %155 = math.rsqrt %154 : vector<48x1xf32>
    %156 = vector.broadcast %155 : vector<48x1xf32> to vector<48x32xf32>
    %157 = arith.mulf %152, %156 : vector<48x32xf32>
    %158 = vector.broadcast %137 : vector<1x32xf32> to vector<48x32xf32>
    %159 = arith.mulf %157, %158 : vector<48x32xf32>
    %160 = vector.broadcast %139 : vector<1x32xf32> to vector<48x32xf32>
    %161 = arith.addf %159, %160 : vector<48x32xf32>
    %c0_69 = arith.constant 0 : index
    %c0_70 = arith.constant 0 : index
    %162 = vector.load %arg17[%c0_69, %c0_70] : memref<48x32xf32, #tpu.memory_space<vmem>>, vector<48x32xf32>
    tpu.vector_store %arg17[%c0_69, %c0_70], %161 {strides = array<i32>} : memref<48x32xf32, #tpu.memory_space<vmem>>, vector<48x32xf32>,
    %c0_71 = arith.constant 0 : index
    %c0_72 = arith.constant 0 : index
    %163 = vector.load %arg12[%c0_71, %c0_72] : memref<1x1xf32, #tpu.memory_space<vmem>>, vector<1x1xf32>
    %164 = tpu.iota {dimensions = array<i32: 0>} : vector<16x16xi32>
    %165 = tpu.iota {dimensions = array<i32: 1>} : vector<16x16xi32>
    %166 = arith.cmpi eq, %164, %165 : vector<16x16xi32>
    %cst_73 = arith.constant 1.000000e+00 : f32
    %cst_74 = arith.constant 0.000000e+00 : f32
    %167 = vector.broadcast %cst_73 : f32 to vector<16x16xf32>
    %168 = vector.broadcast %cst_74 : f32 to vector<16x16xf32>
    %169 = arith.select %166, %167, %168 : vector<16x16xi1>, vector<16x16xf32>
    %170 = vector.extract_strided_slice %161 {offsets = [0, 0], sizes = [16, 32], strides = [1, 1]} : vector<48x32xf32> to vector<16x32xf32>
    %cst_75 = arith.constant dense<0.000000e+00> : vector<16x16xf32>
    %171 = tpu.matmul %170, %170, %cst_75 {dimension_numbers = #tpu.dot_dimension_numbers<[1], [1], [0], [0], [0, 0, 1, 0], [], []>, precision = #tpu.contract_precision<fp32>} : vector<16x32xf32>, vector<16x32xf32>, vector<16x16xf32> -> vector<16x16xf32>
    %cst_76 = arith.constant 1.000000e+00 : f32
    %172 = vector.broadcast %cst_76 : f32 to vector<16x16xf32>
    %173 = arith.addf %171, %172 : vector<16x16xf32>
    %174 = vector.broadcast %163 : vector<1x1xf32> to vector<16x16xf32>
    %175 = arith.mulf %174, %169 : vector<16x16xf32>
    %176 = arith.addf %173, %175 : vector<16x16xf32>
    %c0_77 = arith.constant 0 : index
    %c0_78 = arith.constant 0 : index
    %c0_79 = arith.constant 0 : index
    %177 = vector.load %arg16[%c0_77, %c0_78, %c0_79] : memref<2x16x16xf32, #tpu.memory_space<vmem>>, vector<1x16x16xf32>
    %178 = vector.shape_cast %177 : vector<1x16x16xf32> to vector<16x16xf32>
    %179 = vector.shape_cast %176 : vector<16x16xf32> to vector<1x16x16xf32>
    tpu.vector_store %arg16[%c0_77, %c0_78, %c0_79], %179 {strides = array<i32>} : memref<2x16x16xf32, #tpu.memory_space<vmem>>, vector<1x16x16xf32>,
    %180 = vector.extract_strided_slice %161 {offsets = [16, 0], sizes = [16, 32], strides = [1, 1]} : vector<48x32xf32> to vector<16x32xf32>
    %cst_80 = arith.constant dense<0.000000e+00> : vector<16x16xf32>
    %181 = tpu.matmul %180, %180, %cst_80 {dimension_numbers = #tpu.dot_dimension_numbers<[1], [1], [0], [0], [0, 0, 1, 0], [], []>, precision = #tpu.contract_precision<fp32>} : vector<16x32xf32>, vector<16x32xf32>, vector<16x16xf32> -> vector<16x16xf32>
    %cst_81 = arith.constant 1.000000e+00 : f32
    %182 = vector.broadcast %cst_81 : f32 to vector<16x16xf32>
    %183 = arith.addf %181, %182 : vector<16x16xf32>
    %184 = vector.broadcast %163 : vector<1x1xf32> to vector<16x16xf32>
    %185 = arith.mulf %184, %169 : vector<16x16xf32>
    %186 = arith.addf %183, %185 : vector<16x16xf32>
    %c1_82 = arith.constant 1 : index
    %c0_83 = arith.constant 0 : index
    %c0_84 = arith.constant 0 : index
    %187 = vector.load %arg16[%c1_82, %c0_83, %c0_84] : memref<2x16x16xf32, #tpu.memory_space<vmem>>, vector<1x16x16xf32>
    %188 = vector.shape_cast %187 : vector<1x16x16xf32> to vector<16x16xf32>
    %189 = vector.shape_cast %186 : vector<16x16xf32> to vector<1x16x16xf32>
    tpu.vector_store %arg16[%c1_82, %c0_83, %c0_84], %189 {strides = array<i32>} : memref<2x16x16xf32, #tpu.memory_space<vmem>>, vector<1x16x16xf32>,
    return
  }
}

module attributes {stable_mosaic.version = 11 : i64} {
  func.func @forecast_kernel(%arg0: memref<48x32xf32, #tpu.memory_space<vmem>>, %arg1: memref<2x16xf32, #tpu.memory_space<vmem>>, %arg2: memref<2x1xf32, #tpu.memory_space<vmem>>, %arg3: memref<2x1xf32, #tpu.memory_space<vmem>>, %arg4: memref<2x8xf32, #tpu.memory_space<vmem>>) attributes {dimension_semantics = [], scalar_prefetch = 0 : i64, scratch_operands = 0 : i64, tpu.core_type = #tpu.core_type<tc>} {
    %c0 = arith.constant 0 : index
    %c0_0 = arith.constant 0 : index
    %0 = vector.load %arg1[%c0, %c0_0] : memref<2x16xf32, #tpu.memory_space<vmem>>, vector<2x16xf32>
    %c0_1 = arith.constant 0 : index
    %c0_2 = arith.constant 0 : index
    %1 = vector.load %arg2[%c0_1, %c0_2] : memref<2x1xf32, #tpu.memory_space<vmem>>, vector<2x1xf32>
    %c0_3 = arith.constant 0 : index
    %c0_4 = arith.constant 0 : index
    %2 = vector.load %arg3[%c0_3, %c0_4] : memref<2x1xf32, #tpu.memory_space<vmem>>, vector<2x1xf32>
    %c0_5 = arith.constant 0 : index
    %c0_6 = arith.constant 0 : index
    %3 = vector.load %arg0[%c0_5, %c0_6] : memref<48x32xf32, #tpu.memory_space<vmem>>, vector<16x32xf32>
    %c32 = arith.constant 32 : index
    %c0_7 = arith.constant 0 : index
    %4 = vector.load %arg0[%c32, %c0_7] : memref<48x32xf32, #tpu.memory_space<vmem>>, vector<8x32xf32>
    %5 = vector.extract_strided_slice %0 {offsets = [0, 0], sizes = [1, 16], strides = [1, 1]} : vector<2x16xf32> to vector<1x16xf32>
    %cst = arith.constant dense<0.000000e+00> : vector<1x32xf32>
    %6 = tpu.matmul %5, %3, %cst {dimension_numbers = #tpu.dot_dimension_numbers<[1], [0], [0], [1], [0, 0, 1, 1], [], []>, precision = #tpu.contract_precision<fp32>} : vector<1x16xf32>, vector<16x32xf32>, vector<1x32xf32> -> vector<1x32xf32>
    %cst_8 = arith.constant dense<0.000000e+00> : vector<1xf32>
    %7 = vector.multi_reduction <add>, %5, %cst_8 [1] : vector<1x16xf32> to vector<1xf32>
    %8 = vector.shape_cast %7 : vector<1xf32> to vector<1x1xf32>
    %cst_9 = arith.constant dense<0.000000e+00> : vector<1x8xf32>
    %9 = tpu.matmul %6, %4, %cst_9 {dimension_numbers = #tpu.dot_dimension_numbers<[1], [1], [0], [0], [0, 0, 1, 0], [], []>, precision = #tpu.contract_precision<fp32>} : vector<1x32xf32>, vector<8x32xf32>, vector<1x8xf32> -> vector<1x8xf32>
    %10 = vector.extract_strided_slice %1 {offsets = [0, 0], sizes = [1, 1], strides = [1, 1]} : vector<2x1xf32> to vector<1x1xf32>
    %11 = vector.broadcast %8 : vector<1x1xf32> to vector<1x8xf32>
    %12 = arith.addf %9, %11 : vector<1x8xf32>
    %13 = vector.extract_strided_slice %2 {offsets = [0, 0], sizes = [1, 1], strides = [1, 1]} : vector<2x1xf32> to vector<1x1xf32>
    %14 = vector.broadcast %13 : vector<1x1xf32> to vector<1x8xf32>
    %15 = arith.mulf %12, %14 : vector<1x8xf32>
    %16 = vector.broadcast %10 : vector<1x1xf32> to vector<1x8xf32>
    %17 = arith.addf %16, %15 : vector<1x8xf32>
    %c0_10 = arith.constant 0 : index
    %c0_11 = arith.constant 0 : index
    %18 = vector.load %arg4[%c0_10, %c0_11] : memref<2x8xf32, #tpu.memory_space<vmem>>, vector<1x8xf32>
    tpu.vector_store %arg4[%c0_10, %c0_11], %17 {strides = array<i32>} : memref<2x8xf32, #tpu.memory_space<vmem>>, vector<1x8xf32>,
    %c16 = arith.constant 16 : index
    %c0_12 = arith.constant 0 : index
    %19 = vector.load %arg0[%c16, %c0_12] : memref<48x32xf32, #tpu.memory_space<vmem>>, vector<16x32xf32>
    %c40 = arith.constant 40 : index
    %c0_13 = arith.constant 0 : index
    %20 = vector.load %arg0[%c40, %c0_13] : memref<48x32xf32, #tpu.memory_space<vmem>>, vector<8x32xf32>
    %21 = vector.extract_strided_slice %0 {offsets = [1, 0], sizes = [1, 16], strides = [1, 1]} : vector<2x16xf32> to vector<1x16xf32>
    %cst_14 = arith.constant dense<0.000000e+00> : vector<1x32xf32>
    %22 = tpu.matmul %21, %19, %cst_14 {dimension_numbers = #tpu.dot_dimension_numbers<[1], [0], [0], [1], [0, 0, 1, 1], [], []>, precision = #tpu.contract_precision<fp32>} : vector<1x16xf32>, vector<16x32xf32>, vector<1x32xf32> -> vector<1x32xf32>
    %cst_15 = arith.constant dense<0.000000e+00> : vector<1xf32>
    %23 = vector.multi_reduction <add>, %21, %cst_15 [1] : vector<1x16xf32> to vector<1xf32>
    %24 = vector.shape_cast %23 : vector<1xf32> to vector<1x1xf32>
    %cst_16 = arith.constant dense<0.000000e+00> : vector<1x8xf32>
    %25 = tpu.matmul %22, %20, %cst_16 {dimension_numbers = #tpu.dot_dimension_numbers<[1], [1], [0], [0], [0, 0, 1, 0], [], []>, precision = #tpu.contract_precision<fp32>} : vector<1x32xf32>, vector<8x32xf32>, vector<1x8xf32> -> vector<1x8xf32>
    %26 = vector.extract_strided_slice %1 {offsets = [1, 0], sizes = [1, 1], strides = [1, 1]} : vector<2x1xf32> to vector<1x1xf32>
    %27 = vector.broadcast %24 : vector<1x1xf32> to vector<1x8xf32>
    %28 = arith.addf %25, %27 : vector<1x8xf32>
    %29 = vector.extract_strided_slice %2 {offsets = [1, 0], sizes = [1, 1], strides = [1, 1]} : vector<2x1xf32> to vector<1x1xf32>
    %30 = vector.broadcast %29 : vector<1x1xf32> to vector<1x8xf32>
    %31 = arith.mulf %28, %30 : vector<1x8xf32>
    %32 = vector.broadcast %26 : vector<1x1xf32> to vector<1x8xf32>
    %33 = arith.addf %32, %31 : vector<1x8xf32>
    %c1 = arith.constant 1 : index
    %c0_17 = arith.constant 0 : index
    %34 = vector.load %arg4[%c1, %c0_17] : memref<2x8xf32, #tpu.memory_space<vmem>>, vector<1x8xf32>
    tpu.vector_store %arg4[%c1, %c0_17], %33 {strides = array<i32>} : memref<2x8xf32, #tpu.memory_space<vmem>>, vector<1x8xf32>,
    return
  }
}

</mosaic_0001>

<llo_original>
// kernel: custom-call.8
$region0: #{custom-call.8}
  %s0 = inlined_call_operand.vmem [shape: f32[2,16,16], index: 0, kind: input, shape index: {}]
  %s1 = inlined_call_operand.vmem [shape: f32[2,16,16], index: 1, kind: output, shape index: {0}]
  %s2 = inlined_call_operand.hbm [shape: s32[2,16], index: 2, kind: output, shape index: {1}]
  %s3 = inlined_call_operand.vmem [shape: s32[2,16], index: 3, kind: output, shape index: {2}]
  %4 = xla_tuple %s1, %s2, %s3
  $region1: #{custom-call.8} parent=0
    #allocation0 [shape = 'u8[16384]{0}', space=vmem, size = 0x4000, scoped, tag = 'operand span for operand 0']
    #allocation1 [shape = 'u8[16384]{0}', space=vmem, size = 0x4000, scoped, tag = 'operand span for operand 1']
    #allocation2 [shape = 'u8[4096]{0}', space=vmem, size = 0x1000, scoped, tag = 'operand span for operand 2']
    #allocation3 [shape = 'u8[2048]{0}', space=vmem, size = 0x800, scoped, tag = 'packed  for operand 2']
    #allocation4 [shape = 's32[2]{0}', space=sflag, size = 0x8, scoped, tag = 'scoped memory for custom-call.8']
    #allocation5 [shape = 'u8[4096]{0}', space=vmem, size = 0x1000, scoped, tag = 'operand span for operand 3']
    #allocation6 [shape = 'u8[2048]{0}', space=vmem, size = 0x800, scoped, tag = 'packed  for operand 3']
    %5 = vsyncpa [#allocation4], 0
    %s6 = scalar_lea.sflag [#allocation4], 1
    %7 = vsyncpa %s6, 0
    loop: start=0, step=1, limit=4
    $region2: #{custom-call.8} parent=1 // loop_pre_header
      _
    $region3: #{custom-call.8} parent=1 // loop_header
      %s9 = sphi 0, %s13
      %p10 = scmp.ge.s32.totalorder %s9, 4
      %s21 = sphi 0, %s23
      %s24 = sphi 0, %s21
      %s25 = sphi 0, %s24
      %s41 = sphi 0, %s25
      %s49 = sphi 0, %s51
      %s52 = sphi 0, %s49
      %s53 = sphi 0, %s52
      %s69 = sphi 0, %s53
    $region4: #{custom-call.8} parent=1 // loop_header_branch
      %12 = sbr.rel (%p10) target = $region8
    $region5: #{custom-call.8} parent=1 // loop_body
      %s14 = ssub.s32 %s9, 1
      %s15 = ssub.s32 %s9, 2
      %s16 = sadd.s32 %s9, 1
      %s17 = sshrl.u32 %s9, 3
      %s18 = sshrl.u32 %s16, 3
      %s19 = ssub.s32 %s17, %s18
      %p20 = scmp.eq.s32.totalorder %s19, 0
      %s22 = sadd.s32 %s21, 1
      %s23 = scalar_select %p20, %s21, %s22
      %p26 = pneg %p20
      %p27 = scmp.eq.s32.totalorder %s9, 1
      %p28 = por %p26, %p27
      %p29 = scmp.ne.s32.totalorder %s21, %s24
      %p30 = scmp.eq.s32.totalorder %s9, 0
      %p31 = por %p29, %p30
      %p32 = scmp.ne.s32.totalorder %s21, %s24
      %p33 = scmp.eq.s32.totalorder %s14, 1
      %p34 = por %p32, %p33
      %p35 = scmp.ne.s32.totalorder %s24, %s25
      %p36 = scmp.eq.s32.totalorder %s14, 0
      %p37 = por %p35, %p36
      %p38 = scmp.ne.s32.totalorder %s24, %s25
      %p39 = scmp.eq.s32.totalorder %s15, 1
      %p40 = por %p38, %p39
      %p42 = scmp.ne.s32.totalorder %s25, %s41
      %p43 = scmp.eq.s32.totalorder %s15, 0
      %p44 = por %p42, %p43
      %s45 = sshrl.u32 %s9, 3
      %s46 = sshrl.u32 %s16, 3
      %s47 = ssub.s32 %s45, %s46
      %p48 = scmp.eq.s32.totalorder %s47, 0
      %s50 = sadd.s32 %s49, 1
      %s51 = scalar_select %p48, %s49, %s50
      %p54 = pneg %p48
      %p55 = scmp.eq.s32.totalorder %s9, 1
      %p56 = por %p54, %p55
      %p57 = scmp.ne.s32.totalorder %s49, %s52
      %p58 = scmp.eq.s32.totalorder %s9, 0
      %p59 = por %p57, %p58
      %p60 = scmp.ne.s32.totalorder %s49, %s52
      %p61 = scmp.eq.s32.totalorder %s14, 1
      %p62 = por %p60, %p61
      %p63 = scmp.ne.s32.totalorder %s52, %s53
      %p64 = scmp.eq.s32.totalorder %s14, 0
      %p65 = por %p63, %p64
      %p66 = scmp.ne.s32.totalorder %s52, %s53
      %p67 = scmp.eq.s32.totalorder %s15, 1
      %p68 = por %p66, %p67
      %p70 = scmp.ne.s32.totalorder %s53, %s69
      %p71 = scmp.eq.s32.totalorder %s15, 0
      %p72 = por %p70, %p71
      %p73 = scmp.le.s32.totalorder 1, %s9
      %p74 = scmp.lt.s32.totalorder %s9, 3
      %p75 = pnand %p73, %p74
      %p76 = pneg %p75
      // Predicated region
      $region9: #{custom-call.8} parent=5 // pred_check
        _
      $region10: #{custom-call.8} parent=5 // pred_check_branch
        %78 = sbr.rel (%p75) target = $region12
      $region11: #{custom-call.8} parent=5 // pred_region
        %s79 = ssub.s32 %s9, 1
      $region12: #{custom-call.8} parent=5 // pred_fallthru
        _
      %p80 = scmp.lt.s32.totalorder %s9, 2
      // Predicated region
      $region13: #{custom-call.8} parent=5 // pred_check
        %p81 = pneg %p80
      $region14: #{custom-call.8} parent=5 // pred_check_branch
        %83 = sbr.rel (%p81) target = $region16
      $region15: #{custom-call.8} parent=5 // pred_region
        %s84 = sand.u32 %s9, 1
        %s85 = sand.u32 %s9, 1
        %s86 = smul.addr %s85, 16
        %s87 = scalar_lea.vmem [#allocation0], %s86
        %s88 = smul.addr %s9, 16
        %s89 = scalar_lea.vmem %s0, %s88
        // Predicated region
        $region17: #{custom-call.8} parent=15 // pred_check
          _
        $region18: #{custom-call.8} parent=15 // pred_check_branch
          %91 = sbr.rel (0) target = $region20
        $region19: #{custom-call.8} parent=15 // pred_region
          // Predicated region
          $region21: #{custom-call.8} parent=19 // pred_check
            _
          $region22: #{custom-call.8} parent=19 // pred_check_branch
            %93 = sbr.rel (0) target = $region24
          $region23: #{custom-call.8} parent=19 // pred_region
            loop: start=0, step=1, limit=1
            $region25: #{custom-call.8} parent=23 // loop_pre_header
              _
            $region26: #{custom-call.8} parent=23 // loop_header
              %s95 = sphi 0, %s99
              %p96 = scmp.ge.s32.totalorder %s95, 1
              %s100 = sphi %s89, %s89
              %s101 = sphi %s87, %s87
            $region27: #{custom-call.8} parent=23 // loop_header_branch
              %98 = sbr.rel (%p96) target = $region31
            $region28: #{custom-call.8} parent=23 // loop_body
              %v102 = vld [vmem:[%s100] sm:$0xff]
              %103 = vst [vmem:[%s101] sm:$0xff] %v102
              %v104 = vld [vmem:[%s100 + $0x8] sm:$0xff]
              %105 = vst [vmem:[%s101 + $0x8] sm:$0xff] %v104
            $region29: #{custom-call.8} parent=23 // loop_footer
              %s99 = sadd.s32 1, %s95
            $region30: #{custom-call.8} parent=23 // loop_footer_branch
              %94 = sbr.rel target = $region26
            $region31: #{custom-call.8} parent=23 // loop_exit
              _
          $region24: #{custom-call.8} parent=19 // pred_fallthru
            _
          // Predicated region
          $region32: #{custom-call.8} parent=19 // pred_check
            _
          $region33: #{custom-call.8} parent=19 // pred_check_branch
            %107 = sbr.rel target = $region35
          $region34: #{custom-call.8} parent=19 // pred_region
            _
          $region35: #{custom-call.8} parent=19 // pred_fallthru
            _
        $region20: #{custom-call.8} parent=15 // pred_fallthru
          _
        %108 = vnop
      $region16: #{custom-call.8} parent=5 // pred_fallthru
        _
      %p109 = scmp.le.s32.totalorder 1, %s9
      %p110 = scmp.lt.s32.totalorder %s9, 3
      %p111 = pnand %p109, %p110
      %p112 = pneg %p111
      // Predicated region
      $region36: #{custom-call.8} parent=5 // pred_check
        _
      $region37: #{custom-call.8} parent=5 // pred_check_branch
        %114 = sbr.rel (%p111) target = $region39
      $region38: #{custom-call.8} parent=5 // pred_region
        #allocation7 [shape = 's32[16,128]{1,0}', space=vmem, size = 0x2000, scoped, tag = 'scratch for permutations']
        %s115 = ssub.s32 %s9, 1
        %s116 = sand.u32 %s14, 1
        %s117 = sand.u32 %s14, 1
        %s118 = smul.addr %s117, 16
        %s119 = scalar_lea.vmem [#allocation0], %s118
        %s120 = sand.u32 %s14, 1
        %s121 = sand.u32 %s14, 1
        %s122 = smul.addr %s121, 16
        %s123 = scalar_lea.vmem [#allocation0], %s122
        %s124 = sand.u32 %s14, 1
        %s125 = sand.u32 %s14, 1
        %s126 = smul.addr %s125, 16
        %s127 = scalar_lea.vmem [#allocation1], %s126
        %p128 = pneg %p37
        %p129 = pneg %p34
        %s130 = sand.u32 %s24, 1
        %s131 = scalar_lea.sflag [#allocation4], %s130
        %s132 = sand.u32 %s24, 1
        %s133 = smul.addr %s132, 2
        %s134 = scalar_lea.vmem [#allocation3], %s133
        %p135 = pneg %p65
        %p136 = pneg %p62
        %s137 = sand.u32 %s52, 1
        %s138 = sand.u32 %s52, 1
        %s139 = smul.addr %s138, 2
        %s140 = scalar_lea.vmem [#allocation6], %s139
        %s141 = sshrl.u32 %s14, 3
        %s142 = sshrl.u32 %s14, 3
        %v143 = vld [vmem:[%s119] sm:$0xff]
        %144 = vst [vmem:[%s127] sm:$0xff] %v143
        %s145 = scalar_lea.vmem %s127, 8 [#allocation1]
        %s146 = scalar_lea.vmem %s119, 8 [#allocation0]
        %v147 = vld [vmem:[%s146] sm:$0xff]
        %148 = vst [vmem:[%s145] sm:$0xff] %v147
        %s149 = sand.u32 %s14, 7
        %s150 = scalar_lea.vmem [#allocation2], %s149
        %s151 = sand.u32 %s14, 7
        %s152 = scalar_lea.vmem [#allocation5], %s151
        %153 = vst [vmem:[%s150] sm:$0x1] 0
        %v154 = vlaneseq
        %v155 = vshrl.u32 %v154, 7
        %v156 = vmov %v155
        loop: start=0, step=1, limit=2
        $region40: #{custom-call.8} parent=38 // loop_pre_header
          _
        $region41: #{custom-call.8} parent=38 // loop_header
          %s158 = sphi 0, %s162
          %p159 = scmp.ge.s32.totalorder %s158, 2
        $region42: #{custom-call.8} parent=38 // loop_header_branch
          %161 = sbr.rel (%p159) target = $region46
        $region43: #{custom-call.8} parent=38 // loop_body
          %s163 = smul.addr %s158, 8
          %s164 = scalar_lea.vmem [#allocation7], %s163
          %s165 = smul.u32 %s158, 8
          %v166 = vstv %s165
          %v167 = vadd.s32 %v156, %v166
          %168 = vst [vmem:[%s164] sm:$0xff] %v167
        $region44: #{custom-call.8} parent=38 // loop_footer
          %s162 = sadd.s32 1, %s158
        $region45: #{custom-call.8} parent=38 // loop_footer_branch
          %157 = sbr.rel target = $region41
        $region46: #{custom-call.8} parent=38 // loop_exit
          _
        loop: start=0, step=1, limit=16
        $region47: #{custom-call.8} parent=38 // loop_pre_header
          _
        $region48: #{custom-call.8} parent=38 // loop_header
          %s170 = sphi 0, %s174
          %p171 = scmp.ge.s32.totalorder %s170, 16
        $region49: #{custom-call.8} parent=38 // loop_header_branch
          %173 = sbr.rel (%p171) target = $region53
        $region50: #{custom-call.8} parent=38 // loop_body
          %v175 = vstv %s170
          %v176 = vlaneseq
          %v177 = vshrl.u32 %v176, 7
          %v178 = vmov %v177
          %v179 = vld [vmem:[%s127] sm:$0xff]
          %v180 = vand.u32 2147483647, %v179
          %v182 = vstv %s170
          %vm183 = vcmp.ge.s32.totalorder %v178, %v182
          %vm184 = vcmp.lt.s32.totalorder %v178, 16
          %vm185 = vmand %vm183, %vm184
          %vm186 = vcmp.lt.f32.partialorder -inf, %v180
          %vm187 = vmand %vm185, %vm186
          %v188 = vsel %vm187, %v178, %v175
          %v189 = vsel %vm187, %v180, -inf
          %s190 = scalar_lea.vmem %s127, 8 [#allocation1]
          %v191 = vld [vmem:[%s190] sm:$0xff]
          %v192 = vand.u32 2147483647, %v191
          %v193 = vadd.s32 %v178, 8
          %v194 = vstv %s170
          %vm195 = vcmp.ge.s32.totalorder %v193, %v194
          %vm196 = vcmp.lt.s32.totalorder %v193, 16
          %vm197 = vmand %vm195, %vm196
          %vm198 = vcmp.lt.f32.partialorder %v189, %v192
          %vm199 = vmand %vm197, %vm198
          %v200 = vsel %vm199, %v193, %v188
          %v201 = vsel %vm199, %v192, %v189
          %v202 = vrot.slane %v201, 1
          %v203 = vrot.slane %v200, 1
          %vm204 = vcmp.ge.f32.partialorder %v202, %v201
          %v205 = vsel %vm204, %v202, %v201
          %v206 = vsel %vm204, %v203, %v200
          %v207 = vrot.slane %v202, 1
          %v208 = vrot.slane %v203, 1
          %vm209 = vcmp.ge.f32.partialorder %v207, %v205
          %v210 = vsel %vm209, %v207, %v205
          %v211 = vsel %vm209, %v208, %v206
          %v212 = vrot.slane %v207, 1
          %v213 = vrot.slane %v208, 1
          %vm214 = vcmp.ge.f32.partialorder %v212, %v210
          %v215 = vsel %vm214, %v212, %v210
          %v216 = vsel %vm214, %v213, %v211
          %v217 = vrot.slane %v212, 1
          %v218 = vrot.slane %v213, 1
          %vm219 = vcmp.ge.f32.partialorder %v217, %v215
          %v220 = vsel %vm219, %v217, %v215
          %v221 = vsel %vm219, %v218, %v216
          %v222 = vrot.slane %v217, 1
          %v223 = vrot.slane %v218, 1
          %vm224 = vcmp.ge.f32.partialorder %v222, %v220
          %v225 = vsel %vm224, %v222, %v220
          %v226 = vsel %vm224, %v223, %v221
          %v227 = vrot.slane %v222, 1
          %v228 = vrot.slane %v223, 1
          %vm229 = vcmp.ge.f32.partialorder %v227, %v225
          %v230 = vsel %vm229, %v227, %v225
          %v231 = vsel %vm229, %v228, %v226
          %v232 = vrot.slane %v227, 1
          %v233 = vrot.slane %v228, 1
          %vm234 = vcmp.ge.f32.partialorder %v232, %v230
          %v235 = vsel %vm234, %v232, %v230
          %v236 = vsel %vm234, %v233, %v231
          %s237 = ssub.s32 128, %s170
          %238 = vrot.lane.b32.xlu0 %v236, %s237
          %v239 = vpop.permute.xlu0 %238
          %s240 = vtos %v239
          %v241 = vstv %s170
          %v242 = vlaneseq
          %v243 = vand.u32 %v242, 127
          %vm244 = vcmp.eq.s32.totalorder %v243, %v241
          %v245 = vstv %s240
          %v246 = vld [vmem:[%s150] ss:$0 sm:$0xff]
          %v247 = vsel %vm244, %v245, %v246
          %248 = vst [vmem:[%s150] sm:$0x1] %v247
          %s249 = scalar_lea.vmem %s127, %s170 [#allocation1]
          %s250 = scalar_lea.vmem %s127, %s240 [#allocation1]
          %v251 = vld [vmem:[%s249] ss:$0 sm:$0xff]
          %v252 = vld [vmem:[%s250] ss:$0 sm:$0xff]
          %253 = vst [vmem:[%s250] sm:$0x1] %v251
          %254 = vst [vmem:[%s249] sm:$0x1] %v252
          %s255 = scalar_lea.vmem [#allocation7], %s170
          %s256 = scalar_lea.vmem [#allocation7], %s240
          %v257 = vld [vmem:[%s255] ss:$0 sm:$0xff]
          %v258 = vld [vmem:[%s256] ss:$0 sm:$0xff]
          %259 = vst [vmem:[%s256] sm:$0x1] %v257
          %260 = vst [vmem:[%s255] sm:$0x1] %v258
          %vm261 = vcmp.ne.f32.partialorder %v252, 0.0
          %vm262 = vmand %vm244, %vm261
          %v263 = vsel %vm262, %v252, 1.0
          %v264 = vlaneseq
          %v265 = vand.u32 %v264, 127
          %v266 = vstv %s170
          %vm267 = vcmp.gt.s32.totalorder %v265, %v266
          %v268 = vsel %vm267, %v252, 0.0
          %v269 = vlaneseq
          %v270 = vshrl.u32 %v269, 7
          %v271 = vmov %v270
          %v272 = vld [vmem:[%s127] sm:$0xff]
          %v274 = vstv %s170
          %vm275 = vcmp.gt.s32.totalorder %v271, %v274
          %v276 = vsel %vm275, %v263, 1.0
          %v277 = vrcp.pop %v276
          %v278 = vmul.f32 %v272, %v277
          %vm279 = vmand %vm275, %vm244
          %v280 = vsel %vm279, %v278, 0.0
          %281 = vadd.xlane.f32.xlu0 %v280
          %v282 = vpop.xlane.xlu0 %281
          %v283 = vmul.f32 %v282, %v268
          %v284 = vsub.f32 %v278, %v283
          %285 = vst [vmem:[%s127] sm:$0xff] %v284
          %s286 = scalar_lea.vmem %s127, 8 [#allocation1]
          %v287 = vld [vmem:[%s286] sm:$0xff]
          %v288 = vadd.s32 %v271, 8
          %v289 = vstv %s170
          %vm290 = vcmp.gt.s32.totalorder %v288, %v289
          %v291 = vsel %vm290, %v263, 1.0
          %v292 = vrcp.pop %v291
          %v293 = vmul.f32 %v287, %v292
          %vm294 = vmand %vm290, %vm244
          %v295 = vsel %vm294, %v293, 0.0
          %296 = vadd.xlane.f32.xlu0 %v295
          %v297 = vpop.xlane.xlu0 %296
          %v298 = vmul.f32 %v297, %v268
          %v299 = vsub.f32 %v293, %v298
          %300 = vst [vmem:[%s286] sm:$0xff] %v299
        $region51: #{custom-call.8} parent=38 // loop_footer
          %s174 = sadd.s32 1, %s170
        $region52: #{custom-call.8} parent=38 // loop_footer_branch
          %169 = sbr.rel target = $region48
        $region53: #{custom-call.8} parent=38 // loop_exit
          _
        %v301 = vld [vmem:[#allocation7] sm:$0xff]
        %s302 = scalar_lea.vmem [#allocation7], 8
        %v303 = vld [vmem:[%s302] sm:$0xff]
        %s304 = scalar_lea.vmem [#allocation7], 16
        %s305 = scalar_lea.vmem [#allocation7], 24
        %s306 = scalar_lea.vmem [#allocation7], 32
        %s307 = scalar_lea.vmem [#allocation7], 40
        %s308 = scalar_lea.vmem [#allocation7], 48
        %s309 = scalar_lea.vmem [#allocation7], 56
        %s310 = scalar_lea.vmem [#allocation7], 64
        %s311 = scalar_lea.vmem [#allocation7], 72
        %s312 = scalar_lea.vmem [#allocation7], 80
        %s313 = scalar_lea.vmem [#allocation7], 88
        %s314 = scalar_lea.vmem [#allocation7], 96
        %s315 = scalar_lea.vmem [#allocation7], 104
        %s316 = scalar_lea.vmem [#allocation7], 112
        %s317 = scalar_lea.vmem [#allocation7], 120
        %318 = vxpose.xlu0.b32.start [1/16] %v301, 128
        %319 = vxpose.xlu0.b32.cont [2/16] %v303, 128
        %320 = vxpose.xlu0.b32.cont [3/16] 0, 128
        %321 = vxpose.xlu0.b32.cont [4/16] 0, 128
        %322 = vxpose.xlu0.b32.cont [5/16] 0, 128
        %323 = vxpose.xlu0.b32.cont [6/16] 0, 128
        %324 = vxpose.xlu0.b32.cont [7/16] 0, 128
        %325 = vxpose.xlu0.b32.cont [8/16] 0, 128
        %326 = vxpose.xlu0.b32.cont [9/16] 0, 128
        %327 = vxpose.xlu0.b32.cont [10/16] 0, 128
        %328 = vxpose.xlu0.b32.cont [11/16] 0, 128
        %329 = vxpose.xlu0.b32.cont [12/16] 0, 128
        %330 = vxpose.xlu0.b32.cont [13/16] 0, 128
        %331 = vxpose.xlu0.b32.cont [14/16] 0, 128
        %332 = vxpose.xlu0.b32.cont [15/16] 0, 128
        %333 = vxpose.xlu0.b32.end [16/16] 0, 128
        %v334 = vpop.trf.xlu0
        %v335 = vpop.trf.xlu0
        %v336 = vpop.trf.xlu0
        %v337 = vpop.trf.xlu0
        %v338 = vpop.trf.xlu0
        %v339 = vpop.trf.xlu0
        %v340 = vpop.trf.xlu0
        %v341 = vpop.trf.xlu0
        %v342 = vpop.trf.xlu0
        %v343 = vpop.trf.xlu0
        %v344 = vpop.trf.xlu0
        %v345 = vpop.trf.xlu0
        %v346 = vpop.trf.xlu0
        %v347 = vpop.trf.xlu0
        %v348 = vpop.trf.xlu0
        %v349 = vpop.trf.xlu0
        %350 = vst [vmem:[%s152] sm:$0x1] %v334
        %s352 = sshllo.u32 0, 2
        %v354 = vld [vmem:[#allocation2] sm:%s352]
        %s355 = sshllo.u32 0, 2
        %356 = vst [vmem:[%s134] sm:%s355] %v354
        %s358 = sshllo.u32 0, 2
        %v360 = vld [vmem:[#allocation5] sm:%s358]
        %s361 = sshllo.u32 0, 2
        %362 = vst [vmem:[%s140] sm:%s361] %v360
        %s363 = sand.u32 %s14, 1
        %s364 = sand.u32 %s14, 1
        %s365 = smul.addr %s364, 16
        %s366 = scalar_lea.vmem [#allocation1], %s365
        %s367 = sand.u32 %s24, 1
        %s368 = scalar_lea.sflag [#allocation4], %s367
        %s369 = sand.u32 %s24, 1
        %s370 = smul.addr %s369, 2
        %s371 = scalar_lea.vmem [#allocation3], %s370
        %s372 = sand.u32 %s52, 1
        %s373 = sand.u32 %s52, 1
        %s374 = smul.addr %s373, 2
        %s375 = scalar_lea.vmem [#allocation6], %s374
        %s376 = smul.addr %s14, 16
        %s377 = scalar_lea.vmem %s1, %s376
        // Predicated region
        $region54: #{custom-call.8} parent=38 // pred_check
          _
        $region55: #{custom-call.8} parent=38 // pred_check_branch
          %379 = sbr.rel (0) target = $region57
        $region56: #{custom-call.8} parent=38 // pred_region
          // Predicated region
          $region58: #{custom-call.8} parent=56 // pred_check
            _
          $region59: #{custom-call.8} parent=56 // pred_check_branch
            %381 = sbr.rel (0) target = $region61
          $region60: #{custom-call.8} parent=56 // pred_region
            loop: start=0, step=1, limit=1
            $region62: #{custom-call.8} parent=60 // loop_pre_header
              _
            $region63: #{custom-call.8} parent=60 // loop_header
              %s383 = sphi 0, %s387
              %p384 = scmp.ge.s32.totalorder %s383, 1
              %s388 = sphi %s366, %s366
              %s389 = sphi %s377, %s377
            $region64: #{custom-call.8} parent=60 // loop_header_branch
              %386 = sbr.rel (%p384) target = $region68
            $region65: #{custom-call.8} parent=60 // loop_body
              %v390 = vld [vmem:[%s388] sm:$0xff]
              %391 = vst [vmem:[%s389] sm:$0xff] %v390
              %v392 = vld [vmem:[%s388 + $0x8] sm:$0xff]
              %393 = vst [vmem:[%s389 + $0x8] sm:$0xff] %v392
            $region66: #{custom-call.8} parent=60 // loop_footer
              %s387 = sadd.s32 1, %s383
            $region67: #{custom-call.8} parent=60 // loop_footer_branch
              %382 = sbr.rel target = $region63
            $region68: #{custom-call.8} parent=60 // loop_exit
              _
          $region61: #{custom-call.8} parent=56 // pred_fallthru
            _
          // Predicated region
          $region69: #{custom-call.8} parent=56 // pred_check
            _
          $region70: #{custom-call.8} parent=56 // pred_check_branch
            %395 = sbr.rel target = $region72
          $region71: #{custom-call.8} parent=56 // pred_region
            _
          $region72: #{custom-call.8} parent=56 // pred_fallthru
            _
        $region57: #{custom-call.8} parent=38 // pred_fallthru
          _
        %396 = vnop
        // Predicated region
        $region73: #{custom-call.8} parent=38 // pred_check
          %p397 = pneg %p34
        $region74: #{custom-call.8} parent=38 // pred_check_branch
          %399 = sbr.rel (%p397) target = $region76
        $region75: #{custom-call.8} parent=38 // pred_region
          %s400 = sshrl.u32 %s14, 3
          %s402 = ssub.s32 32, 32
          %403 = vsyncadd %s368, %s402
          %s404 = smul.addr %s400, 32
          %s405 = scalar_lea.hbm %s2, %s404
          %s407 = sshll.u32 %s371, 4
          %s408 = int_to_ptr.vmem [resolvable:$true] %s407
          %410 = dma.vmem_to_hbm [thread:$0]  %s408, 32, %s405, %s368
        $region76: #{custom-call.8} parent=38 // pred_fallthru
          _
        // Predicated region
        $region77: #{custom-call.8} parent=38 // pred_check
          %p411 = pneg %p62
        $region78: #{custom-call.8} parent=38 // pred_check_branch
          %413 = sbr.rel (%p411) target = $region80
        $region79: #{custom-call.8} parent=38 // pred_region
          %s414 = sshrl.u32 %s14, 3
          %s415 = smul.addr %s414, 2
          %s416 = scalar_lea.vmem %s3, %s415
          // Predicated region
          $region81: #{custom-call.8} parent=79 // pred_check
            _
          $region82: #{custom-call.8} parent=79 // pred_check_branch
            %418 = sbr.rel (0) target = $region84
          $region83: #{custom-call.8} parent=79 // pred_region
            // Predicated region
            $region85: #{custom-call.8} parent=83 // pred_check
              _
            $region86: #{custom-call.8} parent=83 // pred_check_branch
              %420 = sbr.rel target = $region88
            $region87: #{custom-call.8} parent=83 // pred_region
              // Predicated region
              $region100: #{custom-call.8} parent=87 // pred_check
                _
              $region101: #{custom-call.8} parent=87 // pred_check_branch
                %435 = sbr.rel (0) target = $region103
              $region102: #{custom-call.8} parent=87 // pred_region
                loop: start=0, step=1, limit=1
                $region104: #{custom-call.8} parent=102 // loop_pre_header
                  _
                $region105: #{custom-call.8} parent=102 // loop_header
                  %s438 = sphi 0, %s442
                  %p439 = scmp.ge.s32.totalorder %s438, 1
                  %s443 = sphi %s375, %s375
                  %s444 = sphi %s416, %s416
                $region106: #{custom-call.8} parent=102 // loop_header_branch
                  %441 = sbr.rel (%p439) target = $region110
                $region107: #{custom-call.8} parent=102 // loop_body
                  %v445 = vld [vmem:[%s443] sm:$0x3]
                  %446 = vst [vmem:[%s444] sm:$0x3] %v445
                $region108: #{custom-call.8} parent=102 // loop_footer
                  %s442 = sadd.s32 1, %s438
                $region109: #{custom-call.8} parent=102 // loop_footer_branch
                  %437 = sbr.rel target = $region105
                $region110: #{custom-call.8} parent=102 // loop_exit
                  _
              $region103: #{custom-call.8} parent=87 // pred_fallthru
                _
            $region88: #{custom-call.8} parent=83 // pred_fallthru
              _
            // Predicated region
            $region89: #{custom-call.8} parent=83 // pred_check
              _
            $region90: #{custom-call.8} parent=83 // pred_check_branch
              %422 = sbr.rel (0) target = $region92
            $region91: #{custom-call.8} parent=83 // pred_region
              loop: start=0, step=1, limit=1
              $region93: #{custom-call.8} parent=91 // loop_pre_header
                _
              $region94: #{custom-call.8} parent=91 // loop_header
                %s425 = sphi 0, %s429
                %p426 = scmp.ge.s32.totalorder %s425, 1
                %s430 = sphi %s375, %s375
                %s431 = sphi %s416, %s416
              $region95: #{custom-call.8} parent=91 // loop_header_branch
                %428 = sbr.rel (%p426) target = $region99
              $region96: #{custom-call.8} parent=91 // loop_body
                %v432 = vld [vmem:[%s430] sm:$0x3]
                %433 = vst [vmem:[%s431] sm:$0x3] %v432
              $region97: #{custom-call.8} parent=91 // loop_footer
                %s429 = sadd.s32 1, %s425
              $region98: #{custom-call.8} parent=91 // loop_footer_branch
                %424 = sbr.rel target = $region94
              $region99: #{custom-call.8} parent=91 // loop_exit
                _
            $region92: #{custom-call.8} parent=83 // pred_fallthru
              _
          $region84: #{custom-call.8} parent=79 // pred_fallthru
            _
          %447 = vnop
        $region80: #{custom-call.8} parent=38 // pred_fallthru
          _
      $region39: #{custom-call.8} parent=5 // pred_fallthru
        _
      %p448 = scmp.le.s32.totalorder 2, %s9
      // Predicated region
      $region111: #{custom-call.8} parent=5 // pred_check
        %p449 = pneg %p448
      $region112: #{custom-call.8} parent=5 // pred_check_branch
        %451 = sbr.rel (%p449) target = $region114
      $region113: #{custom-call.8} parent=5 // pred_region
        %s452 = ssub.s32 %s9, 2
        %s453 = sand.u32 %s15, 1
        %s454 = sand.u32 %s15, 1
        %s455 = smul.addr %s454, 16
        %s456 = scalar_lea.vmem [#allocation1], %s455
        // Predicated region
        $region115: #{custom-call.8} parent=113 // pred_check
          %p457 = pneg %p40
        $region116: #{custom-call.8} parent=113 // pred_check_branch
          %459 = sbr.rel (%p457) target = $region118
        $region117: #{custom-call.8} parent=113 // pred_region
          %s460 = sand.u32 %s25, 1
          %s461 = scalar_lea.sflag [#allocation4], %s460
          %s462 = sand.u32 %s25, 1
          %s463 = smul.addr %s462, 2
          %s464 = scalar_lea.vmem [#allocation3], %s463
          %465 = dma.done %s461, 32
        $region118: #{custom-call.8} parent=113 // pred_fallthru
          _
        // Predicated region
        $region119: #{custom-call.8} parent=113 // pred_check
          %p466 = pneg %p68
        $region120: #{custom-call.8} parent=113 // pred_check_branch
          %468 = sbr.rel (%p466) target = $region122
        $region121: #{custom-call.8} parent=113 // pred_region
          %s469 = sand.u32 %s53, 1
          %s470 = sand.u32 %s53, 1
          %s471 = smul.addr %s470, 2
          %s472 = scalar_lea.vmem [#allocation6], %s471
        $region122: #{custom-call.8} parent=113 // pred_fallthru
          _
      $region114: #{custom-call.8} parent=5 // pred_fallthru
        _
    $region6: #{custom-call.8} parent=1 // loop_footer
      %s13 = sadd.s32 1, %s9
    $region7: #{custom-call.8} parent=1 // loop_footer_branch
      %8 = sbr.rel target = $region3
    $region8: #{custom-call.8} parent=1 // loop_exit
      _
    %473 = vsyncpa [#allocation4], 1
    %s474 = scalar_lea.sflag [#allocation4], 1
    %475 = vsyncpa %s474, 1

// kernel: custom-call.10
$region0: #{custom-call.10}
  %s0 = inlined_call_operand.vmem [shape: f32[2,1,16,16], index: 0, kind: input, shape index: {}]
  %s1 = inlined_call_operand.vmem [shape: f32[2,1,16,16], index: 1, kind: output, shape index: {}]
  $region1: #{custom-call.10} parent=0
    #allocation0 [shape = 'u8[16384]{0}', space=vmem, size = 0x4000, scoped, tag = 'operand span for operand 0']
    #allocation1 [shape = 'u8[16384]{0}', space=vmem, size = 0x4000, scoped, tag = 'operand span for operand 1']
    loop: start=0, step=1, limit=4
    $region2: #{custom-call.10} parent=1 // loop_pre_header
      _
    $region3: #{custom-call.10} parent=1 // loop_header
      %s3 = sphi 0, %s7
      %p4 = scmp.ge.s32.totalorder %s3, 4
      %s10 = sphi 0, %s36
      %s11 = sphi 0, %s32
      %s12 = sphi 0, %s28
      %s13 = sphi 0, %s24
      %s14 = sphi 0, %s10
      %s15 = sphi 0, %s11
      %s16 = sphi 0, %s12
      %s17 = sphi 0, %s13
      %s18 = sphi 0, %s14
      %s19 = sphi 0, %s15
      %s20 = sphi 0, %s16
      %s21 = sphi 0, %s17
    $region4: #{custom-call.10} parent=1 // loop_header_branch
      %6 = sbr.rel (%p4) target = $region8
    $region5: #{custom-call.10} parent=1 // loop_body
      %s8 = ssub.s32 %s3, 1
      %s9 = ssub.s32 %s3, 2
      %s22 = sadd.s32 1, %s13
      %p23 = scmp.ge.s32.totalorder %s22, 1
      %s24 = scalar_select %p23, 0, %s22
      %s25 = sadd.s32 1, %s12
      %s26 = scalar_select %p23, %s25, %s12
      %p27 = scmp.ge.s32.totalorder %s26, 1
      %s28 = scalar_select %p27, 0, %s26
      %s29 = sadd.s32 1, %s11
      %s30 = scalar_select %p27, %s29, %s11
      %p31 = scmp.ge.s32.totalorder %s30, 1
      %s32 = scalar_select %p31, 0, %s30
      %s33 = sadd.s32 1, %s10
      %s34 = scalar_select %p31, %s33, %s10
      %p35 = scmp.ge.s32.totalorder %s34, 2
      %s36 = scalar_select %p35, 0, %s34
      %p37 = scmp.le.s32.totalorder 1, %s3
      %p38 = scmp.lt.s32.totalorder %s3, 3
      %p39 = pnand %p37, %p38
      %p40 = pneg %p39
      // Predicated region
      $region9: #{custom-call.10} parent=5 // pred_check
        _
      $region10: #{custom-call.10} parent=5 // pred_check_branch
        %42 = sbr.rel (%p39) target = $region12
      $region11: #{custom-call.10} parent=5 // pred_region
        %s43 = ssub.s32 %s3, 1
      $region12: #{custom-call.10} parent=5 // pred_fallthru
        _
      %p44 = scmp.lt.s32.totalorder %s3, 2
      // Predicated region
      $region13: #{custom-call.10} parent=5 // pred_check
        %p45 = pneg %p44
      $region14: #{custom-call.10} parent=5 // pred_check_branch
        %47 = sbr.rel (%p45) target = $region16
      $region15: #{custom-call.10} parent=5 // pred_region
        %s48 = sand.u32 %s3, 1
        %s49 = sand.u32 %s3, 1
        %s50 = smul.addr %s49, 16
        %s51 = scalar_lea.vmem [#allocation0], %s50
        %s52 = sadd.s32 %s13, %s12
        %s53 = smul.addr %s11, 2
        %s54 = sadd.s32 %s52, %s53
        %s55 = smul.addr %s10, 2
        %s56 = sadd.s32 %s54, %s55
        %s57 = smul.addr %s56, 8
        %s58 = scalar_lea.vmem %s0, %s57
        // Predicated region
        $region17: #{custom-call.10} parent=15 // pred_check
          _
        $region18: #{custom-call.10} parent=15 // pred_check_branch
          %60 = sbr.rel (0) target = $region20
        $region19: #{custom-call.10} parent=15 // pred_region
          // Predicated region
          $region21: #{custom-call.10} parent=19 // pred_check
            _
          $region22: #{custom-call.10} parent=19 // pred_check_branch
            %62 = sbr.rel (0) target = $region24
          $region23: #{custom-call.10} parent=19 // pred_region
            // Predicated region
            $region36: #{custom-call.10} parent=23 // pred_check
              _
            $region37: #{custom-call.10} parent=23 // pred_check_branch
              %79 = sbr.rel (0) target = $region39
            $region38: #{custom-call.10} parent=23 // pred_region
              loop: start=0, step=1, limit=1
              $region40: #{custom-call.10} parent=38 // loop_pre_header
                _
              $region41: #{custom-call.10} parent=38 // loop_header
                %s81 = sphi 0, %s85
                %p82 = scmp.ge.s32.totalorder %s81, 1
                %s86 = sphi %s58, %s58
                %s87 = sphi %s51, %s51
              $region42: #{custom-call.10} parent=38 // loop_header_branch
                %84 = sbr.rel (%p82) target = $region46
              $region43: #{custom-call.10} parent=38 // loop_body
                %v88 = vld [vmem:[%s86] sm:$0xff]
                %89 = vst [vmem:[%s87] sm:$0xff] %v88
                %v90 = vld [vmem:[%s86 + $0x8] sm:$0xff]
                %91 = vst [vmem:[%s87 + $0x8] sm:$0xff] %v90
              $region44: #{custom-call.10} parent=38 // loop_footer
                %s85 = sadd.s32 1, %s81
              $region45: #{custom-call.10} parent=38 // loop_footer_branch
                %80 = sbr.rel target = $region41
              $region46: #{custom-call.10} parent=38 // loop_exit
                _
            $region39: #{custom-call.10} parent=23 // pred_fallthru
              _
            // Predicated region
            $region47: #{custom-call.10} parent=23 // pred_check
              _
            $region48: #{custom-call.10} parent=23 // pred_check_branch
              %93 = sbr.rel target = $region50
            $region49: #{custom-call.10} parent=23 // pred_region
              _
            $region50: #{custom-call.10} parent=23 // pred_fallthru
              _
          $region24: #{custom-call.10} parent=19 // pred_fallthru
            _
          // Predicated region
          $region25: #{custom-call.10} parent=19 // pred_check
            _
          $region26: #{custom-call.10} parent=19 // pred_check_branch
            %64 = sbr.rel target = $region28
          $region27: #{custom-call.10} parent=19 // pred_region
            loop: start=0, step=1, limit=1
            $region29: #{custom-call.10} parent=27 // loop_pre_header
              _
            $region30: #{custom-call.10} parent=27 // loop_header
              %s67 = sphi 0, %s71
              %p68 = scmp.ge.s32.totalorder %s67, 1
              %s72 = sphi %s58, %s58
              %s73 = sphi %s51, %s51
            $region31: #{custom-call.10} parent=27 // loop_header_branch
              %70 = sbr.rel (%p68) target = $region35
            $region32: #{custom-call.10} parent=27 // loop_body
              %v74 = vld [vmem:[%s72] sm:$0xff]
              %75 = vst [vmem:[%s73] sm:$0xff] %v74
              %v76 = vld [vmem:[%s72 + $0x8] sm:$0xff]
              %77 = vst [vmem:[%s73 + $0x8] sm:$0xff] %v76
            $region33: #{custom-call.10} parent=27 // loop_footer
              %s71 = sadd.s32 1, %s67
            $region34: #{custom-call.10} parent=27 // loop_footer_branch
              %66 = sbr.rel target = $region30
            $region35: #{custom-call.10} parent=27 // loop_exit
              _
          $region28: #{custom-call.10} parent=19 // pred_fallthru
            _
        $region20: #{custom-call.10} parent=15 // pred_fallthru
          _
        %94 = vnop
      $region16: #{custom-call.10} parent=5 // pred_fallthru
        _
      %p95 = scmp.le.s32.totalorder 1, %s3
      %p96 = scmp.lt.s32.totalorder %s3, 3
      %p97 = pnand %p95, %p96
      %p98 = pneg %p97
      // Predicated region
      $region51: #{custom-call.10} parent=5 // pred_check
        _
      $region52: #{custom-call.10} parent=5 // pred_check_branch
        %100 = sbr.rel (%p97) target = $region54
      $region53: #{custom-call.10} parent=5 // pred_region
        #allocation2 [shape = 'f32[16,16]{1,0}', space=vmem, size = 0x2000, scoped, tag = 'rescaled input a']
        %s101 = ssub.s32 %s3, 1
        %s102 = sand.u32 %s8, 1
        %s103 = sand.u32 %s8, 1
        %s104 = smul.addr %s103, 16
        %s105 = scalar_lea.vmem [#allocation0], %s104
        %s106 = sand.u32 %s8, 1
        %s107 = sand.u32 %s8, 1
        %s108 = smul.addr %s107, 16
        %s109 = scalar_lea.vmem [#allocation0], %s108
        %s110 = sand.u32 %s8, 1
        %s111 = sand.u32 %s8, 1
        %s112 = smul.addr %s111, 16
        %s113 = scalar_lea.vmem [#allocation1], %s112
        %v114 = vlaneseq
        %v115 = vand.u32 %v114, 127
        %vm116 = vcmp.lt.s32.totalorder %v115, 16
        %v117 = vlaneseq
        %v118 = vshrl.u32 %v117, 7
        %vm120 = vcmp.eq.s32.totalorder %v118, %v115
        %v121 = vld [vmem:[%s105] sm:$0xff]
        %v122 = vsel %vm120, %v121, 0.0
        %123 = vadd.xlane.f32.xlu0 %v122
        %v124 = vpop.xlane.xlu0 %123
        %vm125 = vcmp.ge.s32.totalorder %v118, %v115
        %vm126 = vmand %vm125, %vm116
        %v127 = vsel %vm126, %v121, 0.0
        %v128 = vrcp.pop %v124
        %v129 = vmul.f32 %v127, %v128
        %130 = vst [vmem:[#allocation2] sm:$0xff] %v129
        %s131 = scalar_lea.vmem %s105, 8 [#allocation0]
        %s132 = scalar_lea.vmem [#allocation2], 8
        %v133 = vlaneseq
        %v134 = vshrl.u32 %v133, 7
        %v135 = vadd.s32 %v134, 8
        %vm136 = vcmp.eq.s32.totalorder %v135, %v115
        %v137 = vld [vmem:[%s131] sm:$0xff]
        %v138 = vsel %vm136, %v137, 0.0
        %139 = vadd.xlane.f32.xlu0 %v138
        %v140 = vpop.xlane.xlu0 %139
        %vm141 = vcmp.ge.s32.totalorder %v135, %v115
        %vm142 = vmand %vm141, %vm116
        %v143 = vsel %vm142, %v137, 0.0
        %v144 = vrcp.pop %v140
        %v145 = vmul.f32 %v143, %v144
        %146 = vst [vmem:[%s132] sm:$0xff] %v145
        %v147 = vlaneseq
        %v148 = vand.u32 %v147, 127
        %v149 = vlaneseq
        %v150 = vshrl.u32 %v149, 7
        %vm152 = vcmp.eq.s32.totalorder %v148, %v150
        %v153 = vlaneseq
        %v154 = vand.u32 %v153, 127
        %vm155 = vcmp.eq.s32.totalorder %v154, 0
        %v156 = vsel %vm155, 1.0, -1.0
        %v157 = vsel %vm152, %v156, 0.0
        %v158 = vlaneseq
        %v159 = vand.u32 %v158, 127
        %v160 = vlaneseq
        %v161 = vshrl.u32 %v160, 7
        %v162 = vadd.s32 %v161, 8
        %vm163 = vcmp.eq.s32.totalorder %v159, %v162
        %v164 = vsel %vm163, -1.0, 0.0
        %s165 = scalar_lea.vmem [#allocation2], 1
        %v166 = vld [vmem:[%s165] ss:$0 sm:$0xff]
        %v167 = vxor.u32 %v166, 2147483648
        %v168 = vlaneseq
        %v169 = vand.u32 %v168, 127
        %vm170 = vcmp.eq.s32.totalorder %v169, 1
        %v171 = vmul.f32 %v167, %v157
        %172 = vadd.xlane.f32.xlu0 %v171
        %v173 = vpop.xlane.xlu0 %172
        %v174 = vsel %vm170, %v173, %v157
        %s175 = scalar_lea.vmem [#allocation2], 2
        %v176 = vld [vmem:[%s175] ss:$0 sm:$0xff]
        %v177 = vxor.u32 %v176, 2147483648
        %v178 = vlaneseq
        %v179 = vand.u32 %v178, 127
        %vm180 = vcmp.eq.s32.totalorder %v179, 2
        %v181 = vmul.f32 %v177, %v174
        %182 = vadd.xlane.f32.xlu0 %v181
        %v183 = vpop.xlane.xlu0 %182
        %v184 = vsel %vm180, %v183, %v174
        %s185 = scalar_lea.vmem [#allocation2], 3
        %v186 = vld [vmem:[%s185] ss:$0 sm:$0xff]
        %v187 = vxor.u32 %v186, 2147483648
        %v188 = vlaneseq
        %v189 = vand.u32 %v188, 127
        %vm190 = vcmp.eq.s32.totalorder %v189, 3
        %v191 = vmul.f32 %v187, %v184
        %192 = vadd.xlane.f32.xlu0 %v191
        %v193 = vpop.xlane.xlu0 %192
        %v194 = vsel %vm190, %v193, %v184
        %s195 = scalar_lea.vmem [#allocation2], 4
        %v196 = vld [vmem:[%s195] ss:$0 sm:$0xff]
        %v197 = vxor.u32 %v196, 2147483648
        %v198 = vlaneseq
        %v199 = vand.u32 %v198, 127
        %vm200 = vcmp.eq.s32.totalorder %v199, 4
        %v201 = vmul.f32 %v197, %v194
        %202 = vadd.xlane.f32.xlu0 %v201
        %v203 = vpop.xlane.xlu0 %202
        %v204 = vsel %vm200, %v203, %v194
        %s205 = scalar_lea.vmem [#allocation2], 5
        %v206 = vld [vmem:[%s205] ss:$0 sm:$0xff]
        %v207 = vxor.u32 %v206, 2147483648
        %v208 = vlaneseq
        %v209 = vand.u32 %v208, 127
        %vm210 = vcmp.eq.s32.totalorder %v209, 5
        %v211 = vmul.f32 %v207, %v204
        %212 = vadd.xlane.f32.xlu0 %v211
        %v213 = vpop.xlane.xlu0 %212
        %v214 = vsel %vm210, %v213, %v204
        %s215 = scalar_lea.vmem [#allocation2], 6
        %v216 = vld [vmem:[%s215] ss:$0 sm:$0xff]
        %v217 = vxor.u32 %v216, 2147483648
        %v218 = vlaneseq
        %v219 = vand.u32 %v218, 127
        %vm220 = vcmp.eq.s32.totalorder %v219, 6
        %v221 = vmul.f32 %v217, %v214
        %222 = vadd.xlane.f32.xlu0 %v221
        %v223 = vpop.xlane.xlu0 %222
        %v224 = vsel %vm220, %v223, %v214
        %s225 = scalar_lea.vmem [#allocation2], 7
        %v226 = vld [vmem:[%s225] ss:$0 sm:$0xff]
        %v227 = vxor.u32 %v226, 2147483648
        %v228 = vlaneseq
        %v229 = vand.u32 %v228, 127
        %vm230 = vcmp.eq.s32.totalorder %v229, 7
        %v231 = vmul.f32 %v227, %v224
        %232 = vadd.xlane.f32.xlu0 %v231
        %v233 = vpop.xlane.xlu0 %232
        %v234 = vsel %vm230, %v233, %v224
        %s235 = scalar_lea.vmem [#allocation2], 8
        %v236 = vld [vmem:[%s235] ss:$0 sm:$0xff]
        %v237 = vxor.u32 %v236, 2147483648
        %v238 = vlaneseq
        %v239 = vand.u32 %v238, 127
        %vm240 = vcmp.eq.s32.totalorder %v239, 8
        %v241 = vmul.f32 %v237, %v234
        %242 = vadd.xlane.f32.xlu0 %v241
        %v243 = vpop.xlane.xlu0 %242
        %v244 = vsel %vm240, %v243, %v234
        %v245 = vmul.f32 %v237, %v164
        %246 = vadd.xlane.f32.xlu0 %v245
        %v247 = vpop.xlane.xlu0 %246
        %v248 = vsel %vm240, %v247, %v164
        %s249 = scalar_lea.vmem [#allocation2], 9
        %v250 = vld [vmem:[%s249] ss:$0 sm:$0xff]
        %v251 = vxor.u32 %v250, 2147483648
        %v252 = vlaneseq
        %v253 = vand.u32 %v252, 127
        %vm254 = vcmp.eq.s32.totalorder %v253, 9
        %v255 = vmul.f32 %v251, %v244
        %256 = vadd.xlane.f32.xlu0 %v255
        %v257 = vpop.xlane.xlu0 %256
        %v258 = vsel %vm254, %v257, %v244
        %v259 = vmul.f32 %v251, %v248
        %260 = vadd.xlane.f32.xlu0 %v259
        %v261 = vpop.xlane.xlu0 %260
        %v262 = vsel %vm254, %v261, %v248
        %s263 = scalar_lea.vmem [#allocation2], 10
        %v264 = vld [vmem:[%s263] ss:$0 sm:$0xff]
        %v265 = vxor.u32 %v264, 2147483648
        %v266 = vlaneseq
        %v267 = vand.u32 %v266, 127
        %vm268 = vcmp.eq.s32.totalorder %v267, 10
        %v269 = vmul.f32 %v265, %v258
        %270 = vadd.xlane.f32.xlu0 %v269
        %v271 = vpop.xlane.xlu0 %270
        %v272 = vsel %vm268, %v271, %v258
        %v273 = vmul.f32 %v265, %v262
        %274 = vadd.xlane.f32.xlu0 %v273
        %v275 = vpop.xlane.xlu0 %274
        %v276 = vsel %vm268, %v275, %v262
        %s277 = scalar_lea.vmem [#allocation2], 11
        %v278 = vld [vmem:[%s277] ss:$0 sm:$0xff]
        %v279 = vxor.u32 %v278, 2147483648
        %v280 = vlaneseq
        %v281 = vand.u32 %v280, 127
        %vm282 = vcmp.eq.s32.totalorder %v281, 11
        %v283 = vmul.f32 %v279, %v272
        %284 = vadd.xlane.f32.xlu0 %v283
        %v285 = vpop.xlane.xlu0 %284
        %v286 = vsel %vm282, %v285, %v272
        %v287 = vmul.f32 %v279, %v276
        %288 = vadd.xlane.f32.xlu0 %v287
        %v289 = vpop.xlane.xlu0 %288
        %v290 = vsel %vm282, %v289, %v276
        %s291 = scalar_lea.vmem [#allocation2], 12
        %v292 = vld [vmem:[%s291] ss:$0 sm:$0xff]
        %v293 = vxor.u32 %v292, 2147483648
        %v294 = vlaneseq
        %v295 = vand.u32 %v294, 127
        %vm296 = vcmp.eq.s32.totalorder %v295, 12
        %v297 = vmul.f32 %v293, %v286
        %298 = vadd.xlane.f32.xlu0 %v297
        %v299 = vpop.xlane.xlu0 %298
        %v300 = vsel %vm296, %v299, %v286
        %v301 = vmul.f32 %v293, %v290
        %302 = vadd.xlane.f32.xlu0 %v301
        %v303 = vpop.xlane.xlu0 %302
        %v304 = vsel %vm296, %v303, %v290
        %s305 = scalar_lea.vmem [#allocation2], 13
        %v306 = vld [vmem:[%s305] ss:$0 sm:$0xff]
        %v307 = vxor.u32 %v306, 2147483648
        %v308 = vlaneseq
        %v309 = vand.u32 %v308, 127
        %vm310 = vcmp.eq.s32.totalorder %v309, 13
        %v311 = vmul.f32 %v307, %v300
        %312 = vadd.xlane.f32.xlu0 %v311
        %v313 = vpop.xlane.xlu0 %312
        %v314 = vsel %vm310, %v313, %v300
        %v315 = vmul.f32 %v307, %v304
        %316 = vadd.xlane.f32.xlu0 %v315
        %v317 = vpop.xlane.xlu0 %316
        %v318 = vsel %vm310, %v317, %v304
        %s319 = scalar_lea.vmem [#allocation2], 14
        %v320 = vld [vmem:[%s319] ss:$0 sm:$0xff]
        %v321 = vxor.u32 %v320, 2147483648
        %v322 = vlaneseq
        %v323 = vand.u32 %v322, 127
        %vm324 = vcmp.eq.s32.totalorder %v323, 14
        %v325 = vmul.f32 %v321, %v314
        %326 = vadd.xlane.f32.xlu0 %v325
        %v327 = vpop.xlane.xlu0 %326
        %v328 = vsel %vm324, %v327, %v314
        %v329 = vmul.f32 %v321, %v318
        %330 = vadd.xlane.f32.xlu0 %v329
        %v331 = vpop.xlane.xlu0 %330
        %v332 = vsel %vm324, %v331, %v318
        %s333 = scalar_lea.vmem [#allocation2], 15
        %v334 = vld [vmem:[%s333] ss:$0 sm:$0xff]
        %v335 = vxor.u32 %v334, 2147483648
        %v336 = vlaneseq
        %v337 = vand.u32 %v336, 127
        %vm338 = vcmp.eq.s32.totalorder %v337, 15
        %v339 = vmul.f32 %v335, %v328
        %340 = vadd.xlane.f32.xlu0 %v339
        %v341 = vpop.xlane.xlu0 %340
        %v342 = vsel %vm338, %v341, %v328
        %v343 = vmul.f32 %v335, %v332
        %344 = vadd.xlane.f32.xlu0 %v343
        %v345 = vpop.xlane.xlu0 %344
        %v346 = vsel %vm338, %v345, %v332
        %v347 = vrcp.pop %v124
        %v348 = vmul.f32 %v342, %v347
        %vm349 = vweird.f32 %v124
        %v350 = vsel %vm349, %v342, %v348
        %351 = vst [vmem:[%s113] sm:$0xff] %v350
        %v352 = vrcp.pop %v140
        %v353 = vmul.f32 %v346, %v352
        %vm354 = vweird.f32 %v140
        %v355 = vsel %vm354, %v346, %v353
        %s356 = scalar_lea.vmem %s113, 8 [#allocation1]
        %357 = vst [vmem:[%s356] sm:$0xff] %v355
        %s358 = sand.u32 %s8, 1
        %s359 = sand.u32 %s8, 1
        %s360 = smul.addr %s359, 16
        %s361 = scalar_lea.vmem [#allocation1], %s360
        %s362 = sadd.s32 %s17, %s16
        %s363 = smul.addr %s15, 2
        %s364 = sadd.s32 %s362, %s363
        %s365 = smul.addr %s14, 2
        %s366 = sadd.s32 %s364, %s365
        %s367 = smul.addr %s366, 8
        %s368 = scalar_lea.vmem %s1, %s367
        // Predicated region
        $region55: #{custom-call.10} parent=53 // pred_check
          _
        $region56: #{custom-call.10} parent=53 // pred_check_branch
          %370 = sbr.rel (0) target = $region58
        $region57: #{custom-call.10} parent=53 // pred_region
          // Predicated region
          $region59: #{custom-call.10} parent=57 // pred_check
            _
          $region60: #{custom-call.10} parent=57 // pred_check_branch
            %372 = sbr.rel (0) target = $region62
          $region61: #{custom-call.10} parent=57 // pred_region
            // Predicated region
            $region74: #{custom-call.10} parent=61 // pred_check
              _
            $region75: #{custom-call.10} parent=61 // pred_check_branch
              %389 = sbr.rel (0) target = $region77
            $region76: #{custom-call.10} parent=61 // pred_region
              loop: start=0, step=1, limit=1
              $region78: #{custom-call.10} parent=76 // loop_pre_header
                _
              $region79: #{custom-call.10} parent=76 // loop_header
                %s391 = sphi 0, %s395
                %p392 = scmp.ge.s32.totalorder %s391, 1
                %s396 = sphi %s361, %s361
                %s397 = sphi %s368, %s368
              $region80: #{custom-call.10} parent=76 // loop_header_branch
                %394 = sbr.rel (%p392) target = $region84
              $region81: #{custom-call.10} parent=76 // loop_body
                %v398 = vld [vmem:[%s396] sm:$0xff]
                %399 = vst [vmem:[%s397] sm:$0xff] %v398
                %v400 = vld [vmem:[%s396 + $0x8] sm:$0xff]
                %401 = vst [vmem:[%s397 + $0x8] sm:$0xff] %v400
              $region82: #{custom-call.10} parent=76 // loop_footer
                %s395 = sadd.s32 1, %s391
              $region83: #{custom-call.10} parent=76 // loop_footer_branch
                %390 = sbr.rel target = $region79
              $region84: #{custom-call.10} parent=76 // loop_exit
                _
            $region77: #{custom-call.10} parent=61 // pred_fallthru
              _
            // Predicated region
            $region85: #{custom-call.10} parent=61 // pred_check
              _
            $region86: #{custom-call.10} parent=61 // pred_check_branch
              %403 = sbr.rel target = $region88
            $region87: #{custom-call.10} parent=61 // pred_region
              _
            $region88: #{custom-call.10} parent=61 // pred_fallthru
              _
          $region62: #{custom-call.10} parent=57 // pred_fallthru
            _
          // Predicated region
          $region63: #{custom-call.10} parent=57 // pred_check
            _
          $region64: #{custom-call.10} parent=57 // pred_check_branch
            %374 = sbr.rel target = $region66
          $region65: #{custom-call.10} parent=57 // pred_region
            loop: start=0, step=1, limit=1
            $region67: #{custom-call.10} parent=65 // loop_pre_header
              _
            $region68: #{custom-call.10} parent=65 // loop_header
              %s377 = sphi 0, %s381
              %p378 = scmp.ge.s32.totalorder %s377, 1
              %s382 = sphi %s361, %s361
              %s383 = sphi %s368, %s368
            $region69: #{custom-call.10} parent=65 // loop_header_branch
              %380 = sbr.rel (%p378) target = $region73
            $region70: #{custom-call.10} parent=65 // loop_body
              %v384 = vld [vmem:[%s382] sm:$0xff]
              %385 = vst [vmem:[%s383] sm:$0xff] %v384
              %v386 = vld [vmem:[%s382 + $0x8] sm:$0xff]
              %387 = vst [vmem:[%s383 + $0x8] sm:$0xff] %v386
            $region71: #{custom-call.10} parent=65 // loop_footer
              %s381 = sadd.s32 1, %s377
            $region72: #{custom-call.10} parent=65 // loop_footer_branch
              %376 = sbr.rel target = $region68
            $region73: #{custom-call.10} parent=65 // loop_exit
              _
          $region66: #{custom-call.10} parent=57 // pred_fallthru
            _
        $region58: #{custom-call.10} parent=53 // pred_fallthru
          _
        %404 = vnop
      $region54: #{custom-call.10} parent=5 // pred_fallthru
        _
      %p405 = scmp.le.s32.totalorder 2, %s3
      // Predicated region
      $region89: #{custom-call.10} parent=5 // pred_check
        %p406 = pneg %p405
      $region90: #{custom-call.10} parent=5 // pred_check_branch
        %408 = sbr.rel (%p406) target = $region92
      $region91: #{custom-call.10} parent=5 // pred_region
        %s409 = ssub.s32 %s3, 2
        %s410 = sand.u32 %s9, 1
        %s411 = sand.u32 %s9, 1
        %s412 = smul.addr %s411, 16
        %s413 = scalar_lea.vmem [#allocation1], %s412
      $region92: #{custom-call.10} parent=5 // pred_fallthru
        _
    $region6: #{custom-call.10} parent=1 // loop_footer
      %s7 = sadd.s32 1, %s3
    $region7: #{custom-call.10} parent=1 // loop_footer_branch
      %2 = sbr.rel target = $region3
    $region8: #{custom-call.10} parent=1 // loop_exit
      _

// kernel: custom-call.9
$region0: #{custom-call.9}
  %s0 = inlined_call_operand.vmem [shape: f32[2,1,16,16], index: 0, kind: input, shape index: {}]
  %s1 = inlined_call_operand.vmem [shape: f32[2,1,16,16], index: 1, kind: output, shape index: {}]
  $region1: #{custom-call.9} parent=0
    #allocation0 [shape = 'u8[16384]{0}', space=vmem, size = 0x4000, scoped, tag = 'operand span for operand 0']
    #allocation1 [shape = 'u8[16384]{0}', space=vmem, size = 0x4000, scoped, tag = 'operand span for operand 1']
    loop: start=0, step=1, limit=4
    $region2: #{custom-call.9} parent=1 // loop_pre_header
      _
    $region3: #{custom-call.9} parent=1 // loop_header
      %s3 = sphi 0, %s7
      %p4 = scmp.ge.s32.totalorder %s3, 4
      %s10 = sphi 0, %s36
      %s11 = sphi 0, %s32
      %s12 = sphi 0, %s28
      %s13 = sphi 0, %s24
      %s14 = sphi 0, %s10
      %s15 = sphi 0, %s11
      %s16 = sphi 0, %s12
      %s17 = sphi 0, %s13
      %s18 = sphi 0, %s14
      %s19 = sphi 0, %s15
      %s20 = sphi 0, %s16
      %s21 = sphi 0, %s17
    $region4: #{custom-call.9} parent=1 // loop_header_branch
      %6 = sbr.rel (%p4) target = $region8
    $region5: #{custom-call.9} parent=1 // loop_body
      %s8 = ssub.s32 %s3, 1
      %s9 = ssub.s32 %s3, 2
      %s22 = sadd.s32 1, %s13
      %p23 = scmp.ge.s32.totalorder %s22, 1
      %s24 = scalar_select %p23, 0, %s22
      %s25 = sadd.s32 1, %s12
      %s26 = scalar_select %p23, %s25, %s12
      %p27 = scmp.ge.s32.totalorder %s26, 1
      %s28 = scalar_select %p27, 0, %s26
      %s29 = sadd.s32 1, %s11
      %s30 = scalar_select %p27, %s29, %s11
      %p31 = scmp.ge.s32.totalorder %s30, 1
      %s32 = scalar_select %p31, 0, %s30
      %s33 = sadd.s32 1, %s10
      %s34 = scalar_select %p31, %s33, %s10
      %p35 = scmp.ge.s32.totalorder %s34, 2
      %s36 = scalar_select %p35, 0, %s34
      %p37 = scmp.le.s32.totalorder 1, %s3
      %p38 = scmp.lt.s32.totalorder %s3, 3
      %p39 = pnand %p37, %p38
      %p40 = pneg %p39
      // Predicated region
      $region9: #{custom-call.9} parent=5 // pred_check
        _
      $region10: #{custom-call.9} parent=5 // pred_check_branch
        %42 = sbr.rel (%p39) target = $region12
      $region11: #{custom-call.9} parent=5 // pred_region
        %s43 = ssub.s32 %s3, 1
      $region12: #{custom-call.9} parent=5 // pred_fallthru
        _
      %p44 = scmp.lt.s32.totalorder %s3, 2
      // Predicated region
      $region13: #{custom-call.9} parent=5 // pred_check
        %p45 = pneg %p44
      $region14: #{custom-call.9} parent=5 // pred_check_branch
        %47 = sbr.rel (%p45) target = $region16
      $region15: #{custom-call.9} parent=5 // pred_region
        %s48 = sand.u32 %s3, 1
        %s49 = sand.u32 %s3, 1
        %s50 = smul.addr %s49, 16
        %s51 = scalar_lea.vmem [#allocation0], %s50
        %s52 = sadd.s32 %s13, %s12
        %s53 = smul.addr %s11, 2
        %s54 = sadd.s32 %s52, %s53
        %s55 = smul.addr %s10, 2
        %s56 = sadd.s32 %s54, %s55
        %s57 = smul.addr %s56, 8
        %s58 = scalar_lea.vmem %s0, %s57
        // Predicated region
        $region17: #{custom-call.9} parent=15 // pred_check
          _
        $region18: #{custom-call.9} parent=15 // pred_check_branch
          %60 = sbr.rel (0) target = $region20
        $region19: #{custom-call.9} parent=15 // pred_region
          // Predicated region
          $region21: #{custom-call.9} parent=19 // pred_check
            _
          $region22: #{custom-call.9} parent=19 // pred_check_branch
            %62 = sbr.rel (0) target = $region24
          $region23: #{custom-call.9} parent=19 // pred_region
            // Predicated region
            $region36: #{custom-call.9} parent=23 // pred_check
              _
            $region37: #{custom-call.9} parent=23 // pred_check_branch
              %79 = sbr.rel (0) target = $region39
            $region38: #{custom-call.9} parent=23 // pred_region
              loop: start=0, step=1, limit=1
              $region40: #{custom-call.9} parent=38 // loop_pre_header
                _
              $region41: #{custom-call.9} parent=38 // loop_header
                %s81 = sphi 0, %s85
                %p82 = scmp.ge.s32.totalorder %s81, 1
                %s86 = sphi %s58, %s58
                %s87 = sphi %s51, %s51
              $region42: #{custom-call.9} parent=38 // loop_header_branch
                %84 = sbr.rel (%p82) target = $region46
              $region43: #{custom-call.9} parent=38 // loop_body
                %v88 = vld [vmem:[%s86] sm:$0xff]
                %89 = vst [vmem:[%s87] sm:$0xff] %v88
                %v90 = vld [vmem:[%s86 + $0x8] sm:$0xff]
                %91 = vst [vmem:[%s87 + $0x8] sm:$0xff] %v90
              $region44: #{custom-call.9} parent=38 // loop_footer
                %s85 = sadd.s32 1, %s81
              $region45: #{custom-call.9} parent=38 // loop_footer_branch
                %80 = sbr.rel target = $region41
              $region46: #{custom-call.9} parent=38 // loop_exit
                _
            $region39: #{custom-call.9} parent=23 // pred_fallthru
              _
            // Predicated region
            $region47: #{custom-call.9} parent=23 // pred_check
              _
            $region48: #{custom-call.9} parent=23 // pred_check_branch
              %93 = sbr.rel target = $region50
            $region49: #{custom-call.9} parent=23 // pred_region
              _
            $region50: #{custom-call.9} parent=23 // pred_fallthru
              _
          $region24: #{custom-call.9} parent=19 // pred_fallthru
            _
          // Predicated region
          $region25: #{custom-call.9} parent=19 // pred_check
            _
          $region26: #{custom-call.9} parent=19 // pred_check_branch
            %64 = sbr.rel target = $region28
          $region27: #{custom-call.9} parent=19 // pred_region
            loop: start=0, step=1, limit=1
            $region29: #{custom-call.9} parent=27 // loop_pre_header
              _
            $region30: #{custom-call.9} parent=27 // loop_header
              %s67 = sphi 0, %s71
              %p68 = scmp.ge.s32.totalorder %s67, 1
              %s72 = sphi %s58, %s58
              %s73 = sphi %s51, %s51
            $region31: #{custom-call.9} parent=27 // loop_header_branch
              %70 = sbr.rel (%p68) target = $region35
            $region32: #{custom-call.9} parent=27 // loop_body
              %v74 = vld [vmem:[%s72] sm:$0xff]
              %75 = vst [vmem:[%s73] sm:$0xff] %v74
              %v76 = vld [vmem:[%s72 + $0x8] sm:$0xff]
              %77 = vst [vmem:[%s73 + $0x8] sm:$0xff] %v76
            $region33: #{custom-call.9} parent=27 // loop_footer
              %s71 = sadd.s32 1, %s67
            $region34: #{custom-call.9} parent=27 // loop_footer_branch
              %66 = sbr.rel target = $region30
            $region35: #{custom-call.9} parent=27 // loop_exit
              _
          $region28: #{custom-call.9} parent=19 // pred_fallthru
            _
        $region20: #{custom-call.9} parent=15 // pred_fallthru
          _
        %94 = vnop
      $region16: #{custom-call.9} parent=5 // pred_fallthru
        _
      %p95 = scmp.le.s32.totalorder 1, %s3
      %p96 = scmp.lt.s32.totalorder %s3, 3
      %p97 = pnand %p95, %p96
      %p98 = pneg %p97
      // Predicated region
      $region51: #{custom-call.9} parent=5 // pred_check
        _
      $region52: #{custom-call.9} parent=5 // pred_check_branch
        %100 = sbr.rel (%p97) target = $region54
      $region53: #{custom-call.9} parent=5 // pred_region
        #allocation2 [shape = 'f32[16,16]{1,0}', space=vmem, size = 0x2000, scoped, tag = 'rescaled input a']
        %s101 = ssub.s32 %s3, 1
        %s102 = sand.u32 %s8, 1
        %s103 = sand.u32 %s8, 1
        %s104 = smul.addr %s103, 16
        %s105 = scalar_lea.vmem [#allocation0], %s104
        %s106 = sand.u32 %s8, 1
        %s107 = sand.u32 %s8, 1
        %s108 = smul.addr %s107, 16
        %s109 = scalar_lea.vmem [#allocation0], %s108
        %s110 = sand.u32 %s8, 1
        %s111 = sand.u32 %s8, 1
        %s112 = smul.addr %s111, 16
        %s113 = scalar_lea.vmem [#allocation1], %s112
        %v114 = vlaneseq
        %v115 = vand.u32 %v114, 127
        %vm116 = vcmp.lt.s32.totalorder %v115, 16
        %v117 = vlaneseq
        %v118 = vshrl.u32 %v117, 7
        %vm120 = vcmp.eq.s32.totalorder %v118, %v115
        %v121 = vld [vmem:[%s105] sm:$0xff]
        %v122 = vsel %vm120, %v121, 0.0
        %123 = vadd.xlane.f32.xlu0 %v122
        %v124 = vpop.xlane.xlu0 %123
        %vm125 = vcmp.le.s32.totalorder %v118, %v115
        %vm126 = vmand %vm125, %vm116
        %v127 = vsel %vm126, %v121, 0.0
        %v128 = vrcp.pop %v124
        %v129 = vmul.f32 %v127, %v128
        %130 = vst [vmem:[#allocation2] sm:$0xff] %v129
        %s131 = scalar_lea.vmem %s105, 8 [#allocation0]
        %s132 = scalar_lea.vmem [#allocation2], 8
        %v133 = vlaneseq
        %v134 = vshrl.u32 %v133, 7
        %v135 = vadd.s32 %v134, 8
        %vm136 = vcmp.eq.s32.totalorder %v135, %v115
        %v137 = vld [vmem:[%s131] sm:$0xff]
        %v138 = vsel %vm136, %v137, 0.0
        %139 = vadd.xlane.f32.xlu0 %v138
        %v140 = vpop.xlane.xlu0 %139
        %vm141 = vcmp.le.s32.totalorder %v135, %v115
        %vm142 = vmand %vm141, %vm116
        %v143 = vsel %vm142, %v137, 0.0
        %v144 = vrcp.pop %v140
        %v145 = vmul.f32 %v143, %v144
        %146 = vst [vmem:[%s132] sm:$0xff] %v145
        %v147 = vlaneseq
        %v148 = vand.u32 %v147, 127
        %v149 = vlaneseq
        %v150 = vshrl.u32 %v149, 7
        %vm152 = vcmp.eq.s32.totalorder %v148, %v150
        %v153 = vsel %vm152, -1.0, 0.0
        %v154 = vlaneseq
        %v155 = vand.u32 %v154, 127
        %v156 = vlaneseq
        %v157 = vshrl.u32 %v156, 7
        %v158 = vadd.s32 %v157, 8
        %vm159 = vcmp.eq.s32.totalorder %v155, %v158
        %v160 = vlaneseq
        %v161 = vand.u32 %v160, 127
        %vm162 = vcmp.eq.s32.totalorder %v161, 15
        %v163 = vsel %vm162, 1.0, -1.0
        %v164 = vsel %vm159, %v163, 0.0
        %s165 = scalar_lea.vmem [#allocation2], 14
        %v166 = vld [vmem:[%s165] ss:$0 sm:$0xff]
        %v167 = vxor.u32 %v166, 2147483648
        %v168 = vlaneseq
        %v169 = vand.u32 %v168, 127
        %vm170 = vcmp.eq.s32.totalorder %v169, 14
        %v171 = vmul.f32 %v167, %v164
        %172 = vadd.xlane.f32.xlu0 %v171
        %v173 = vpop.xlane.xlu0 %172
        %v174 = vsel %vm170, %v173, %v164
        %s175 = scalar_lea.vmem [#allocation2], 13
        %v176 = vld [vmem:[%s175] ss:$0 sm:$0xff]
        %v177 = vxor.u32 %v176, 2147483648
        %v178 = vlaneseq
        %v179 = vand.u32 %v178, 127
        %vm180 = vcmp.eq.s32.totalorder %v179, 13
        %v181 = vmul.f32 %v177, %v174
        %182 = vadd.xlane.f32.xlu0 %v181
        %v183 = vpop.xlane.xlu0 %182
        %v184 = vsel %vm180, %v183, %v174
        %s185 = scalar_lea.vmem [#allocation2], 12
        %v186 = vld [vmem:[%s185] ss:$0 sm:$0xff]
        %v187 = vxor.u32 %v186, 2147483648
        %v188 = vlaneseq
        %v189 = vand.u32 %v188, 127
        %vm190 = vcmp.eq.s32.totalorder %v189, 12
        %v191 = vmul.f32 %v187, %v184
        %192 = vadd.xlane.f32.xlu0 %v191
        %v193 = vpop.xlane.xlu0 %192
        %v194 = vsel %vm190, %v193, %v184
        %s195 = scalar_lea.vmem [#allocation2], 11
        %v196 = vld [vmem:[%s195] ss:$0 sm:$0xff]
        %v197 = vxor.u32 %v196, 2147483648
        %v198 = vlaneseq
        %v199 = vand.u32 %v198, 127
        %vm200 = vcmp.eq.s32.totalorder %v199, 11
        %v201 = vmul.f32 %v197, %v194
        %202 = vadd.xlane.f32.xlu0 %v201
        %v203 = vpop.xlane.xlu0 %202
        %v204 = vsel %vm200, %v203, %v194
        %s205 = scalar_lea.vmem [#allocation2], 10
        %v206 = vld [vmem:[%s205] ss:$0 sm:$0xff]
        %v207 = vxor.u32 %v206, 2147483648
        %v208 = vlaneseq
        %v209 = vand.u32 %v208, 127
        %vm210 = vcmp.eq.s32.totalorder %v209, 10
        %v211 = vmul.f32 %v207, %v204
        %212 = vadd.xlane.f32.xlu0 %v211
        %v213 = vpop.xlane.xlu0 %212
        %v214 = vsel %vm210, %v213, %v204
        %s215 = scalar_lea.vmem [#allocation2], 9
        %v216 = vld [vmem:[%s215] ss:$0 sm:$0xff]
        %v217 = vxor.u32 %v216, 2147483648
        %v218 = vlaneseq
        %v219 = vand.u32 %v218, 127
        %vm220 = vcmp.eq.s32.totalorder %v219, 9
        %v221 = vmul.f32 %v217, %v214
        %222 = vadd.xlane.f32.xlu0 %v221
        %v223 = vpop.xlane.xlu0 %222
        %v224 = vsel %vm220, %v223, %v214
        %s225 = scalar_lea.vmem [#allocation2], 8
        %v226 = vld [vmem:[%s225] ss:$0 sm:$0xff]
        %v227 = vxor.u32 %v226, 2147483648
        %v228 = vlaneseq
        %v229 = vand.u32 %v228, 127
        %vm230 = vcmp.eq.s32.totalorder %v229, 8
        %v231 = vmul.f32 %v227, %v224
        %232 = vadd.xlane.f32.xlu0 %v231
        %v233 = vpop.xlane.xlu0 %232
        %v234 = vsel %vm230, %v233, %v224
        %s235 = scalar_lea.vmem [#allocation2], 7
        %v236 = vld [vmem:[%s235] ss:$0 sm:$0xff]
        %v237 = vxor.u32 %v236, 2147483648
        %v238 = vlaneseq
        %v239 = vand.u32 %v238, 127
        %vm240 = vcmp.eq.s32.totalorder %v239, 7
        %v241 = vmul.f32 %v237, %v153
        %242 = vadd.xlane.f32.xlu0 %v241
        %v243 = vpop.xlane.xlu0 %242
        %v244 = vsel %vm240, %v243, %v153
        %v245 = vmul.f32 %v237, %v234
        %246 = vadd.xlane.f32.xlu0 %v245
        %v247 = vpop.xlane.xlu0 %246
        %v248 = vsel %vm240, %v247, %v234
        %s249 = scalar_lea.vmem [#allocation2], 6
        %v250 = vld [vmem:[%s249] ss:$0 sm:$0xff]
        %v251 = vxor.u32 %v250, 2147483648
        %v252 = vlaneseq
        %v253 = vand.u32 %v252, 127
        %vm254 = vcmp.eq.s32.totalorder %v253, 6
        %v255 = vmul.f32 %v251, %v244
        %256 = vadd.xlane.f32.xlu0 %v255
        %v257 = vpop.xlane.xlu0 %256
        %v258 = vsel %vm254, %v257, %v244
        %v259 = vmul.f32 %v251, %v248
        %260 = vadd.xlane.f32.xlu0 %v259
        %v261 = vpop.xlane.xlu0 %260
        %v262 = vsel %vm254, %v261, %v248
        %s263 = scalar_lea.vmem [#allocation2], 5
        %v264 = vld [vmem:[%s263] ss:$0 sm:$0xff]
        %v265 = vxor.u32 %v264, 2147483648
        %v266 = vlaneseq
        %v267 = vand.u32 %v266, 127
        %vm268 = vcmp.eq.s32.totalorder %v267, 5
        %v269 = vmul.f32 %v265, %v258
        %270 = vadd.xlane.f32.xlu0 %v269
        %v271 = vpop.xlane.xlu0 %270
        %v272 = vsel %vm268, %v271, %v258
        %v273 = vmul.f32 %v265, %v262
        %274 = vadd.xlane.f32.xlu0 %v273
        %v275 = vpop.xlane.xlu0 %274
        %v276 = vsel %vm268, %v275, %v262
        %s277 = scalar_lea.vmem [#allocation2], 4
        %v278 = vld [vmem:[%s277] ss:$0 sm:$0xff]
        %v279 = vxor.u32 %v278, 2147483648
        %v280 = vlaneseq
        %v281 = vand.u32 %v280, 127
        %vm282 = vcmp.eq.s32.totalorder %v281, 4
        %v283 = vmul.f32 %v279, %v272
        %284 = vadd.xlane.f32.xlu0 %v283
        %v285 = vpop.xlane.xlu0 %284
        %v286 = vsel %vm282, %v285, %v272
        %v287 = vmul.f32 %v279, %v276
        %288 = vadd.xlane.f32.xlu0 %v287
        %v289 = vpop.xlane.xlu0 %288
        %v290 = vsel %vm282, %v289, %v276
        %s291 = scalar_lea.vmem [#allocation2], 3
        %v292 = vld [vmem:[%s291] ss:$0 sm:$0xff]
        %v293 = vxor.u32 %v292, 2147483648
        %v294 = vlaneseq
        %v295 = vand.u32 %v294, 127
        %vm296 = vcmp.eq.s32.totalorder %v295, 3
        %v297 = vmul.f32 %v293, %v286
        %298 = vadd.xlane.f32.xlu0 %v297
        %v299 = vpop.xlane.xlu0 %298
        %v300 = vsel %vm296, %v299, %v286
        %v301 = vmul.f32 %v293, %v290
        %302 = vadd.xlane.f32.xlu0 %v301
        %v303 = vpop.xlane.xlu0 %302
        %v304 = vsel %vm296, %v303, %v290
        %s305 = scalar_lea.vmem [#allocation2], 2
        %v306 = vld [vmem:[%s305] ss:$0 sm:$0xff]
        %v307 = vxor.u32 %v306, 2147483648
        %v308 = vlaneseq
        %v309 = vand.u32 %v308, 127
        %vm310 = vcmp.eq.s32.totalorder %v309, 2
        %v311 = vmul.f32 %v307, %v300
        %312 = vadd.xlane.f32.xlu0 %v311
        %v313 = vpop.xlane.xlu0 %312
        %v314 = vsel %vm310, %v313, %v300
        %v315 = vmul.f32 %v307, %v304
        %316 = vadd.xlane.f32.xlu0 %v315
        %v317 = vpop.xlane.xlu0 %316
        %v318 = vsel %vm310, %v317, %v304
        %s319 = scalar_lea.vmem [#allocation2], 1
        %v320 = vld [vmem:[%s319] ss:$0 sm:$0xff]
        %v321 = vxor.u32 %v320, 2147483648
        %v322 = vlaneseq
        %v323 = vand.u32 %v322, 127
        %vm324 = vcmp.eq.s32.totalorder %v323, 1
        %v325 = vmul.f32 %v321, %v314
        %326 = vadd.xlane.f32.xlu0 %v325
        %v327 = vpop.xlane.xlu0 %326
        %v328 = vsel %vm324, %v327, %v314
        %v329 = vmul.f32 %v321, %v318
        %330 = vadd.xlane.f32.xlu0 %v329
        %v331 = vpop.xlane.xlu0 %330
        %v332 = vsel %vm324, %v331, %v318
        %v333 = vld [vmem:[#allocation2] ss:$0 sm:$0xff]
        %v334 = vxor.u32 %v333, 2147483648
        %v335 = vlaneseq
        %v336 = vand.u32 %v335, 127
        %vm337 = vcmp.eq.s32.totalorder %v336, 0
        %v338 = vmul.f32 %v334, %v328
        %339 = vadd.xlane.f32.xlu0 %v338
        %v340 = vpop.xlane.xlu0 %339
        %v341 = vsel %vm337, %v340, %v328
        %v342 = vmul.f32 %v334, %v332
        %343 = vadd.xlane.f32.xlu0 %v342
        %v344 = vpop.xlane.xlu0 %343
        %v345 = vsel %vm337, %v344, %v332
        %v346 = vrcp.pop %v124
        %v347 = vmul.f32 %v341, %v346
        %vm348 = vweird.f32 %v124
        %v349 = vsel %vm348, %v341, %v347
        %350 = vst [vmem:[%s113] sm:$0xff] %v349
        %v351 = vrcp.pop %v140
        %v352 = vmul.f32 %v345, %v351
        %vm353 = vweird.f32 %v140
        %v354 = vsel %vm353, %v345, %v352
        %s355 = scalar_lea.vmem %s113, 8 [#allocation1]
        %356 = vst [vmem:[%s355] sm:$0xff] %v354
        %s357 = sand.u32 %s8, 1
        %s358 = sand.u32 %s8, 1
        %s359 = smul.addr %s358, 16
        %s360 = scalar_lea.vmem [#allocation1], %s359
        %s361 = sadd.s32 %s17, %s16
        %s362 = smul.addr %s15, 2
        %s363 = sadd.s32 %s361, %s362
        %s364 = smul.addr %s14, 2
        %s365 = sadd.s32 %s363, %s364
        %s366 = smul.addr %s365, 8
        %s367 = scalar_lea.vmem %s1, %s366
        // Predicated region
        $region55: #{custom-call.9} parent=53 // pred_check
          _
        $region56: #{custom-call.9} parent=53 // pred_check_branch
          %369 = sbr.rel (0) target = $region58
        $region57: #{custom-call.9} parent=53 // pred_region
          // Predicated region
          $region59: #{custom-call.9} parent=57 // pred_check
            _
          $region60: #{custom-call.9} parent=57 // pred_check_branch
            %371 = sbr.rel (0) target = $region62
          $region61: #{custom-call.9} parent=57 // pred_region
            // Predicated region
            $region74: #{custom-call.9} parent=61 // pred_check
              _
            $region75: #{custom-call.9} parent=61 // pred_check_branch
              %388 = sbr.rel (0) target = $region77
            $region76: #{custom-call.9} parent=61 // pred_region
              loop: start=0, step=1, limit=1
              $region78: #{custom-call.9} parent=76 // loop_pre_header
                _
              $region79: #{custom-call.9} parent=76 // loop_header
                %s390 = sphi 0, %s394
                %p391 = scmp.ge.s32.totalorder %s390, 1
                %s395 = sphi %s360, %s360
                %s396 = sphi %s367, %s367
              $region80: #{custom-call.9} parent=76 // loop_header_branch
                %393 = sbr.rel (%p391) target = $region84
              $region81: #{custom-call.9} parent=76 // loop_body
                %v397 = vld [vmem:[%s395] sm:$0xff]
                %398 = vst [vmem:[%s396] sm:$0xff] %v397
                %v399 = vld [vmem:[%s395 + $0x8] sm:$0xff]
                %400 = vst [vmem:[%s396 + $0x8] sm:$0xff] %v399
              $region82: #{custom-call.9} parent=76 // loop_footer
                %s394 = sadd.s32 1, %s390
              $region83: #{custom-call.9} parent=76 // loop_footer_branch
                %389 = sbr.rel target = $region79
              $region84: #{custom-call.9} parent=76 // loop_exit
                _
            $region77: #{custom-call.9} parent=61 // pred_fallthru
              _
            // Predicated region
            $region85: #{custom-call.9} parent=61 // pred_check
              _
            $region86: #{custom-call.9} parent=61 // pred_check_branch
              %402 = sbr.rel target = $region88
            $region87: #{custom-call.9} parent=61 // pred_region
              _
            $region88: #{custom-call.9} parent=61 // pred_fallthru
              _
          $region62: #{custom-call.9} parent=57 // pred_fallthru
            _
          // Predicated region
          $region63: #{custom-call.9} parent=57 // pred_check
            _
          $region64: #{custom-call.9} parent=57 // pred_check_branch
            %373 = sbr.rel target = $region66
          $region65: #{custom-call.9} parent=57 // pred_region
            loop: start=0, step=1, limit=1
            $region67: #{custom-call.9} parent=65 // loop_pre_header
              _
            $region68: #{custom-call.9} parent=65 // loop_header
              %s376 = sphi 0, %s380
              %p377 = scmp.ge.s32.totalorder %s376, 1
              %s381 = sphi %s360, %s360
              %s382 = sphi %s367, %s367
            $region69: #{custom-call.9} parent=65 // loop_header_branch
              %379 = sbr.rel (%p377) target = $region73
            $region70: #{custom-call.9} parent=65 // loop_body
              %v383 = vld [vmem:[%s381] sm:$0xff]
              %384 = vst [vmem:[%s382] sm:$0xff] %v383
              %v385 = vld [vmem:[%s381 + $0x8] sm:$0xff]
              %386 = vst [vmem:[%s382 + $0x8] sm:$0xff] %v385
            $region71: #{custom-call.9} parent=65 // loop_footer
              %s380 = sadd.s32 1, %s376
            $region72: #{custom-call.9} parent=65 // loop_footer_branch
              %375 = sbr.rel target = $region68
            $region73: #{custom-call.9} parent=65 // loop_exit
              _
          $region66: #{custom-call.9} parent=57 // pred_fallthru
            _
        $region58: #{custom-call.9} parent=53 // pred_fallthru
          _
        %403 = vnop
      $region54: #{custom-call.9} parent=5 // pred_fallthru
        _
      %p404 = scmp.le.s32.totalorder 2, %s3
      // Predicated region
      $region89: #{custom-call.9} parent=5 // pred_check
        %p405 = pneg %p404
      $region90: #{custom-call.9} parent=5 // pred_check_branch
        %407 = sbr.rel (%p405) target = $region92
      $region91: #{custom-call.9} parent=5 // pred_region
        %s408 = ssub.s32 %s3, 2
        %s409 = sand.u32 %s9, 1
        %s410 = sand.u32 %s9, 1
        %s411 = smul.addr %s410, 16
        %s412 = scalar_lea.vmem [#allocation1], %s411
      $region92: #{custom-call.9} parent=5 // pred_fallthru
        _
    $region6: #{custom-call.9} parent=1 // loop_footer
      %s7 = sadd.s32 1, %s3
    $region7: #{custom-call.9} parent=1 // loop_footer_branch
      %2 = sbr.rel target = $region3
    $region8: #{custom-call.9} parent=1 // loop_exit
      _

// kernel: deep_time_forward.3
$region0: #{deep_time_forward.3}
  #allocation0 [shape = 'u32[]', space=smem, size = 0x4, offset = 0x4, fixed_abs, tag = 'smem constant byte address 0x4 - core index']
  #allocation1 [shape = 'u32[144,128]{1,0:T(1,128)}', space=vmem, size = 0x12000, scoped, tag = 'internal scratch']
  %s0 = inlined_call_operand.vmem [shape: f32[48,32], index: 0, kind: input, shape index: {}]
  %s1 = inlined_call_operand.vmem [shape: f32[2,16], index: 1, kind: input, shape index: {}]
  %s2 = inlined_call_operand.vmem [shape: f32[2,1], index: 2, kind: input, shape index: {}]
  %s3 = inlined_call_operand.vmem [shape: f32[2,1], index: 3, kind: input, shape index: {}]
  %s4 = inlined_call_operand.hbm [shape: f32[2,8], index: 4, kind: output, shape index: {}]
  %s5 = sld [smem:[#allocation0]]
  $region26: #{deep_time_forward.3} parent=0
    _
  %s7 = ssub.s32 1, %s5
  %s8 = scalar_select 0, %s7, %s5
  $region1: #{deep_time_forward.3} parent=0
    #allocation2 [shape = 'u8[1024]{0}', space=vmem, size = 0x400, scoped, tag = 'output window, operand 0, single buffered']
    #allocation3 [shape = 's32[1]{0}', space=sflag, size = 0x4, scoped, tag = 'scoped memory for deep_time_forward.3']
    %9 = vsyncpa [#allocation3], 0
    // Predicated region
    $region2: #{deep_time_forward.3} parent=1 // pred_check
      _
    $region3: #{deep_time_forward.3} parent=1 // pred_check_branch
      %11 = sbr.rel (0) target = $region5
    $region4: #{deep_time_forward.3} parent=1 // pred_region
      _
    $region5: #{deep_time_forward.3} parent=1 // pred_fallthru
      _
    // Predicated region
    $region6: #{deep_time_forward.3} parent=1 // pred_check
      _
    $region7: #{deep_time_forward.3} parent=1 // pred_check_branch
      %13 = sbr.rel (0) target = $region9
    $region8: #{deep_time_forward.3} parent=1 // pred_region
      _
    $region9: #{deep_time_forward.3} parent=1 // pred_fallthru
      _
    // Predicated region
    $region10: #{deep_time_forward.3} parent=1 // pred_check
      _
    $region11: #{deep_time_forward.3} parent=1 // pred_check_branch
      %15 = sbr.rel (0) target = $region13
    $region12: #{deep_time_forward.3} parent=1 // pred_region
      _
    $region13: #{deep_time_forward.3} parent=1 // pred_fallthru
      _
    // Predicated region
    $region14: #{deep_time_forward.3} parent=1 // pred_check
      _
    $region15: #{deep_time_forward.3} parent=1 // pred_check_branch
      %17 = sbr.rel (0) target = $region17
    $region16: #{deep_time_forward.3} parent=1 // pred_region
      _
    $region17: #{deep_time_forward.3} parent=1 // pred_fallthru
      _
    %v18 = vld [vmem:[%s1] sm:$0x3]
    %v19 = vld [vmem:[%s2] sm:$0x3]
    %v20 = vld [vmem:[%s3] sm:$0x3]
    %v21 = vld [vmem:[%s0] sm:$0xff]
    %v22 = vld [vmem:[%s0 + $0x8] sm:$0xff]
    %v23 = vld [vmem:[%s0 + $0x20] sm:$0xff]
    %vm24 = vcmask 130048
    %v26 = vsel %vm24, %v18, 0
    %28 = vmatprep.subr.mxu0 0.0
    %v29 = vand.u32 %v21, 4294901760
    %30 = vmatpush1.msra.mxu0 %v29
    %31 = vmatprep.subr.mxu0 0.0
    %v32 = vand.u32 %v22, 4294901760
    %33 = vmatpush1.msra.mxu0 %v32
    %34 = vmatprep.subr.mxu0 0.0
    %35 = vmatpush1.msra.mxu0 0.0
    %36 = vmatprep.subr.mxu0 0.0
    %37 = vmatpush1.msra.mxu0 0.0
    %38 = vmatprep.subr.mxu0 0.0
    %39 = vmatpush1.msra.mxu0 0.0
    %40 = vmatprep.subr.mxu0 0.0
    %41 = vmatpush1.msra.mxu0 0.0
    %42 = vmatprep.subr.mxu0 0.0
    %43 = vmatpush1.msra.mxu0 0.0
    %44 = vmatprep.subr.mxu0 0.0
    %45 = vmatpush1.msra.mxu0 0.0
    %46 = vmatprep.subr.mxu0 0.0
    %47 = vmatpush1.msra.mxu0 0.0
    %48 = vmatprep.subr.mxu0 0.0
    %49 = vmatpush1.msra.mxu0 0.0
    %50 = vmatprep.subr.mxu0 0.0
    %51 = vmatpush1.msra.mxu0 0.0
    %52 = vmatprep.subr.mxu0 0.0
    %53 = vmatpush1.msra.mxu0 0.0
    %54 = vmatprep.subr.mxu0 0.0
    %55 = vmatpush1.msra.mxu0 0.0
    %56 = vmatprep.subr.mxu0 0.0
    %57 = vmatpush1.msra.mxu0 0.0
    %58 = vmatprep.subr.mxu0 0.0
    %59 = vmatpush1.msra.mxu0 0.0
    %60 = vmatprep.subr.mxu0 0.0
    %61 = vmatpush1.msra.mxu0 0.0
    %62 = vmatprep.subr.mxu0 0.0
    %63 = vmatpush1.msra.mxu0 0.0
    %64 = vmatprep.subr.mxu0 0.0
    %65 = vmatpush1.msra.mxu0 0.0
    %66 = vmatprep.subr.mxu0 0.0
    %67 = vmatpush1.msra.mxu0 0.0
    %68 = vmatprep.subr.mxu0 0.0
    %69 = vmatpush1.msra.mxu0 0.0
    %70 = vmatprep.subr.mxu0 0.0
    %71 = vmatpush1.msra.mxu0 0.0
    %72 = vmatprep.subr.mxu0 0.0
    %73 = vmatpush1.msra.mxu0 0.0
    %74 = vmatprep.subr.mxu0 0.0
    %75 = vmatpush1.msra.mxu0 0.0
    %76 = vmatprep.subr.mxu0 0.0
    %77 = vmatpush1.msra.mxu0 0.0
    %78 = vmatprep.subr.mxu0 0.0
    %79 = vmatpush1.msra.mxu0 0.0
    %80 = vmatprep.subr.mxu0 0.0
    %81 = vmatpush1.msra.mxu0 0.0
    %82 = vmatprep.subr.mxu0 0.0
    %83 = vmatpush1.msra.mxu0 0.0
    %84 = vmatprep.subr.mxu0 0.0
    %85 = vmatpush1.msra.mxu0 0.0
    %86 = vmatprep.subr.mxu0 0.0
    %87 = vmatpush1.msra.mxu0 0.0
    %88 = vmatprep.subr.mxu0 0.0
    %89 = vmatpush1.msra.mxu0 0.0
    %90 = vmatprep.subr.mxu0 0.0
    %91 = vmatpush1.msra.mxu0 0.0
    %92 = vmatprep.subr.mxu0 0.0
    %93 = vmatpush1.msra.mxu0 0.0
    %94 = vmatprep.mubr.f32.mxu0 0.0
    %v95 = vand.u32 %v26, 4294901760
    %v96 = vsub.f32 %v26, %v95
    %v97 = vand.u32 %v96, 4294901760
    %v98 = vsub.f32 %v96, %v97
    %v99 = vand.u32 %v98, 4294901760
    %100 = vmatmul.mubr.f32.gmra.mrb[0].mxu0 %v99
    %v101 = vpop.f32.mrb[0].mxu0
    %v102 = vadd.f32 0.0, %v101
    %v103 = vpop.f32.mrb[0].mxu0
    %104 = vdwg.mxu0
    %105 = vmatprep.subr.mxu0 0.0
    %v106 = vand.u32 %v21, 4294901760
    %v107 = vsub.f32 %v21, %v106
    %v108 = vand.u32 %v107, 4294901760
    %v109 = vsub.f32 %v107, %v108
    %v110 = vand.u32 %v109, 4294901760
    %111 = vmatpush1.msra.mxu0 %v110
    %112 = vmatprep.subr.mxu0 0.0
    %v113 = vand.u32 %v22, 4294901760
    %v114 = vsub.f32 %v22, %v113
    %v115 = vand.u32 %v114, 4294901760
    %v116 = vsub.f32 %v114, %v115
    %v117 = vand.u32 %v116, 4294901760
    %118 = vmatpush1.msra.mxu0 %v117
    %119 = vmatprep.subr.mxu0 0.0
    %120 = vmatpush1.msra.mxu0 0.0
    %121 = vmatprep.subr.mxu0 0.0
    %122 = vmatpush1.msra.mxu0 0.0
    %123 = vmatprep.subr.mxu0 0.0
    %124 = vmatpush1.msra.mxu0 0.0
    %125 = vmatprep.subr.mxu0 0.0
    %126 = vmatpush1.msra.mxu0 0.0
    %127 = vmatprep.subr.mxu0 0.0
    %128 = vmatpush1.msra.mxu0 0.0
    %129 = vmatprep.subr.mxu0 0.0
    %130 = vmatpush1.msra.mxu0 0.0
    %131 = vmatprep.subr.mxu0 0.0
    %132 = vmatpush1.msra.mxu0 0.0
    %133 = vmatprep.subr.mxu0 0.0
    %134 = vmatpush1.msra.mxu0 0.0
    %135 = vmatprep.subr.mxu0 0.0
    %136 = vmatpush1.msra.mxu0 0.0
    %137 = vmatprep.subr.mxu0 0.0
    %138 = vmatpush1.msra.mxu0 0.0
    %139 = vmatprep.subr.mxu0 0.0
    %140 = vmatpush1.msra.mxu0 0.0
    %141 = vmatprep.subr.mxu0 0.0
    %142 = vmatpush1.msra.mxu0 0.0
    %143 = vmatprep.subr.mxu0 0.0
    %144 = vmatpush1.msra.mxu0 0.0
    %145 = vmatprep.subr.mxu0 0.0
    %146 = vmatpush1.msra.mxu0 0.0
    %147 = vmatprep.subr.mxu0 0.0
    %148 = vmatpush1.msra.mxu0 0.0
    %149 = vmatprep.subr.mxu0 0.0
    %150 = vmatpush1.msra.mxu0 0.0
    %151 = vmatprep.subr.mxu0 0.0
    %152 = vmatpush1.msra.mxu0 0.0
    %153 = vmatprep.subr.mxu0 0.0
    %154 = vmatpush1.msra.mxu0 0.0
    %155 = vmatprep.subr.mxu0 0.0
    %156 = vmatpush1.msra.mxu0 0.0
    %157 = vmatprep.subr.mxu0 0.0
    %158 = vmatpush1.msra.mxu0 0.0
    %159 = vmatprep.subr.mxu0 0.0
    %160 = vmatpush1.msra.mxu0 0.0
    %161 = vmatprep.subr.mxu0 0.0
    %162 = vmatpush1.msra.mxu0 0.0
    %163 = vmatprep.subr.mxu0 0.0
    %164 = vmatpush1.msra.mxu0 0.0
    %165 = vmatprep.subr.mxu0 0.0
    %166 = vmatpush1.msra.mxu0 0.0
    %167 = vmatprep.subr.mxu0 0.0
    %168 = vmatpush1.msra.mxu0 0.0
    %169 = vmatprep.subr.mxu0 0.0
    %170 = vmatpush1.msra.mxu0 0.0
    %171 = vmatprep.subr.mxu0 0.0
    %172 = vmatpush1.msra.mxu0 0.0
    %173 = vmatprep.subr.mxu0 0.0
    %174 = vmatpush1.msra.mxu0 0.0
    %175 = vmatprep.subr.mxu0 0.0
    %176 = vmatpush1.msra.mxu0 0.0
    %177 = vmatprep.subr.mxu0 0.0
    %178 = vmatpush1.msra.mxu0 0.0
    %179 = vmatprep.mubr.f32.mxu0 0.0
    %v180 = vand.u32 %v26, 4294901760
    %181 = vmatmul.mubr.f32.gmra.mrb[0].mxu0 %v180
    %v182 = vpop.f32.mrb[0].mxu0
    %v183 = vadd.f32 %v102, %v182
    %v184 = vpop.f32.mrb[0].mxu0
    %185 = vdwg.mxu0
    %186 = vmatprep.subr.mxu0 0.0
    %v187 = vand.u32 %v21, 4294901760
    %v188 = vsub.f32 %v21, %v187
    %189 = vmatpush1.msra.mxu0 %v188
    %190 = vmatprep.subr.mxu0 0.0
    %v191 = vand.u32 %v22, 4294901760
    %v192 = vsub.f32 %v22, %v191
    %193 = vmatpush1.msra.mxu0 %v192
    %194 = vmatprep.subr.mxu0 0.0
    %195 = vmatpush1.msra.mxu0 0.0
    %196 = vmatprep.subr.mxu0 0.0
    %197 = vmatpush1.msra.mxu0 0.0
    %198 = vmatprep.subr.mxu0 0.0
    %199 = vmatpush1.msra.mxu0 0.0
    %200 = vmatprep.subr.mxu0 0.0
    %201 = vmatpush1.msra.mxu0 0.0
    %202 = vmatprep.subr.mxu0 0.0
    %203 = vmatpush1.msra.mxu0 0.0
    %204 = vmatprep.subr.mxu0 0.0
    %205 = vmatpush1.msra.mxu0 0.0
    %206 = vmatprep.subr.mxu0 0.0
    %207 = vmatpush1.msra.mxu0 0.0
    %208 = vmatprep.subr.mxu0 0.0
    %209 = vmatpush1.msra.mxu0 0.0
    %210 = vmatprep.subr.mxu0 0.0
    %211 = vmatpush1.msra.mxu0 0.0
    %212 = vmatprep.subr.mxu0 0.0
    %213 = vmatpush1.msra.mxu0 0.0
    %214 = vmatprep.subr.mxu0 0.0
    %215 = vmatpush1.msra.mxu0 0.0
    %216 = vmatprep.subr.mxu0 0.0
    %217 = vmatpush1.msra.mxu0 0.0
    %218 = vmatprep.subr.mxu0 0.0
    %219 = vmatpush1.msra.mxu0 0.0
    %220 = vmatprep.subr.mxu0 0.0
    %221 = vmatpush1.msra.mxu0 0.0
    %222 = vmatprep.subr.mxu0 0.0
    %223 = vmatpush1.msra.mxu0 0.0
    %224 = vmatprep.subr.mxu0 0.0
    %225 = vmatpush1.msra.mxu0 0.0
    %226 = vmatprep.subr.mxu0 0.0
    %227 = vmatpush1.msra.mxu0 0.0
    %228 = vmatprep.subr.mxu0 0.0
    %229 = vmatpush1.msra.mxu0 0.0
    %230 = vmatprep.subr.mxu0 0.0
    %231 = vmatpush1.msra.mxu0 0.0
    %232 = vmatprep.subr.mxu0 0.0
    %233 = vmatpush1.msra.mxu0 0.0
    %234 = vmatprep.subr.mxu0 0.0
    %235 = vmatpush1.msra.mxu0 0.0
    %236 = vmatprep.subr.mxu0 0.0
    %237 = vmatpush1.msra.mxu0 0.0
    %238 = vmatprep.subr.mxu0 0.0
    %239 = vmatpush1.msra.mxu0 0.0
    %240 = vmatprep.subr.mxu0 0.0
    %241 = vmatpush1.msra.mxu0 0.0
    %242 = vmatprep.subr.mxu0 0.0
    %243 = vmatpush1.msra.mxu0 0.0
    %244 = vmatprep.subr.mxu0 0.0
    %245 = vmatpush1.msra.mxu0 0.0
    %246 = vmatprep.subr.mxu0 0.0
    %247 = vmatpush1.msra.mxu0 0.0
    %248 = vmatprep.subr.mxu0 0.0
    %249 = vmatpush1.msra.mxu0 0.0
    %250 = vmatprep.subr.mxu0 0.0
    %251 = vmatpush1.msra.mxu0 0.0
    %252 = vmatprep.subr.mxu0 0.0
    %253 = vmatpush1.msra.mxu0 0.0
    %254 = vmatprep.mubr.f32.mxu0 0.0
    %v255 = vand.u32 %v26, 4294901760
    %v256 = vsub.f32 %v26, %v255
    %257 = vmatmul.mubr.f32.gmra.mrb[0].mxu0 %v256
    %v258 = vpop.f32.mrb[0].mxu0
    %v259 = vadd.f32 %v183, %v258
    %v260 = vpop.f32.mrb[0].mxu0
    %261 = vdwg.mxu0
    %262 = vmatprep.subr.mxu0 0.0
    %v263 = vand.u32 %v21, 4294901760
    %264 = vmatpush1.msra.mxu0 %v263
    %265 = vmatprep.subr.mxu0 0.0
    %v266 = vand.u32 %v22, 4294901760
    %267 = vmatpush1.msra.mxu0 %v266
    %268 = vmatprep.subr.mxu0 0.0
    %269 = vmatpush1.msra.mxu0 0.0
    %270 = vmatprep.subr.mxu0 0.0
    %271 = vmatpush1.msra.mxu0 0.0
    %272 = vmatprep.subr.mxu0 0.0
    %273 = vmatpush1.msra.mxu0 0.0
    %274 = vmatprep.subr.mxu0 0.0
    %275 = vmatpush1.msra.mxu0 0.0
    %276 = vmatprep.subr.mxu0 0.0
    %277 = vmatpush1.msra.mxu0 0.0
    %278 = vmatprep.subr.mxu0 0.0
    %279 = vmatpush1.msra.mxu0 0.0
    %280 = vmatprep.subr.mxu0 0.0
    %281 = vmatpush1.msra.mxu0 0.0
    %282 = vmatprep.subr.mxu0 0.0
    %283 = vmatpush1.msra.mxu0 0.0
    %284 = vmatprep.subr.mxu0 0.0
    %285 = vmatpush1.msra.mxu0 0.0
    %286 = vmatprep.subr.mxu0 0.0
    %287 = vmatpush1.msra.mxu0 0.0
    %288 = vmatprep.subr.mxu0 0.0
    %289 = vmatpush1.msra.mxu0 0.0
    %290 = vmatprep.subr.mxu0 0.0
    %291 = vmatpush1.msra.mxu0 0.0
    %292 = vmatprep.subr.mxu0 0.0
    %293 = vmatpush1.msra.mxu0 0.0
    %294 = vmatprep.subr.mxu0 0.0
    %295 = vmatpush1.msra.mxu0 0.0
    %296 = vmatprep.subr.mxu0 0.0
    %297 = vmatpush1.msra.mxu0 0.0
    %298 = vmatprep.subr.mxu0 0.0
    %299 = vmatpush1.msra.mxu0 0.0
    %300 = vmatprep.subr.mxu0 0.0
    %301 = vmatpush1.msra.mxu0 0.0
    %302 = vmatprep.subr.mxu0 0.0
    %303 = vmatpush1.msra.mxu0 0.0
    %304 = vmatprep.subr.mxu0 0.0
    %305 = vmatpush1.msra.mxu0 0.0
    %306 = vmatprep.subr.mxu0 0.0
    %307 = vmatpush1.msra.mxu0 0.0
    %308 = vmatprep.subr.mxu0 0.0
    %309 = vmatpush1.msra.mxu0 0.0
    %310 = vmatprep.subr.mxu0 0.0
    %311 = vmatpush1.msra.mxu0 0.0
    %312 = vmatprep.subr.mxu0 0.0
    %313 = vmatpush1.msra.mxu0 0.0
    %314 = vmatprep.subr.mxu0 0.0
    %315 = vmatpush1.msra.mxu0 0.0
    %316 = vmatprep.subr.mxu0 0.0
    %317 = vmatpush1.msra.mxu0 0.0
    %318 = vmatprep.subr.mxu0 0.0
    %319 = vmatpush1.msra.mxu0 0.0
    %320 = vmatprep.subr.mxu0 0.0
    %321 = vmatpush1.msra.mxu0 0.0
    %322 = vmatprep.subr.mxu0 0.0
    %323 = vmatpush1.msra.mxu0 0.0
    %324 = vmatprep.subr.mxu0 0.0
    %325 = vmatpush1.msra.mxu0 0.0
    %326 = vmatprep.subr.mxu0 0.0
    %327 = vmatpush1.msra.mxu0 0.0
    %328 = vmatprep.mubr.f32.mxu0 0.0
    %v329 = vand.u32 %v26, 4294901760
    %v330 = vsub.f32 %v26, %v329
    %v331 = vand.u32 %v330, 4294901760
    %332 = vmatmul.mubr.f32.gmra.mrb[0].mxu0 %v331
    %v333 = vpop.f32.mrb[0].mxu0
    %v334 = vadd.f32 %v259, %v333
    %v335 = vpop.f32.mrb[0].mxu0
    %336 = vdwg.mxu0
    %337 = vmatprep.subr.mxu0 0.0
    %v338 = vand.u32 %v21, 4294901760
    %v339 = vsub.f32 %v21, %v338
    %v340 = vand.u32 %v339, 4294901760
    %341 = vmatpush1.msra.mxu0 %v340
    %342 = vmatprep.subr.mxu0 0.0
    %v343 = vand.u32 %v22, 4294901760
    %v344 = vsub.f32 %v22, %v343
    %v345 = vand.u32 %v344, 4294901760
    %346 = vmatpush1.msra.mxu0 %v345
    %347 = vmatprep.subr.mxu0 0.0
    %348 = vmatpush1.msra.mxu0 0.0
    %349 = vmatprep.subr.mxu0 0.0
    %350 = vmatpush1.msra.mxu0 0.0
    %351 = vmatprep.subr.mxu0 0.0
    %352 = vmatpush1.msra.mxu0 0.0
    %353 = vmatprep.subr.mxu0 0.0
    %354 = vmatpush1.msra.mxu0 0.0
    %355 = vmatprep.subr.mxu0 0.0
    %356 = vmatpush1.msra.mxu0 0.0
    %357 = vmatprep.subr.mxu0 0.0
    %358 = vmatpush1.msra.mxu0 0.0
    %359 = vmatprep.subr.mxu0 0.0
    %360 = vmatpush1.msra.mxu0 0.0
    %361 = vmatprep.subr.mxu0 0.0
    %362 = vmatpush1.msra.mxu0 0.0
    %363 = vmatprep.subr.mxu0 0.0
    %364 = vmatpush1.msra.mxu0 0.0
    %365 = vmatprep.subr.mxu0 0.0
    %366 = vmatpush1.msra.mxu0 0.0
    %367 = vmatprep.subr.mxu0 0.0
    %368 = vmatpush1.msra.mxu0 0.0
    %369 = vmatprep.subr.mxu0 0.0
    %370 = vmatpush1.msra.mxu0 0.0
    %371 = vmatprep.subr.mxu0 0.0
    %372 = vmatpush1.msra.mxu0 0.0
    %373 = vmatprep.subr.mxu0 0.0
    %374 = vmatpush1.msra.mxu0 0.0
    %375 = vmatprep.subr.mxu0 0.0
    %376 = vmatpush1.msra.mxu0 0.0
    %377 = vmatprep.subr.mxu0 0.0
    %378 = vmatpush1.msra.mxu0 0.0
    %379 = vmatprep.subr.mxu0 0.0
    %380 = vmatpush1.msra.mxu0 0.0
    %381 = vmatprep.subr.mxu0 0.0
    %382 = vmatpush1.msra.mxu0 0.0
    %383 = vmatprep.subr.mxu0 0.0
    %384 = vmatpush1.msra.mxu0 0.0
    %385 = vmatprep.subr.mxu0 0.0
    %386 = vmatpush1.msra.mxu0 0.0
    %387 = vmatprep.subr.mxu0 0.0
    %388 = vmatpush1.msra.mxu0 0.0
    %389 = vmatprep.subr.mxu0 0.0
    %390 = vmatpush1.msra.mxu0 0.0
    %391 = vmatprep.subr.mxu0 0.0
    %392 = vmatpush1.msra.mxu0 0.0
    %393 = vmatprep.subr.mxu0 0.0
    %394 = vmatpush1.msra.mxu0 0.0
    %395 = vmatprep.subr.mxu0 0.0
    %396 = vmatpush1.msra.mxu0 0.0
    %397 = vmatprep.subr.mxu0 0.0
    %398 = vmatpush1.msra.mxu0 0.0
    %399 = vmatprep.subr.mxu0 0.0
    %400 = vmatpush1.msra.mxu0 0.0
    %401 = vmatprep.subr.mxu0 0.0
    %402 = vmatpush1.msra.mxu0 0.0
    %403 = vmatprep.subr.mxu0 0.0
    %404 = vmatpush1.msra.mxu0 0.0
    %405 = vmatprep.subr.mxu0 0.0
    %406 = vmatpush1.msra.mxu0 0.0
    %407 = vmatprep.mubr.f32.mxu0 0.0
    %v408 = vand.u32 %v26, 4294901760
    %409 = vmatmul.mubr.f32.gmra.mrb[0].mxu0 %v408
    %v410 = vpop.f32.mrb[0].mxu0
    %v411 = vadd.f32 %v334, %v410
    %v412 = vpop.f32.mrb[0].mxu0
    %413 = vdwg.mxu0
    %414 = vmatprep.subr.mxu0 0.0
    %v415 = vand.u32 %v21, 4294901760
    %416 = vmatpush1.msra.mxu0 %v415
    %417 = vmatprep.subr.mxu0 0.0
    %v418 = vand.u32 %v22, 4294901760
    %419 = vmatpush1.msra.mxu0 %v418
    %420 = vmatprep.subr.mxu0 0.0
    %421 = vmatpush1.msra.mxu0 0.0
    %422 = vmatprep.subr.mxu0 0.0
    %423 = vmatpush1.msra.mxu0 0.0
    %424 = vmatprep.subr.mxu0 0.0
    %425 = vmatpush1.msra.mxu0 0.0
    %426 = vmatprep.subr.mxu0 0.0
    %427 = vmatpush1.msra.mxu0 0.0
    %428 = vmatprep.subr.mxu0 0.0
    %429 = vmatpush1.msra.mxu0 0.0
    %430 = vmatprep.subr.mxu0 0.0
    %431 = vmatpush1.msra.mxu0 0.0
    %432 = vmatprep.subr.mxu0 0.0
    %433 = vmatpush1.msra.mxu0 0.0
    %434 = vmatprep.subr.mxu0 0.0
    %435 = vmatpush1.msra.mxu0 0.0
    %436 = vmatprep.subr.mxu0 0.0
    %437 = vmatpush1.msra.mxu0 0.0
    %438 = vmatprep.subr.mxu0 0.0
    %439 = vmatpush1.msra.mxu0 0.0
    %440 = vmatprep.subr.mxu0 0.0
    %441 = vmatpush1.msra.mxu0 0.0
    %442 = vmatprep.subr.mxu0 0.0
    %443 = vmatpush1.msra.mxu0 0.0
    %444 = vmatprep.subr.mxu0 0.0
    %445 = vmatpush1.msra.mxu0 0.0
    %446 = vmatprep.subr.mxu0 0.0
    %447 = vmatpush1.msra.mxu0 0.0
    %448 = vmatprep.subr.mxu0 0.0
    %449 = vmatpush1.msra.mxu0 0.0
    %450 = vmatprep.subr.mxu0 0.0
    %451 = vmatpush1.msra.mxu0 0.0
    %452 = vmatprep.subr.mxu0 0.0
    %453 = vmatpush1.msra.mxu0 0.0
    %454 = vmatprep.subr.mxu0 0.0
    %455 = vmatpush1.msra.mxu0 0.0
    %456 = vmatprep.subr.mxu0 0.0
    %457 = vmatpush1.msra.mxu0 0.0
    %458 = vmatprep.subr.mxu0 0.0
    %459 = vmatpush1.msra.mxu0 0.0
    %460 = vmatprep.subr.mxu0 0.0
    %461 = vmatpush1.msra.mxu0 0.0
    %462 = vmatprep.subr.mxu0 0.0
    %463 = vmatpush1.msra.mxu0 0.0
    %464 = vmatprep.subr.mxu0 0.0
    %465 = vmatpush1.msra.mxu0 0.0
    %466 = vmatprep.subr.mxu0 0.0
    %467 = vmatpush1.msra.mxu0 0.0
    %468 = vmatprep.subr.mxu0 0.0
    %469 = vmatpush1.msra.mxu0 0.0
    %470 = vmatprep.subr.mxu0 0.0
    %471 = vmatpush1.msra.mxu0 0.0
    %472 = vmatprep.subr.mxu0 0.0
    %473 = vmatpush1.msra.mxu0 0.0
    %474 = vmatprep.subr.mxu0 0.0
    %475 = vmatpush1.msra.mxu0 0.0
    %476 = vmatprep.subr.mxu0 0.0
    %477 = vmatpush1.msra.mxu0 0.0
    %478 = vmatprep.subr.mxu0 0.0
    %479 = vmatpush1.msra.mxu0 0.0
    %480 = vmatprep.mubr.f32.mxu0 0.0
    %v481 = vand.u32 %v26, 4294901760
    %482 = vmatmul.mubr.f32.gmra.mrb[0].mxu0 %v481
    %v483 = vpop.f32.mrb[0].mxu0
    %v484 = vadd.f32 %v411, %v483
    %v485 = vpop.f32.mrb[0].mxu0
    %486 = vdwg.mxu0
    %vm487 = vcmask 122880
    %v488 = vsel %vm487, %v18, 0.0
    %489 = vadd.xlane.f32.xlu0 %v488
    %v490 = vpop.xlane.xlu0 %489
    %vm491 = vcmask 261120
    %v493 = vsel %vm491, %v484, 0
    %v496 = vsel %vm491, %v23, 0
    %498 = vmatprep.subr.mxu0 0.0
    %v499 = vand.u32 %v496, 4294901760
    %500 = vmatpush1.xpose.msra.mxu0 %v499
    %501 = vmatprep.subr.mxu0 0.0
    %502 = vmatpush1.xpose.msra.mxu0 0.0
    %503 = vmatprep.subr.mxu0 0.0
    %504 = vmatpush1.xpose.msra.mxu0 0.0
    %505 = vmatprep.subr.mxu0 0.0
    %506 = vmatpush1.xpose.msra.mxu0 0.0
    %507 = vmatprep.subr.mxu0 0.0
    %508 = vmatpush1.xpose.msra.mxu0 0.0
    %509 = vmatprep.subr.mxu0 0.0
    %510 = vmatpush1.xpose.msra.mxu0 0.0
    %511 = vmatprep.subr.mxu0 0.0
    %512 = vmatpush1.xpose.msra.mxu0 0.0
    %513 = vmatprep.subr.mxu0 0.0
    %514 = vmatpush1.xpose.msra.mxu0 0.0
    %515 = vmatprep.subr.mxu0 0.0
    %516 = vmatpush1.xpose.msra.mxu0 0.0
    %517 = vmatprep.subr.mxu0 0.0
    %518 = vmatpush1.xpose.msra.mxu0 0.0
    %519 = vmatprep.subr.mxu0 0.0
    %520 = vmatpush1.xpose.msra.mxu0 0.0
    %521 = vmatprep.subr.mxu0 0.0
    %522 = vmatpush1.xpose.msra.mxu0 0.0
    %523 = vmatprep.subr.mxu0 0.0
    %524 = vmatpush1.xpose.msra.mxu0 0.0
    %525 = vmatprep.subr.mxu0 0.0
    %526 = vmatpush1.xpose.msra.mxu0 0.0
    %527 = vmatprep.subr.mxu0 0.0
    %528 = vmatpush1.xpose.msra.mxu0 0.0
    %529 = vmatprep.subr.mxu0 0.0
    %530 = vmatpush1.xpose.msra.mxu0 0.0
    %531 = vmatprep.subr.mxu0 0.0
    %532 = vmatpush1.xpose.msra.mxu0 0.0
    %533 = vmatprep.subr.mxu0 0.0
    %534 = vmatpush1.xpose.msra.mxu0 0.0
    %535 = vmatprep.subr.mxu0 0.0
    %536 = vmatpush1.xpose.msra.mxu0 0.0
    %537 = vmatprep.subr.mxu0 0.0
    %538 = vmatpush1.xpose.msra.mxu0 0.0
    %539 = vmatprep.subr.mxu0 0.0
    %540 = vmatpush1.xpose.msra.mxu0 0.0
    %541 = vmatprep.subr.mxu0 0.0
    %542 = vmatpush1.xpose.msra.mxu0 0.0
    %543 = vmatprep.subr.mxu0 0.0
    %544 = vmatpush1.xpose.msra.mxu0 0.0
    %545 = vmatprep.subr.mxu0 0.0
    %546 = vmatpush1.xpose.msra.mxu0 0.0
    %547 = vmatprep.subr.mxu0 0.0
    %548 = vmatpush1.xpose.msra.mxu0 0.0
    %549 = vmatprep.subr.mxu0 0.0
    %550 = vmatpush1.xpose.msra.mxu0 0.0
    %551 = vmatprep.subr.mxu0 0.0
    %552 = vmatpush1.xpose.msra.mxu0 0.0
    %553 = vmatprep.subr.mxu0 0.0
    %554 = vmatpush1.xpose.msra.mxu0 0.0
    %555 = vmatprep.subr.mxu0 0.0
    %556 = vmatpush1.xpose.msra.mxu0 0.0
    %557 = vmatprep.subr.mxu0 0.0
    %558 = vmatpush1.xpose.msra.mxu0 0.0
    %559 = vmatprep.subr.mxu0 0.0
    %560 = vmatpush1.xpose.msra.mxu0 0.0
    %561 = vmatprep.subr.mxu0 0.0
    %562 = vmatpush1.xpose.msra.mxu0 0.0
    %563 = vmatprep.mubr.f32.mxu0 0.0
    %v564 = vand.u32 %v493, 4294901760
    %v565 = vsub.f32 %v493, %v564
    %v566 = vand.u32 %v565, 4294901760
    %v567 = vsub.f32 %v565, %v566
    %v568 = vand.u32 %v567, 4294901760
    %569 = vmatmul.mubr.f32.gmra.mrb[0].mxu0 %v568
    %v570 = vpop.f32.mrb[0].mxu0
    %v571 = vadd.f32 %v490, %v570
    %v572 = vpop.f32.mrb[0].mxu0
    %573 = vdwg.mxu0
    %574 = vmatprep.subr.mxu0 0.0
    %v575 = vand.u32 %v496, 4294901760
    %v576 = vsub.f32 %v496, %v575
    %v577 = vand.u32 %v576, 4294901760
    %v578 = vsub.f32 %v576, %v577
    %v579 = vand.u32 %v578, 4294901760
    %580 = vmatpush1.xpose.msra.mxu0 %v579
    %581 = vmatprep.subr.mxu0 0.0
    %582 = vmatpush1.xpose.msra.mxu0 0.0
    %583 = vmatprep.subr.mxu0 0.0
    %584 = vmatpush1.xpose.msra.mxu0 0.0
    %585 = vmatprep.subr.mxu0 0.0
    %586 = vmatpush1.xpose.msra.mxu0 0.0
    %587 = vmatprep.subr.mxu0 0.0
    %588 = vmatpush1.xpose.msra.mxu0 0.0
    %589 = vmatprep.subr.mxu0 0.0
    %590 = vmatpush1.xpose.msra.mxu0 0.0
    %591 = vmatprep.subr.mxu0 0.0
    %592 = vmatpush1.xpose.msra.mxu0 0.0
    %593 = vmatprep.subr.mxu0 0.0
    %594 = vmatpush1.xpose.msra.mxu0 0.0
    %595 = vmatprep.subr.mxu0 0.0
    %596 = vmatpush1.xpose.msra.mxu0 0.0
    %597 = vmatprep.subr.mxu0 0.0
    %598 = vmatpush1.xpose.msra.mxu0 0.0
    %599 = vmatprep.subr.mxu0 0.0
    %600 = vmatpush1.xpose.msra.mxu0 0.0
    %601 = vmatprep.subr.mxu0 0.0
    %602 = vmatpush1.xpose.msra.mxu0 0.0
    %603 = vmatprep.subr.mxu0 0.0
    %604 = vmatpush1.xpose.msra.mxu0 0.0
    %605 = vmatprep.subr.mxu0 0.0
    %606 = vmatpush1.xpose.msra.mxu0 0.0
    %607 = vmatprep.subr.mxu0 0.0
    %608 = vmatpush1.xpose.msra.mxu0 0.0
    %609 = vmatprep.subr.mxu0 0.0
    %610 = vmatpush1.xpose.msra.mxu0 0.0
    %611 = vmatprep.subr.mxu0 0.0
    %612 = vmatpush1.xpose.msra.mxu0 0.0
    %613 = vmatprep.subr.mxu0 0.0
    %614 = vmatpush1.xpose.msra.mxu0 0.0
    %615 = vmatprep.subr.mxu0 0.0
    %616 = vmatpush1.xpose.msra.mxu0 0.0
    %617 = vmatprep.subr.mxu0 0.0
    %618 = vmatpush1.xpose.msra.mxu0 0.0
    %619 = vmatprep.subr.mxu0 0.0
    %620 = vmatpush1.xpose.msra.mxu0 0.0
    %621 = vmatprep.subr.mxu0 0.0
    %622 = vmatpush1.xpose.msra.mxu0 0.0
    %623 = vmatprep.subr.mxu0 0.0
    %624 = vmatpush1.xpose.msra.mxu0 0.0
    %625 = vmatprep.subr.mxu0 0.0
    %626 = vmatpush1.xpose.msra.mxu0 0.0
    %627 = vmatprep.subr.mxu0 0.0
    %628 = vmatpush1.xpose.msra.mxu0 0.0
    %629 = vmatprep.subr.mxu0 0.0
    %630 = vmatpush1.xpose.msra.mxu0 0.0
    %631 = vmatprep.subr.mxu0 0.0
    %632 = vmatpush1.xpose.msra.mxu0 0.0
    %633 = vmatprep.subr.mxu0 0.0
    %634 = vmatpush1.xpose.msra.mxu0 0.0
    %635 = vmatprep.subr.mxu0 0.0
    %636 = vmatpush1.xpose.msra.mxu0 0.0
    %637 = vmatprep.subr.mxu0 0.0
    %638 = vmatpush1.xpose.msra.mxu0 0.0
    %639 = vmatprep.subr.mxu0 0.0
    %640 = vmatpush1.xpose.msra.mxu0 0.0
    %641 = vmatprep.subr.mxu0 0.0
    %642 = vmatpush1.xpose.msra.mxu0 0.0
    %643 = vmatprep.mubr.f32.mxu0 0.0
    %v644 = vand.u32 %v493, 4294901760
    %645 = vmatmul.mubr.f32.gmra.mrb[0].mxu0 %v644
    %v646 = vpop.f32.mrb[0].mxu0
    %v647 = vadd.f32 %v571, %v646
    %v648 = vpop.f32.mrb[0].mxu0
    %649 = vdwg.mxu0
    %650 = vmatprep.subr.mxu0 0.0
    %v651 = vand.u32 %v496, 4294901760
    %v652 = vsub.f32 %v496, %v651
    %653 = vmatpush1.xpose.msra.mxu0 %v652
    %654 = vmatprep.subr.mxu0 0.0
    %655 = vmatpush1.xpose.msra.mxu0 0.0
    %656 = vmatprep.subr.mxu0 0.0
    %657 = vmatpush1.xpose.msra.mxu0 0.0
    %658 = vmatprep.subr.mxu0 0.0
    %659 = vmatpush1.xpose.msra.mxu0 0.0
    %660 = vmatprep.subr.mxu0 0.0
    %661 = vmatpush1.xpose.msra.mxu0 0.0
    %662 = vmatprep.subr.mxu0 0.0
    %663 = vmatpush1.xpose.msra.mxu0 0.0
    %664 = vmatprep.subr.mxu0 0.0
    %665 = vmatpush1.xpose.msra.mxu0 0.0
    %666 = vmatprep.subr.mxu0 0.0
    %667 = vmatpush1.xpose.msra.mxu0 0.0
    %668 = vmatprep.subr.mxu0 0.0
    %669 = vmatpush1.xpose.msra.mxu0 0.0
    %670 = vmatprep.subr.mxu0 0.0
    %671 = vmatpush1.xpose.msra.mxu0 0.0
    %672 = vmatprep.subr.mxu0 0.0
    %673 = vmatpush1.xpose.msra.mxu0 0.0
    %674 = vmatprep.subr.mxu0 0.0
    %675 = vmatpush1.xpose.msra.mxu0 0.0
    %676 = vmatprep.subr.mxu0 0.0
    %677 = vmatpush1.xpose.msra.mxu0 0.0
    %678 = vmatprep.subr.mxu0 0.0
    %679 = vmatpush1.xpose.msra.mxu0 0.0
    %680 = vmatprep.subr.mxu0 0.0
    %681 = vmatpush1.xpose.msra.mxu0 0.0
    %682 = vmatprep.subr.mxu0 0.0
    %683 = vmatpush1.xpose.msra.mxu0 0.0
    %684 = vmatprep.subr.mxu0 0.0
    %685 = vmatpush1.xpose.msra.mxu0 0.0
    %686 = vmatprep.subr.mxu0 0.0
    %687 = vmatpush1.xpose.msra.mxu0 0.0
    %688 = vmatprep.subr.mxu0 0.0
    %689 = vmatpush1.xpose.msra.mxu0 0.0
    %690 = vmatprep.subr.mxu0 0.0
    %691 = vmatpush1.xpose.msra.mxu0 0.0
    %692 = vmatprep.subr.mxu0 0.0
    %693 = vmatpush1.xpose.msra.mxu0 0.0
    %694 = vmatprep.subr.mxu0 0.0
    %695 = vmatpush1.xpose.msra.mxu0 0.0
    %696 = vmatprep.subr.mxu0 0.0
    %697 = vmatpush1.xpose.msra.mxu0 0.0
    %698 = vmatprep.subr.mxu0 0.0
    %699 = vmatpush1.xpose.msra.mxu0 0.0
    %700 = vmatprep.subr.mxu0 0.0
    %701 = vmatpush1.xpose.msra.mxu0 0.0
    %702 = vmatprep.subr.mxu0 0.0
    %703 = vmatpush1.xpose.msra.mxu0 0.0
    %704 = vmatprep.subr.mxu0 0.0
    %705 = vmatpush1.xpose.msra.mxu0 0.0
    %706 = vmatprep.subr.mxu0 0.0
    %707 = vmatpush1.xpose.msra.mxu0 0.0
    %708 = vmatprep.subr.mxu0 0.0
    %709 = vmatpush1.xpose.msra.mxu0 0.0
    %710 = vmatprep.subr.mxu0 0.0
    %711 = vmatpush1.xpose.msra.mxu0 0.0
    %712 = vmatprep.subr.mxu0 0.0
    %713 = vmatpush1.xpose.msra.mxu0 0.0
    %714 = vmatprep.subr.mxu0 0.0
    %715 = vmatpush1.xpose.msra.mxu0 0.0
    %716 = vmatprep.mubr.f32.mxu0 0.0
    %v717 = vand.u32 %v493, 4294901760
    %v718 = vsub.f32 %v493, %v717
    %719 = vmatmul.mubr.f32.gmra.mrb[0].mxu0 %v718
    %v720 = vpop.f32.mrb[0].mxu0
    %v721 = vadd.f32 %v647, %v720
    %v722 = vpop.f32.mrb[0].mxu0
    %723 = vdwg.mxu0
    %724 = vmatprep.subr.mxu0 0.0
    %v725 = vand.u32 %v496, 4294901760
    %726 = vmatpush1.xpose.msra.mxu0 %v725
    %727 = vmatprep.subr.mxu0 0.0
    %728 = vmatpush1.xpose.msra.mxu0 0.0
    %729 = vmatprep.subr.mxu0 0.0
    %730 = vmatpush1.xpose.msra.mxu0 0.0
    %731 = vmatprep.subr.mxu0 0.0
    %732 = vmatpush1.xpose.msra.mxu0 0.0
    %733 = vmatprep.subr.mxu0 0.0
    %734 = vmatpush1.xpose.msra.mxu0 0.0
    %735 = vmatprep.subr.mxu0 0.0
    %736 = vmatpush1.xpose.msra.mxu0 0.0
    %737 = vmatprep.subr.mxu0 0.0
    %738 = vmatpush1.xpose.msra.mxu0 0.0
    %739 = vmatprep.subr.mxu0 0.0
    %740 = vmatpush1.xpose.msra.mxu0 0.0
    %741 = vmatprep.subr.mxu0 0.0
    %742 = vmatpush1.xpose.msra.mxu0 0.0
    %743 = vmatprep.subr.mxu0 0.0
    %744 = vmatpush1.xpose.msra.mxu0 0.0
    %745 = vmatprep.subr.mxu0 0.0
    %746 = vmatpush1.xpose.msra.mxu0 0.0
    %747 = vmatprep.subr.mxu0 0.0
    %748 = vmatpush1.xpose.msra.mxu0 0.0
    %749 = vmatprep.subr.mxu0 0.0
    %750 = vmatpush1.xpose.msra.mxu0 0.0
    %751 = vmatprep.subr.mxu0 0.0
    %752 = vmatpush1.xpose.msra.mxu0 0.0
    %753 = vmatprep.subr.mxu0 0.0
    %754 = vmatpush1.xpose.msra.mxu0 0.0
    %755 = vmatprep.subr.mxu0 0.0
    %756 = vmatpush1.xpose.msra.mxu0 0.0
    %757 = vmatprep.subr.mxu0 0.0
    %758 = vmatpush1.xpose.msra.mxu0 0.0
    %759 = vmatprep.subr.mxu0 0.0
    %760 = vmatpush1.xpose.msra.mxu0 0.0
    %761 = vmatprep.subr.mxu0 0.0
    %762 = vmatpush1.xpose.msra.mxu0 0.0
    %763 = vmatprep.subr.mxu0 0.0
    %764 = vmatpush1.xpose.msra.mxu0 0.0
    %765 = vmatprep.subr.mxu0 0.0
    %766 = vmatpush1.xpose.msra.mxu0 0.0
    %767 = vmatprep.subr.mxu0 0.0
    %768 = vmatpush1.xpose.msra.mxu0 0.0
    %769 = vmatprep.subr.mxu0 0.0
    %770 = vmatpush1.xpose.msra.mxu0 0.0
    %771 = vmatprep.subr.mxu0 0.0
    %772 = vmatpush1.xpose.msra.mxu0 0.0
    %773 = vmatprep.subr.mxu0 0.0
    %774 = vmatpush1.xpose.msra.mxu0 0.0
    %775 = vmatprep.subr.mxu0 0.0
    %776 = vmatpush1.xpose.msra.mxu0 0.0
    %777 = vmatprep.subr.mxu0 0.0
    %778 = vmatpush1.xpose.msra.mxu0 0.0
    %779 = vmatprep.subr.mxu0 0.0
    %780 = vmatpush1.xpose.msra.mxu0 0.0
    %781 = vmatprep.subr.mxu0 0.0
    %782 = vmatpush1.xpose.msra.mxu0 0.0
    %783 = vmatprep.subr.mxu0 0.0
    %784 = vmatpush1.xpose.msra.mxu0 0.0
    %785 = vmatprep.subr.mxu0 0.0
    %786 = vmatpush1.xpose.msra.mxu0 0.0
    %787 = vmatprep.subr.mxu0 0.0
    %788 = vmatpush1.xpose.msra.mxu0 0.0
    %789 = vmatprep.mubr.f32.mxu0 0.0
    %v790 = vand.u32 %v493, 4294901760
    %v791 = vsub.f32 %v493, %v790
    %v792 = vand.u32 %v791, 4294901760
    %793 = vmatmul.mubr.f32.gmra.mrb[0].mxu0 %v792
    %v794 = vpop.f32.mrb[0].mxu0
    %v795 = vadd.f32 %v721, %v794
    %v796 = vpop.f32.mrb[0].mxu0
    %797 = vdwg.mxu0
    %798 = vmatprep.subr.mxu0 0.0
    %v799 = vand.u32 %v496, 4294901760
    %v800 = vsub.f32 %v496, %v799
    %v801 = vand.u32 %v800, 4294901760
    %802 = vmatpush1.xpose.msra.mxu0 %v801
    %803 = vmatprep.subr.mxu0 0.0
    %804 = vmatpush1.xpose.msra.mxu0 0.0
    %805 = vmatprep.subr.mxu0 0.0
    %806 = vmatpush1.xpose.msra.mxu0 0.0
    %807 = vmatprep.subr.mxu0 0.0
    %808 = vmatpush1.xpose.msra.mxu0 0.0
    %809 = vmatprep.subr.mxu0 0.0
    %810 = vmatpush1.xpose.msra.mxu0 0.0
    %811 = vmatprep.subr.mxu0 0.0
    %812 = vmatpush1.xpose.msra.mxu0 0.0
    %813 = vmatprep.subr.mxu0 0.0
    %814 = vmatpush1.xpose.msra.mxu0 0.0
    %815 = vmatprep.subr.mxu0 0.0
    %816 = vmatpush1.xpose.msra.mxu0 0.0
    %817 = vmatprep.subr.mxu0 0.0
    %818 = vmatpush1.xpose.msra.mxu0 0.0
    %819 = vmatprep.subr.mxu0 0.0
    %820 = vmatpush1.xpose.msra.mxu0 0.0
    %821 = vmatprep.subr.mxu0 0.0
    %822 = vmatpush1.xpose.msra.mxu0 0.0
    %823 = vmatprep.subr.mxu0 0.0
    %824 = vmatpush1.xpose.msra.mxu0 0.0
    %825 = vmatprep.subr.mxu0 0.0
    %826 = vmatpush1.xpose.msra.mxu0 0.0
    %827 = vmatprep.subr.mxu0 0.0
    %828 = vmatpush1.xpose.msra.mxu0 0.0
    %829 = vmatprep.subr.mxu0 0.0
    %830 = vmatpush1.xpose.msra.mxu0 0.0
    %831 = vmatprep.subr.mxu0 0.0
    %832 = vmatpush1.xpose.msra.mxu0 0.0
    %833 = vmatprep.subr.mxu0 0.0
    %834 = vmatpush1.xpose.msra.mxu0 0.0
    %835 = vmatprep.subr.mxu0 0.0
    %836 = vmatpush1.xpose.msra.mxu0 0.0
    %837 = vmatprep.subr.mxu0 0.0
    %838 = vmatpush1.xpose.msra.mxu0 0.0
    %839 = vmatprep.subr.mxu0 0.0
    %840 = vmatpush1.xpose.msra.mxu0 0.0
    %841 = vmatprep.subr.mxu0 0.0
    %842 = vmatpush1.xpose.msra.mxu0 0.0
    %843 = vmatprep.subr.mxu0 0.0
    %844 = vmatpush1.xpose.msra.mxu0 0.0
    %845 = vmatprep.subr.mxu0 0.0
    %846 = vmatpush1.xpose.msra.mxu0 0.0
    %847 = vmatprep.subr.mxu0 0.0
    %848 = vmatpush1.xpose.msra.mxu0 0.0
    %849 = vmatprep.subr.mxu0 0.0
    %850 = vmatpush1.xpose.msra.mxu0 0.0
    %851 = vmatprep.subr.mxu0 0.0
    %852 = vmatpush1.xpose.msra.mxu0 0.0
    %853 = vmatprep.subr.mxu0 0.0
    %854 = vmatpush1.xpose.msra.mxu0 0.0
    %855 = vmatprep.subr.mxu0 0.0
    %856 = vmatpush1.xpose.msra.mxu0 0.0
    %857 = vmatprep.subr.mxu0 0.0
    %858 = vmatpush1.xpose.msra.mxu0 0.0
    %859 = vmatprep.subr.mxu0 0.0
    %860 = vmatpush1.xpose.msra.mxu0 0.0
    %861 = vmatprep.subr.mxu0 0.0
    %862 = vmatpush1.xpose.msra.mxu0 0.0
    %863 = vmatprep.subr.mxu0 0.0
    %864 = vmatpush1.xpose.msra.mxu0 0.0
    %865 = vmatprep.mubr.f32.mxu0 0.0
    %v866 = vand.u32 %v493, 4294901760
    %867 = vmatmul.mubr.f32.gmra.mrb[0].mxu0 %v866
    %v868 = vpop.f32.mrb[0].mxu0
    %v869 = vadd.f32 %v795, %v868
    %v870 = vpop.f32.mrb[0].mxu0
    %871 = vdwg.mxu0
    %872 = vmatprep.subr.mxu0 0.0
    %v873 = vand.u32 %v496, 4294901760
    %874 = vmatpush1.xpose.msra.mxu0 %v873
    %875 = vmatprep.subr.mxu0 0.0
    %876 = vmatpush1.xpose.msra.mxu0 0.0
    %877 = vmatprep.subr.mxu0 0.0
    %878 = vmatpush1.xpose.msra.mxu0 0.0
    %879 = vmatprep.subr.mxu0 0.0
    %880 = vmatpush1.xpose.msra.mxu0 0.0
    %881 = vmatprep.subr.mxu0 0.0
    %882 = vmatpush1.xpose.msra.mxu0 0.0
    %883 = vmatprep.subr.mxu0 0.0
    %884 = vmatpush1.xpose.msra.mxu0 0.0
    %885 = vmatprep.subr.mxu0 0.0
    %886 = vmatpush1.xpose.msra.mxu0 0.0
    %887 = vmatprep.subr.mxu0 0.0
    %888 = vmatpush1.xpose.msra.mxu0 0.0
    %889 = vmatprep.subr.mxu0 0.0
    %890 = vmatpush1.xpose.msra.mxu0 0.0
    %891 = vmatprep.subr.mxu0 0.0
    %892 = vmatpush1.xpose.msra.mxu0 0.0
    %893 = vmatprep.subr.mxu0 0.0
    %894 = vmatpush1.xpose.msra.mxu0 0.0
    %895 = vmatprep.subr.mxu0 0.0
    %896 = vmatpush1.xpose.msra.mxu0 0.0
    %897 = vmatprep.subr.mxu0 0.0
    %898 = vmatpush1.xpose.msra.mxu0 0.0
    %899 = vmatprep.subr.mxu0 0.0
    %900 = vmatpush1.xpose.msra.mxu0 0.0
    %901 = vmatprep.subr.mxu0 0.0
    %902 = vmatpush1.xpose.msra.mxu0 0.0
    %903 = vmatprep.subr.mxu0 0.0
    %904 = vmatpush1.xpose.msra.mxu0 0.0
    %905 = vmatprep.subr.mxu0 0.0
    %906 = vmatpush1.xpose.msra.mxu0 0.0
    %907 = vmatprep.subr.mxu0 0.0
    %908 = vmatpush1.xpose.msra.mxu0 0.0
    %909 = vmatprep.subr.mxu0 0.0
    %910 = vmatpush1.xpose.msra.mxu0 0.0
    %911 = vmatprep.subr.mxu0 0.0
    %912 = vmatpush1.xpose.msra.mxu0 0.0
    %913 = vmatprep.subr.mxu0 0.0
    %914 = vmatpush1.xpose.msra.mxu0 0.0
    %915 = vmatprep.subr.mxu0 0.0
    %916 = vmatpush1.xpose.msra.mxu0 0.0
    %917 = vmatprep.subr.mxu0 0.0
    %918 = vmatpush1.xpose.msra.mxu0 0.0
    %919 = vmatprep.subr.mxu0 0.0
    %920 = vmatpush1.xpose.msra.mxu0 0.0
    %921 = vmatprep.subr.mxu0 0.0
    %922 = vmatpush1.xpose.msra.mxu0 0.0
    %923 = vmatprep.subr.mxu0 0.0
    %924 = vmatpush1.xpose.msra.mxu0 0.0
    %925 = vmatprep.subr.mxu0 0.0
    %926 = vmatpush1.xpose.msra.mxu0 0.0
    %927 = vmatprep.subr.mxu0 0.0
    %928 = vmatpush1.xpose.msra.mxu0 0.0
    %929 = vmatprep.subr.mxu0 0.0
    %930 = vmatpush1.xpose.msra.mxu0 0.0
    %931 = vmatprep.subr.mxu0 0.0
    %932 = vmatpush1.xpose.msra.mxu0 0.0
    %933 = vmatprep.subr.mxu0 0.0
    %934 = vmatpush1.xpose.msra.mxu0 0.0
    %935 = vmatprep.subr.mxu0 0.0
    %936 = vmatpush1.xpose.msra.mxu0 0.0
    %937 = vmatprep.mubr.f32.mxu0 0.0
    %v938 = vand.u32 %v493, 4294901760
    %939 = vmatmul.mubr.f32.gmra.mrb[0].mxu0 %v938
    %v940 = vpop.f32.mrb[0].mxu0
    %v941 = vadd.f32 %v869, %v940
    %v942 = vpop.f32.mrb[0].mxu0
    %943 = vdwg.mxu0
    %945 = vset.pattern.permute.xlu0 0
    %946 = vperm.xlu0 %945, %v20
    %v947 = vpop.permute.xlu0 %946
    %v949 = vmul.f32 %v941, %v947
    %951 = vset.pattern.permute.xlu0 0
    %952 = vperm.xlu0 %951, %v19
    %v953 = vpop.permute.xlu0 %952
    %v955 = vadd.f32 %v953, %v949
    %vm956 = vcmask 57344
    %957 = vst.msk [vmem:[#allocation2] sm:$0x1] %vm956, %v955
    %v958 = vld [vmem:[%s0 + $0x10] sm:$0xff]
    %v959 = vld [vmem:[%s0 + $0x18] sm:$0xff]
    %v960 = vld [vmem:[%s0 + $0x28] sm:$0xff]
    %v961 = vrot.slane %v18, 1
    %v962 = vsel %vm24, %v961, 0
    %964 = vmatprep.subr.mxu0 0.0
    %v965 = vand.u32 %v958, 4294901760
    %966 = vmatpush1.msra.mxu0 %v965
    %967 = vmatprep.subr.mxu0 0.0
    %v968 = vand.u32 %v959, 4294901760
    %969 = vmatpush1.msra.mxu0 %v968
    %970 = vmatprep.subr.mxu0 0.0
    %971 = vmatpush1.msra.mxu0 0.0
    %972 = vmatprep.subr.mxu0 0.0
    %973 = vmatpush1.msra.mxu0 0.0
    %974 = vmatprep.subr.mxu0 0.0
    %975 = vmatpush1.msra.mxu0 0.0
    %976 = vmatprep.subr.mxu0 0.0
    %977 = vmatpush1.msra.mxu0 0.0
    %978 = vmatprep.subr.mxu0 0.0
    %979 = vmatpush1.msra.mxu0 0.0
    %980 = vmatprep.subr.mxu0 0.0
    %981 = vmatpush1.msra.mxu0 0.0
    %982 = vmatprep.subr.mxu0 0.0
    %983 = vmatpush1.msra.mxu0 0.0
    %984 = vmatprep.subr.mxu0 0.0
    %985 = vmatpush1.msra.mxu0 0.0
    %986 = vmatprep.subr.mxu0 0.0
    %987 = vmatpush1.msra.mxu0 0.0
    %988 = vmatprep.subr.mxu0 0.0
    %989 = vmatpush1.msra.mxu0 0.0
    %990 = vmatprep.subr.mxu0 0.0
    %991 = vmatpush1.msra.mxu0 0.0
    %992 = vmatprep.subr.mxu0 0.0
    %993 = vmatpush1.msra.mxu0 0.0
    %994 = vmatprep.subr.mxu0 0.0
    %995 = vmatpush1.msra.mxu0 0.0
    %996 = vmatprep.subr.mxu0 0.0
    %997 = vmatpush1.msra.mxu0 0.0
    %998 = vmatprep.subr.mxu0 0.0
    %999 = vmatpush1.msra.mxu0 0.0
    %1000 = vmatprep.subr.mxu0 0.0
    %1001 = vmatpush1.msra.mxu0 0.0
    %1002 = vmatprep.subr.mxu0 0.0
    %1003 = vmatpush1.msra.mxu0 0.0
    %1004 = vmatprep.subr.mxu0 0.0
    %1005 = vmatpush1.msra.mxu0 0.0
    %1006 = vmatprep.subr.mxu0 0.0
    %1007 = vmatpush1.msra.mxu0 0.0
    %1008 = vmatprep.subr.mxu0 0.0
    %1009 = vmatpush1.msra.mxu0 0.0
    %1010 = vmatprep.subr.mxu0 0.0
    %1011 = vmatpush1.msra.mxu0 0.0
    %1012 = vmatprep.subr.mxu0 0.0
    %1013 = vmatpush1.msra.mxu0 0.0
    %1014 = vmatprep.subr.mxu0 0.0
    %1015 = vmatpush1.msra.mxu0 0.0
    %1016 = vmatprep.subr.mxu0 0.0
    %1017 = vmatpush1.msra.mxu0 0.0
    %1018 = vmatprep.subr.mxu0 0.0
    %1019 = vmatpush1.msra.mxu0 0.0
    %1020 = vmatprep.subr.mxu0 0.0
    %1021 = vmatpush1.msra.mxu0 0.0
    %1022 = vmatprep.subr.mxu0 0.0
    %1023 = vmatpush1.msra.mxu0 0.0
    %1024 = vmatprep.subr.mxu0 0.0
    %1025 = vmatpush1.msra.mxu0 0.0
    %1026 = vmatprep.subr.mxu0 0.0
    %1027 = vmatpush1.msra.mxu0 0.0
    %1028 = vmatprep.subr.mxu0 0.0
    %1029 = vmatpush1.msra.mxu0 0.0
    %1030 = vmatprep.mubr.f32.mxu0 0.0
    %v1031 = vand.u32 %v962, 4294901760
    %v1032 = vsub.f32 %v962, %v1031
    %v1033 = vand.u32 %v1032, 4294901760
    %v1034 = vsub.f32 %v1032, %v1033
    %v1035 = vand.u32 %v1034, 4294901760
    %1036 = vmatmul.mubr.f32.gmra.mrb[0].mxu0 %v1035
    %v1037 = vpop.f32.mrb[0].mxu0
    %v1038 = vadd.f32 0.0, %v1037
    %v1039 = vpop.f32.mrb[0].mxu0
    %1040 = vdwg.mxu0
    %1041 = vmatprep.subr.mxu0 0.0
    %v1042 = vand.u32 %v958, 4294901760
    %v1043 = vsub.f32 %v958, %v1042
    %v1044 = vand.u32 %v1043, 4294901760
    %v1045 = vsub.f32 %v1043, %v1044
    %v1046 = vand.u32 %v1045, 4294901760
    %1047 = vmatpush1.msra.mxu0 %v1046
    %1048 = vmatprep.subr.mxu0 0.0
    %v1049 = vand.u32 %v959, 4294901760
    %v1050 = vsub.f32 %v959, %v1049
    %v1051 = vand.u32 %v1050, 4294901760
    %v1052 = vsub.f32 %v1050, %v1051
    %v1053 = vand.u32 %v1052, 4294901760
    %1054 = vmatpush1.msra.mxu0 %v1053
    %1055 = vmatprep.subr.mxu0 0.0
    %1056 = vmatpush1.msra.mxu0 0.0
    %1057 = vmatprep.subr.mxu0 0.0
    %1058 = vmatpush1.msra.mxu0 0.0
    %1059 = vmatprep.subr.mxu0 0.0
    %1060 = vmatpush1.msra.mxu0 0.0
    %1061 = vmatprep.subr.mxu0 0.0
    %1062 = vmatpush1.msra.mxu0 0.0
    %1063 = vmatprep.subr.mxu0 0.0
    %1064 = vmatpush1.msra.mxu0 0.0
    %1065 = vmatprep.subr.mxu0 0.0
    %1066 = vmatpush1.msra.mxu0 0.0
    %1067 = vmatprep.subr.mxu0 0.0
    %1068 = vmatpush1.msra.mxu0 0.0
    %1069 = vmatprep.subr.mxu0 0.0
    %1070 = vmatpush1.msra.mxu0 0.0
    %1071 = vmatprep.subr.mxu0 0.0
    %1072 = vmatpush1.msra.mxu0 0.0
    %1073 = vmatprep.subr.mxu0 0.0
    %1074 = vmatpush1.msra.mxu0 0.0
    %1075 = vmatprep.subr.mxu0 0.0
    %1076 = vmatpush1.msra.mxu0 0.0
    %1077 = vmatprep.subr.mxu0 0.0
    %1078 = vmatpush1.msra.mxu0 0.0
    %1079 = vmatprep.subr.mxu0 0.0
    %1080 = vmatpush1.msra.mxu0 0.0
    %1081 = vmatprep.subr.mxu0 0.0
    %1082 = vmatpush1.msra.mxu0 0.0
    %1083 = vmatprep.subr.mxu0 0.0
    %1084 = vmatpush1.msra.mxu0 0.0
    %1085 = vmatprep.subr.mxu0 0.0
    %1086 = vmatpush1.msra.mxu0 0.0
    %1087 = vmatprep.subr.mxu0 0.0
    %1088 = vmatpush1.msra.mxu0 0.0
    %1089 = vmatprep.subr.mxu0 0.0
    %1090 = vmatpush1.msra.mxu0 0.0
    %1091 = vmatprep.subr.mxu0 0.0
    %1092 = vmatpush1.msra.mxu0 0.0
    %1093 = vmatprep.subr.mxu0 0.0
    %1094 = vmatpush1.msra.mxu0 0.0
    %1095 = vmatprep.subr.mxu0 0.0
    %1096 = vmatpush1.msra.mxu0 0.0
    %1097 = vmatprep.subr.mxu0 0.0
    %1098 = vmatpush1.msra.mxu0 0.0
    %1099 = vmatprep.subr.mxu0 0.0
    %1100 = vmatpush1.msra.mxu0 0.0
    %1101 = vmatprep.subr.mxu0 0.0
    %1102 = vmatpush1.msra.mxu0 0.0
    %1103 = vmatprep.subr.mxu0 0.0
    %1104 = vmatpush1.msra.mxu0 0.0
    %1105 = vmatprep.subr.mxu0 0.0
    %1106 = vmatpush1.msra.mxu0 0.0
    %1107 = vmatprep.subr.mxu0 0.0
    %1108 = vmatpush1.msra.mxu0 0.0
    %1109 = vmatprep.subr.mxu0 0.0
    %1110 = vmatpush1.msra.mxu0 0.0
    %1111 = vmatprep.subr.mxu0 0.0
    %1112 = vmatpush1.msra.mxu0 0.0
    %1113 = vmatprep.subr.mxu0 0.0
    %1114 = vmatpush1.msra.mxu0 0.0
    %1115 = vmatprep.mubr.f32.mxu0 0.0
    %v1116 = vand.u32 %v962, 4294901760
    %1117 = vmatmul.mubr.f32.gmra.mrb[0].mxu0 %v1116
    %v1118 = vpop.f32.mrb[0].mxu0
    %v1119 = vadd.f32 %v1038, %v1118
    %v1120 = vpop.f32.mrb[0].mxu0
    %1121 = vdwg.mxu0
    %1122 = vmatprep.subr.mxu0 0.0
    %v1123 = vand.u32 %v958, 4294901760
    %v1124 = vsub.f32 %v958, %v1123
    %1125 = vmatpush1.msra.mxu0 %v1124
    %1126 = vmatprep.subr.mxu0 0.0
    %v1127 = vand.u32 %v959, 4294901760
    %v1128 = vsub.f32 %v959, %v1127
    %1129 = vmatpush1.msra.mxu0 %v1128
    %1130 = vmatprep.subr.mxu0 0.0
    %1131 = vmatpush1.msra.mxu0 0.0
    %1132 = vmatprep.subr.mxu0 0.0
    %1133 = vmatpush1.msra.mxu0 0.0
    %1134 = vmatprep.subr.mxu0 0.0
    %1135 = vmatpush1.msra.mxu0 0.0
    %1136 = vmatprep.subr.mxu0 0.0
    %1137 = vmatpush1.msra.mxu0 0.0
    %1138 = vmatprep.subr.mxu0 0.0
    %1139 = vmatpush1.msra.mxu0 0.0
    %1140 = vmatprep.subr.mxu0 0.0
    %1141 = vmatpush1.msra.mxu0 0.0
    %1142 = vmatprep.subr.mxu0 0.0
    %1143 = vmatpush1.msra.mxu0 0.0
    %1144 = vmatprep.subr.mxu0 0.0
    %1145 = vmatpush1.msra.mxu0 0.0
    %1146 = vmatprep.subr.mxu0 0.0
    %1147 = vmatpush1.msra.mxu0 0.0
    %1148 = vmatprep.subr.mxu0 0.0
    %1149 = vmatpush1.msra.mxu0 0.0
    %1150 = vmatprep.subr.mxu0 0.0
    %1151 = vmatpush1.msra.mxu0 0.0
    %1152 = vmatprep.subr.mxu0 0.0
    %1153 = vmatpush1.msra.mxu0 0.0
    %1154 = vmatprep.subr.mxu0 0.0
    %1155 = vmatpush1.msra.mxu0 0.0
    %1156 = vmatprep.subr.mxu0 0.0
    %1157 = vmatpush1.msra.mxu0 0.0
    %1158 = vmatprep.subr.mxu0 0.0
    %1159 = vmatpush1.msra.mxu0 0.0
    %1160 = vmatprep.subr.mxu0 0.0
    %1161 = vmatpush1.msra.mxu0 0.0
    %1162 = vmatprep.subr.mxu0 0.0
    %1163 = vmatpush1.msra.mxu0 0.0
    %1164 = vmatprep.subr.mxu0 0.0
    %1165 = vmatpush1.msra.mxu0 0.0
    %1166 = vmatprep.subr.mxu0 0.0
    %1167 = vmatpush1.msra.mxu0 0.0
    %1168 = vmatprep.subr.mxu0 0.0
    %1169 = vmatpush1.msra.mxu0 0.0
    %1170 = vmatprep.subr.mxu0 0.0
    %1171 = vmatpush1.msra.mxu0 0.0
    %1172 = vmatprep.subr.mxu0 0.0
    %1173 = vmatpush1.msra.mxu0 0.0
    %1174 = vmatprep.subr.mxu0 0.0
    %1175 = vmatpush1.msra.mxu0 0.0
    %1176 = vmatprep.subr.mxu0 0.0
    %1177 = vmatpush1.msra.mxu0 0.0
    %1178 = vmatprep.subr.mxu0 0.0
    %1179 = vmatpush1.msra.mxu0 0.0
    %1180 = vmatprep.subr.mxu0 0.0
    %1181 = vmatpush1.msra.mxu0 0.0
    %1182 = vmatprep.subr.mxu0 0.0
    %1183 = vmatpush1.msra.mxu0 0.0
    %1184 = vmatprep.subr.mxu0 0.0
    %1185 = vmatpush1.msra.mxu0 0.0
    %1186 = vmatprep.subr.mxu0 0.0
    %1187 = vmatpush1.msra.mxu0 0.0
    %1188 = vmatprep.subr.mxu0 0.0
    %1189 = vmatpush1.msra.mxu0 0.0
    %1190 = vmatprep.mubr.f32.mxu0 0.0
    %v1191 = vand.u32 %v962, 4294901760
    %v1192 = vsub.f32 %v962, %v1191
    %1193 = vmatmul.mubr.f32.gmra.mrb[0].mxu0 %v1192
    %v1194 = vpop.f32.mrb[0].mxu0
    %v1195 = vadd.f32 %v1119, %v1194
    %v1196 = vpop.f32.mrb[0].mxu0
    %1197 = vdwg.mxu0
    %1198 = vmatprep.subr.mxu0 0.0
    %v1199 = vand.u32 %v958, 4294901760
    %1200 = vmatpush1.msra.mxu0 %v1199
    %1201 = vmatprep.subr.mxu0 0.0
    %v1202 = vand.u32 %v959, 4294901760
    %1203 = vmatpush1.msra.mxu0 %v1202
    %1204 = vmatprep.subr.mxu0 0.0
    %1205 = vmatpush1.msra.mxu0 0.0
    %1206 = vmatprep.subr.mxu0 0.0
    %1207 = vmatpush1.msra.mxu0 0.0
    %1208 = vmatprep.subr.mxu0 0.0
    %1209 = vmatpush1.msra.mxu0 0.0
    %1210 = vmatprep.subr.mxu0 0.0
    %1211 = vmatpush1.msra.mxu0 0.0
    %1212 = vmatprep.subr.mxu0 0.0
    %1213 = vmatpush1.msra.mxu0 0.0
    %1214 = vmatprep.subr.mxu0 0.0
    %1215 = vmatpush1.msra.mxu0 0.0
    %1216 = vmatprep.subr.mxu0 0.0
    %1217 = vmatpush1.msra.mxu0 0.0
    %1218 = vmatprep.subr.mxu0 0.0
    %1219 = vmatpush1.msra.mxu0 0.0
    %1220 = vmatprep.subr.mxu0 0.0
    %1221 = vmatpush1.msra.mxu0 0.0
    %1222 = vmatprep.subr.mxu0 0.0
    %1223 = vmatpush1.msra.mxu0 0.0
    %1224 = vmatprep.subr.mxu0 0.0
    %1225 = vmatpush1.msra.mxu0 0.0
    %1226 = vmatprep.subr.mxu0 0.0
    %1227 = vmatpush1.msra.mxu0 0.0
    %1228 = vmatprep.subr.mxu0 0.0
    %1229 = vmatpush1.msra.mxu0 0.0
    %1230 = vmatprep.subr.mxu0 0.0
    %1231 = vmatpush1.msra.mxu0 0.0
    %1232 = vmatprep.subr.mxu0 0.0
    %1233 = vmatpush1.msra.mxu0 0.0
    %1234 = vmatprep.subr.mxu0 0.0
    %1235 = vmatpush1.msra.mxu0 0.0
    %1236 = vmatprep.subr.mxu0 0.0
    %1237 = vmatpush1.msra.mxu0 0.0
    %1238 = vmatprep.subr.mxu0 0.0
    %1239 = vmatpush1.msra.mxu0 0.0
    %1240 = vmatprep.subr.mxu0 0.0
    %1241 = vmatpush1.msra.mxu0 0.0
    %1242 = vmatprep.subr.mxu0 0.0
    %1243 = vmatpush1.msra.mxu0 0.0
    %1244 = vmatprep.subr.mxu0 0.0
    %1245 = vmatpush1.msra.mxu0 0.0
    %1246 = vmatprep.subr.mxu0 0.0
    %1247 = vmatpush1.msra.mxu0 0.0
    %1248 = vmatprep.subr.mxu0 0.0
    %1249 = vmatpush1.msra.mxu0 0.0
    %1250 = vmatprep.subr.mxu0 0.0
    %1251 = vmatpush1.msra.mxu0 0.0
    %1252 = vmatprep.subr.mxu0 0.0
    %1253 = vmatpush1.msra.mxu0 0.0
    %1254 = vmatprep.subr.mxu0 0.0
    %1255 = vmatpush1.msra.mxu0 0.0
    %1256 = vmatprep.subr.mxu0 0.0
    %1257 = vmatpush1.msra.mxu0 0.0
    %1258 = vmatprep.subr.mxu0 0.0
    %1259 = vmatpush1.msra.mxu0 0.0
    %1260 = vmatprep.subr.mxu0 0.0
    %1261 = vmatpush1.msra.mxu0 0.0
    %1262 = vmatprep.subr.mxu0 0.0
    %1263 = vmatpush1.msra.mxu0 0.0
    %1264 = vmatprep.mubr.f32.mxu0 0.0
    %v1265 = vand.u32 %v962, 4294901760
    %v1266 = vsub.f32 %v962, %v1265
    %v1267 = vand.u32 %v1266, 4294901760
    %1268 = vmatmul.mubr.f32.gmra.mrb[0].mxu0 %v1267
    %v1269 = vpop.f32.mrb[0].mxu0
    %v1270 = vadd.f32 %v1195, %v1269
    %v1271 = vpop.f32.mrb[0].mxu0
    %1272 = vdwg.mxu0
    %1273 = vmatprep.subr.mxu0 0.0
    %v1274 = vand.u32 %v958, 4294901760
    %v1275 = vsub.f32 %v958, %v1274
    %v1276 = vand.u32 %v1275, 4294901760
    %1277 = vmatpush1.msra.mxu0 %v1276
    %1278 = vmatprep.subr.mxu0 0.0
    %v1279 = vand.u32 %v959, 4294901760
    %v1280 = vsub.f32 %v959, %v1279
    %v1281 = vand.u32 %v1280, 4294901760
    %1282 = vmatpush1.msra.mxu0 %v1281
    %1283 = vmatprep.subr.mxu0 0.0
    %1284 = vmatpush1.msra.mxu0 0.0
    %1285 = vmatprep.subr.mxu0 0.0
    %1286 = vmatpush1.msra.mxu0 0.0
    %1287 = vmatprep.subr.mxu0 0.0
    %1288 = vmatpush1.msra.mxu0 0.0
    %1289 = vmatprep.subr.mxu0 0.0
    %1290 = vmatpush1.msra.mxu0 0.0
    %1291 = vmatprep.subr.mxu0 0.0
    %1292 = vmatpush1.msra.mxu0 0.0
    %1293 = vmatprep.subr.mxu0 0.0
    %1294 = vmatpush1.msra.mxu0 0.0
    %1295 = vmatprep.subr.mxu0 0.0
    %1296 = vmatpush1.msra.mxu0 0.0
    %1297 = vmatprep.subr.mxu0 0.0
    %1298 = vmatpush1.msra.mxu0 0.0
    %1299 = vmatprep.subr.mxu0 0.0
    %1300 = vmatpush1.msra.mxu0 0.0
    %1301 = vmatprep.subr.mxu0 0.0
    %1302 = vmatpush1.msra.mxu0 0.0
    %1303 = vmatprep.subr.mxu0 0.0
    %1304 = vmatpush1.msra.mxu0 0.0
    %1305 = vmatprep.subr.mxu0 0.0
    %1306 = vmatpush1.msra.mxu0 0.0
    %1307 = vmatprep.subr.mxu0 0.0
    %1308 = vmatpush1.msra.mxu0 0.0
    %1309 = vmatprep.subr.mxu0 0.0
    %1310 = vmatpush1.msra.mxu0 0.0
    %1311 = vmatprep.subr.mxu0 0.0
    %1312 = vmatpush1.msra.mxu0 0.0
    %1313 = vmatprep.subr.mxu0 0.0
    %1314 = vmatpush1.msra.mxu0 0.0
    %1315 = vmatprep.subr.mxu0 0.0
    %1316 = vmatpush1.msra.mxu0 0.0
    %1317 = vmatprep.subr.mxu0 0.0
    %1318 = vmatpush1.msra.mxu0 0.0
    %1319 = vmatprep.subr.mxu0 0.0
    %1320 = vmatpush1.msra.mxu0 0.0
    %1321 = vmatprep.subr.mxu0 0.0
    %1322 = vmatpush1.msra.mxu0 0.0
    %1323 = vmatprep.subr.mxu0 0.0
    %1324 = vmatpush1.msra.mxu0 0.0
    %1325 = vmatprep.subr.mxu0 0.0
    %1326 = vmatpush1.msra.mxu0 0.0
    %1327 = vmatprep.subr.mxu0 0.0
    %1328 = vmatpush1.msra.mxu0 0.0
    %1329 = vmatprep.subr.mxu0 0.0
    %1330 = vmatpush1.msra.mxu0 0.0
    %1331 = vmatprep.subr.mxu0 0.0
    %1332 = vmatpush1.msra.mxu0 0.0
    %1333 = vmatprep.subr.mxu0 0.0
    %1334 = vmatpush1.msra.mxu0 0.0
    %1335 = vmatprep.subr.mxu0 0.0
    %1336 = vmatpush1.msra.mxu0 0.0
    %1337 = vmatprep.subr.mxu0 0.0
    %1338 = vmatpush1.msra.mxu0 0.0
    %1339 = vmatprep.subr.mxu0 0.0
    %1340 = vmatpush1.msra.mxu0 0.0
    %1341 = vmatprep.subr.mxu0 0.0
    %1342 = vmatpush1.msra.mxu0 0.0
    %1343 = vmatprep.mubr.f32.mxu0 0.0
    %v1344 = vand.u32 %v962, 4294901760
    %1345 = vmatmul.mubr.f32.gmra.mrb[0].mxu0 %v1344
    %v1346 = vpop.f32.mrb[0].mxu0
    %v1347 = vadd.f32 %v1270, %v1346
    %v1348 = vpop.f32.mrb[0].mxu0
    %1349 = vdwg.mxu0
    %1350 = vmatprep.subr.mxu0 0.0
    %v1351 = vand.u32 %v958, 4294901760
    %1352 = vmatpush1.msra.mxu0 %v1351
    %1353 = vmatprep.subr.mxu0 0.0
    %v1354 = vand.u32 %v959, 4294901760
    %1355 = vmatpush1.msra.mxu0 %v1354
    %1356 = vmatprep.subr.mxu0 0.0
    %1357 = vmatpush1.msra.mxu0 0.0
    %1358 = vmatprep.subr.mxu0 0.0
    %1359 = vmatpush1.msra.mxu0 0.0
    %1360 = vmatprep.subr.mxu0 0.0
    %1361 = vmatpush1.msra.mxu0 0.0
    %1362 = vmatprep.subr.mxu0 0.0
    %1363 = vmatpush1.msra.mxu0 0.0
    %1364 = vmatprep.subr.mxu0 0.0
    %1365 = vmatpush1.msra.mxu0 0.0
    %1366 = vmatprep.subr.mxu0 0.0
    %1367 = vmatpush1.msra.mxu0 0.0
    %1368 = vmatprep.subr.mxu0 0.0
    %1369 = vmatpush1.msra.mxu0 0.0
    %1370 = vmatprep.subr.mxu0 0.0
    %1371 = vmatpush1.msra.mxu0 0.0
    %1372 = vmatprep.subr.mxu0 0.0
    %1373 = vmatpush1.msra.mxu0 0.0
    %1374 = vmatprep.subr.mxu0 0.0
    %1375 = vmatpush1.msra.mxu0 0.0
    %1376 = vmatprep.subr.mxu0 0.0
    %1377 = vmatpush1.msra.mxu0 0.0
    %1378 = vmatprep.subr.mxu0 0.0
    %1379 = vmatpush1.msra.mxu0 0.0
    %1380 = vmatprep.subr.mxu0 0.0
    %1381 = vmatpush1.msra.mxu0 0.0
    %1382 = vmatprep.subr.mxu0 0.0
    %1383 = vmatpush1.msra.mxu0 0.0
    %1384 = vmatprep.subr.mxu0 0.0
    %1385 = vmatpush1.msra.mxu0 0.0
    %1386 = vmatprep.subr.mxu0 0.0
    %1387 = vmatpush1.msra.mxu0 0.0
    %1388 = vmatprep.subr.mxu0 0.0
    %1389 = vmatpush1.msra.mxu0 0.0
    %1390 = vmatprep.subr.mxu0 0.0
    %1391 = vmatpush1.msra.mxu0 0.0
    %1392 = vmatprep.subr.mxu0 0.0
    %1393 = vmatpush1.msra.mxu0 0.0
    %1394 = vmatprep.subr.mxu0 0.0
    %1395 = vmatpush1.msra.mxu0 0.0
    %1396 = vmatprep.subr.mxu0 0.0
    %1397 = vmatpush1.msra.mxu0 0.0
    %1398 = vmatprep.subr.mxu0 0.0
    %1399 = vmatpush1.msra.mxu0 0.0
    %1400 = vmatprep.subr.mxu0 0.0
    %1401 = vmatpush1.msra.mxu0 0.0
    %1402 = vmatprep.subr.mxu0 0.0
    %1403 = vmatpush1.msra.mxu0 0.0
    %1404 = vmatprep.subr.mxu0 0.0
    %1405 = vmatpush1.msra.mxu0 0.0
    %1406 = vmatprep.subr.mxu0 0.0
    %1407 = vmatpush1.msra.mxu0 0.0
    %1408 = vmatprep.subr.mxu0 0.0
    %1409 = vmatpush1.msra.mxu0 0.0
    %1410 = vmatprep.subr.mxu0 0.0
    %1411 = vmatpush1.msra.mxu0 0.0
    %1412 = vmatprep.subr.mxu0 0.0
    %1413 = vmatpush1.msra.mxu0 0.0
    %1414 = vmatprep.subr.mxu0 0.0
    %1415 = vmatpush1.msra.mxu0 0.0
    %1416 = vmatprep.mubr.f32.mxu0 0.0
    %v1417 = vand.u32 %v962, 4294901760
    %1418 = vmatmul.mubr.f32.gmra.mrb[0].mxu0 %v1417
    %v1419 = vpop.f32.mrb[0].mxu0
    %v1420 = vadd.f32 %v1347, %v1419
    %v1421 = vpop.f32.mrb[0].mxu0
    %1422 = vdwg.mxu0
    %vm1423 = vcmask 123905
    %v1424 = vsel %vm1423, %v18, 0.0
    %1425 = vadd.xlane.f32.xlu0 %v1424
    %v1426 = vpop.xlane.xlu0 %1425
    %v1428 = vrot.slane %v1426, 1
    %v1431 = vsel %vm491, %v1420, 0
    %v1434 = vsel %vm491, %v960, 0
    %1436 = vmatprep.subr.mxu0 0.0
    %v1437 = vand.u32 %v1434, 4294901760
    %1438 = vmatpush1.xpose.msra.mxu0 %v1437
    %1439 = vmatprep.subr.mxu0 0.0
    %1440 = vmatpush1.xpose.msra.mxu0 0.0
    %1441 = vmatprep.subr.mxu0 0.0
    %1442 = vmatpush1.xpose.msra.mxu0 0.0
    %1443 = vmatprep.subr.mxu0 0.0
    %1444 = vmatpush1.xpose.msra.mxu0 0.0
    %1445 = vmatprep.subr.mxu0 0.0
    %1446 = vmatpush1.xpose.msra.mxu0 0.0
    %1447 = vmatprep.subr.mxu0 0.0
    %1448 = vmatpush1.xpose.msra.mxu0 0.0
    %1449 = vmatprep.subr.mxu0 0.0
    %1450 = vmatpush1.xpose.msra.mxu0 0.0
    %1451 = vmatprep.subr.mxu0 0.0
    %1452 = vmatpush1.xpose.msra.mxu0 0.0
    %1453 = vmatprep.subr.mxu0 0.0
    %1454 = vmatpush1.xpose.msra.mxu0 0.0
    %1455 = vmatprep.subr.mxu0 0.0
    %1456 = vmatpush1.xpose.msra.mxu0 0.0
    %1457 = vmatprep.subr.mxu0 0.0
    %1458 = vmatpush1.xpose.msra.mxu0 0.0
    %1459 = vmatprep.subr.mxu0 0.0
    %1460 = vmatpush1.xpose.msra.mxu0 0.0
    %1461 = vmatprep.subr.mxu0 0.0
    %1462 = vmatpush1.xpose.msra.mxu0 0.0
    %1463 = vmatprep.subr.mxu0 0.0
    %1464 = vmatpush1.xpose.msra.mxu0 0.0
    %1465 = vmatprep.subr.mxu0 0.0
    %1466 = vmatpush1.xpose.msra.mxu0 0.0
    %1467 = vmatprep.subr.mxu0 0.0
    %1468 = vmatpush1.xpose.msra.mxu0 0.0
    %1469 = vmatprep.subr.mxu0 0.0
    %1470 = vmatpush1.xpose.msra.mxu0 0.0
    %1471 = vmatprep.subr.mxu0 0.0
    %1472 = vmatpush1.xpose.msra.mxu0 0.0
    %1473 = vmatprep.subr.mxu0 0.0
    %1474 = vmatpush1.xpose.msra.mxu0 0.0
    %1475 = vmatprep.subr.mxu0 0.0
    %1476 = vmatpush1.xpose.msra.mxu0 0.0
    %1477 = vmatprep.subr.mxu0 0.0
    %1478 = vmatpush1.xpose.msra.mxu0 0.0
    %1479 = vmatprep.subr.mxu0 0.0
    %1480 = vmatpush1.xpose.msra.mxu0 0.0
    %1481 = vmatprep.subr.mxu0 0.0
    %1482 = vmatpush1.xpose.msra.mxu0 0.0
    %1483 = vmatprep.subr.mxu0 0.0
    %1484 = vmatpush1.xpose.msra.mxu0 0.0
    %1485 = vmatprep.subr.mxu0 0.0
    %1486 = vmatpush1.xpose.msra.mxu0 0.0
    %1487 = vmatprep.subr.mxu0 0.0
    %1488 = vmatpush1.xpose.msra.mxu0 0.0
    %1489 = vmatprep.subr.mxu0 0.0
    %1490 = vmatpush1.xpose.msra.mxu0 0.0
    %1491 = vmatprep.subr.mxu0 0.0
    %1492 = vmatpush1.xpose.msra.mxu0 0.0
    %1493 = vmatprep.subr.mxu0 0.0
    %1494 = vmatpush1.xpose.msra.mxu0 0.0
    %1495 = vmatprep.subr.mxu0 0.0
    %1496 = vmatpush1.xpose.msra.mxu0 0.0
    %1497 = vmatprep.subr.mxu0 0.0
    %1498 = vmatpush1.xpose.msra.mxu0 0.0
    %1499 = vmatprep.subr.mxu0 0.0
    %1500 = vmatpush1.xpose.msra.mxu0 0.0
    %1501 = vmatprep.mubr.f32.mxu0 0.0
    %v1502 = vand.u32 %v1431, 4294901760
    %v1503 = vsub.f32 %v1431, %v1502
    %v1504 = vand.u32 %v1503, 4294901760
    %v1505 = vsub.f32 %v1503, %v1504
    %v1506 = vand.u32 %v1505, 4294901760
    %1507 = vmatmul.mubr.f32.gmra.mrb[0].mxu0 %v1506
    %v1508 = vpop.f32.mrb[0].mxu0
    %v1509 = vadd.f32 %v1428, %v1508
    %v1510 = vpop.f32.mrb[0].mxu0
    %1511 = vdwg.mxu0
    %1512 = vmatprep.subr.mxu0 0.0
    %v1513 = vand.u32 %v1434, 4294901760
    %v1514 = vsub.f32 %v1434, %v1513
    %v1515 = vand.u32 %v1514, 4294901760
    %v1516 = vsub.f32 %v1514, %v1515
    %v1517 = vand.u32 %v1516, 4294901760
    %1518 = vmatpush1.xpose.msra.mxu0 %v1517
    %1519 = vmatprep.subr.mxu0 0.0
    %1520 = vmatpush1.xpose.msra.mxu0 0.0
    %1521 = vmatprep.subr.mxu0 0.0
    %1522 = vmatpush1.xpose.msra.mxu0 0.0
    %1523 = vmatprep.subr.mxu0 0.0
    %1524 = vmatpush1.xpose.msra.mxu0 0.0
    %1525 = vmatprep.subr.mxu0 0.0
    %1526 = vmatpush1.xpose.msra.mxu0 0.0
    %1527 = vmatprep.subr.mxu0 0.0
    %1528 = vmatpush1.xpose.msra.mxu0 0.0
    %1529 = vmatprep.subr.mxu0 0.0
    %1530 = vmatpush1.xpose.msra.mxu0 0.0
    %1531 = vmatprep.subr.mxu0 0.0
    %1532 = vmatpush1.xpose.msra.mxu0 0.0
    %1533 = vmatprep.subr.mxu0 0.0
    %1534 = vmatpush1.xpose.msra.mxu0 0.0
    %1535 = vmatprep.subr.mxu0 0.0
    %1536 = vmatpush1.xpose.msra.mxu0 0.0
    %1537 = vmatprep.subr.mxu0 0.0
    %1538 = vmatpush1.xpose.msra.mxu0 0.0
    %1539 = vmatprep.subr.mxu0 0.0
    %1540 = vmatpush1.xpose.msra.mxu0 0.0
    %1541 = vmatprep.subr.mxu0 0.0
    %1542 = vmatpush1.xpose.msra.mxu0 0.0
    %1543 = vmatprep.subr.mxu0 0.0
    %1544 = vmatpush1.xpose.msra.mxu0 0.0
    %1545 = vmatprep.subr.mxu0 0.0
    %1546 = vmatpush1.xpose.msra.mxu0 0.0
    %1547 = vmatprep.subr.mxu0 0.0
    %1548 = vmatpush1.xpose.msra.mxu0 0.0
    %1549 = vmatprep.subr.mxu0 0.0
    %1550 = vmatpush1.xpose.msra.mxu0 0.0
    %1551 = vmatprep.subr.mxu0 0.0
    %1552 = vmatpush1.xpose.msra.mxu0 0.0
    %1553 = vmatprep.subr.mxu0 0.0
    %1554 = vmatpush1.xpose.msra.mxu0 0.0
    %1555 = vmatprep.subr.mxu0 0.0
    %1556 = vmatpush1.xpose.msra.mxu0 0.0
    %1557 = vmatprep.subr.mxu0 0.0
    %1558 = vmatpush1.xpose.msra.mxu0 0.0
    %1559 = vmatprep.subr.mxu0 0.0
    %1560 = vmatpush1.xpose.msra.mxu0 0.0
    %1561 = vmatprep.subr.mxu0 0.0
    %1562 = vmatpush1.xpose.msra.mxu0 0.0
    %1563 = vmatprep.subr.mxu0 0.0
    %1564 = vmatpush1.xpose.msra.mxu0 0.0
    %1565 = vmatprep.subr.mxu0 0.0
    %1566 = vmatpush1.xpose.msra.mxu0 0.0
    %1567 = vmatprep.subr.mxu0 0.0
    %1568 = vmatpush1.xpose.msra.mxu0 0.0
    %1569 = vmatprep.subr.mxu0 0.0
    %1570 = vmatpush1.xpose.msra.mxu0 0.0
    %1571 = vmatprep.subr.mxu0 0.0
    %1572 = vmatpush1.xpose.msra.mxu0 0.0
    %1573 = vmatprep.subr.mxu0 0.0
    %1574 = vmatpush1.xpose.msra.mxu0 0.0
    %1575 = vmatprep.subr.mxu0 0.0
    %1576 = vmatpush1.xpose.msra.mxu0 0.0
    %1577 = vmatprep.subr.mxu0 0.0
    %1578 = vmatpush1.xpose.msra.mxu0 0.0
    %1579 = vmatprep.subr.mxu0 0.0
    %1580 = vmatpush1.xpose.msra.mxu0 0.0
    %1581 = vmatprep.mubr.f32.mxu0 0.0
    %v1582 = vand.u32 %v1431, 4294901760
    %1583 = vmatmul.mubr.f32.gmra.mrb[0].mxu0 %v1582
    %v1584 = vpop.f32.mrb[0].mxu0
    %v1585 = vadd.f32 %v1509, %v1584
    %v1586 = vpop.f32.mrb[0].mxu0
    %1587 = vdwg.mxu0
    %1588 = vmatprep.subr.mxu0 0.0
    %v1589 = vand.u32 %v1434, 4294901760
    %v1590 = vsub.f32 %v1434, %v1589
    %1591 = vmatpush1.xpose.msra.mxu0 %v1590
    %1592 = vmatprep.subr.mxu0 0.0
    %1593 = vmatpush1.xpose.msra.mxu0 0.0
    %1594 = vmatprep.subr.mxu0 0.0
    %1595 = vmatpush1.xpose.msra.mxu0 0.0
    %1596 = vmatprep.subr.mxu0 0.0
    %1597 = vmatpush1.xpose.msra.mxu0 0.0
    %1598 = vmatprep.subr.mxu0 0.0
    %1599 = vmatpush1.xpose.msra.mxu0 0.0
    %1600 = vmatprep.subr.mxu0 0.0
    %1601 = vmatpush1.xpose.msra.mxu0 0.0
    %1602 = vmatprep.subr.mxu0 0.0
    %1603 = vmatpush1.xpose.msra.mxu0 0.0
    %1604 = vmatprep.subr.mxu0 0.0
    %1605 = vmatpush1.xpose.msra.mxu0 0.0
    %1606 = vmatprep.subr.mxu0 0.0
    %1607 = vmatpush1.xpose.msra.mxu0 0.0
    %1608 = vmatprep.subr.mxu0 0.0
    %1609 = vmatpush1.xpose.msra.mxu0 0.0
    %1610 = vmatprep.subr.mxu0 0.0
    %1611 = vmatpush1.xpose.msra.mxu0 0.0
    %1612 = vmatprep.subr.mxu0 0.0
    %1613 = vmatpush1.xpose.msra.mxu0 0.0
    %1614 = vmatprep.subr.mxu0 0.0
    %1615 = vmatpush1.xpose.msra.mxu0 0.0
    %1616 = vmatprep.subr.mxu0 0.0
    %1617 = vmatpush1.xpose.msra.mxu0 0.0
    %1618 = vmatprep.subr.mxu0 0.0
    %1619 = vmatpush1.xpose.msra.mxu0 0.0
    %1620 = vmatprep.subr.mxu0 0.0
    %1621 = vmatpush1.xpose.msra.mxu0 0.0
    %1622 = vmatprep.subr.mxu0 0.0
    %1623 = vmatpush1.xpose.msra.mxu0 0.0
    %1624 = vmatprep.subr.mxu0 0.0
    %1625 = vmatpush1.xpose.msra.mxu0 0.0
    %1626 = vmatprep.subr.mxu0 0.0
    %1627 = vmatpush1.xpose.msra.mxu0 0.0
    %1628 = vmatprep.subr.mxu0 0.0
    %1629 = vmatpush1.xpose.msra.mxu0 0.0
    %1630 = vmatprep.subr.mxu0 0.0
    %1631 = vmatpush1.xpose.msra.mxu0 0.0
    %1632 = vmatprep.subr.mxu0 0.0
    %1633 = vmatpush1.xpose.msra.mxu0 0.0
    %1634 = vmatprep.subr.mxu0 0.0
    %1635 = vmatpush1.xpose.msra.mxu0 0.0
    %1636 = vmatprep.subr.mxu0 0.0
    %1637 = vmatpush1.xpose.msra.mxu0 0.0
    %1638 = vmatprep.subr.mxu0 0.0
    %1639 = vmatpush1.xpose.msra.mxu0 0.0
    %1640 = vmatprep.subr.mxu0 0.0
    %1641 = vmatpush1.xpose.msra.mxu0 0.0
    %1642 = vmatprep.subr.mxu0 0.0
    %1643 = vmatpush1.xpose.msra.mxu0 0.0
    %1644 = vmatprep.subr.mxu0 0.0
    %1645 = vmatpush1.xpose.msra.mxu0 0.0
    %1646 = vmatprep.subr.mxu0 0.0
    %1647 = vmatpush1.xpose.msra.mxu0 0.0
    %1648 = vmatprep.subr.mxu0 0.0
    %1649 = vmatpush1.xpose.msra.mxu0 0.0
    %1650 = vmatprep.subr.mxu0 0.0
    %1651 = vmatpush1.xpose.msra.mxu0 0.0
    %1652 = vmatprep.subr.mxu0 0.0
    %1653 = vmatpush1.xpose.msra.mxu0 0.0
    %1654 = vmatprep.mubr.f32.mxu0 0.0
    %v1655 = vand.u32 %v1431, 4294901760
    %v1656 = vsub.f32 %v1431, %v1655
    %1657 = vmatmul.mubr.f32.gmra.mrb[0].mxu0 %v1656
    %v1658 = vpop.f32.mrb[0].mxu0
    %v1659 = vadd.f32 %v1585, %v1658
    %v1660 = vpop.f32.mrb[0].mxu0
    %1661 = vdwg.mxu0
    %1662 = vmatprep.subr.mxu0 0.0
    %v1663 = vand.u32 %v1434, 4294901760
    %1664 = vmatpush1.xpose.msra.mxu0 %v1663
    %1665 = vmatprep.subr.mxu0 0.0
    %1666 = vmatpush1.xpose.msra.mxu0 0.0
    %1667 = vmatprep.subr.mxu0 0.0
    %1668 = vmatpush1.xpose.msra.mxu0 0.0
    %1669 = vmatprep.subr.mxu0 0.0
    %1670 = vmatpush1.xpose.msra.mxu0 0.0
    %1671 = vmatprep.subr.mxu0 0.0
    %1672 = vmatpush1.xpose.msra.mxu0 0.0
    %1673 = vmatprep.subr.mxu0 0.0
    %1674 = vmatpush1.xpose.msra.mxu0 0.0
    %1675 = vmatprep.subr.mxu0 0.0
    %1676 = vmatpush1.xpose.msra.mxu0 0.0
    %1677 = vmatprep.subr.mxu0 0.0
    %1678 = vmatpush1.xpose.msra.mxu0 0.0
    %1679 = vmatprep.subr.mxu0 0.0
    %1680 = vmatpush1.xpose.msra.mxu0 0.0
    %1681 = vmatprep.subr.mxu0 0.0
    %1682 = vmatpush1.xpose.msra.mxu0 0.0
    %1683 = vmatprep.subr.mxu0 0.0
    %1684 = vmatpush1.xpose.msra.mxu0 0.0
    %1685 = vmatprep.subr.mxu0 0.0
    %1686 = vmatpush1.xpose.msra.mxu0 0.0
    %1687 = vmatprep.subr.mxu0 0.0
    %1688 = vmatpush1.xpose.msra.mxu0 0.0
    %1689 = vmatprep.subr.mxu0 0.0
    %1690 = vmatpush1.xpose.msra.mxu0 0.0
    %1691 = vmatprep.subr.mxu0 0.0
    %1692 = vmatpush1.xpose.msra.mxu0 0.0
    %1693 = vmatprep.subr.mxu0 0.0
    %1694 = vmatpush1.xpose.msra.mxu0 0.0
    %1695 = vmatprep.subr.mxu0 0.0
    %1696 = vmatpush1.xpose.msra.mxu0 0.0
    %1697 = vmatprep.subr.mxu0 0.0
    %1698 = vmatpush1.xpose.msra.mxu0 0.0
    %1699 = vmatprep.subr.mxu0 0.0
    %1700 = vmatpush1.xpose.msra.mxu0 0.0
    %1701 = vmatprep.subr.mxu0 0.0
    %1702 = vmatpush1.xpose.msra.mxu0 0.0
    %1703 = vmatprep.subr.mxu0 0.0
    %1704 = vmatpush1.xpose.msra.mxu0 0.0
    %1705 = vmatprep.subr.mxu0 0.0
    %1706 = vmatpush1.xpose.msra.mxu0 0.0
    %1707 = vmatprep.subr.mxu0 0.0
    %1708 = vmatpush1.xpose.msra.mxu0 0.0
    %1709 = vmatprep.subr.mxu0 0.0
    %1710 = vmatpush1.xpose.msra.mxu0 0.0
    %1711 = vmatprep.subr.mxu0 0.0
    %1712 = vmatpush1.xpose.msra.mxu0 0.0
    %1713 = vmatprep.subr.mxu0 0.0
    %1714 = vmatpush1.xpose.msra.mxu0 0.0
    %1715 = vmatprep.subr.mxu0 0.0
    %1716 = vmatpush1.xpose.msra.mxu0 0.0
    %1717 = vmatprep.subr.mxu0 0.0
    %1718 = vmatpush1.xpose.msra.mxu0 0.0
    %1719 = vmatprep.subr.mxu0 0.0
    %1720 = vmatpush1.xpose.msra.mxu0 0.0
    %1721 = vmatprep.subr.mxu0 0.0
    %1722 = vmatpush1.xpose.msra.mxu0 0.0
    %1723 = vmatprep.subr.mxu0 0.0
    %1724 = vmatpush1.xpose.msra.mxu0 0.0
    %1725 = vmatprep.subr.mxu0 0.0
    %1726 = vmatpush1.xpose.msra.mxu0 0.0
    %1727 = vmatprep.mubr.f32.mxu0 0.0
    %v1728 = vand.u32 %v1431, 4294901760
    %v1729 = vsub.f32 %v1431, %v1728
    %v1730 = vand.u32 %v1729, 4294901760
    %1731 = vmatmul.mubr.f32.gmra.mrb[0].mxu0 %v1730
    %v1732 = vpop.f32.mrb[0].mxu0
    %v1733 = vadd.f32 %v1659, %v1732
    %v1734 = vpop.f32.mrb[0].mxu0
    %1735 = vdwg.mxu0
    %1736 = vmatprep.subr.mxu0 0.0
    %v1737 = vand.u32 %v1434, 4294901760
    %v1738 = vsub.f32 %v1434, %v1737
    %v1739 = vand.u32 %v1738, 4294901760
    %1740 = vmatpush1.xpose.msra.mxu0 %v1739
    %1741 = vmatprep.subr.mxu0 0.0
    %1742 = vmatpush1.xpose.msra.mxu0 0.0
    %1743 = vmatprep.subr.mxu0 0.0
    %1744 = vmatpush1.xpose.msra.mxu0 0.0
    %1745 = vmatprep.subr.mxu0 0.0
    %1746 = vmatpush1.xpose.msra.mxu0 0.0
    %1747 = vmatprep.subr.mxu0 0.0
    %1748 = vmatpush1.xpose.msra.mxu0 0.0
    %1749 = vmatprep.subr.mxu0 0.0
    %1750 = vmatpush1.xpose.msra.mxu0 0.0
    %1751 = vmatprep.subr.mxu0 0.0
    %1752 = vmatpush1.xpose.msra.mxu0 0.0
    %1753 = vmatprep.subr.mxu0 0.0
    %1754 = vmatpush1.xpose.msra.mxu0 0.0
    %1755 = vmatprep.subr.mxu0 0.0
    %1756 = vmatpush1.xpose.msra.mxu0 0.0
    %1757 = vmatprep.subr.mxu0 0.0
    %1758 = vmatpush1.xpose.msra.mxu0 0.0
    %1759 = vmatprep.subr.mxu0 0.0
    %1760 = vmatpush1.xpose.msra.mxu0 0.0
    %1761 = vmatprep.subr.mxu0 0.0
    %1762 = vmatpush1.xpose.msra.mxu0 0.0
    %1763 = vmatprep.subr.mxu0 0.0
    %1764 = vmatpush1.xpose.msra.mxu0 0.0
    %1765 = vmatprep.subr.mxu0 0.0
    %1766 = vmatpush1.xpose.msra.mxu0 0.0
    %1767 = vmatprep.subr.mxu0 0.0
    %1768 = vmatpush1.xpose.msra.mxu0 0.0
    %1769 = vmatprep.subr.mxu0 0.0
    %1770 = vmatpush1.xpose.msra.mxu0 0.0
    %1771 = vmatprep.subr.mxu0 0.0
    %1772 = vmatpush1.xpose.msra.mxu0 0.0
    %1773 = vmatprep.subr.mxu0 0.0
    %1774 = vmatpush1.xpose.msra.mxu0 0.0
    %1775 = vmatprep.subr.mxu0 0.0
    %1776 = vmatpush1.xpose.msra.mxu0 0.0
    %1777 = vmatprep.subr.mxu0 0.0
    %1778 = vmatpush1.xpose.msra.mxu0 0.0
    %1779 = vmatprep.subr.mxu0 0.0
    %1780 = vmatpush1.xpose.msra.mxu0 0.0
    %1781 = vmatprep.subr.mxu0 0.0
    %1782 = vmatpush1.xpose.msra.mxu0 0.0
    %1783 = vmatprep.subr.mxu0 0.0
    %1784 = vmatpush1.xpose.msra.mxu0 0.0
    %1785 = vmatprep.subr.mxu0 0.0
    %1786 = vmatpush1.xpose.msra.mxu0 0.0
    %1787 = vmatprep.subr.mxu0 0.0
    %1788 = vmatpush1.xpose.msra.mxu0 0.0
    %1789 = vmatprep.subr.mxu0 0.0
    %1790 = vmatpush1.xpose.msra.mxu0 0.0
    %1791 = vmatprep.subr.mxu0 0.0
    %1792 = vmatpush1.xpose.msra.mxu0 0.0
    %1793 = vmatprep.subr.mxu0 0.0
    %1794 = vmatpush1.xpose.msra.mxu0 0.0
    %1795 = vmatprep.subr.mxu0 0.0
    %1796 = vmatpush1.xpose.msra.mxu0 0.0
    %1797 = vmatprep.subr.mxu0 0.0
    %1798 = vmatpush1.xpose.msra.mxu0 0.0
    %1799 = vmatprep.subr.mxu0 0.0
    %1800 = vmatpush1.xpose.msra.mxu0 0.0
    %1801 = vmatprep.subr.mxu0 0.0
    %1802 = vmatpush1.xpose.msra.mxu0 0.0
    %1803 = vmatprep.mubr.f32.mxu0 0.0
    %v1804 = vand.u32 %v1431, 4294901760
    %1805 = vmatmul.mubr.f32.gmra.mrb[0].mxu0 %v1804
    %v1806 = vpop.f32.mrb[0].mxu0
    %v1807 = vadd.f32 %v1733, %v1806
    %v1808 = vpop.f32.mrb[0].mxu0
    %1809 = vdwg.mxu0
    %1810 = vmatprep.subr.mxu0 0.0
    %v1811 = vand.u32 %v1434, 4294901760
    %1812 = vmatpush1.xpose.msra.mxu0 %v1811
    %1813 = vmatprep.subr.mxu0 0.0
    %1814 = vmatpush1.xpose.msra.mxu0 0.0
    %1815 = vmatprep.subr.mxu0 0.0
    %1816 = vmatpush1.xpose.msra.mxu0 0.0
    %1817 = vmatprep.subr.mxu0 0.0
    %1818 = vmatpush1.xpose.msra.mxu0 0.0
    %1819 = vmatprep.subr.mxu0 0.0
    %1820 = vmatpush1.xpose.msra.mxu0 0.0
    %1821 = vmatprep.subr.mxu0 0.0
    %1822 = vmatpush1.xpose.msra.mxu0 0.0
    %1823 = vmatprep.subr.mxu0 0.0
    %1824 = vmatpush1.xpose.msra.mxu0 0.0
    %1825 = vmatprep.subr.mxu0 0.0
    %1826 = vmatpush1.xpose.msra.mxu0 0.0
    %1827 = vmatprep.subr.mxu0 0.0
    %1828 = vmatpush1.xpose.msra.mxu0 0.0
    %1829 = vmatprep.subr.mxu0 0.0
    %1830 = vmatpush1.xpose.msra.mxu0 0.0
    %1831 = vmatprep.subr.mxu0 0.0
    %1832 = vmatpush1.xpose.msra.mxu0 0.0
    %1833 = vmatprep.subr.mxu0 0.0
    %1834 = vmatpush1.xpose.msra.mxu0 0.0
    %1835 = vmatprep.subr.mxu0 0.0
    %1836 = vmatpush1.xpose.msra.mxu0 0.0
    %1837 = vmatprep.subr.mxu0 0.0
    %1838 = vmatpush1.xpose.msra.mxu0 0.0
    %1839 = vmatprep.subr.mxu0 0.0
    %1840 = vmatpush1.xpose.msra.mxu0 0.0
    %1841 = vmatprep.subr.mxu0 0.0
    %1842 = vmatpush1.xpose.msra.mxu0 0.0
    %1843 = vmatprep.subr.mxu0 0.0
    %1844 = vmatpush1.xpose.msra.mxu0 0.0
    %1845 = vmatprep.subr.mxu0 0.0
    %1846 = vmatpush1.xpose.msra.mxu0 0.0
    %1847 = vmatprep.subr.mxu0 0.0
    %1848 = vmatpush1.xpose.msra.mxu0 0.0
    %1849 = vmatprep.subr.mxu0 0.0
    %1850 = vmatpush1.xpose.msra.mxu0 0.0
    %1851 = vmatprep.subr.mxu0 0.0
    %1852 = vmatpush1.xpose.msra.mxu0 0.0
    %1853 = vmatprep.subr.mxu0 0.0
    %1854 = vmatpush1.xpose.msra.mxu0 0.0
    %1855 = vmatprep.subr.mxu0 0.0
    %1856 = vmatpush1.xpose.msra.mxu0 0.0
    %1857 = vmatprep.subr.mxu0 0.0
    %1858 = vmatpush1.xpose.msra.mxu0 0.0
    %1859 = vmatprep.subr.mxu0 0.0
    %1860 = vmatpush1.xpose.msra.mxu0 0.0
    %1861 = vmatprep.subr.mxu0 0.0
    %1862 = vmatpush1.xpose.msra.mxu0 0.0
    %1863 = vmatprep.subr.mxu0 0.0
    %1864 = vmatpush1.xpose.msra.mxu0 0.0
    %1865 = vmatprep.subr.mxu0 0.0
    %1866 = vmatpush1.xpose.msra.mxu0 0.0
    %1867 = vmatprep.subr.mxu0 0.0
    %1868 = vmatpush1.xpose.msra.mxu0 0.0
    %1869 = vmatprep.subr.mxu0 0.0
    %1870 = vmatpush1.xpose.msra.mxu0 0.0
    %1871 = vmatprep.subr.mxu0 0.0
    %1872 = vmatpush1.xpose.msra.mxu0 0.0
    %1873 = vmatprep.subr.mxu0 0.0
    %1874 = vmatpush1.xpose.msra.mxu0 0.0
    %1875 = vmatprep.mubr.f32.mxu0 0.0
    %v1876 = vand.u32 %v1431, 4294901760
    %1877 = vmatmul.mubr.f32.gmra.mrb[0].mxu0 %v1876
    %v1878 = vpop.f32.mrb[0].mxu0
    %v1879 = vadd.f32 %v1807, %v1878
    %v1880 = vpop.f32.mrb[0].mxu0
    %1881 = vdwg.mxu0
    %v1882 = vrot.slane %v947, 1
    %v1884 = vmul.f32 %v1879, %v1882
    %v1886 = vrot.slane %v1884, 7
    %v1888 = vadd.f32 %v953, %v1886
    %vm1889 = vcmask 58369
    %1890 = vst.msk [vmem:[#allocation2] sm:$0x2] %vm1889, %v1888
    // Predicated region
    $region18: #{deep_time_forward.3} parent=1 // pred_check
      _
    $region19: #{deep_time_forward.3} parent=1 // pred_check_branch
      %1892 = sbr.rel (0) target = $region21
    $region20: #{deep_time_forward.3} parent=1 // pred_region
      %s1894 = ssub.s32 32, 32
      %1895 = vsyncadd [#allocation3], %s1894
      %s1897 = sshll.u32 [#allocation2], 4
      %s1898 = int_to_ptr.vmem [resolvable:$true] %s1897
      %1900 = dma.vmem_to_hbm [thread:$0]  %s1898, 32, %s4, [#allocation3]
    $region21: #{deep_time_forward.3} parent=1 // pred_fallthru
      _
    // Predicated region
    $region22: #{deep_time_forward.3} parent=1 // pred_check
      _
    $region23: #{deep_time_forward.3} parent=1 // pred_check_branch
      %1902 = sbr.rel (0) target = $region25
    $region24: #{deep_time_forward.3} parent=1 // pred_region
      %1903 = dma.done [#allocation3], 32
    $region25: #{deep_time_forward.3} parent=1 // pred_fallthru
      _
    %1904 = vsyncpa [#allocation3], 1

// kernel: deep_time_forward.2
$region0: #{deep_time_forward.2}
  #allocation0 [shape = 'u32[]', space=smem, size = 0x4, offset = 0x4, fixed_abs, tag = 'smem constant byte address 0x4 - core index']
  #allocation1 [shape = 'u32[144,128]{1,0:T(1,128)}', space=vmem, size = 0x12000, scoped, tag = 'internal scratch']
  #allocation2 [shape = 'f32[1,1]{1,0:T(1,128)S(1)}', space=vmem, size = 0x200, scoped, tag = 'scoped memory for deep_time_forward.2']
  %s0 = inlined_call_operand.vmem [shape: f32[2,16], index: 0, kind: input, shape index: {}]
  %s1 = inlined_call_operand.vmem [shape: f32[2,16], index: 1, kind: input, shape index: {}]
  %s2 = inlined_call_operand.vmem [shape: f32[48,5], index: 2, kind: input, shape index: {}]
  %s3 = inlined_call_operand.vmem [shape: f32[5,32], index: 3, kind: input, shape index: {}]
  %s4 = inlined_call_operand.vmem [shape: f32[64,32], index: 4, kind: input, shape index: {}]
  %s5 = inlined_call_operand.vmem [shape: f32[1,32], index: 5, kind: input, shape index: {}]
  %s6 = inlined_call_operand.vmem [shape: f32[1,32], index: 6, kind: input, shape index: {}]
  %s7 = inlined_call_operand.vmem [shape: f32[1,32], index: 7, kind: input, shape index: {}]
  %s8 = inlined_call_operand.vmem [shape: f32[2,32,32], index: 8, kind: input, shape index: {}]
  %s9 = inlined_call_operand.vmem [shape: f32[2,1,32], index: 9, kind: input, shape index: {}]
  %s10 = inlined_call_operand.vmem [shape: f32[2,1,32], index: 10, kind: input, shape index: {}]
  %s11 = inlined_call_operand.vmem [shape: f32[2,1,32], index: 11, kind: input, shape index: {}]
  %s12 = inlined_call_operand.<no memory space> [shape: f32[1,1], index: 12, kind: input, shape index: {}]
  %s13 = inlined_call_operand.vmem [shape: f32[2,16], index: 13, kind: output, shape index: {0}]
  %s14 = inlined_call_operand.vmem [shape: f32[2,1], index: 14, kind: output, shape index: {1}]
  %s15 = inlined_call_operand.vmem [shape: f32[2,1], index: 15, kind: output, shape index: {2}]
  %s16 = inlined_call_operand.vmem [shape: f32[2,16,16], index: 16, kind: output, shape index: {3}]
  %s17 = inlined_call_operand.vmem [shape: f32[48,32], index: 17, kind: output, shape index: {4}]
  %18 = xla_tuple %s13, %s14, %s15, %s16, %s17
  %s19 = sld [smem:[#allocation0]]
  $region94: #{deep_time_forward.2} parent=0
    _
  %s21 = ssub.s32 1, %s19
  %s22 = scalar_select 0, %s21, %s19
  %v23 = vstv %s12
  %24 = vst [vmem:[#allocation2] sm:$0x1] %v23
  // Predicated region
  $region2: #{deep_time_forward.2} parent=0 // pred_check
    _
  $region3: #{deep_time_forward.2} parent=0 // pred_check_branch
    %26 = sbr.rel (0) target = $region5
  $region4: #{deep_time_forward.2} parent=0 // pred_region
    _
  $region5: #{deep_time_forward.2} parent=0 // pred_fallthru
    _
  // Predicated region
  $region6: #{deep_time_forward.2} parent=0 // pred_check
    _
  $region7: #{deep_time_forward.2} parent=0 // pred_check_branch
    %28 = sbr.rel (0) target = $region9
  $region8: #{deep_time_forward.2} parent=0 // pred_region
    _
  $region9: #{deep_time_forward.2} parent=0 // pred_fallthru
    _
  // Predicated region
  $region10: #{deep_time_forward.2} parent=0 // pred_check
    _
  $region11: #{deep_time_forward.2} parent=0 // pred_check_branch
    %30 = sbr.rel (0) target = $region13
  $region12: #{deep_time_forward.2} parent=0 // pred_region
    _
  $region13: #{deep_time_forward.2} parent=0 // pred_fallthru
    _
  // Predicated region
  $region14: #{deep_time_forward.2} parent=0 // pred_check
    _
  $region15: #{deep_time_forward.2} parent=0 // pred_check_branch
    %32 = sbr.rel (0) target = $region17
  $region16: #{deep_time_forward.2} parent=0 // pred_region
    _
  $region17: #{deep_time_forward.2} parent=0 // pred_fallthru
    _
  // Predicated region
  $region18: #{deep_time_forward.2} parent=0 // pred_check
    _
  $region19: #{deep_time_forward.2} parent=0 // pred_check_branch
    %34 = sbr.rel (0) target = $region21
  $region20: #{deep_time_forward.2} parent=0 // pred_region
    _
  $region21: #{deep_time_forward.2} parent=0 // pred_fallthru
    _
  // Predicated region
  $region22: #{deep_time_forward.2} parent=0 // pred_check
    _
  $region23: #{deep_time_forward.2} parent=0 // pred_check_branch
    %36 = sbr.rel (0) target = $region25
  $region24: #{deep_time_forward.2} parent=0 // pred_region
    _
  $region25: #{deep_time_forward.2} parent=0 // pred_fallthru
    _
  // Predicated region
  $region26: #{deep_time_forward.2} parent=0 // pred_check
    _
  $region27: #{deep_time_forward.2} parent=0 // pred_check_branch
    %38 = sbr.rel (0) target = $region29
  $region28: #{deep_time_forward.2} parent=0 // pred_region
    _
  $region29: #{deep_time_forward.2} parent=0 // pred_fallthru
    _
  // Predicated region
  $region30: #{deep_time_forward.2} parent=0 // pred_check
    _
  $region31: #{deep_time_forward.2} parent=0 // pred_check_branch
    %40 = sbr.rel (0) target = $region33
  $region32: #{deep_time_forward.2} parent=0 // pred_region
    _
  $region33: #{deep_time_forward.2} parent=0 // pred_fallthru
    _
  // Predicated region
  $region34: #{deep_time_forward.2} parent=0 // pred_check
    _
  $region35: #{deep_time_forward.2} parent=0 // pred_check_branch
    %42 = sbr.rel (0) target = $region37
  $region36: #{deep_time_forward.2} parent=0 // pred_region
    _
  $region37: #{deep_time_forward.2} parent=0 // pred_fallthru
    _
  // Predicated region
  $region38: #{deep_time_forward.2} parent=0 // pred_check
    _
  $region39: #{deep_time_forward.2} parent=0 // pred_check_branch
    %44 = sbr.rel (0) target = $region41
  $region40: #{deep_time_forward.2} parent=0 // pred_region
    _
  $region41: #{deep_time_forward.2} parent=0 // pred_fallthru
    _
  // Predicated region
  $region42: #{deep_time_forward.2} parent=0 // pred_check
    _
  $region43: #{deep_time_forward.2} parent=0 // pred_check_branch
    %46 = sbr.rel (0) target = $region45
  $region44: #{deep_time_forward.2} parent=0 // pred_region
    _
  $region45: #{deep_time_forward.2} parent=0 // pred_fallthru
    _
  // Predicated region
  $region46: #{deep_time_forward.2} parent=0 // pred_check
    _
  $region47: #{deep_time_forward.2} parent=0 // pred_check_branch
    %48 = sbr.rel (0) target = $region49
  $region48: #{deep_time_forward.2} parent=0 // pred_region
    _
  $region49: #{deep_time_forward.2} parent=0 // pred_fallthru
    _
  // Predicated region
  $region50: #{deep_time_forward.2} parent=0 // pred_check
    _
  $region51: #{deep_time_forward.2} parent=0 // pred_check_branch
    %50 = sbr.rel (0) target = $region53
  $region52: #{deep_time_forward.2} parent=0 // pred_region
    _
  $region53: #{deep_time_forward.2} parent=0 // pred_fallthru
    _
  %v51 = vld [vmem:[%s0] sm:$0x3]
  %v52 = vld [vmem:[%s1] sm:$0x3]
  %vm53 = vcmask 123904
  %v54 = vsel %vm53, %v52, 0.0
  %55 = vadd.xlane.f32.xlu0 %v54
  %v56 = vpop.xlane.xlu0 %55
  %v57 = vmax.f32 %v56, 1.0
  %v58 = vmul.f32 %v51, %v52
  %v59 = vsel %vm53, %v58, 0.0
  %60 = vadd.xlane.f32.xlu0 %v59
  %v61 = vpop.xlane.xlu0 %60
  %v62 = vrcp.pop %v57
  %v63 = vmul.f32 %v61, %v62
  %v64 = vsub.f32 %v51, %v63
  %v65 = vmul.f32 %v64, %v52
  %v66 = vmul.f32 %v65, %v65
  %v67 = vsel %vm53, %v66, 0.0
  %68 = vadd.xlane.f32.xlu0 %v67
  %v69 = vpop.xlane.xlu0 %68
  %v70 = vmul.f32 %v69, %v62
  %v71 = vadd.f32 %v70, 1e-05
  %v72 = vrsqrt.pop %v71
  %v73 = vmul.f32 %v71, %v72
  %vm74 = vcmp.eq.f32.partialorder %v71, inf
  %v75 = vsel %vm74, %v71, %v73
  %vm76 = vcmp.eq.f32.partialorder %v71, 0.0
  %v77 = vand.u32 %v71, 2147483648
  %v78 = vsel %vm76, %v77, %v75
  %v79 = vrcp.pop %v78
  %v80 = vmul.f32 %v64, %v79
  %81 = vst.msk [vmem:[%s13] sm:$0x3] %vm53, %v80
  %vm82 = vcmask 1024
  %83 = vst.msk [vmem:[%s14] sm:$0x3] %vm82, %v63
  %84 = vst.msk [vmem:[%s15] sm:$0x3] %vm82, %v78
  %v85 = vld [vmem:[%s2] sm:$0xff]
  %v86 = vld [vmem:[%s2 + $0x8] sm:$0xff]
  %v87 = vld [vmem:[%s2 + $0x10] sm:$0xff]
  %v88 = vld [vmem:[%s2 + $0x18] sm:$0xff]
  %v89 = vld [vmem:[%s2 + $0x20] sm:$0xff]
  %v90 = vld [vmem:[%s2 + $0x28] sm:$0xff]
  %v91 = vld [vmem:[%s3] sm:$0x1f]
  %93 = vset.pattern.permute.xlu0 0
  %94 = vperm.xlu0 %93, %v85
  %v95 = vpop.permute.xlu0 %94
  %98 = vset.pattern.permute.xlu0 0
  %99 = vperm.xlu0 %98, %v86
  %v100 = vpop.permute.xlu0 %99
  %103 = vset.pattern.permute.xlu0 0
  %104 = vperm.xlu0 %103, %v87
  %v105 = vpop.permute.xlu0 %104
  %108 = vset.pattern.permute.xlu0 0
  %109 = vperm.xlu0 %108, %v88
  %v110 = vpop.permute.xlu0 %109
  %113 = vset.pattern.permute.xlu0 0
  %114 = vperm.xlu0 %113, %v89
  %v115 = vpop.permute.xlu0 %114
  %118 = vset.pattern.permute.xlu0 0
  %119 = vperm.xlu0 %118, %v90
  %v120 = vpop.permute.xlu0 %119
  %v122 = vlaneseq
  %v123 = vshrl.u32 %v122, 7
  %v124 = vsub.s32 0, %v123
  %v125 = vrot.slane %v91, %v124
  %v126 = vmul.f32 %v95, %v125
  %v127 = vmul.f32 %v100, %v125
  %v128 = vmul.f32 %v105, %v125
  %v129 = vmul.f32 %v110, %v125
  %v130 = vmul.f32 %v115, %v125
  %v131 = vmul.f32 %v120, %v125
  %132 = vset.pattern.permute.xlu0 1
  %133 = vperm.xlu0 %132, %v85
  %v134 = vpop.permute.xlu0 %133
  %136 = vset.pattern.permute.xlu0 1
  %137 = vperm.xlu0 %136, %v86
  %v138 = vpop.permute.xlu0 %137
  %140 = vset.pattern.permute.xlu0 1
  %141 = vperm.xlu0 %140, %v87
  %v142 = vpop.permute.xlu0 %141
  %144 = vset.pattern.permute.xlu0 1
  %145 = vperm.xlu0 %144, %v88
  %v146 = vpop.permute.xlu0 %145
  %148 = vset.pattern.permute.xlu0 1
  %149 = vperm.xlu0 %148, %v89
  %v150 = vpop.permute.xlu0 %149
  %152 = vset.pattern.permute.xlu0 1
  %153 = vperm.xlu0 %152, %v90
  %v154 = vpop.permute.xlu0 %153
  %v156 = vlaneseq
  %v157 = vshrl.u32 %v156, 7
  %v158 = vsub.s32 1, %v157
  %v159 = vrot.slane %v91, %v158
  %v160 = vmul.f32 %v134, %v159
  %v161 = vmul.f32 %v138, %v159
  %v162 = vmul.f32 %v142, %v159
  %v163 = vmul.f32 %v146, %v159
  %v164 = vmul.f32 %v150, %v159
  %v165 = vmul.f32 %v154, %v159
  %v166 = vadd.f32 %v126, %v160
  %v167 = vadd.f32 %v127, %v161
  %v168 = vadd.f32 %v128, %v162
  %v169 = vadd.f32 %v129, %v163
  %v170 = vadd.f32 %v130, %v164
  %v171 = vadd.f32 %v131, %v165
  %172 = vset.pattern.permute.xlu0 2
  %173 = vperm.xlu0 %172, %v85
  %v174 = vpop.permute.xlu0 %173
  %176 = vset.pattern.permute.xlu0 2
  %177 = vperm.xlu0 %176, %v86
  %v178 = vpop.permute.xlu0 %177
  %180 = vset.pattern.permute.xlu0 2
  %181 = vperm.xlu0 %180, %v87
  %v182 = vpop.permute.xlu0 %181
  %184 = vset.pattern.permute.xlu0 2
  %185 = vperm.xlu0 %184, %v88
  %v186 = vpop.permute.xlu0 %185
  %188 = vset.pattern.permute.xlu0 2
  %189 = vperm.xlu0 %188, %v89
  %v190 = vpop.permute.xlu0 %189
  %192 = vset.pattern.permute.xlu0 2
  %193 = vperm.xlu0 %192, %v90
  %v194 = vpop.permute.xlu0 %193
  %v196 = vlaneseq
  %v197 = vshrl.u32 %v196, 7
  %v198 = vsub.s32 2, %v197
  %v199 = vrot.slane %v91, %v198
  %v200 = vmul.f32 %v174, %v199
  %v201 = vmul.f32 %v178, %v199
  %v202 = vmul.f32 %v182, %v199
  %v203 = vmul.f32 %v186, %v199
  %v204 = vmul.f32 %v190, %v199
  %v205 = vmul.f32 %v194, %v199
  %v206 = vadd.f32 %v166, %v200
  %v207 = vadd.f32 %v167, %v201
  %v208 = vadd.f32 %v168, %v202
  %v209 = vadd.f32 %v169, %v203
  %v210 = vadd.f32 %v170, %v204
  %v211 = vadd.f32 %v171, %v205
  %212 = vset.pattern.permute.xlu0 3
  %213 = vperm.xlu0 %212, %v85
  %v214 = vpop.permute.xlu0 %213
  %216 = vset.pattern.permute.xlu0 3
  %217 = vperm.xlu0 %216, %v86
  %v218 = vpop.permute.xlu0 %217
  %220 = vset.pattern.permute.xlu0 3
  %221 = vperm.xlu0 %220, %v87
  %v222 = vpop.permute.xlu0 %221
  %224 = vset.pattern.permute.xlu0 3
  %225 = vperm.xlu0 %224, %v88
  %v226 = vpop.permute.xlu0 %225
  %228 = vset.pattern.permute.xlu0 3
  %229 = vperm.xlu0 %228, %v89
  %v230 = vpop.permute.xlu0 %229
  %232 = vset.pattern.permute.xlu0 3
  %233 = vperm.xlu0 %232, %v90
  %v234 = vpop.permute.xlu0 %233
  %v236 = vlaneseq
  %v237 = vshrl.u32 %v236, 7
  %v238 = vsub.s32 3, %v237
  %v239 = vrot.slane %v91, %v238
  %v240 = vmul.f32 %v214, %v239
  %v241 = vmul.f32 %v218, %v239
  %v242 = vmul.f32 %v222, %v239
  %v243 = vmul.f32 %v226, %v239
  %v244 = vmul.f32 %v230, %v239
  %v245 = vmul.f32 %v234, %v239
  %v246 = vadd.f32 %v206, %v240
  %v247 = vadd.f32 %v207, %v241
  %v248 = vadd.f32 %v208, %v242
  %v249 = vadd.f32 %v209, %v243
  %v250 = vadd.f32 %v210, %v244
  %v251 = vadd.f32 %v211, %v245
  %252 = vset.pattern.permute.xlu0 4
  %253 = vperm.xlu0 %252, %v85
  %v254 = vpop.permute.xlu0 %253
  %256 = vset.pattern.permute.xlu0 4
  %257 = vperm.xlu0 %256, %v86
  %v258 = vpop.permute.xlu0 %257
  %260 = vset.pattern.permute.xlu0 4
  %261 = vperm.xlu0 %260, %v87
  %v262 = vpop.permute.xlu0 %261
  %264 = vset.pattern.permute.xlu0 4
  %265 = vperm.xlu0 %264, %v88
  %v266 = vpop.permute.xlu0 %265
  %268 = vset.pattern.permute.xlu0 4
  %269 = vperm.xlu0 %268, %v89
  %v270 = vpop.permute.xlu0 %269
  %272 = vset.pattern.permute.xlu0 4
  %273 = vperm.xlu0 %272, %v90
  %v274 = vpop.permute.xlu0 %273
  %v276 = vlaneseq
  %v277 = vshrl.u32 %v276, 7
  %v278 = vsub.s32 4, %v277
  %v279 = vrot.slane %v91, %v278
  %v280 = vmul.f32 %v254, %v279
  %v281 = vmul.f32 %v258, %v279
  %v282 = vmul.f32 %v262, %v279
  %v283 = vmul.f32 %v266, %v279
  %v284 = vmul.f32 %v270, %v279
  %v285 = vmul.f32 %v274, %v279
  %v286 = vadd.f32 %v246, %v280
  %v287 = vadd.f32 %v247, %v281
  %v288 = vadd.f32 %v248, %v282
  %v289 = vadd.f32 %v249, %v283
  %v290 = vadd.f32 %v250, %v284
  %v291 = vadd.f32 %v251, %v285
  %v292 = vand.u32 2147483647, %v286
  %vm293 = vcmp.le.f32.partialorder %v292, 0.7853982
  %vm294 = vcmp.lt.s32.totalorder %v286, 0
  %v295 = vand.u32 %v286, 2139095040
  %v296 = vshrl.u32 %v295, 23
  %v297 = vsub.s32 %v296, 127
  %v298 = vand.u32 2147483647, %v286
  %v299 = vand.u32 %v298, 8388607
  %v300 = vor.u32 %v299, 8388608
  %v301 = vsub.s32 0, %v300
  %v302 = vadd.s32 %v297, 1
  %vm303 = vcmp.gt.s32.totalorder %v302, 0
  %v304 = vsel %vm303, %v302, 0
  %v305 = vshrl.u32 %v304, 5
  %v306 = vand.u32 %v304, 31
  %v307 = vsub.s32 32, %v306
  %v308 = vshrl.u32 683565275, %v307
  %v309 = vshll.u32 683565275, %v306
  %v310 = vshrl.u32 2475754826, %v307
  %v311 = vor.u32 %v309, %v310
  %v312 = vshll.u32 2475754826, %v306
  %v313 = vshrl.u32 2131351028, %v307
  %v314 = vor.u32 %v312, %v313
  %v315 = vshll.u32 2131351028, %v306
  %v316 = vshrl.u32 2102212464, %v307
  %v317 = vor.u32 %v315, %v316
  %v318 = vshll.u32 2102212464, %v306
  %v319 = vshrl.u32 920167782, %v307
  %v320 = vor.u32 %v318, %v319
  %v321 = vshll.u32 920167782, %v306
  %v322 = vshrl.u32 1326507024, %v307
  %v323 = vor.u32 %v321, %v322
  %vm324 = vcmp.lt.s32.totalorder %v305, 1
  %vm325 = vcmp.lt.s32.totalorder %v305, 2
  %vm326 = vcmp.lt.s32.totalorder %v305, 3
  %vm327 = vcmp.lt.s32.totalorder %v305, 4
  %v328 = vsel %vm324, %v308, %v311
  %v329 = vsel %vm327, %v317, 2102212464
  %v330 = vsel %vm326, %v314, %v329
  %v331 = vsel %vm325, %v328, %v330
  %v332 = vsel %vm324, %v311, %v314
  %v333 = vsel %vm327, %v320, 920167782
  %v334 = vsel %vm326, %v317, %v333
  %v335 = vsel %vm325, %v332, %v334
  %v336 = vsel %vm324, %v314, %v317
  %v337 = vsel %vm327, %v323, 1326507024
  %v338 = vsel %vm326, %v320, %v337
  %v339 = vsel %vm325, %v336, %v338
  %v340 = vshll.u32 %v300, 8
  %v341 = vmul.u32.u64.compose %v340, %v339
  %v342 = vextract.low.u32 %v341
  %v343 = vextract.high.u32 %v341
  %v344 = vmul.u32.u64.compose %v340, %v335
  %v345 = vextract.low.u32 %v344
  %v346 = vextract.high.u32 %v344
  %v347 = vmul.u32 %v340, %v331
  %v348 = vadd.s32 %v343, %v345
  %vm349 = vc.u32 %v343, %v345
  %v350 = vadd.s32 %v346, 1
  %v351 = vsel %vm349, %v350, %v346
  %v352 = vadd.s32 %v347, %v351
  %v353 = vadd.s32 %v352, 536870912
  %v354 = vshrl.u32 %v353, 30
  %v355 = vshll.u32 %v354, 30
  %v356 = vsub.s32 %v352, %v355
  %vm357 = vcmp.lt.s32.totalorder %v356, 0
  %v358 = vsub.s32 0, %v356
  %v359 = vsel %vm357, %v358, %v356
  %v360 = vclz %v359
  %v361 = vsub.s32 %v360, 2
  %vm362 = vcmp.gt.s32.totalorder 0, %v361
  %v363 = vsel %vm362, 0, %v361
  %v364 = vsub.s32 32, %v363
  %v365 = vshll.u32 %v356, %v363
  %v366 = vshrl.u32 %v348, %v364
  %v367 = vor.u32 %v365, %v366
  %v368 = vsub.s32 4294967266, %v363
  %v369 = vadd.s32 %v368, 127
  %v370 = vshll.u32 %v369, 23
  %v371 = vor.u32 4788187, %v370
  %v372 = vand.u32 2147483647, %v371
  %v374 = vcvt.s32.f32 %v367
  %v375 = vmul.f32 %v374, %v372
  %v376 = vxor.u32 %v375, 2147483648
  %v377 = vsel %vm294, %v376, %v375
  %v378 = vsub.s32 4, %v354
  %v379 = vsel %vm294, %v378, %v354
  %v380 = vsel %vm293, %v286, %v377
  %v381 = vsel %vm293, 0, %v379
  %v382 = vcosq.f32.pop %v380
  %v383 = vsinq.f32.pop %v380
  %vm384 = vweird.f32 %v286
  %v385 = vadd.s32 %v381, 3
  %v386 = vand.u32 %v385, 3
  %vm387 = vcmp.lt.s32.totalorder %v386, 2
  %vm388 = vcmp.eq.s32.totalorder %v386, 0
  %v389 = vxor.u32 %v383, 2147483648
  %v390 = vsel %vm388, %v382, %v389
  %vm391 = vcmp.eq.s32.totalorder %v386, 2
  %v392 = vxor.u32 %v382, 2147483648
  %v393 = vsel %vm391, %v392, %v383
  %v394 = vsel %vm387, %v390, %v393
  %v395 = vsel %vm384, nan, %v394
  %v396 = vand.u32 2147483647, %v287
  %vm397 = vcmp.le.f32.partialorder %v396, 0.7853982
  %vm398 = vcmp.lt.s32.totalorder %v287, 0
  %v399 = vand.u32 %v287, 2139095040
  %v400 = vshrl.u32 %v399, 23
  %v401 = vsub.s32 %v400, 127
  %v402 = vand.u32 2147483647, %v287
  %v403 = vand.u32 %v402, 8388607
  %v404 = vor.u32 %v403, 8388608
  %v405 = vsub.s32 0, %v404
  %v406 = vadd.s32 %v401, 1
  %vm407 = vcmp.gt.s32.totalorder %v406, 0
  %v408 = vsel %vm407, %v406, 0
  %v409 = vshrl.u32 %v408, 5
  %v410 = vand.u32 %v408, 31
  %v411 = vsub.s32 32, %v410
  %v412 = vshrl.u32 683565275, %v411
  %v413 = vshll.u32 683565275, %v410
  %v414 = vshrl.u32 2475754826, %v411
  %v415 = vor.u32 %v413, %v414
  %v416 = vshll.u32 2475754826, %v410
  %v417 = vshrl.u32 2131351028, %v411
  %v418 = vor.u32 %v416, %v417
  %v419 = vshll.u32 2131351028, %v410
  %v420 = vshrl.u32 2102212464, %v411
  %v421 = vor.u32 %v419, %v420
  %v422 = vshll.u32 2102212464, %v410
  %v423 = vshrl.u32 920167782, %v411
  %v424 = vor.u32 %v422, %v423
  %v425 = vshll.u32 920167782, %v410
  %v426 = vshrl.u32 1326507024, %v411
  %v427 = vor.u32 %v425, %v426
  %vm428 = vcmp.lt.s32.totalorder %v409, 1
  %vm429 = vcmp.lt.s32.totalorder %v409, 2
  %vm430 = vcmp.lt.s32.totalorder %v409, 3
  %vm431 = vcmp.lt.s32.totalorder %v409, 4
  %v432 = vsel %vm428, %v412, %v415
  %v433 = vsel %vm431, %v421, 2102212464
  %v434 = vsel %vm430, %v418, %v433
  %v435 = vsel %vm429, %v432, %v434
  %v436 = vsel %vm428, %v415, %v418
  %v437 = vsel %vm431, %v424, 920167782
  %v438 = vsel %vm430, %v421, %v437
  %v439 = vsel %vm429, %v436, %v438
  %v440 = vsel %vm428, %v418, %v421
  %v441 = vsel %vm431, %v427, 1326507024
  %v442 = vsel %vm430, %v424, %v441
  %v443 = vsel %vm429, %v440, %v442
  %v444 = vshll.u32 %v404, 8
  %v445 = vmul.u32.u64.compose %v444, %v443
  %v446 = vextract.low.u32 %v445
  %v447 = vextract.high.u32 %v445
  %v448 = vmul.u32.u64.compose %v444, %v439
  %v449 = vextract.low.u32 %v448
  %v450 = vextract.high.u32 %v448
  %v451 = vmul.u32 %v444, %v435
  %v452 = vadd.s32 %v447, %v449
  %vm453 = vc.u32 %v447, %v449
  %v454 = vadd.s32 %v450, 1
  %v455 = vsel %vm453, %v454, %v450
  %v456 = vadd.s32 %v451, %v455
  %v457 = vadd.s32 %v456, 536870912
  %v458 = vshrl.u32 %v457, 30
  %v459 = vshll.u32 %v458, 30
  %v460 = vsub.s32 %v456, %v459
  %vm461 = vcmp.lt.s32.totalorder %v460, 0
  %v462 = vsub.s32 0, %v460
  %v463 = vsel %vm461, %v462, %v460
  %v464 = vclz %v463
  %v465 = vsub.s32 %v464, 2
  %vm466 = vcmp.gt.s32.totalorder 0, %v465
  %v467 = vsel %vm466, 0, %v465
  %v468 = vsub.s32 32, %v467
  %v469 = vshll.u32 %v460, %v467
  %v470 = vshrl.u32 %v452, %v468
  %v471 = vor.u32 %v469, %v470
  %v472 = vsub.s32 4294967266, %v467
  %v473 = vadd.s32 %v472, 127
  %v474 = vshll.u32 %v473, 23
  %v475 = vor.u32 4788187, %v474
  %v476 = vand.u32 2147483647, %v475
  %v478 = vcvt.s32.f32 %v471
  %v479 = vmul.f32 %v478, %v476
  %v480 = vxor.u32 %v479, 2147483648
  %v481 = vsel %vm398, %v480, %v479
  %v482 = vsub.s32 4, %v458
  %v483 = vsel %vm398, %v482, %v458
  %v484 = vsel %vm397, %v287, %v481
  %v485 = vsel %vm397, 0, %v483
  %v486 = vcosq.f32.pop %v484
  %v487 = vsinq.f32.pop %v484
  %vm488 = vweird.f32 %v287
  %v489 = vadd.s32 %v485, 3
  %v490 = vand.u32 %v489, 3
  %vm491 = vcmp.lt.s32.totalorder %v490, 2
  %vm492 = vcmp.eq.s32.totalorder %v490, 0
  %v493 = vxor.u32 %v487, 2147483648
  %v494 = vsel %vm492, %v486, %v493
  %vm495 = vcmp.eq.s32.totalorder %v490, 2
  %v496 = vxor.u32 %v486, 2147483648
  %v497 = vsel %vm495, %v496, %v487
  %v498 = vsel %vm491, %v494, %v497
  %v499 = vsel %vm488, nan, %v498
  %v500 = vand.u32 2147483647, %v288
  %vm501 = vcmp.le.f32.partialorder %v500, 0.7853982
  %vm502 = vcmp.lt.s32.totalorder %v288, 0
  %v503 = vand.u32 %v288, 2139095040
  %v504 = vshrl.u32 %v503, 23
  %v505 = vsub.s32 %v504, 127
  %v506 = vand.u32 2147483647, %v288
  %v507 = vand.u32 %v506, 8388607
  %v508 = vor.u32 %v507, 8388608
  %v509 = vsub.s32 0, %v508
  %v510 = vadd.s32 %v505, 1
  %vm511 = vcmp.gt.s32.totalorder %v510, 0
  %v512 = vsel %vm511, %v510, 0
  %v513 = vshrl.u32 %v512, 5
  %v514 = vand.u32 %v512, 31
  %v515 = vsub.s32 32, %v514
  %v516 = vshrl.u32 683565275, %v515
  %v517 = vshll.u32 683565275, %v514
  %v518 = vshrl.u32 2475754826, %v515
  %v519 = vor.u32 %v517, %v518
  %v520 = vshll.u32 2475754826, %v514
  %v521 = vshrl.u32 2131351028, %v515
  %v522 = vor.u32 %v520, %v521
  %v523 = vshll.u32 2131351028, %v514
  %v524 = vshrl.u32 2102212464, %v515
  %v525 = vor.u32 %v523, %v524
  %v526 = vshll.u32 2102212464, %v514
  %v527 = vshrl.u32 920167782, %v515
  %v528 = vor.u32 %v526, %v527
  %v529 = vshll.u32 920167782, %v514
  %v530 = vshrl.u32 1326507024, %v515
  %v531 = vor.u32 %v529, %v530
  %vm532 = vcmp.lt.s32.totalorder %v513, 1
  %vm533 = vcmp.lt.s32.totalorder %v513, 2
  %vm534 = vcmp.lt.s32.totalorder %v513, 3
  %vm535 = vcmp.lt.s32.totalorder %v513, 4
  %v536 = vsel %vm532, %v516, %v519
  %v537 = vsel %vm535, %v525, 2102212464
  %v538 = vsel %vm534, %v522, %v537
  %v539 = vsel %vm533, %v536, %v538
  %v540 = vsel %vm532, %v519, %v522
  %v541 = vsel %vm535, %v528, 920167782
  %v542 = vsel %vm534, %v525, %v541
  %v543 = vsel %vm533, %v540, %v542
  %v544 = vsel %vm532, %v522, %v525
  %v545 = vsel %vm535, %v531, 1326507024
  %v546 = vsel %vm534, %v528, %v545
  %v547 = vsel %vm533, %v544, %v546
  %v548 = vshll.u32 %v508, 8
  %v549 = vmul.u32.u64.compose %v548, %v547
  %v550 = vextract.low.u32 %v549
  %v551 = vextract.high.u32 %v549
  %v552 = vmul.u32.u64.compose %v548, %v543
  %v553 = vextract.low.u32 %v552
  %v554 = vextract.high.u32 %v552
  %v555 = vmul.u32 %v548, %v539
  %v556 = vadd.s32 %v551, %v553
  %vm557 = vc.u32 %v551, %v553
  %v558 = vadd.s32 %v554, 1
  %v559 = vsel %vm557, %v558, %v554
  %v560 = vadd.s32 %v555, %v559
  %v561 = vadd.s32 %v560, 536870912
  %v562 = vshrl.u32 %v561, 30
  %v563 = vshll.u32 %v562, 30
  %v564 = vsub.s32 %v560, %v563
  %vm565 = vcmp.lt.s32.totalorder %v564, 0
  %v566 = vsub.s32 0, %v564
  %v567 = vsel %vm565, %v566, %v564
  %v568 = vclz %v567
  %v569 = vsub.s32 %v568, 2
  %vm570 = vcmp.gt.s32.totalorder 0, %v569
  %v571 = vsel %vm570, 0, %v569
  %v572 = vsub.s32 32, %v571
  %v573 = vshll.u32 %v564, %v571
  %v574 = vshrl.u32 %v556, %v572
  %v575 = vor.u32 %v573, %v574
  %v576 = vsub.s32 4294967266, %v571
  %v577 = vadd.s32 %v576, 127
  %v578 = vshll.u32 %v577, 23
  %v579 = vor.u32 4788187, %v578
  %v580 = vand.u32 2147483647, %v579
  %v582 = vcvt.s32.f32 %v575
  %v583 = vmul.f32 %v582, %v580
  %v584 = vxor.u32 %v583, 2147483648
  %v585 = vsel %vm502, %v584, %v583
  %v586 = vsub.s32 4, %v562
  %v587 = vsel %vm502, %v586, %v562
  %v588 = vsel %vm501, %v288, %v585
  %v589 = vsel %vm501, 0, %v587
  %v590 = vcosq.f32.pop %v588
  %v591 = vsinq.f32.pop %v588
  %vm592 = vweird.f32 %v288
  %v593 = vadd.s32 %v589, 3
  %v594 = vand.u32 %v593, 3
  %vm595 = vcmp.lt.s32.totalorder %v594, 2
  %vm596 = vcmp.eq.s32.totalorder %v594, 0
  %v597 = vxor.u32 %v591, 2147483648
  %v598 = vsel %vm596, %v590, %v597
  %vm599 = vcmp.eq.s32.totalorder %v594, 2
  %v600 = vxor.u32 %v590, 2147483648
  %v601 = vsel %vm599, %v600, %v591
  %v602 = vsel %vm595, %v598, %v601
  %v603 = vsel %vm592, nan, %v602
  %v604 = vand.u32 2147483647, %v289
  %vm605 = vcmp.le.f32.partialorder %v604, 0.7853982
  %vm606 = vcmp.lt.s32.totalorder %v289, 0
  %v607 = vand.u32 %v289, 2139095040
  %v608 = vshrl.u32 %v607, 23
  %v609 = vsub.s32 %v608, 127
  %v610 = vand.u32 2147483647, %v289
  %v611 = vand.u32 %v610, 8388607
  %v612 = vor.u32 %v611, 8388608
  %v613 = vsub.s32 0, %v612
  %v614 = vadd.s32 %v609, 1
  %vm615 = vcmp.gt.s32.totalorder %v614, 0
  %v616 = vsel %vm615, %v614, 0
  %v617 = vshrl.u32 %v616, 5
  %v618 = vand.u32 %v616, 31
  %v619 = vsub.s32 32, %v618
  %v620 = vshrl.u32 683565275, %v619
  %v621 = vshll.u32 683565275, %v618
  %v622 = vshrl.u32 2475754826, %v619
  %v623 = vor.u32 %v621, %v622
  %v624 = vshll.u32 2475754826, %v618
  %v625 = vshrl.u32 2131351028, %v619
  %v626 = vor.u32 %v624, %v625
  %v627 = vshll.u32 2131351028, %v618
  %v628 = vshrl.u32 2102212464, %v619
  %v629 = vor.u32 %v627, %v628
  %v630 = vshll.u32 2102212464, %v618
  %v631 = vshrl.u32 920167782, %v619
  %v632 = vor.u32 %v630, %v631
  %v633 = vshll.u32 920167782, %v618
  %v634 = vshrl.u32 1326507024, %v619
  %v635 = vor.u32 %v633, %v634
  %vm636 = vcmp.lt.s32.totalorder %v617, 1
  %vm637 = vcmp.lt.s32.totalorder %v617, 2
  %vm638 = vcmp.lt.s32.totalorder %v617, 3
  %vm639 = vcmp.lt.s32.totalorder %v617, 4
  %v640 = vsel %vm636, %v620, %v623
  %v641 = vsel %vm639, %v629, 2102212464
  %v642 = vsel %vm638, %v626, %v641
  %v643 = vsel %vm637, %v640, %v642
  %v644 = vsel %vm636, %v623, %v626
  %v645 = vsel %vm639, %v632, 920167782
  %v646 = vsel %vm638, %v629, %v645
  %v647 = vsel %vm637, %v644, %v646
  %v648 = vsel %vm636, %v626, %v629
  %v649 = vsel %vm639, %v635, 1326507024
  %v650 = vsel %vm638, %v632, %v649
  %v651 = vsel %vm637, %v648, %v650
  %v652 = vshll.u32 %v612, 8
  %v653 = vmul.u32.u64.compose %v652, %v651
  %v654 = vextract.low.u32 %v653
  %v655 = vextract.high.u32 %v653
  %v656 = vmul.u32.u64.compose %v652, %v647
  %v657 = vextract.low.u32 %v656
  %v658 = vextract.high.u32 %v656
  %v659 = vmul.u32 %v652, %v643
  %v660 = vadd.s32 %v655, %v657
  %vm661 = vc.u32 %v655, %v657
  %v662 = vadd.s32 %v658, 1
  %v663 = vsel %vm661, %v662, %v658
  %v664 = vadd.s32 %v659, %v663
  %v665 = vadd.s32 %v664, 536870912
  %v666 = vshrl.u32 %v665, 30
  %v667 = vshll.u32 %v666, 30
  %v668 = vsub.s32 %v664, %v667
  %vm669 = vcmp.lt.s32.totalorder %v668, 0
  %v670 = vsub.s32 0, %v668
  %v671 = vsel %vm669, %v670, %v668
  %v672 = vclz %v671
  %v673 = vsub.s32 %v672, 2
  %vm674 = vcmp.gt.s32.totalorder 0, %v673
  %v675 = vsel %vm674, 0, %v673
  %v676 = vsub.s32 32, %v675
  %v677 = vshll.u32 %v668, %v675
  %v678 = vshrl.u32 %v660, %v676
  %v679 = vor.u32 %v677, %v678
  %v680 = vsub.s32 4294967266, %v675
  %v681 = vadd.s32 %v680, 127
  %v682 = vshll.u32 %v681, 23
  %v683 = vor.u32 4788187, %v682
  %v684 = vand.u32 2147483647, %v683
  %v686 = vcvt.s32.f32 %v679
  %v687 = vmul.f32 %v686, %v684
  %v688 = vxor.u32 %v687, 2147483648
  %v689 = vsel %vm606, %v688, %v687
  %v690 = vsub.s32 4, %v666
  %v691 = vsel %vm606, %v690, %v666
  %v692 = vsel %vm605, %v289, %v689
  %v693 = vsel %vm605, 0, %v691
  %v694 = vcosq.f32.pop %v692
  %v695 = vsinq.f32.pop %v692
  %vm696 = vweird.f32 %v289
  %v697 = vadd.s32 %v693, 3
  %v698 = vand.u32 %v697, 3
  %vm699 = vcmp.lt.s32.totalorder %v698, 2
  %vm700 = vcmp.eq.s32.totalorder %v698, 0
  %v701 = vxor.u32 %v695, 2147483648
  %v702 = vsel %vm700, %v694, %v701
  %vm703 = vcmp.eq.s32.totalorder %v698, 2
  %v704 = vxor.u32 %v694, 2147483648
  %v705 = vsel %vm703, %v704, %v695
  %v706 = vsel %vm699, %v702, %v705
  %v707 = vsel %vm696, nan, %v706
  %v708 = vand.u32 2147483647, %v290
  %vm709 = vcmp.le.f32.partialorder %v708, 0.7853982
  %vm710 = vcmp.lt.s32.totalorder %v290, 0
  %v711 = vand.u32 %v290, 2139095040
  %v712 = vshrl.u32 %v711, 23
  %v713 = vsub.s32 %v712, 127
  %v714 = vand.u32 2147483647, %v290
  %v715 = vand.u32 %v714, 8388607
  %v716 = vor.u32 %v715, 8388608
  %v717 = vsub.s32 0, %v716
  %v718 = vadd.s32 %v713, 1
  %vm719 = vcmp.gt.s32.totalorder %v718, 0
  %v720 = vsel %vm719, %v718, 0
  %v721 = vshrl.u32 %v720, 5
  %v722 = vand.u32 %v720, 31
  %v723 = vsub.s32 32, %v722
  %v724 = vshrl.u32 683565275, %v723
  %v725 = vshll.u32 683565275, %v722
  %v726 = vshrl.u32 2475754826, %v723
  %v727 = vor.u32 %v725, %v726
  %v728 = vshll.u32 2475754826, %v722
  %v729 = vshrl.u32 2131351028, %v723
  %v730 = vor.u32 %v728, %v729
  %v731 = vshll.u32 2131351028, %v722
  %v732 = vshrl.u32 2102212464, %v723
  %v733 = vor.u32 %v731, %v732
  %v734 = vshll.u32 2102212464, %v722
  %v735 = vshrl.u32 920167782, %v723
  %v736 = vor.u32 %v734, %v735
  %v737 = vshll.u32 920167782, %v722
  %v738 = vshrl.u32 1326507024, %v723
  %v739 = vor.u32 %v737, %v738
  %vm740 = vcmp.lt.s32.totalorder %v721, 1
  %vm741 = vcmp.lt.s32.totalorder %v721, 2
  %vm742 = vcmp.lt.s32.totalorder %v721, 3
  %vm743 = vcmp.lt.s32.totalorder %v721, 4
  %v744 = vsel %vm740, %v724, %v727
  %v745 = vsel %vm743, %v733, 2102212464
  %v746 = vsel %vm742, %v730, %v745
  %v747 = vsel %vm741, %v744, %v746
  %v748 = vsel %vm740, %v727, %v730
  %v749 = vsel %vm743, %v736, 920167782
  %v750 = vsel %vm742, %v733, %v749
  %v751 = vsel %vm741, %v748, %v750
  %v752 = vsel %vm740, %v730, %v733
  %v753 = vsel %vm743, %v739, 1326507024
  %v754 = vsel %vm742, %v736, %v753
  %v755 = vsel %vm741, %v752, %v754
  %v756 = vshll.u32 %v716, 8
  %v757 = vmul.u32.u64.compose %v756, %v755
  %v758 = vextract.low.u32 %v757
  %v759 = vextract.high.u32 %v757
  %v760 = vmul.u32.u64.compose %v756, %v751
  %v761 = vextract.low.u32 %v760
  %v762 = vextract.high.u32 %v760
  %v763 = vmul.u32 %v756, %v747
  %v764 = vadd.s32 %v759, %v761
  %vm765 = vc.u32 %v759, %v761
  %v766 = vadd.s32 %v762, 1
  %v767 = vsel %vm765, %v766, %v762
  %v768 = vadd.s32 %v763, %v767
  %v769 = vadd.s32 %v768, 536870912
  %v770 = vshrl.u32 %v769, 30
  %v771 = vshll.u32 %v770, 30
  %v772 = vsub.s32 %v768, %v771
  %vm773 = vcmp.lt.s32.totalorder %v772, 0
  %v774 = vsub.s32 0, %v772
  %v775 = vsel %vm773, %v774, %v772
  %v776 = vclz %v775
  %v777 = vsub.s32 %v776, 2
  %vm778 = vcmp.gt.s32.totalorder 0, %v777
  %v779 = vsel %vm778, 0, %v777
  %v780 = vsub.s32 32, %v779
  %v781 = vshll.u32 %v772, %v779
  %v782 = vshrl.u32 %v764, %v780
  %v783 = vor.u32 %v781, %v782
  %v784 = vsub.s32 4294967266, %v779
  %v785 = vadd.s32 %v784, 127
  %v786 = vshll.u32 %v785, 23
  %v787 = vor.u32 4788187, %v786
  %v788 = vand.u32 2147483647, %v787
  %v790 = vcvt.s32.f32 %v783
  %v791 = vmul.f32 %v790, %v788
  %v792 = vxor.u32 %v791, 2147483648
  %v793 = vsel %vm710, %v792, %v791
  %v794 = vsub.s32 4, %v770
  %v795 = vsel %vm710, %v794, %v770
  %v796 = vsel %vm709, %v290, %v793
  %v797 = vsel %vm709, 0, %v795
  %v798 = vcosq.f32.pop %v796
  %v799 = vsinq.f32.pop %v796
  %vm800 = vweird.f32 %v290
  %v801 = vadd.s32 %v797, 3
  %v802 = vand.u32 %v801, 3
  %vm803 = vcmp.lt.s32.totalorder %v802, 2
  %vm804 = vcmp.eq.s32.totalorder %v802, 0
  %v805 = vxor.u32 %v799, 2147483648
  %v806 = vsel %vm804, %v798, %v805
  %vm807 = vcmp.eq.s32.totalorder %v802, 2
  %v808 = vxor.u32 %v798, 2147483648
  %v809 = vsel %vm807, %v808, %v799
  %v810 = vsel %vm803, %v806, %v809
  %v811 = vsel %vm800, nan, %v810
  %v812 = vand.u32 2147483647, %v291
  %vm813 = vcmp.le.f32.partialorder %v812, 0.7853982
  %vm814 = vcmp.lt.s32.totalorder %v291, 0
  %v815 = vand.u32 %v291, 2139095040
  %v816 = vshrl.u32 %v815, 23
  %v817 = vsub.s32 %v816, 127
  %v818 = vand.u32 2147483647, %v291
  %v819 = vand.u32 %v818, 8388607
  %v820 = vor.u32 %v819, 8388608
  %v821 = vsub.s32 0, %v820
  %v822 = vadd.s32 %v817, 1
  %vm823 = vcmp.gt.s32.totalorder %v822, 0
  %v824 = vsel %vm823, %v822, 0
  %v825 = vshrl.u32 %v824, 5
  %v826 = vand.u32 %v824, 31
  %v827 = vsub.s32 32, %v826
  %v828 = vshrl.u32 683565275, %v827
  %v829 = vshll.u32 683565275, %v826
  %v830 = vshrl.u32 2475754826, %v827
  %v831 = vor.u32 %v829, %v830
  %v832 = vshll.u32 2475754826, %v826
  %v833 = vshrl.u32 2131351028, %v827
  %v834 = vor.u32 %v832, %v833
  %v835 = vshll.u32 2131351028, %v826
  %v836 = vshrl.u32 2102212464, %v827
  %v837 = vor.u32 %v835, %v836
  %v838 = vshll.u32 2102212464, %v826
  %v839 = vshrl.u32 920167782, %v827
  %v840 = vor.u32 %v838, %v839
  %v841 = vshll.u32 920167782, %v826
  %v842 = vshrl.u32 1326507024, %v827
  %v843 = vor.u32 %v841, %v842
  %vm844 = vcmp.lt.s32.totalorder %v825, 1
  %vm845 = vcmp.lt.s32.totalorder %v825, 2
  %vm846 = vcmp.lt.s32.totalorder %v825, 3
  %vm847 = vcmp.lt.s32.totalorder %v825, 4
  %v848 = vsel %vm844, %v828, %v831
  %v849 = vsel %vm847, %v837, 2102212464
  %v850 = vsel %vm846, %v834, %v849
  %v851 = vsel %vm845, %v848, %v850
  %v852 = vsel %vm844, %v831, %v834
  %v853 = vsel %vm847, %v840, 920167782
  %v854 = vsel %vm846, %v837, %v853
  %v855 = vsel %vm845, %v852, %v854
  %v856 = vsel %vm844, %v834, %v837
  %v857 = vsel %vm847, %v843, 1326507024
  %v858 = vsel %vm846, %v840, %v857
  %v859 = vsel %vm845, %v856, %v858
  %v860 = vshll.u32 %v820, 8
  %v861 = vmul.u32.u64.compose %v860, %v859
  %v862 = vextract.low.u32 %v861
  %v863 = vextract.high.u32 %v861
  %v864 = vmul.u32.u64.compose %v860, %v855
  %v865 = vextract.low.u32 %v864
  %v866 = vextract.high.u32 %v864
  %v867 = vmul.u32 %v860, %v851
  %v868 = vadd.s32 %v863, %v865
  %vm869 = vc.u32 %v863, %v865
  %v870 = vadd.s32 %v866, 1
  %v871 = vsel %vm869, %v870, %v866
  %v872 = vadd.s32 %v867, %v871
  %v873 = vadd.s32 %v872, 536870912
  %v874 = vshrl.u32 %v873, 30
  %v875 = vshll.u32 %v874, 30
  %v876 = vsub.s32 %v872, %v875
  %vm877 = vcmp.lt.s32.totalorder %v876, 0
  %v878 = vsub.s32 0, %v876
  %v879 = vsel %vm877, %v878, %v876
  %v880 = vclz %v879
  %v881 = vsub.s32 %v880, 2
  %vm882 = vcmp.gt.s32.totalorder 0, %v881
  %v883 = vsel %vm882, 0, %v881
  %v884 = vsub.s32 32, %v883
  %v885 = vshll.u32 %v876, %v883
  %v886 = vshrl.u32 %v868, %v884
  %v887 = vor.u32 %v885, %v886
  %v888 = vsub.s32 4294967266, %v883
  %v889 = vadd.s32 %v888, 127
  %v890 = vshll.u32 %v889, 23
  %v891 = vor.u32 4788187, %v890
  %v892 = vand.u32 2147483647, %v891
  %v894 = vcvt.s32.f32 %v887
  %v895 = vmul.f32 %v894, %v892
  %v896 = vxor.u32 %v895, 2147483648
  %v897 = vsel %vm814, %v896, %v895
  %v898 = vsub.s32 4, %v874
  %v899 = vsel %vm814, %v898, %v874
  %v900 = vsel %vm813, %v291, %v897
  %v901 = vsel %vm813, 0, %v899
  %v902 = vcosq.f32.pop %v900
  %v903 = vsinq.f32.pop %v900
  %vm904 = vweird.f32 %v291
  %v905 = vadd.s32 %v901, 3
  %v906 = vand.u32 %v905, 3
  %vm907 = vcmp.lt.s32.totalorder %v906, 2
  %vm908 = vcmp.eq.s32.totalorder %v906, 0
  %v909 = vxor.u32 %v903, 2147483648
  %v910 = vsel %vm908, %v902, %v909
  %vm911 = vcmp.eq.s32.totalorder %v906, 2
  %v912 = vxor.u32 %v902, 2147483648
  %v913 = vsel %vm911, %v912, %v903
  %v914 = vsel %vm907, %v910, %v913
  %v915 = vsel %vm904, nan, %v914
  %v916 = vand.u32 2147483647, %v286
  %vm917 = vcmp.le.f32.partialorder %v916, 0.7853982
  %vm918 = vcmp.lt.s32.totalorder %v286, 0
  %v919 = vand.u32 %v286, 2139095040
  %v920 = vshrl.u32 %v919, 23
  %v921 = vsub.s32 %v920, 127
  %v922 = vand.u32 2147483647, %v286
  %v923 = vand.u32 %v922, 8388607
  %v924 = vor.u32 %v923, 8388608
  %v925 = vsub.s32 0, %v924
  %v926 = vadd.s32 %v921, 1
  %vm927 = vcmp.gt.s32.totalorder %v926, 0
  %v928 = vsel %vm927, %v926, 0
  %v929 = vshrl.u32 %v928, 5
  %v930 = vand.u32 %v928, 31
  %v931 = vsub.s32 32, %v930
  %v932 = vshrl.u32 683565275, %v931
  %v933 = vshll.u32 683565275, %v930
  %v934 = vshrl.u32 2475754826, %v931
  %v935 = vor.u32 %v933, %v934
  %v936 = vshll.u32 2475754826, %v930
  %v937 = vshrl.u32 2131351028, %v931
  %v938 = vor.u32 %v936, %v937
  %v939 = vshll.u32 2131351028, %v930
  %v940 = vshrl.u32 2102212464, %v931
  %v941 = vor.u32 %v939, %v940
  %v942 = vshll.u32 2102212464, %v930
  %v943 = vshrl.u32 920167782, %v931
  %v944 = vor.u32 %v942, %v943
  %v945 = vshll.u32 920167782, %v930
  %v946 = vshrl.u32 1326507024, %v931
  %v947 = vor.u32 %v945, %v946
  %vm948 = vcmp.lt.s32.totalorder %v929, 1
  %vm949 = vcmp.lt.s32.totalorder %v929, 2
  %vm950 = vcmp.lt.s32.totalorder %v929, 3
  %vm951 = vcmp.lt.s32.totalorder %v929, 4
  %v952 = vsel %vm948, %v932, %v935
  %v953 = vsel %vm951, %v941, 2102212464
  %v954 = vsel %vm950, %v938, %v953
  %v955 = vsel %vm949, %v952, %v954
  %v956 = vsel %vm948, %v935, %v938
  %v957 = vsel %vm951, %v944, 920167782
  %v958 = vsel %vm950, %v941, %v957
  %v959 = vsel %vm949, %v956, %v958
  %v960 = vsel %vm948, %v938, %v941
  %v961 = vsel %vm951, %v947, 1326507024
  %v962 = vsel %vm950, %v944, %v961
  %v963 = vsel %vm949, %v960, %v962
  %v964 = vshll.u32 %v924, 8
  %v965 = vmul.u32.u64.compose %v964, %v963
  %v966 = vextract.low.u32 %v965
  %v967 = vextract.high.u32 %v965
  %v968 = vmul.u32.u64.compose %v964, %v959
  %v969 = vextract.low.u32 %v968
  %v970 = vextract.high.u32 %v968
  %v971 = vmul.u32 %v964, %v955
  %v972 = vadd.s32 %v967, %v969
  %vm973 = vc.u32 %v967, %v969
  %v974 = vadd.s32 %v970, 1
  %v975 = vsel %vm973, %v974, %v970
  %v976 = vadd.s32 %v971, %v975
  %v977 = vadd.s32 %v976, 536870912
  %v978 = vshrl.u32 %v977, 30
  %v979 = vshll.u32 %v978, 30
  %v980 = vsub.s32 %v976, %v979
  %vm981 = vcmp.lt.s32.totalorder %v980, 0
  %v982 = vsub.s32 0, %v980
  %v983 = vsel %vm981, %v982, %v980
  %v984 = vclz %v983
  %v985 = vsub.s32 %v984, 2
  %vm986 = vcmp.gt.s32.totalorder 0, %v985
  %v987 = vsel %vm986, 0, %v985
  %v988 = vsub.s32 32, %v987
  %v989 = vshll.u32 %v980, %v987
  %v990 = vshrl.u32 %v972, %v988
  %v991 = vor.u32 %v989, %v990
  %v992 = vsub.s32 4294967266, %v987
  %v993 = vadd.s32 %v992, 127
  %v994 = vshll.u32 %v993, 23
  %v995 = vor.u32 4788187, %v994
  %v996 = vand.u32 2147483647, %v995
  %v998 = vcvt.s32.f32 %v991
  %v999 = vmul.f32 %v998, %v996
  %v1000 = vxor.u32 %v999, 2147483648
  %v1001 = vsel %vm918, %v1000, %v999
  %v1002 = vsub.s32 4, %v978
  %v1003 = vsel %vm918, %v1002, %v978
  %v1004 = vsel %vm917, %v286, %v1001
  %v1005 = vsel %vm917, 0, %v1003
  %v1006 = vcosq.f32.pop %v1004
  %v1007 = vsinq.f32.pop %v1004
  %vm1008 = vweird.f32 %v286
  %v1009 = vand.u32 %v1005, 3
  %vm1010 = vcmp.lt.s32.totalorder %v1009, 2
  %vm1011 = vcmp.eq.s32.totalorder %v1009, 0
  %v1012 = vxor.u32 %v1007, 2147483648
  %v1013 = vsel %vm1011, %v1006, %v1012
  %vm1014 = vcmp.eq.s32.totalorder %v1009, 2
  %v1015 = vxor.u32 %v1006, 2147483648
  %v1016 = vsel %vm1014, %v1015, %v1007
  %v1017 = vsel %vm1010, %v1013, %v1016
  %v1018 = vsel %vm1008, nan, %v1017
  %v1019 = vand.u32 2147483647, %v287
  %vm1020 = vcmp.le.f32.partialorder %v1019, 0.7853982
  %vm1021 = vcmp.lt.s32.totalorder %v287, 0
  %v1022 = vand.u32 %v287, 2139095040
  %v1023 = vshrl.u32 %v1022, 23
  %v1024 = vsub.s32 %v1023, 127
  %v1025 = vand.u32 2147483647, %v287
  %v1026 = vand.u32 %v1025, 8388607
  %v1027 = vor.u32 %v1026, 8388608
  %v1028 = vsub.s32 0, %v1027
  %v1029 = vadd.s32 %v1024, 1
  %vm1030 = vcmp.gt.s32.totalorder %v1029, 0
  %v1031 = vsel %vm1030, %v1029, 0
  %v1032 = vshrl.u32 %v1031, 5
  %v1033 = vand.u32 %v1031, 31
  %v1034 = vsub.s32 32, %v1033
  %v1035 = vshrl.u32 683565275, %v1034
  %v1036 = vshll.u32 683565275, %v1033
  %v1037 = vshrl.u32 2475754826, %v1034
  %v1038 = vor.u32 %v1036, %v1037
  %v1039 = vshll.u32 2475754826, %v1033
  %v1040 = vshrl.u32 2131351028, %v1034
  %v1041 = vor.u32 %v1039, %v1040
  %v1042 = vshll.u32 2131351028, %v1033
  %v1043 = vshrl.u32 2102212464, %v1034
  %v1044 = vor.u32 %v1042, %v1043
  %v1045 = vshll.u32 2102212464, %v1033
  %v1046 = vshrl.u32 920167782, %v1034
  %v1047 = vor.u32 %v1045, %v1046
  %v1048 = vshll.u32 920167782, %v1033
  %v1049 = vshrl.u32 1326507024, %v1034
  %v1050 = vor.u32 %v1048, %v1049
  %vm1051 = vcmp.lt.s32.totalorder %v1032, 1
  %vm1052 = vcmp.lt.s32.totalorder %v1032, 2
  %vm1053 = vcmp.lt.s32.totalorder %v1032, 3
  %vm1054 = vcmp.lt.s32.totalorder %v1032, 4
  %v1055 = vsel %vm1051, %v1035, %v1038
  %v1056 = vsel %vm1054, %v1044, 2102212464
  %v1057 = vsel %vm1053, %v1041, %v1056
  %v1058 = vsel %vm1052, %v1055, %v1057
  %v1059 = vsel %vm1051, %v1038, %v1041
  %v1060 = vsel %vm1054, %v1047, 920167782
  %v1061 = vsel %vm1053, %v1044, %v1060
  %v1062 = vsel %vm1052, %v1059, %v1061
  %v1063 = vsel %vm1051, %v1041, %v1044
  %v1064 = vsel %vm1054, %v1050, 1326507024
  %v1065 = vsel %vm1053, %v1047, %v1064
  %v1066 = vsel %vm1052, %v1063, %v1065
  %v1067 = vshll.u32 %v1027, 8
  %v1068 = vmul.u32.u64.compose %v1067, %v1066
  %v1069 = vextract.low.u32 %v1068
  %v1070 = vextract.high.u32 %v1068
  %v1071 = vmul.u32.u64.compose %v1067, %v1062
  %v1072 = vextract.low.u32 %v1071
  %v1073 = vextract.high.u32 %v1071
  %v1074 = vmul.u32 %v1067, %v1058
  %v1075 = vadd.s32 %v1070, %v1072
  %vm1076 = vc.u32 %v1070, %v1072
  %v1077 = vadd.s32 %v1073, 1
  %v1078 = vsel %vm1076, %v1077, %v1073
  %v1079 = vadd.s32 %v1074, %v1078
  %v1080 = vadd.s32 %v1079, 536870912
  %v1081 = vshrl.u32 %v1080, 30
  %v1082 = vshll.u32 %v1081, 30
  %v1083 = vsub.s32 %v1079, %v1082
  %vm1084 = vcmp.lt.s32.totalorder %v1083, 0
  %v1085 = vsub.s32 0, %v1083
  %v1086 = vsel %vm1084, %v1085, %v1083
  %v1087 = vclz %v1086
  %v1088 = vsub.s32 %v1087, 2
  %vm1089 = vcmp.gt.s32.totalorder 0, %v1088
  %v1090 = vsel %vm1089, 0, %v1088
  %v1091 = vsub.s32 32, %v1090
  %v1092 = vshll.u32 %v1083, %v1090
  %v1093 = vshrl.u32 %v1075, %v1091
  %v1094 = vor.u32 %v1092, %v1093
  %v1095 = vsub.s32 4294967266, %v1090
  %v1096 = vadd.s32 %v1095, 127
  %v1097 = vshll.u32 %v1096, 23
  %v1098 = vor.u32 4788187, %v1097
  %v1099 = vand.u32 2147483647, %v1098
  %v1101 = vcvt.s32.f32 %v1094
  %v1102 = vmul.f32 %v1101, %v1099
  %v1103 = vxor.u32 %v1102, 2147483648
  %v1104 = vsel %vm1021, %v1103, %v1102
  %v1105 = vsub.s32 4, %v1081
  %v1106 = vsel %vm1021, %v1105, %v1081
  %v1107 = vsel %vm1020, %v287, %v1104
  %v1108 = vsel %vm1020, 0, %v1106
  %v1109 = vcosq.f32.pop %v1107
  %v1110 = vsinq.f32.pop %v1107
  %vm1111 = vweird.f32 %v287
  %v1112 = vand.u32 %v1108, 3
  %vm1113 = vcmp.lt.s32.totalorder %v1112, 2
  %vm1114 = vcmp.eq.s32.totalorder %v1112, 0
  %v1115 = vxor.u32 %v1110, 2147483648
  %v1116 = vsel %vm1114, %v1109, %v1115
  %vm1117 = vcmp.eq.s32.totalorder %v1112, 2
  %v1118 = vxor.u32 %v1109, 2147483648
  %v1119 = vsel %vm1117, %v1118, %v1110
  %v1120 = vsel %vm1113, %v1116, %v1119
  %v1121 = vsel %vm1111, nan, %v1120
  %v1122 = vand.u32 2147483647, %v288
  %vm1123 = vcmp.le.f32.partialorder %v1122, 0.7853982
  %vm1124 = vcmp.lt.s32.totalorder %v288, 0
  %v1125 = vand.u32 %v288, 2139095040
  %v1126 = vshrl.u32 %v1125, 23
  %v1127 = vsub.s32 %v1126, 127
  %v1128 = vand.u32 2147483647, %v288
  %v1129 = vand.u32 %v1128, 8388607
  %v1130 = vor.u32 %v1129, 8388608
  %v1131 = vsub.s32 0, %v1130
  %v1132 = vadd.s32 %v1127, 1
  %vm1133 = vcmp.gt.s32.totalorder %v1132, 0
  %v1134 = vsel %vm1133, %v1132, 0
  %v1135 = vshrl.u32 %v1134, 5
  %v1136 = vand.u32 %v1134, 31
  %v1137 = vsub.s32 32, %v1136
  %v1138 = vshrl.u32 683565275, %v1137
  %v1139 = vshll.u32 683565275, %v1136
  %v1140 = vshrl.u32 2475754826, %v1137
  %v1141 = vor.u32 %v1139, %v1140
  %v1142 = vshll.u32 2475754826, %v1136
  %v1143 = vshrl.u32 2131351028, %v1137
  %v1144 = vor.u32 %v1142, %v1143
  %v1145 = vshll.u32 2131351028, %v1136
  %v1146 = vshrl.u32 2102212464, %v1137
  %v1147 = vor.u32 %v1145, %v1146
  %v1148 = vshll.u32 2102212464, %v1136
  %v1149 = vshrl.u32 920167782, %v1137
  %v1150 = vor.u32 %v1148, %v1149
  %v1151 = vshll.u32 920167782, %v1136
  %v1152 = vshrl.u32 1326507024, %v1137
  %v1153 = vor.u32 %v1151, %v1152
  %vm1154 = vcmp.lt.s32.totalorder %v1135, 1
  %vm1155 = vcmp.lt.s32.totalorder %v1135, 2
  %vm1156 = vcmp.lt.s32.totalorder %v1135, 3
  %vm1157 = vcmp.lt.s32.totalorder %v1135, 4
  %v1158 = vsel %vm1154, %v1138, %v1141
  %v1159 = vsel %vm1157, %v1147, 2102212464
  %v1160 = vsel %vm1156, %v1144, %v1159
  %v1161 = vsel %vm1155, %v1158, %v1160
  %v1162 = vsel %vm1154, %v1141, %v1144
  %v1163 = vsel %vm1157, %v1150, 920167782
  %v1164 = vsel %vm1156, %v1147, %v1163
  %v1165 = vsel %vm1155, %v1162, %v1164
  %v1166 = vsel %vm1154, %v1144, %v1147
  %v1167 = vsel %vm1157, %v1153, 1326507024
  %v1168 = vsel %vm1156, %v1150, %v1167
  %v1169 = vsel %vm1155, %v1166, %v1168
  %v1170 = vshll.u32 %v1130, 8
  %v1171 = vmul.u32.u64.compose %v1170, %v1169
  %v1172 = vextract.low.u32 %v1171
  %v1173 = vextract.high.u32 %v1171
  %v1174 = vmul.u32.u64.compose %v1170, %v1165
  %v1175 = vextract.low.u32 %v1174
  %v1176 = vextract.high.u32 %v1174
  %v1177 = vmul.u32 %v1170, %v1161
  %v1178 = vadd.s32 %v1173, %v1175
  %vm1179 = vc.u32 %v1173, %v1175
  %v1180 = vadd.s32 %v1176, 1
  %v1181 = vsel %vm1179, %v1180, %v1176
  %v1182 = vadd.s32 %v1177, %v1181
  %v1183 = vadd.s32 %v1182, 536870912
  %v1184 = vshrl.u32 %v1183, 30
  %v1185 = vshll.u32 %v1184, 30
  %v1186 = vsub.s32 %v1182, %v1185
  %vm1187 = vcmp.lt.s32.totalorder %v1186, 0
  %v1188 = vsub.s32 0, %v1186
  %v1189 = vsel %vm1187, %v1188, %v1186
  %v1190 = vclz %v1189
  %v1191 = vsub.s32 %v1190, 2
  %vm1192 = vcmp.gt.s32.totalorder 0, %v1191
  %v1193 = vsel %vm1192, 0, %v1191
  %v1194 = vsub.s32 32, %v1193
  %v1195 = vshll.u32 %v1186, %v1193
  %v1196 = vshrl.u32 %v1178, %v1194
  %v1197 = vor.u32 %v1195, %v1196
  %v1198 = vsub.s32 4294967266, %v1193
  %v1199 = vadd.s32 %v1198, 127
  %v1200 = vshll.u32 %v1199, 23
  %v1201 = vor.u32 4788187, %v1200
  %v1202 = vand.u32 2147483647, %v1201
  %v1204 = vcvt.s32.f32 %v1197
  %v1205 = vmul.f32 %v1204, %v1202
  %v1206 = vxor.u32 %v1205, 2147483648
  %v1207 = vsel %vm1124, %v1206, %v1205
  %v1208 = vsub.s32 4, %v1184
  %v1209 = vsel %vm1124, %v1208, %v1184
  %v1210 = vsel %vm1123, %v288, %v1207
  %v1211 = vsel %vm1123, 0, %v1209
  %v1212 = vcosq.f32.pop %v1210
  %v1213 = vsinq.f32.pop %v1210
  %vm1214 = vweird.f32 %v288
  %v1215 = vand.u32 %v1211, 3
  %vm1216 = vcmp.lt.s32.totalorder %v1215, 2
  %vm1217 = vcmp.eq.s32.totalorder %v1215, 0
  %v1218 = vxor.u32 %v1213, 2147483648
  %v1219 = vsel %vm1217, %v1212, %v1218
  %vm1220 = vcmp.eq.s32.totalorder %v1215, 2
  %v1221 = vxor.u32 %v1212, 2147483648
  %v1222 = vsel %vm1220, %v1221, %v1213
  %v1223 = vsel %vm1216, %v1219, %v1222
  %v1224 = vsel %vm1214, nan, %v1223
  %v1225 = vand.u32 2147483647, %v289
  %vm1226 = vcmp.le.f32.partialorder %v1225, 0.7853982
  %vm1227 = vcmp.lt.s32.totalorder %v289, 0
  %v1228 = vand.u32 %v289, 2139095040
  %v1229 = vshrl.u32 %v1228, 23
  %v1230 = vsub.s32 %v1229, 127
  %v1231 = vand.u32 2147483647, %v289
  %v1232 = vand.u32 %v1231, 8388607
  %v1233 = vor.u32 %v1232, 8388608
  %v1234 = vsub.s32 0, %v1233
  %v1235 = vadd.s32 %v1230, 1
  %vm1236 = vcmp.gt.s32.totalorder %v1235, 0
  %v1237 = vsel %vm1236, %v1235, 0
  %v1238 = vshrl.u32 %v1237, 5
  %v1239 = vand.u32 %v1237, 31
  %v1240 = vsub.s32 32, %v1239
  %v1241 = vshrl.u32 683565275, %v1240
  %v1242 = vshll.u32 683565275, %v1239
  %v1243 = vshrl.u32 2475754826, %v1240
  %v1244 = vor.u32 %v1242, %v1243
  %v1245 = vshll.u32 2475754826, %v1239
  %v1246 = vshrl.u32 2131351028, %v1240
  %v1247 = vor.u32 %v1245, %v1246
  %v1248 = vshll.u32 2131351028, %v1239
  %v1249 = vshrl.u32 2102212464, %v1240
  %v1250 = vor.u32 %v1248, %v1249
  %v1251 = vshll.u32 2102212464, %v1239
  %v1252 = vshrl.u32 920167782, %v1240
  %v1253 = vor.u32 %v1251, %v1252
  %v1254 = vshll.u32 920167782, %v1239
  %v1255 = vshrl.u32 1326507024, %v1240
  %v1256 = vor.u32 %v1254, %v1255
  %vm1257 = vcmp.lt.s32.totalorder %v1238, 1
  %vm1258 = vcmp.lt.s32.totalorder %v1238, 2
  %vm1259 = vcmp.lt.s32.totalorder %v1238, 3
  %vm1260 = vcmp.lt.s32.totalorder %v1238, 4
  %v1261 = vsel %vm1257, %v1241, %v1244
  %v1262 = vsel %vm1260, %v1250, 2102212464
  %v1263 = vsel %vm1259, %v1247, %v1262
  %v1264 = vsel %vm1258, %v1261, %v1263
  %v1265 = vsel %vm1257, %v1244, %v1247
  %v1266 = vsel %vm1260, %v1253, 920167782
  %v1267 = vsel %vm1259, %v1250, %v1266
  %v1268 = vsel %vm1258, %v1265, %v1267
  %v1269 = vsel %vm1257, %v1247, %v1250
  %v1270 = vsel %vm1260, %v1256, 1326507024
  %v1271 = vsel %vm1259, %v1253, %v1270
  %v1272 = vsel %vm1258, %v1269, %v1271
  %v1273 = vshll.u32 %v1233, 8
  %v1274 = vmul.u32.u64.compose %v1273, %v1272
  %v1275 = vextract.low.u32 %v1274
  %v1276 = vextract.high.u32 %v1274
  %v1277 = vmul.u32.u64.compose %v1273, %v1268
  %v1278 = vextract.low.u32 %v1277
  %v1279 = vextract.high.u32 %v1277
  %v1280 = vmul.u32 %v1273, %v1264
  %v1281 = vadd.s32 %v1276, %v1278
  %vm1282 = vc.u32 %v1276, %v1278
  %v1283 = vadd.s32 %v1279, 1
  %v1284 = vsel %vm1282, %v1283, %v1279
  %v1285 = vadd.s32 %v1280, %v1284
  %v1286 = vadd.s32 %v1285, 536870912
  %v1287 = vshrl.u32 %v1286, 30
  %v1288 = vshll.u32 %v1287, 30
  %v1289 = vsub.s32 %v1285, %v1288
  %vm1290 = vcmp.lt.s32.totalorder %v1289, 0
  %v1291 = vsub.s32 0, %v1289
  %v1292 = vsel %vm1290, %v1291, %v1289
  %v1293 = vclz %v1292
  %v1294 = vsub.s32 %v1293, 2
  %vm1295 = vcmp.gt.s32.totalorder 0, %v1294
  %v1296 = vsel %vm1295, 0, %v1294
  %v1297 = vsub.s32 32, %v1296
  %v1298 = vshll.u32 %v1289, %v1296
  %v1299 = vshrl.u32 %v1281, %v1297
  %v1300 = vor.u32 %v1298, %v1299
  %v1301 = vsub.s32 4294967266, %v1296
  %v1302 = vadd.s32 %v1301, 127
  %v1303 = vshll.u32 %v1302, 23
  %v1304 = vor.u32 4788187, %v1303
  %v1305 = vand.u32 2147483647, %v1304
  %v1307 = vcvt.s32.f32 %v1300
  %v1308 = vmul.f32 %v1307, %v1305
  %v1309 = vxor.u32 %v1308, 2147483648
  %v1310 = vsel %vm1227, %v1309, %v1308
  %v1311 = vsub.s32 4, %v1287
  %v1312 = vsel %vm1227, %v1311, %v1287
  %v1313 = vsel %vm1226, %v289, %v1310
  %v1314 = vsel %vm1226, 0, %v1312
  %v1315 = vcosq.f32.pop %v1313
  %v1316 = vsinq.f32.pop %v1313
  %vm1317 = vweird.f32 %v289
  %v1318 = vand.u32 %v1314, 3
  %vm1319 = vcmp.lt.s32.totalorder %v1318, 2
  %vm1320 = vcmp.eq.s32.totalorder %v1318, 0
  %v1321 = vxor.u32 %v1316, 2147483648
  %v1322 = vsel %vm1320, %v1315, %v1321
  %vm1323 = vcmp.eq.s32.totalorder %v1318, 2
  %v1324 = vxor.u32 %v1315, 2147483648
  %v1325 = vsel %vm1323, %v1324, %v1316
  %v1326 = vsel %vm1319, %v1322, %v1325
  %v1327 = vsel %vm1317, nan, %v1326
  %v1328 = vand.u32 2147483647, %v290
  %vm1329 = vcmp.le.f32.partialorder %v1328, 0.7853982
  %vm1330 = vcmp.lt.s32.totalorder %v290, 0
  %v1331 = vand.u32 %v290, 2139095040
  %v1332 = vshrl.u32 %v1331, 23
  %v1333 = vsub.s32 %v1332, 127
  %v1334 = vand.u32 2147483647, %v290
  %v1335 = vand.u32 %v1334, 8388607
  %v1336 = vor.u32 %v1335, 8388608
  %v1337 = vsub.s32 0, %v1336
  %v1338 = vadd.s32 %v1333, 1
  %vm1339 = vcmp.gt.s32.totalorder %v1338, 0
  %v1340 = vsel %vm1339, %v1338, 0
  %v1341 = vshrl.u32 %v1340, 5
  %v1342 = vand.u32 %v1340, 31
  %v1343 = vsub.s32 32, %v1342
  %v1344 = vshrl.u32 683565275, %v1343
  %v1345 = vshll.u32 683565275, %v1342
  %v1346 = vshrl.u32 2475754826, %v1343
  %v1347 = vor.u32 %v1345, %v1346
  %v1348 = vshll.u32 2475754826, %v1342
  %v1349 = vshrl.u32 2131351028, %v1343
  %v1350 = vor.u32 %v1348, %v1349
  %v1351 = vshll.u32 2131351028, %v1342
  %v1352 = vshrl.u32 2102212464, %v1343
  %v1353 = vor.u32 %v1351, %v1352
  %v1354 = vshll.u32 2102212464, %v1342
  %v1355 = vshrl.u32 920167782, %v1343
  %v1356 = vor.u32 %v1354, %v1355
  %v1357 = vshll.u32 920167782, %v1342
  %v1358 = vshrl.u32 1326507024, %v1343
  %v1359 = vor.u32 %v1357, %v1358
  %vm1360 = vcmp.lt.s32.totalorder %v1341, 1
  %vm1361 = vcmp.lt.s32.totalorder %v1341, 2
  %vm1362 = vcmp.lt.s32.totalorder %v1341, 3
  %vm1363 = vcmp.lt.s32.totalorder %v1341, 4
  %v1364 = vsel %vm1360, %v1344, %v1347
  %v1365 = vsel %vm1363, %v1353, 2102212464
  %v1366 = vsel %vm1362, %v1350, %v1365
  %v1367 = vsel %vm1361, %v1364, %v1366
  %v1368 = vsel %vm1360, %v1347, %v1350
  %v1369 = vsel %vm1363, %v1356, 920167782
  %v1370 = vsel %vm1362, %v1353, %v1369
  %v1371 = vsel %vm1361, %v1368, %v1370
  %v1372 = vsel %vm1360, %v1350, %v1353
  %v1373 = vsel %vm1363, %v1359, 1326507024
  %v1374 = vsel %vm1362, %v1356, %v1373
  %v1375 = vsel %vm1361, %v1372, %v1374
  %v1376 = vshll.u32 %v1336, 8
  %v1377 = vmul.u32.u64.compose %v1376, %v1375
  %v1378 = vextract.low.u32 %v1377
  %v1379 = vextract.high.u32 %v1377
  %v1380 = vmul.u32.u64.compose %v1376, %v1371
  %v1381 = vextract.low.u32 %v1380
  %v1382 = vextract.high.u32 %v1380
  %v1383 = vmul.u32 %v1376, %v1367
  %v1384 = vadd.s32 %v1379, %v1381
  %vm1385 = vc.u32 %v1379, %v1381
  %v1386 = vadd.s32 %v1382, 1
  %v1387 = vsel %vm1385, %v1386, %v1382
  %v1388 = vadd.s32 %v1383, %v1387
  %v1389 = vadd.s32 %v1388, 536870912
  %v1390 = vshrl.u32 %v1389, 30
  %v1391 = vshll.u32 %v1390, 30
  %v1392 = vsub.s32 %v1388, %v1391
  %vm1393 = vcmp.lt.s32.totalorder %v1392, 0
  %v1394 = vsub.s32 0, %v1392
  %v1395 = vsel %vm1393, %v1394, %v1392
  %v1396 = vclz %v1395
  %v1397 = vsub.s32 %v1396, 2
  %vm1398 = vcmp.gt.s32.totalorder 0, %v1397
  %v1399 = vsel %vm1398, 0, %v1397
  %v1400 = vsub.s32 32, %v1399
  %v1401 = vshll.u32 %v1392, %v1399
  %v1402 = vshrl.u32 %v1384, %v1400
  %v1403 = vor.u32 %v1401, %v1402
  %v1404 = vsub.s32 4294967266, %v1399
  %v1405 = vadd.s32 %v1404, 127
  %v1406 = vshll.u32 %v1405, 23
  %v1407 = vor.u32 4788187, %v1406
  %v1408 = vand.u32 2147483647, %v1407
  %v1410 = vcvt.s32.f32 %v1403
  %v1411 = vmul.f32 %v1410, %v1408
  %v1412 = vxor.u32 %v1411, 2147483648
  %v1413 = vsel %vm1330, %v1412, %v1411
  %v1414 = vsub.s32 4, %v1390
  %v1415 = vsel %vm1330, %v1414, %v1390
  %v1416 = vsel %vm1329, %v290, %v1413
  %v1417 = vsel %vm1329, 0, %v1415
  %v1418 = vcosq.f32.pop %v1416
  %v1419 = vsinq.f32.pop %v1416
  %vm1420 = vweird.f32 %v290
  %v1421 = vand.u32 %v1417, 3
  %vm1422 = vcmp.lt.s32.totalorder %v1421, 2
  %vm1423 = vcmp.eq.s32.totalorder %v1421, 0
  %v1424 = vxor.u32 %v1419, 2147483648
  %v1425 = vsel %vm1423, %v1418, %v1424
  %vm1426 = vcmp.eq.s32.totalorder %v1421, 2
  %v1427 = vxor.u32 %v1418, 2147483648
  %v1428 = vsel %vm1426, %v1427, %v1419
  %v1429 = vsel %vm1422, %v1425, %v1428
  %v1430 = vsel %vm1420, nan, %v1429
  %v1431 = vand.u32 2147483647, %v291
  %vm1432 = vcmp.le.f32.partialorder %v1431, 0.7853982
  %vm1433 = vcmp.lt.s32.totalorder %v291, 0
  %v1434 = vand.u32 %v291, 2139095040
  %v1435 = vshrl.u32 %v1434, 23
  %v1436 = vsub.s32 %v1435, 127
  %v1437 = vand.u32 2147483647, %v291
  %v1438 = vand.u32 %v1437, 8388607
  %v1439 = vor.u32 %v1438, 8388608
  %v1440 = vsub.s32 0, %v1439
  %v1441 = vadd.s32 %v1436, 1
  %vm1442 = vcmp.gt.s32.totalorder %v1441, 0
  %v1443 = vsel %vm1442, %v1441, 0
  %v1444 = vshrl.u32 %v1443, 5
  %v1445 = vand.u32 %v1443, 31
  %v1446 = vsub.s32 32, %v1445
  %v1447 = vshrl.u32 683565275, %v1446
  %v1448 = vshll.u32 683565275, %v1445
  %v1449 = vshrl.u32 2475754826, %v1446
  %v1450 = vor.u32 %v1448, %v1449
  %v1451 = vshll.u32 2475754826, %v1445
  %v1452 = vshrl.u32 2131351028, %v1446
  %v1453 = vor.u32 %v1451, %v1452
  %v1454 = vshll.u32 2131351028, %v1445
  %v1455 = vshrl.u32 2102212464, %v1446
  %v1456 = vor.u32 %v1454, %v1455
  %v1457 = vshll.u32 2102212464, %v1445
  %v1458 = vshrl.u32 920167782, %v1446
  %v1459 = vor.u32 %v1457, %v1458
  %v1460 = vshll.u32 920167782, %v1445
  %v1461 = vshrl.u32 1326507024, %v1446
  %v1462 = vor.u32 %v1460, %v1461
  %vm1463 = vcmp.lt.s32.totalorder %v1444, 1
  %vm1464 = vcmp.lt.s32.totalorder %v1444, 2
  %vm1465 = vcmp.lt.s32.totalorder %v1444, 3
  %vm1466 = vcmp.lt.s32.totalorder %v1444, 4
  %v1467 = vsel %vm1463, %v1447, %v1450
  %v1468 = vsel %vm1466, %v1456, 2102212464
  %v1469 = vsel %vm1465, %v1453, %v1468
  %v1470 = vsel %vm1464, %v1467, %v1469
  %v1471 = vsel %vm1463, %v1450, %v1453
  %v1472 = vsel %vm1466, %v1459, 920167782
  %v1473 = vsel %vm1465, %v1456, %v1472
  %v1474 = vsel %vm1464, %v1471, %v1473
  %v1475 = vsel %vm1463, %v1453, %v1456
  %v1476 = vsel %vm1466, %v1462, 1326507024
  %v1477 = vsel %vm1465, %v1459, %v1476
  %v1478 = vsel %vm1464, %v1475, %v1477
  %v1479 = vshll.u32 %v1439, 8
  %v1480 = vmul.u32.u64.compose %v1479, %v1478
  %v1481 = vextract.low.u32 %v1480
  %v1482 = vextract.high.u32 %v1480
  %v1483 = vmul.u32.u64.compose %v1479, %v1474
  %v1484 = vextract.low.u32 %v1483
  %v1485 = vextract.high.u32 %v1483
  %v1486 = vmul.u32 %v1479, %v1470
  %v1487 = vadd.s32 %v1482, %v1484
  %vm1488 = vc.u32 %v1482, %v1484
  %v1489 = vadd.s32 %v1485, 1
  %v1490 = vsel %vm1488, %v1489, %v1485
  %v1491 = vadd.s32 %v1486, %v1490
  %v1492 = vadd.s32 %v1491, 536870912
  %v1493 = vshrl.u32 %v1492, 30
  %v1494 = vshll.u32 %v1493, 30
  %v1495 = vsub.s32 %v1491, %v1494
  %vm1496 = vcmp.lt.s32.totalorder %v1495, 0
  %v1497 = vsub.s32 0, %v1495
  %v1498 = vsel %vm1496, %v1497, %v1495
  %v1499 = vclz %v1498
  %v1500 = vsub.s32 %v1499, 2
  %vm1501 = vcmp.gt.s32.totalorder 0, %v1500
  %v1502 = vsel %vm1501, 0, %v1500
  %v1503 = vsub.s32 32, %v1502
  %v1504 = vshll.u32 %v1495, %v1502
  %v1505 = vshrl.u32 %v1487, %v1503
  %v1506 = vor.u32 %v1504, %v1505
  %v1507 = vsub.s32 4294967266, %v1502
  %v1508 = vadd.s32 %v1507, 127
  %v1509 = vshll.u32 %v1508, 23
  %v1510 = vor.u32 4788187, %v1509
  %v1511 = vand.u32 2147483647, %v1510
  %v1513 = vcvt.s32.f32 %v1506
  %v1514 = vmul.f32 %v1513, %v1511
  %v1515 = vxor.u32 %v1514, 2147483648
  %v1516 = vsel %vm1433, %v1515, %v1514
  %v1517 = vsub.s32 4, %v1493
  %v1518 = vsel %vm1433, %v1517, %v1493
  %v1519 = vsel %vm1432, %v291, %v1516
  %v1520 = vsel %vm1432, 0, %v1518
  %v1521 = vcosq.f32.pop %v1519
  %v1522 = vsinq.f32.pop %v1519
  %vm1523 = vweird.f32 %v291
  %v1524 = vand.u32 %v1520, 3
  %vm1525 = vcmp.lt.s32.totalorder %v1524, 2
  %vm1526 = vcmp.eq.s32.totalorder %v1524, 0
  %v1527 = vxor.u32 %v1522, 2147483648
  %v1528 = vsel %vm1526, %v1521, %v1527
  %vm1529 = vcmp.eq.s32.totalorder %v1524, 2
  %v1530 = vxor.u32 %v1521, 2147483648
  %v1531 = vsel %vm1529, %v1530, %v1522
  %v1532 = vsel %vm1525, %v1528, %v1531
  %v1533 = vsel %vm1523, nan, %v1532
  %1540 = vrot.lane.b32.xlu0 %v1018, 32
  %v1541 = vpop.permute.xlu0 %1540
  %1542 = vrot.lane.b32.xlu0 %v1121, 32
  %v1543 = vpop.permute.xlu0 %1542
  %1544 = vrot.lane.b32.xlu0 %v1224, 32
  %v1545 = vpop.permute.xlu0 %1544
  %1546 = vrot.lane.b32.xlu0 %v1327, 32
  %v1547 = vpop.permute.xlu0 %1546
  %1548 = vrot.lane.b32.xlu0 %v1430, 32
  %v1549 = vpop.permute.xlu0 %1548
  %1550 = vrot.lane.b32.xlu0 %v1533, 32
  %v1551 = vpop.permute.xlu0 %1550
  %vm1558 = vcmask 261120
  %v1559 = vsel %vm1558, %v395, %v1541
  %v1560 = vsel %vm1558, %v499, %v1543
  %v1561 = vsel %vm1558, %v603, %v1545
  %v1562 = vsel %vm1558, %v707, %v1547
  %v1563 = vsel %vm1558, %v811, %v1549
  %v1564 = vsel %vm1558, %v915, %v1551
  %v1565 = vld [vmem:[%s4] sm:$0xff]
  %v1566 = vld [vmem:[%s4 + $0x8] sm:$0xff]
  %v1567 = vld [vmem:[%s4 + $0x10] sm:$0xff]
  %v1568 = vld [vmem:[%s4 + $0x18] sm:$0xff]
  %v1569 = vld [vmem:[%s4 + $0x20] sm:$0xff]
  %v1570 = vld [vmem:[%s4 + $0x28] sm:$0xff]
  %v1571 = vld [vmem:[%s4 + $0x30] sm:$0xff]
  %v1572 = vld [vmem:[%s4 + $0x38] sm:$0xff]
  %v1573 = vld [vmem:[%s5] sm:$0x1]
  %v1575 = vlaneseq
  %v1576 = vshrl.u32 %v1575, 7
  %v1577 = vsub.s32 0, %v1576
  %v1578 = vrot.slane %v1573, %v1577
  %vm1580 = vcmask 523264
  %v1582 = vsel %vm1580, %v1559, 0
  %v1585 = vsel %vm1580, %v1560, 0
  %v1588 = vsel %vm1580, %v1561, 0
  %v1591 = vsel %vm1580, %v1562, 0
  %v1594 = vsel %vm1580, %v1563, 0
  %v1597 = vsel %vm1580, %v1564, 0
  %1599 = vmatprep.subr.mxu0 0.0
  %v1600 = vand.u32 %v1565, 4294901760
  %1601 = vmatpush1.msra.mxu0 %v1600
  %1602 = vmatprep.subr.mxu0 0.0
  %v1603 = vand.u32 %v1566, 4294901760
  %1604 = vmatpush1.msra.mxu0 %v1603
  %1605 = vmatprep.subr.mxu0 0.0
  %v1606 = vand.u32 %v1567, 4294901760
  %1607 = vmatpush1.msra.mxu0 %v1606
  %1608 = vmatprep.subr.mxu0 0.0
  %v1609 = vand.u32 %v1568, 4294901760
  %1610 = vmatpush1.msra.mxu0 %v1609
  %1611 = vmatprep.subr.mxu0 0.0
  %v1612 = vand.u32 %v1569, 4294901760
  %1613 = vmatpush1.msra.mxu0 %v1612
  %1614 = vmatprep.subr.mxu0 0.0
  %v1615 = vand.u32 %v1570, 4294901760
  %1616 = vmatpush1.msra.mxu0 %v1615
  %1617 = vmatprep.subr.mxu0 0.0
  %v1618 = vand.u32 %v1571, 4294901760
  %1619 = vmatpush1.msra.mxu0 %v1618
  %1620 = vmatprep.subr.mxu0 0.0
  %v1621 = vand.u32 %v1572, 4294901760
  %1622 = vmatpush1.msra.mxu0 %v1621
  %1623 = vmatprep.subr.mxu0 0.0
  %1624 = vmatpush1.msra.mxu0 0.0
  %1625 = vmatprep.subr.mxu0 0.0
  %1626 = vmatpush1.msra.mxu0 0.0
  %1627 = vmatprep.subr.mxu0 0.0
  %1628 = vmatpush1.msra.mxu0 0.0
  %1629 = vmatprep.subr.mxu0 0.0
  %1630 = vmatpush1.msra.mxu0 0.0
  %1631 = vmatprep.subr.mxu0 0.0
  %1632 = vmatpush1.msra.mxu0 0.0
  %1633 = vmatprep.subr.mxu0 0.0
  %1634 = vmatpush1.msra.mxu0 0.0
  %1635 = vmatprep.subr.mxu0 0.0
  %1636 = vmatpush1.msra.mxu0 0.0
  %1637 = vmatprep.subr.mxu0 0.0
  %1638 = vmatpush1.msra.mxu0 0.0
  %1639 = vmatprep.subr.mxu0 0.0
  %1640 = vmatpush1.msra.mxu0 0.0
  %1641 = vmatprep.subr.mxu0 0.0
  %1642 = vmatpush1.msra.mxu0 0.0
  %1643 = vmatprep.subr.mxu0 0.0
  %1644 = vmatpush1.msra.mxu0 0.0
  %1645 = vmatprep.subr.mxu0 0.0
  %1646 = vmatpush1.msra.mxu0 0.0
  %1647 = vmatprep.subr.mxu0 0.0
  %1648 = vmatpush1.msra.mxu0 0.0
  %1649 = vmatprep.subr.mxu0 0.0
  %1650 = vmatpush1.msra.mxu0 0.0
  %1651 = vmatprep.subr.mxu0 0.0
  %1652 = vmatpush1.msra.mxu0 0.0
  %1653 = vmatprep.subr.mxu0 0.0
  %1654 = vmatpush1.msra.mxu0 0.0
  %1655 = vmatprep.subr.mxu0 0.0
  %1656 = vmatpush1.msra.mxu0 0.0
  %1657 = vmatprep.subr.mxu0 0.0
  %1658 = vmatpush1.msra.mxu0 0.0
  %1659 = vmatprep.subr.mxu0 0.0
  %1660 = vmatpush1.msra.mxu0 0.0
  %1661 = vmatprep.subr.mxu0 0.0
  %1662 = vmatpush1.msra.mxu0 0.0
  %1663 = vmatprep.subr.mxu0 0.0
  %1664 = vmatpush1.msra.mxu0 0.0
  %1665 = vmatprep.subr.mxu0 0.0
  %1666 = vmatpush1.msra.mxu0 0.0
  %1667 = vmatprep.subr.mxu0 0.0
  %1668 = vmatpush1.msra.mxu0 0.0
  %1669 = vmatprep.subr.mxu0 0.0
  %1670 = vmatpush1.msra.mxu0 0.0
  %1671 = vmatprep.mubr.f32.mxu0 0.0
  %v1672 = vand.u32 %v1582, 4294901760
  %v1673 = vsub.f32 %v1582, %v1672
  %v1674 = vand.u32 %v1673, 4294901760
  %v1675 = vsub.f32 %v1673, %v1674
  %v1676 = vand.u32 %v1675, 4294901760
  %1677 = vmatmul.mubr.f32.gmra.mrb[0].mxu0 %v1676
  %v1678 = vpop.f32.mrb[0].mxu0
  %v1679 = vadd.f32 %v1578, %v1678
  %v1680 = vpop.f32.mrb[0].mxu0
  %1681 = vmatprep.mubr.f32.mxu0 0.0
  %v1682 = vand.u32 %v1585, 4294901760
  %v1683 = vsub.f32 %v1585, %v1682
  %v1684 = vand.u32 %v1683, 4294901760
  %v1685 = vsub.f32 %v1683, %v1684
  %v1686 = vand.u32 %v1685, 4294901760
  %1687 = vmatmul.mubr.f32.gmra.mrb[0].mxu0 %v1686
  %v1688 = vpop.f32.mrb[0].mxu0
  %v1689 = vadd.f32 %v1578, %v1688
  %v1690 = vpop.f32.mrb[0].mxu0
  %1691 = vmatprep.mubr.f32.mxu0 0.0
  %v1692 = vand.u32 %v1588, 4294901760
  %v1693 = vsub.f32 %v1588, %v1692
  %v1694 = vand.u32 %v1693, 4294901760
  %v1695 = vsub.f32 %v1693, %v1694
  %v1696 = vand.u32 %v1695, 4294901760
  %1697 = vmatmul.mubr.f32.gmra.mrb[0].mxu0 %v1696
  %v1698 = vpop.f32.mrb[0].mxu0
  %v1699 = vadd.f32 %v1578, %v1698
  %v1700 = vpop.f32.mrb[0].mxu0
  %1701 = vmatprep.mubr.f32.mxu0 0.0
  %v1702 = vand.u32 %v1591, 4294901760
  %v1703 = vsub.f32 %v1591, %v1702
  %v1704 = vand.u32 %v1703, 4294901760
  %v1705 = vsub.f32 %v1703, %v1704
  %v1706 = vand.u32 %v1705, 4294901760
  %1707 = vmatmul.mubr.f32.gmra.mrb[0].mxu0 %v1706
  %v1708 = vpop.f32.mrb[0].mxu0
  %v1709 = vadd.f32 %v1578, %v1708
  %v1710 = vpop.f32.mrb[0].mxu0
  %1711 = vmatprep.mubr.f32.mxu0 0.0
  %v1712 = vand.u32 %v1594, 4294901760
  %v1713 = vsub.f32 %v1594, %v1712
  %v1714 = vand.u32 %v1713, 4294901760
  %v1715 = vsub.f32 %v1713, %v1714
  %v1716 = vand.u32 %v1715, 4294901760
  %1717 = vmatmul.mubr.f32.gmra.mrb[0].mxu0 %v1716
  %v1718 = vpop.f32.mrb[0].mxu0
  %v1719 = vadd.f32 %v1578, %v1718
  %v1720 = vpop.f32.mrb[0].mxu0
  %1721 = vmatprep.mubr.f32.mxu0 0.0
  %v1722 = vand.u32 %v1597, 4294901760
  %v1723 = vsub.f32 %v1597, %v1722
  %v1724 = vand.u32 %v1723, 4294901760
  %v1725 = vsub.f32 %v1723, %v1724
  %v1726 = vand.u32 %v1725, 4294901760
  %1727 = vmatmul.mubr.f32.gmra.mrb[0].mxu0 %v1726
  %v1728 = vpop.f32.mrb[0].mxu0
  %v1729 = vadd.f32 %v1578, %v1728
  %v1730 = vpop.f32.mrb[0].mxu0
  %1731 = vdwg.mxu0
  %1732 = vmatprep.subr.mxu0 0.0
  %v1733 = vand.u32 %v1565, 4294901760
  %v1734 = vsub.f32 %v1565, %v1733
  %v1735 = vand.u32 %v1734, 4294901760
  %v1736 = vsub.f32 %v1734, %v1735
  %v1737 = vand.u32 %v1736, 4294901760
  %1738 = vmatpush1.msra.mxu0 %v1737
  %1739 = vmatprep.subr.mxu0 0.0
  %v1740 = vand.u32 %v1566, 4294901760
  %v1741 = vsub.f32 %v1566, %v1740
  %v1742 = vand.u32 %v1741, 4294901760
  %v1743 = vsub.f32 %v1741, %v1742
  %v1744 = vand.u32 %v1743, 4294901760
  %1745 = vmatpush1.msra.mxu0 %v1744
  %1746 = vmatprep.subr.mxu0 0.0
  %v1747 = vand.u32 %v1567, 4294901760
  %v1748 = vsub.f32 %v1567, %v1747
  %v1749 = vand.u32 %v1748, 4294901760
  %v1750 = vsub.f32 %v1748, %v1749
  %v1751 = vand.u32 %v1750, 4294901760
  %1752 = vmatpush1.msra.mxu0 %v1751
  %1753 = vmatprep.subr.mxu0 0.0
  %v1754 = vand.u32 %v1568, 4294901760
  %v1755 = vsub.f32 %v1568, %v1754
  %v1756 = vand.u32 %v1755, 4294901760
  %v1757 = vsub.f32 %v1755, %v1756
  %v1758 = vand.u32 %v1757, 4294901760
  %1759 = vmatpush1.msra.mxu0 %v1758
  %1760 = vmatprep.subr.mxu0 0.0
  %v1761 = vand.u32 %v1569, 4294901760
  %v1762 = vsub.f32 %v1569, %v1761
  %v1763 = vand.u32 %v1762, 4294901760
  %v1764 = vsub.f32 %v1762, %v1763
  %v1765 = vand.u32 %v1764, 4294901760
  %1766 = vmatpush1.msra.mxu0 %v1765
  %1767 = vmatprep.subr.mxu0 0.0
  %v1768 = vand.u32 %v1570, 4294901760
  %v1769 = vsub.f32 %v1570, %v1768
  %v1770 = vand.u32 %v1769, 4294901760
  %v1771 = vsub.f32 %v1769, %v1770
  %v1772 = vand.u32 %v1771, 4294901760
  %1773 = vmatpush1.msra.mxu0 %v1772
  %1774 = vmatprep.subr.mxu0 0.0
  %v1775 = vand.u32 %v1571, 4294901760
  %v1776 = vsub.f32 %v1571, %v1775
  %v1777 = vand.u32 %v1776, 4294901760
  %v1778 = vsub.f32 %v1776, %v1777
  %v1779 = vand.u32 %v1778, 4294901760
  %1780 = vmatpush1.msra.mxu0 %v1779
  %1781 = vmatprep.subr.mxu0 0.0
  %v1782 = vand.u32 %v1572, 4294901760
  %v1783 = vsub.f32 %v1572, %v1782
  %v1784 = vand.u32 %v1783, 4294901760
  %v1785 = vsub.f32 %v1783, %v1784
  %v1786 = vand.u32 %v1785, 4294901760
  %1787 = vmatpush1.msra.mxu0 %v1786
  %1788 = vmatprep.subr.mxu0 0.0
  %1789 = vmatpush1.msra.mxu0 0.0
  %1790 = vmatprep.subr.mxu0 0.0
  %1791 = vmatpush1.msra.mxu0 0.0
  %1792 = vmatprep.subr.mxu0 0.0
  %1793 = vmatpush1.msra.mxu0 0.0
  %1794 = vmatprep.subr.mxu0 0.0
  %1795 = vmatpush1.msra.mxu0 0.0
  %1796 = vmatprep.subr.mxu0 0.0
  %1797 = vmatpush1.msra.mxu0 0.0
  %1798 = vmatprep.subr.mxu0 0.0
  %1799 = vmatpush1.msra.mxu0 0.0
  %1800 = vmatprep.subr.mxu0 0.0
  %1801 = vmatpush1.msra.mxu0 0.0
  %1802 = vmatprep.subr.mxu0 0.0
  %1803 = vmatpush1.msra.mxu0 0.0
  %1804 = vmatprep.subr.mxu0 0.0
  %1805 = vmatpush1.msra.mxu0 0.0
  %1806 = vmatprep.subr.mxu0 0.0
  %1807 = vmatpush1.msra.mxu0 0.0
  %1808 = vmatprep.subr.mxu0 0.0
  %1809 = vmatpush1.msra.mxu0 0.0
  %1810 = vmatprep.subr.mxu0 0.0
  %1811 = vmatpush1.msra.mxu0 0.0
  %1812 = vmatprep.subr.mxu0 0.0
  %1813 = vmatpush1.msra.mxu0 0.0
  %1814 = vmatprep.subr.mxu0 0.0
  %1815 = vmatpush1.msra.mxu0 0.0
  %1816 = vmatprep.subr.mxu0 0.0
  %1817 = vmatpush1.msra.mxu0 0.0
  %1818 = vmatprep.subr.mxu0 0.0
  %1819 = vmatpush1.msra.mxu0 0.0
  %1820 = vmatprep.subr.mxu0 0.0
  %1821 = vmatpush1.msra.mxu0 0.0
  %1822 = vmatprep.subr.mxu0 0.0
  %1823 = vmatpush1.msra.mxu0 0.0
  %1824 = vmatprep.subr.mxu0 0.0
  %1825 = vmatpush1.msra.mxu0 0.0
  %1826 = vmatprep.subr.mxu0 0.0
  %1827 = vmatpush1.msra.mxu0 0.0
  %1828 = vmatprep.subr.mxu0 0.0
  %1829 = vmatpush1.msra.mxu0 0.0
  %1830 = vmatprep.subr.mxu0 0.0
  %1831 = vmatpush1.msra.mxu0 0.0
  %1832 = vmatprep.subr.mxu0 0.0
  %1833 = vmatpush1.msra.mxu0 0.0
  %1834 = vmatprep.subr.mxu0 0.0
  %1835 = vmatpush1.msra.mxu0 0.0
  %1836 = vmatprep.mubr.f32.mxu0 0.0
  %v1837 = vand.u32 %v1582, 4294901760
  %1838 = vmatmul.mubr.f32.gmra.mrb[0].mxu0 %v1837
  %v1839 = vpop.f32.mrb[0].mxu0
  %v1840 = vadd.f32 %v1679, %v1839
  %v1841 = vpop.f32.mrb[0].mxu0
  %1842 = vmatprep.mubr.f32.mxu0 0.0
  %v1843 = vand.u32 %v1585, 4294901760
  %1844 = vmatmul.mubr.f32.gmra.mrb[0].mxu0 %v1843
  %v1845 = vpop.f32.mrb[0].mxu0
  %v1846 = vadd.f32 %v1689, %v1845
  %v1847 = vpop.f32.mrb[0].mxu0
  %1848 = vmatprep.mubr.f32.mxu0 0.0
  %v1849 = vand.u32 %v1588, 4294901760
  %1850 = vmatmul.mubr.f32.gmra.mrb[0].mxu0 %v1849
  %v1851 = vpop.f32.mrb[0].mxu0
  %v1852 = vadd.f32 %v1699, %v1851
  %v1853 = vpop.f32.mrb[0].mxu0
  %1854 = vmatprep.mubr.f32.mxu0 0.0
  %v1855 = vand.u32 %v1591, 4294901760
  %1856 = vmatmul.mubr.f32.gmra.mrb[0].mxu0 %v1855
  %v1857 = vpop.f32.mrb[0].mxu0
  %v1858 = vadd.f32 %v1709, %v1857
  %v1859 = vpop.f32.mrb[0].mxu0
  %1860 = vmatprep.mubr.f32.mxu0 0.0
  %v1861 = vand.u32 %v1594, 4294901760
  %1862 = vmatmul.mubr.f32.gmra.mrb[0].mxu0 %v1861
  %v1863 = vpop.f32.mrb[0].mxu0
  %v1864 = vadd.f32 %v1719, %v1863
  %v1865 = vpop.f32.mrb[0].mxu0
  %1866 = vmatprep.mubr.f32.mxu0 0.0
  %v1867 = vand.u32 %v1597, 4294901760
  %1868 = vmatmul.mubr.f32.gmra.mrb[0].mxu0 %v1867
  %v1869 = vpop.f32.mrb[0].mxu0
  %v1870 = vadd.f32 %v1729, %v1869
  %v1871 = vpop.f32.mrb[0].mxu0
  %1872 = vdwg.mxu0
  %1873 = vmatprep.subr.mxu0 0.0
  %v1874 = vand.u32 %v1565, 4294901760
  %v1875 = vsub.f32 %v1565, %v1874
  %1876 = vmatpush1.msra.mxu0 %v1875
  %1877 = vmatprep.subr.mxu0 0.0
  %v1878 = vand.u32 %v1566, 4294901760
  %v1879 = vsub.f32 %v1566, %v1878
  %1880 = vmatpush1.msra.mxu0 %v1879
  %1881 = vmatprep.subr.mxu0 0.0
  %v1882 = vand.u32 %v1567, 4294901760
  %v1883 = vsub.f32 %v1567, %v1882
  %1884 = vmatpush1.msra.mxu0 %v1883
  %1885 = vmatprep.subr.mxu0 0.0
  %v1886 = vand.u32 %v1568, 4294901760
  %v1887 = vsub.f32 %v1568, %v1886
  %1888 = vmatpush1.msra.mxu0 %v1887
  %1889 = vmatprep.subr.mxu0 0.0
  %v1890 = vand.u32 %v1569, 4294901760
  %v1891 = vsub.f32 %v1569, %v1890
  %1892 = vmatpush1.msra.mxu0 %v1891
  %1893 = vmatprep.subr.mxu0 0.0
  %v1894 = vand.u32 %v1570, 4294901760
  %v1895 = vsub.f32 %v1570, %v1894
  %1896 = vmatpush1.msra.mxu0 %v1895
  %1897 = vmatprep.subr.mxu0 0.0
  %v1898 = vand.u32 %v1571, 4294901760
  %v1899 = vsub.f32 %v1571, %v1898
  %1900 = vmatpush1.msra.mxu0 %v1899
  %1901 = vmatprep.subr.mxu0 0.0
  %v1902 = vand.u32 %v1572, 4294901760
  %v1903 = vsub.f32 %v1572, %v1902
  %1904 = vmatpush1.msra.mxu0 %v1903
  %1905 = vmatprep.subr.mxu0 0.0
  %1906 = vmatpush1.msra.mxu0 0.0
  %1907 = vmatprep.subr.mxu0 0.0
  %1908 = vmatpush1.msra.mxu0 0.0
  %1909 = vmatprep.subr.mxu0 0.0
  %1910 = vmatpush1.msra.mxu0 0.0
  %1911 = vmatprep.subr.mxu0 0.0
  %1912 = vmatpush1.msra.mxu0 0.0
  %1913 = vmatprep.subr.mxu0 0.0
  %1914 = vmatpush1.msra.mxu0 0.0
  %1915 = vmatprep.subr.mxu0 0.0
  %1916 = vmatpush1.msra.mxu0 0.0
  %1917 = vmatprep.subr.mxu0 0.0
  %1918 = vmatpush1.msra.mxu0 0.0
  %1919 = vmatprep.subr.mxu0 0.0
  %1920 = vmatpush1.msra.mxu0 0.0
  %1921 = vmatprep.subr.mxu0 0.0
  %1922 = vmatpush1.msra.mxu0 0.0
  %1923 = vmatprep.subr.mxu0 0.0
  %1924 = vmatpush1.msra.mxu0 0.0
  %1925 = vmatprep.subr.mxu0 0.0
  %1926 = vmatpush1.msra.mxu0 0.0
  %1927 = vmatprep.subr.mxu0 0.0
  %1928 = vmatpush1.msra.mxu0 0.0
  %1929 = vmatprep.subr.mxu0 0.0
  %1930 = vmatpush1.msra.mxu0 0.0
  %1931 = vmatprep.subr.mxu0 0.0
  %1932 = vmatpush1.msra.mxu0 0.0
  %1933 = vmatprep.subr.mxu0 0.0
  %1934 = vmatpush1.msra.mxu0 0.0
  %1935 = vmatprep.subr.mxu0 0.0
  %1936 = vmatpush1.msra.mxu0 0.0
  %1937 = vmatprep.subr.mxu0 0.0
  %1938 = vmatpush1.msra.mxu0 0.0
  %1939 = vmatprep.subr.mxu0 0.0
  %1940 = vmatpush1.msra.mxu0 0.0
  %1941 = vmatprep.subr.mxu0 0.0
  %1942 = vmatpush1.msra.mxu0 0.0
  %1943 = vmatprep.subr.mxu0 0.0
  %1944 = vmatpush1.msra.mxu0 0.0
  %1945 = vmatprep.subr.mxu0 0.0
  %1946 = vmatpush1.msra.mxu0 0.0
  %1947 = vmatprep.subr.mxu0 0.0
  %1948 = vmatpush1.msra.mxu0 0.0
  %1949 = vmatprep.subr.mxu0 0.0
  %1950 = vmatpush1.msra.mxu0 0.0
  %1951 = vmatprep.subr.mxu0 0.0
  %1952 = vmatpush1.msra.mxu0 0.0
  %1953 = vmatprep.mubr.f32.mxu0 0.0
  %v1954 = vand.u32 %v1582, 4294901760
  %v1955 = vsub.f32 %v1582, %v1954
  %1956 = vmatmul.mubr.f32.gmra.mrb[0].mxu0 %v1955
  %v1957 = vpop.f32.mrb[0].mxu0
  %v1958 = vadd.f32 %v1840, %v1957
  %v1959 = vpop.f32.mrb[0].mxu0
  %1960 = vmatprep.mubr.f32.mxu0 0.0
  %v1961 = vand.u32 %v1585, 4294901760
  %v1962 = vsub.f32 %v1585, %v1961
  %1963 = vmatmul.mubr.f32.gmra.mrb[0].mxu0 %v1962
  %v1964 = vpop.f32.mrb[0].mxu0
  %v1965 = vadd.f32 %v1846, %v1964
  %v1966 = vpop.f32.mrb[0].mxu0
  %1967 = vmatprep.mubr.f32.mxu0 0.0
  %v1968 = vand.u32 %v1588, 4294901760
  %v1969 = vsub.f32 %v1588, %v1968
  %1970 = vmatmul.mubr.f32.gmra.mrb[0].mxu0 %v1969
  %v1971 = vpop.f32.mrb[0].mxu0
  %v1972 = vadd.f32 %v1852, %v1971
  %v1973 = vpop.f32.mrb[0].mxu0
  %1974 = vmatprep.mubr.f32.mxu0 0.0
  %v1975 = vand.u32 %v1591, 4294901760
  %v1976 = vsub.f32 %v1591, %v1975
  %1977 = vmatmul.mubr.f32.gmra.mrb[0].mxu0 %v1976
  %v1978 = vpop.f32.mrb[0].mxu0
  %v1979 = vadd.f32 %v1858, %v1978
  %v1980 = vpop.f32.mrb[0].mxu0
  %1981 = vmatprep.mubr.f32.mxu0 0.0
  %v1982 = vand.u32 %v1594, 4294901760
  %v1983 = vsub.f32 %v1594, %v1982
  %1984 = vmatmul.mubr.f32.gmra.mrb[0].mxu0 %v1983
  %v1985 = vpop.f32.mrb[0].mxu0
  %v1986 = vadd.f32 %v1864, %v1985
  %v1987 = vpop.f32.mrb[0].mxu0
  %1988 = vmatprep.mubr.f32.mxu0 0.0
  %v1989 = vand.u32 %v1597, 4294901760
  %v1990 = vsub.f32 %v1597, %v1989
  %1991 = vmatmul.mubr.f32.gmra.mrb[0].mxu0 %v1990
  %v1992 = vpop.f32.mrb[0].mxu0
  %v1993 = vadd.f32 %v1870, %v1992
  %v1994 = vpop.f32.mrb[0].mxu0
  %1995 = vdwg.mxu0
  %1996 = vmatprep.subr.mxu0 0.0
  %v1997 = vand.u32 %v1565, 4294901760
  %1998 = vmatpush1.msra.mxu0 %v1997
  %1999 = vmatprep.subr.mxu0 0.0
  %v2000 = vand.u32 %v1566, 4294901760
  %2001 = vmatpush1.msra.mxu0 %v2000
  %2002 = vmatprep.subr.mxu0 0.0
  %v2003 = vand.u32 %v1567, 4294901760
  %2004 = vmatpush1.msra.mxu0 %v2003
  %2005 = vmatprep.subr.mxu0 0.0
  %v2006 = vand.u32 %v1568, 4294901760
  %2007 = vmatpush1.msra.mxu0 %v2006
  %2008 = vmatprep.subr.mxu0 0.0
  %v2009 = vand.u32 %v1569, 4294901760
  %2010 = vmatpush1.msra.mxu0 %v2009
  %2011 = vmatprep.subr.mxu0 0.0
  %v2012 = vand.u32 %v1570, 4294901760
  %2013 = vmatpush1.msra.mxu0 %v2012
  %2014 = vmatprep.subr.mxu0 0.0
  %v2015 = vand.u32 %v1571, 4294901760
  %2016 = vmatpush1.msra.mxu0 %v2015
  %2017 = vmatprep.subr.mxu0 0.0
  %v2018 = vand.u32 %v1572, 4294901760
  %2019 = vmatpush1.msra.mxu0 %v2018
  %2020 = vmatprep.subr.mxu0 0.0
  %2021 = vmatpush1.msra.mxu0 0.0
  %2022 = vmatprep.subr.mxu0 0.0
  %2023 = vmatpush1.msra.mxu0 0.0
  %2024 = vmatprep.subr.mxu0 0.0
  %2025 = vmatpush1.msra.mxu0 0.0
  %2026 = vmatprep.subr.mxu0 0.0
  %2027 = vmatpush1.msra.mxu0 0.0
  %2028 = vmatprep.subr.mxu0 0.0
  %2029 = vmatpush1.msra.mxu0 0.0
  %2030 = vmatprep.subr.mxu0 0.0
  %2031 = vmatpush1.msra.mxu0 0.0
  %2032 = vmatprep.subr.mxu0 0.0
  %2033 = vmatpush1.msra.mxu0 0.0
  %2034 = vmatprep.subr.mxu0 0.0
  %2035 = vmatpush1.msra.mxu0 0.0
  %2036 = vmatprep.subr.mxu0 0.0
  %2037 = vmatpush1.msra.mxu0 0.0
  %2038 = vmatprep.subr.mxu0 0.0
  %2039 = vmatpush1.msra.mxu0 0.0
  %2040 = vmatprep.subr.mxu0 0.0
  %2041 = vmatpush1.msra.mxu0 0.0
  %2042 = vmatprep.subr.mxu0 0.0
  %2043 = vmatpush1.msra.mxu0 0.0
  %2044 = vmatprep.subr.mxu0 0.0
  %2045 = vmatpush1.msra.mxu0 0.0
  %2046 = vmatprep.subr.mxu0 0.0
  %2047 = vmatpush1.msra.mxu0 0.0
  %2048 = vmatprep.subr.mxu0 0.0
  %2049 = vmatpush1.msra.mxu0 0.0
  %2050 = vmatprep.subr.mxu0 0.0
  %2051 = vmatpush1.msra.mxu0 0.0
  %2052 = vmatprep.subr.mxu0 0.0
  %2053 = vmatpush1.msra.mxu0 0.0
  %2054 = vmatprep.subr.mxu0 0.0
  %2055 = vmatpush1.msra.mxu0 0.0
  %2056 = vmatprep.subr.mxu0 0.0
  %2057 = vmatpush1.msra.mxu0 0.0
  %2058 = vmatprep.subr.mxu0 0.0
  %2059 = vmatpush1.msra.mxu0 0.0
  %2060 = vmatprep.subr.mxu0 0.0
  %2061 = vmatpush1.msra.mxu0 0.0
  %2062 = vmatprep.subr.mxu0 0.0
  %2063 = vmatpush1.msra.mxu0 0.0
  %2064 = vmatprep.subr.mxu0 0.0
  %2065 = vmatpush1.msra.mxu0 0.0
  %2066 = vmatprep.subr.mxu0 0.0
  %2067 = vmatpush1.msra.mxu0 0.0
  %2068 = vmatprep.mubr.f32.mxu0 0.0
  %v2069 = vand.u32 %v1582, 4294901760
  %v2070 = vsub.f32 %v1582, %v2069
  %v2071 = vand.u32 %v2070, 4294901760
  %2072 = vmatmul.mubr.f32.gmra.mrb[0].mxu0 %v2071
  %v2073 = vpop.f32.mrb[0].mxu0
  %v2074 = vadd.f32 %v1958, %v2073
  %v2075 = vpop.f32.mrb[0].mxu0
  %2076 = vmatprep.mubr.f32.mxu0 0.0
  %v2077 = vand.u32 %v1585, 4294901760
  %v2078 = vsub.f32 %v1585, %v2077
  %v2079 = vand.u32 %v2078, 4294901760
  %2080 = vmatmul.mubr.f32.gmra.mrb[0].mxu0 %v2079
  %v2081 = vpop.f32.mrb[0].mxu0
  %v2082 = vadd.f32 %v1965, %v2081
  %v2083 = vpop.f32.mrb[0].mxu0
  %2084 = vmatprep.mubr.f32.mxu0 0.0
  %v2085 = vand.u32 %v1588, 4294901760
  %v2086 = vsub.f32 %v1588, %v2085
  %v2087 = vand.u32 %v2086, 4294901760
  %2088 = vmatmul.mubr.f32.gmra.mrb[0].mxu0 %v2087
  %v2089 = vpop.f32.mrb[0].mxu0
  %v2090 = vadd.f32 %v1972, %v2089
  %v2091 = vpop.f32.mrb[0].mxu0
  %2092 = vmatprep.mubr.f32.mxu0 0.0
  %v2093 = vand.u32 %v1591, 4294901760
  %v2094 = vsub.f32 %v1591, %v2093
  %v2095 = vand.u32 %v2094, 4294901760
  %2096 = vmatmul.mubr.f32.gmra.mrb[0].mxu0 %v2095
  %v2097 = vpop.f32.mrb[0].mxu0
  %v2098 = vadd.f32 %v1979, %v2097
  %v2099 = vpop.f32.mrb[0].mxu0
  %2100 = vmatprep.mubr.f32.mxu0 0.0
  %v2101 = vand.u32 %v1594, 4294901760
  %v2102 = vsub.f32 %v1594, %v2101
  %v2103 = vand.u32 %v2102, 4294901760
  %2104 = vmatmul.mubr.f32.gmra.mrb[0].mxu0 %v2103
  %v2105 = vpop.f32.mrb[0].mxu0
  %v2106 = vadd.f32 %v1986, %v2105
  %v2107 = vpop.f32.mrb[0].mxu0
  %2108 = vmatprep.mubr.f32.mxu0 0.0
  %v2109 = vand.u32 %v1597, 4294901760
  %v2110 = vsub.f32 %v1597, %v2109
  %v2111 = vand.u32 %v2110, 4294901760
  %2112 = vmatmul.mubr.f32.gmra.mrb[0].mxu0 %v2111
  %v2113 = vpop.f32.mrb[0].mxu0
  %v2114 = vadd.f32 %v1993, %v2113
  %v2115 = vpop.f32.mrb[0].mxu0
  %2116 = vdwg.mxu0
  %2117 = vmatprep.subr.mxu0 0.0
  %v2118 = vand.u32 %v1565, 4294901760
  %v2119 = vsub.f32 %v1565, %v2118
  %v2120 = vand.u32 %v2119, 4294901760
  %2121 = vmatpush1.msra.mxu0 %v2120
  %2122 = vmatprep.subr.mxu0 0.0
  %v2123 = vand.u32 %v1566, 4294901760
  %v2124 = vsub.f32 %v1566, %v2123
  %v2125 = vand.u32 %v2124, 4294901760
  %2126 = vmatpush1.msra.mxu0 %v2125
  %2127 = vmatprep.subr.mxu0 0.0
  %v2128 = vand.u32 %v1567, 4294901760
  %v2129 = vsub.f32 %v1567, %v2128
  %v2130 = vand.u32 %v2129, 4294901760
  %2131 = vmatpush1.msra.mxu0 %v2130
  %2132 = vmatprep.subr.mxu0 0.0
  %v2133 = vand.u32 %v1568, 4294901760
  %v2134 = vsub.f32 %v1568, %v2133
  %v2135 = vand.u32 %v2134, 4294901760
  %2136 = vmatpush1.msra.mxu0 %v2135
  %2137 = vmatprep.subr.mxu0 0.0
  %v2138 = vand.u32 %v1569, 4294901760
  %v2139 = vsub.f32 %v1569, %v2138
  %v2140 = vand.u32 %v2139, 4294901760
  %2141 = vmatpush1.msra.mxu0 %v2140
  %2142 = vmatprep.subr.mxu0 0.0
  %v2143 = vand.u32 %v1570, 4294901760
  %v2144 = vsub.f32 %v1570, %v2143
  %v2145 = vand.u32 %v2144, 4294901760
  %2146 = vmatpush1.msra.mxu0 %v2145
  %2147 = vmatprep.subr.mxu0 0.0
  %v2148 = vand.u32 %v1571, 4294901760
  %v2149 = vsub.f32 %v1571, %v2148
  %v2150 = vand.u32 %v2149, 4294901760
  %2151 = vmatpush1.msra.mxu0 %v2150
  %2152 = vmatprep.subr.mxu0 0.0
  %v2153 = vand.u32 %v1572, 4294901760
  %v2154 = vsub.f32 %v1572, %v2153
  %v2155 = vand.u32 %v2154, 4294901760
  %2156 = vmatpush1.msra.mxu0 %v2155
  %2157 = vmatprep.subr.mxu0 0.0
  %2158 = vmatpush1.msra.mxu0 0.0
  %2159 = vmatprep.subr.mxu0 0.0
  %2160 = vmatpush1.msra.mxu0 0.0
  %2161 = vmatprep.subr.mxu0 0.0
  %2162 = vmatpush1.msra.mxu0 0.0
  %2163 = vmatprep.subr.mxu0 0.0
  %2164 = vmatpush1.msra.mxu0 0.0
  %2165 = vmatprep.subr.mxu0 0.0
  %2166 = vmatpush1.msra.mxu0 0.0
  %2167 = vmatprep.subr.mxu0 0.0
  %2168 = vmatpush1.msra.mxu0 0.0
  %2169 = vmatprep.subr.mxu0 0.0
  %2170 = vmatpush1.msra.mxu0 0.0
  %2171 = vmatprep.subr.mxu0 0.0
  %2172 = vmatpush1.msra.mxu0 0.0
  %2173 = vmatprep.subr.mxu0 0.0
  %2174 = vmatpush1.msra.mxu0 0.0
  %2175 = vmatprep.subr.mxu0 0.0
  %2176 = vmatpush1.msra.mxu0 0.0
  %2177 = vmatprep.subr.mxu0 0.0
  %2178 = vmatpush1.msra.mxu0 0.0
  %2179 = vmatprep.subr.mxu0 0.0
  %2180 = vmatpush1.msra.mxu0 0.0
  %2181 = vmatprep.subr.mxu0 0.0
  %2182 = vmatpush1.msra.mxu0 0.0
  %2183 = vmatprep.subr.mxu0 0.0
  %2184 = vmatpush1.msra.mxu0 0.0
  %2185 = vmatprep.subr.mxu0 0.0
  %2186 = vmatpush1.msra.mxu0 0.0
  %2187 = vmatprep.subr.mxu0 0.0
  %2188 = vmatpush1.msra.mxu0 0.0
  %2189 = vmatprep.subr.mxu0 0.0
  %2190 = vmatpush1.msra.mxu0 0.0
  %2191 = vmatprep.subr.mxu0 0.0
  %2192 = vmatpush1.msra.mxu0 0.0
  %2193 = vmatprep.subr.mxu0 0.0
  %2194 = vmatpush1.msra.mxu0 0.0
  %2195 = vmatprep.subr.mxu0 0.0
  %2196 = vmatpush1.msra.mxu0 0.0
  %2197 = vmatprep.subr.mxu0 0.0
  %2198 = vmatpush1.msra.mxu0 0.0
  %2199 = vmatprep.subr.mxu0 0.0
  %2200 = vmatpush1.msra.mxu0 0.0
  %2201 = vmatprep.subr.mxu0 0.0
  %2202 = vmatpush1.msra.mxu0 0.0
  %2203 = vmatprep.subr.mxu0 0.0
  %2204 = vmatpush1.msra.mxu0 0.0
  %2205 = vmatprep.mubr.f32.mxu0 0.0
  %v2206 = vand.u32 %v1582, 4294901760
  %2207 = vmatmul.mubr.f32.gmra.mrb[0].mxu0 %v2206
  %v2208 = vpop.f32.mrb[0].mxu0
  %v2209 = vadd.f32 %v2074, %v2208
  %v2210 = vpop.f32.mrb[0].mxu0
  %2211 = vmatprep.mubr.f32.mxu0 0.0
  %v2212 = vand.u32 %v1585, 4294901760
  %2213 = vmatmul.mubr.f32.gmra.mrb[0].mxu0 %v2212
  %v2214 = vpop.f32.mrb[0].mxu0
  %v2215 = vadd.f32 %v2082, %v2214
  %v2216 = vpop.f32.mrb[0].mxu0
  %2217 = vmatprep.mubr.f32.mxu0 0.0
  %v2218 = vand.u32 %v1588, 4294901760
  %2219 = vmatmul.mubr.f32.gmra.mrb[0].mxu0 %v2218
  %v2220 = vpop.f32.mrb[0].mxu0
  %v2221 = vadd.f32 %v2090, %v2220
  %v2222 = vpop.f32.mrb[0].mxu0
  %2223 = vmatprep.mubr.f32.mxu0 0.0
  %v2224 = vand.u32 %v1591, 4294901760
  %2225 = vmatmul.mubr.f32.gmra.mrb[0].mxu0 %v2224
  %v2226 = vpop.f32.mrb[0].mxu0
  %v2227 = vadd.f32 %v2098, %v2226
  %v2228 = vpop.f32.mrb[0].mxu0
  %2229 = vmatprep.mubr.f32.mxu0 0.0
  %v2230 = vand.u32 %v1594, 4294901760
  %2231 = vmatmul.mubr.f32.gmra.mrb[0].mxu0 %v2230
  %v2232 = vpop.f32.mrb[0].mxu0
  %v2233 = vadd.f32 %v2106, %v2232
  %v2234 = vpop.f32.mrb[0].mxu0
  %2235 = vmatprep.mubr.f32.mxu0 0.0
  %v2236 = vand.u32 %v1597, 4294901760
  %2237 = vmatmul.mubr.f32.gmra.mrb[0].mxu0 %v2236
  %v2238 = vpop.f32.mrb[0].mxu0
  %v2239 = vadd.f32 %v2114, %v2238
  %v2240 = vpop.f32.mrb[0].mxu0
  %2241 = vdwg.mxu0
  %2242 = vmatprep.subr.mxu0 0.0
  %v2243 = vand.u32 %v1565, 4294901760
  %2244 = vmatpush1.msra.mxu0 %v2243
  %2245 = vmatprep.subr.mxu0 0.0
  %v2246 = vand.u32 %v1566, 4294901760
  %2247 = vmatpush1.msra.mxu0 %v2246
  %2248 = vmatprep.subr.mxu0 0.0
  %v2249 = vand.u32 %v1567, 4294901760
  %2250 = vmatpush1.msra.mxu0 %v2249
  %2251 = vmatprep.subr.mxu0 0.0
  %v2252 = vand.u32 %v1568, 4294901760
  %2253 = vmatpush1.msra.mxu0 %v2252
  %2254 = vmatprep.subr.mxu0 0.0
  %v2255 = vand.u32 %v1569, 4294901760
  %2256 = vmatpush1.msra.mxu0 %v2255
  %2257 = vmatprep.subr.mxu0 0.0
  %v2258 = vand.u32 %v1570, 4294901760
  %2259 = vmatpush1.msra.mxu0 %v2258
  %2260 = vmatprep.subr.mxu0 0.0
  %v2261 = vand.u32 %v1571, 4294901760
  %2262 = vmatpush1.msra.mxu0 %v2261
  %2263 = vmatprep.subr.mxu0 0.0
  %v2264 = vand.u32 %v1572, 4294901760
  %2265 = vmatpush1.msra.mxu0 %v2264
  %2266 = vmatprep.subr.mxu0 0.0
  %2267 = vmatpush1.msra.mxu0 0.0
  %2268 = vmatprep.subr.mxu0 0.0
  %2269 = vmatpush1.msra.mxu0 0.0
  %2270 = vmatprep.subr.mxu0 0.0
  %2271 = vmatpush1.msra.mxu0 0.0
  %2272 = vmatprep.subr.mxu0 0.0
  %2273 = vmatpush1.msra.mxu0 0.0
  %2274 = vmatprep.subr.mxu0 0.0
  %2275 = vmatpush1.msra.mxu0 0.0
  %2276 = vmatprep.subr.mxu0 0.0
  %2277 = vmatpush1.msra.mxu0 0.0
  %2278 = vmatprep.subr.mxu0 0.0
  %2279 = vmatpush1.msra.mxu0 0.0
  %2280 = vmatprep.subr.mxu0 0.0
  %2281 = vmatpush1.msra.mxu0 0.0
  %2282 = vmatprep.subr.mxu0 0.0
  %2283 = vmatpush1.msra.mxu0 0.0
  %2284 = vmatprep.subr.mxu0 0.0
  %2285 = vmatpush1.msra.mxu0 0.0
  %2286 = vmatprep.subr.mxu0 0.0
  %2287 = vmatpush1.msra.mxu0 0.0
  %2288 = vmatprep.subr.mxu0 0.0
  %2289 = vmatpush1.msra.mxu0 0.0
  %2290 = vmatprep.subr.mxu0 0.0
  %2291 = vmatpush1.msra.mxu0 0.0
  %2292 = vmatprep.subr.mxu0 0.0
  %2293 = vmatpush1.msra.mxu0 0.0
  %2294 = vmatprep.subr.mxu0 0.0
  %2295 = vmatpush1.msra.mxu0 0.0
  %2296 = vmatprep.subr.mxu0 0.0
  %2297 = vmatpush1.msra.mxu0 0.0
  %2298 = vmatprep.subr.mxu0 0.0
  %2299 = vmatpush1.msra.mxu0 0.0
  %2300 = vmatprep.subr.mxu0 0.0
  %2301 = vmatpush1.msra.mxu0 0.0
  %2302 = vmatprep.subr.mxu0 0.0
  %2303 = vmatpush1.msra.mxu0 0.0
  %2304 = vmatprep.subr.mxu0 0.0
  %2305 = vmatpush1.msra.mxu0 0.0
  %2306 = vmatprep.subr.mxu0 0.0
  %2307 = vmatpush1.msra.mxu0 0.0
  %2308 = vmatprep.subr.mxu0 0.0
  %2309 = vmatpush1.msra.mxu0 0.0
  %2310 = vmatprep.subr.mxu0 0.0
  %2311 = vmatpush1.msra.mxu0 0.0
  %2312 = vmatprep.subr.mxu0 0.0
  %2313 = vmatpush1.msra.mxu0 0.0
  %2314 = vmatprep.mubr.f32.mxu0 0.0
  %v2315 = vand.u32 %v1582, 4294901760
  %2316 = vmatmul.mubr.f32.gmra.mrb[0].mxu0 %v2315
  %v2317 = vpop.f32.mrb[0].mxu0
  %v2318 = vadd.f32 %v2209, %v2317
  %v2319 = vpop.f32.mrb[0].mxu0
  %2320 = vmatprep.mubr.f32.mxu0 0.0
  %v2321 = vand.u32 %v1585, 4294901760
  %2322 = vmatmul.mubr.f32.gmra.mrb[0].mxu0 %v2321
  %v2323 = vpop.f32.mrb[0].mxu0
  %v2324 = vadd.f32 %v2215, %v2323
  %v2325 = vpop.f32.mrb[0].mxu0
  %2326 = vmatprep.mubr.f32.mxu0 0.0
  %v2327 = vand.u32 %v1588, 4294901760
  %2328 = vmatmul.mubr.f32.gmra.mrb[0].mxu0 %v2327
  %v2329 = vpop.f32.mrb[0].mxu0
  %v2330 = vadd.f32 %v2221, %v2329
  %v2331 = vpop.f32.mrb[0].mxu0
  %2332 = vmatprep.mubr.f32.mxu0 0.0
  %v2333 = vand.u32 %v1591, 4294901760
  %2334 = vmatmul.mubr.f32.gmra.mrb[0].mxu0 %v2333
  %v2335 = vpop.f32.mrb[0].mxu0
  %v2336 = vadd.f32 %v2227, %v2335
  %v2337 = vpop.f32.mrb[0].mxu0
  %2338 = vmatprep.mubr.f32.mxu0 0.0
  %v2339 = vand.u32 %v1594, 4294901760
  %2340 = vmatmul.mubr.f32.gmra.mrb[0].mxu0 %v2339
  %v2341 = vpop.f32.mrb[0].mxu0
  %v2342 = vadd.f32 %v2233, %v2341
  %v2343 = vpop.f32.mrb[0].mxu0
  %2344 = vmatprep.mubr.f32.mxu0 0.0
  %v2345 = vand.u32 %v1597, 4294901760
  %2346 = vmatmul.mubr.f32.gmra.mrb[0].mxu0 %v2345
  %v2347 = vpop.f32.mrb[0].mxu0
  %v2348 = vadd.f32 %v2239, %v2347
  %v2349 = vpop.f32.mrb[0].mxu0
  %2350 = vdwg.mxu0
  %v2351 = vmax.f32 %v2318, 0.0
  %v2352 = vmax.f32 %v2324, 0.0
  %v2353 = vmax.f32 %v2330, 0.0
  %v2354 = vmax.f32 %v2336, 0.0
  %v2355 = vmax.f32 %v2342, 0.0
  %v2356 = vmax.f32 %v2348, 0.0
  %v2357 = vld [vmem:[%s6] sm:$0x1]
  %v2358 = vld [vmem:[%s7] sm:$0x1]
  %v2359 = vsel %vm1558, %v2351, 0.0
  %2360 = vadd.xlane.f32.xlu0 %v2359
  %v2361 = vpop.xlane.xlu0 %2360
  %v2362 = vsel %vm1558, %v2352, 0.0
  %2363 = vadd.xlane.f32.xlu0 %v2362
  %v2364 = vpop.xlane.xlu0 %2363
  %v2365 = vsel %vm1558, %v2353, 0.0
  %2366 = vadd.xlane.f32.xlu0 %v2365
  %v2367 = vpop.xlane.xlu0 %2366
  %v2368 = vsel %vm1558, %v2354, 0.0
  %2369 = vadd.xlane.f32.xlu0 %v2368
  %v2370 = vpop.xlane.xlu0 %2369
  %v2371 = vsel %vm1558, %v2355, 0.0
  %2372 = vadd.xlane.f32.xlu0 %v2371
  %v2373 = vpop.xlane.xlu0 %2372
  %v2374 = vsel %vm1558, %v2356, 0.0
  %2375 = vadd.xlane.f32.xlu0 %v2374
  %v2376 = vpop.xlane.xlu0 %2375
  %v2377 = vrcp.pop 32.0
  %v2378 = vmul.f32 %v2361, %v2377
  %v2379 = vmul.f32 %v2364, %v2377
  %v2380 = vmul.f32 %v2367, %v2377
  %v2381 = vmul.f32 %v2370, %v2377
  %v2382 = vmul.f32 %v2373, %v2377
  %v2383 = vmul.f32 %v2376, %v2377
  %v2384 = vsub.f32 %v2351, %v2378
  %v2385 = vsub.f32 %v2352, %v2379
  %v2386 = vsub.f32 %v2353, %v2380
  %v2387 = vsub.f32 %v2354, %v2381
  %v2388 = vsub.f32 %v2355, %v2382
  %v2389 = vsub.f32 %v2356, %v2383
  %v2390 = vmul.f32 %v2384, %v2384
  %v2391 = vmul.f32 %v2385, %v2385
  %v2392 = vmul.f32 %v2386, %v2386
  %v2393 = vmul.f32 %v2387, %v2387
  %v2394 = vmul.f32 %v2388, %v2388
  %v2395 = vmul.f32 %v2389, %v2389
  %v2396 = vsel %vm1558, %v2390, 0.0
  %2397 = vadd.xlane.f32.xlu0 %v2396
  %v2398 = vpop.xlane.xlu0 %2397
  %v2399 = vsel %vm1558, %v2391, 0.0
  %2400 = vadd.xlane.f32.xlu0 %v2399
  %v2401 = vpop.xlane.xlu0 %2400
  %v2402 = vsel %vm1558, %v2392, 0.0
  %2403 = vadd.xlane.f32.xlu0 %v2402
  %v2404 = vpop.xlane.xlu0 %2403
  %v2405 = vsel %vm1558, %v2393, 0.0
  %2406 = vadd.xlane.f32.xlu0 %v2405
  %v2407 = vpop.xlane.xlu0 %2406
  %v2408 = vsel %vm1558, %v2394, 0.0
  %2409 = vadd.xlane.f32.xlu0 %v2408
  %v2410 = vpop.xlane.xlu0 %2409
  %v2411 = vsel %vm1558, %v2395, 0.0
  %2412 = vadd.xlane.f32.xlu0 %v2411
  %v2413 = vpop.xlane.xlu0 %2412
  %v2414 = vmul.f32 %v2398, %v2377
  %v2415 = vmul.f32 %v2401, %v2377
  %v2416 = vmul.f32 %v2404, %v2377
  %v2417 = vmul.f32 %v2407, %v2377
  %v2418 = vmul.f32 %v2410, %v2377
  %v2419 = vmul.f32 %v2413, %v2377
  %v2420 = vadd.f32 %v2414, 1e-05
  %v2421 = vadd.f32 %v2415, 1e-05
  %v2422 = vadd.f32 %v2416, 1e-05
  %v2423 = vadd.f32 %v2417, 1e-05
  %v2424 = vadd.f32 %v2418, 1e-05
  %v2425 = vadd.f32 %v2419, 1e-05
  %v2426 = vrsqrt.pop %v2420
  %v2427 = vrsqrt.pop %v2421
  %v2428 = vrsqrt.pop %v2422
  %v2429 = vrsqrt.pop %v2423
  %v2430 = vrsqrt.pop %v2424
  %v2431 = vrsqrt.pop %v2425
  %v2432 = vmul.f32 %v2384, %v2426
  %v2433 = vmul.f32 %v2385, %v2427
  %v2434 = vmul.f32 %v2386, %v2428
  %v2435 = vmul.f32 %v2387, %v2429
  %v2436 = vmul.f32 %v2388, %v2430
  %v2437 = vmul.f32 %v2389, %v2431
  %v2439 = vlaneseq
  %v2440 = vshrl.u32 %v2439, 7
  %v2441 = vsub.s32 0, %v2440
  %v2442 = vrot.slane %v2357, %v2441
  %v2444 = vmul.f32 %v2432, %v2442
  %v2445 = vmul.f32 %v2433, %v2442
  %v2446 = vmul.f32 %v2434, %v2442
  %v2447 = vmul.f32 %v2435, %v2442
  %v2448 = vmul.f32 %v2436, %v2442
  %v2449 = vmul.f32 %v2437, %v2442
  %v2451 = vlaneseq
  %v2452 = vshrl.u32 %v2451, 7
  %v2453 = vsub.s32 0, %v2452
  %v2454 = vrot.slane %v2358, %v2453
  %v2456 = vadd.f32 %v2444, %v2454
  %v2457 = vadd.f32 %v2445, %v2454
  %v2458 = vadd.f32 %v2446, %v2454
  %v2459 = vadd.f32 %v2447, %v2454
  %v2460 = vadd.f32 %v2448, %v2454
  %v2461 = vadd.f32 %v2449, %v2454
  %v2462 = vld [vmem:[%s8] sm:$0xff]
  %v2463 = vld [vmem:[%s8 + $0x8] sm:$0xff]
  %v2464 = vld [vmem:[%s8 + $0x10] sm:$0xff]
  %v2465 = vld [vmem:[%s8 + $0x18] sm:$0xff]
  %v2466 = vld [vmem:[%s9] sm:$0x1]
  %v2468 = vlaneseq
  %v2469 = vshrl.u32 %v2468, 7
  %v2470 = vsub.s32 0, %v2469
  %v2471 = vrot.slane %v2466, %v2470
  %v2474 = vsel %vm1558, %v2456, 0
  %v2477 = vsel %vm1558, %v2457, 0
  %v2480 = vsel %vm1558, %v2458, 0
  %v2483 = vsel %vm1558, %v2459, 0
  %v2486 = vsel %vm1558, %v2460, 0
  %v2489 = vsel %vm1558, %v2461, 0
  %2491 = vmatprep.subr.mxu0 0.0
  %v2492 = vand.u32 %v2462, 4294901760
  %2493 = vmatpush1.msra.mxu0 %v2492
  %2494 = vmatprep.subr.mxu0 0.0
  %v2495 = vand.u32 %v2463, 4294901760
  %2496 = vmatpush1.msra.mxu0 %v2495
  %2497 = vmatprep.subr.mxu0 0.0
  %v2498 = vand.u32 %v2464, 4294901760
  %2499 = vmatpush1.msra.mxu0 %v2498
  %2500 = vmatprep.subr.mxu0 0.0
  %v2501 = vand.u32 %v2465, 4294901760
  %2502 = vmatpush1.msra.mxu0 %v2501
  %2503 = vmatprep.subr.mxu0 0.0
  %2504 = vmatpush1.msra.mxu0 0.0
  %2505 = vmatprep.subr.mxu0 0.0
  %2506 = vmatpush1.msra.mxu0 0.0
  %2507 = vmatprep.subr.mxu0 0.0
  %2508 = vmatpush1.msra.mxu0 0.0
  %2509 = vmatprep.subr.mxu0 0.0
  %2510 = vmatpush1.msra.mxu0 0.0
  %2511 = vmatprep.subr.mxu0 0.0
  %2512 = vmatpush1.msra.mxu0 0.0
  %2513 = vmatprep.subr.mxu0 0.0
  %2514 = vmatpush1.msra.mxu0 0.0
  %2515 = vmatprep.subr.mxu0 0.0
  %2516 = vmatpush1.msra.mxu0 0.0
  %2517 = vmatprep.subr.mxu0 0.0
  %2518 = vmatpush1.msra.mxu0 0.0
  %2519 = vmatprep.subr.mxu0 0.0
  %2520 = vmatpush1.msra.mxu0 0.0
  %2521 = vmatprep.subr.mxu0 0.0
  %2522 = vmatpush1.msra.mxu0 0.0
  %2523 = vmatprep.subr.mxu0 0.0
  %2524 = vmatpush1.msra.mxu0 0.0
  %2525 = vmatprep.subr.mxu0 0.0
  %2526 = vmatpush1.msra.mxu0 0.0
  %2527 = vmatprep.subr.mxu0 0.0
  %2528 = vmatpush1.msra.mxu0 0.0
  %2529 = vmatprep.subr.mxu0 0.0
  %2530 = vmatpush1.msra.mxu0 0.0
  %2531 = vmatprep.subr.mxu0 0.0
  %2532 = vmatpush1.msra.mxu0 0.0
  %2533 = vmatprep.subr.mxu0 0.0
  %2534 = vmatpush1.msra.mxu0 0.0
  %2535 = vmatprep.subr.mxu0 0.0
  %2536 = vmatpush1.msra.mxu0 0.0
  %2537 = vmatprep.subr.mxu0 0.0
  %2538 = vmatpush1.msra.mxu0 0.0
  %2539 = vmatprep.subr.mxu0 0.0
  %2540 = vmatpush1.msra.mxu0 0.0
  %2541 = vmatprep.subr.mxu0 0.0
  %2542 = vmatpush1.msra.mxu0 0.0
  %2543 = vmatprep.subr.mxu0 0.0
  %2544 = vmatpush1.msra.mxu0 0.0
  %2545 = vmatprep.subr.mxu0 0.0
  %2546 = vmatpush1.msra.mxu0 0.0
  %2547 = vmatprep.subr.mxu0 0.0
  %2548 = vmatpush1.msra.mxu0 0.0
  %2549 = vmatprep.subr.mxu0 0.0
  %2550 = vmatpush1.msra.mxu0 0.0
  %2551 = vmatprep.subr.mxu0 0.0
  %2552 = vmatpush1.msra.mxu0 0.0
  %2553 = vmatprep.subr.mxu0 0.0
  %2554 = vmatpush1.msra.mxu0 0.0
  %2555 = vmatprep.subr.mxu0 0.0
  %2556 = vmatpush1.msra.mxu0 0.0
  %2557 = vmatprep.subr.mxu0 0.0
  %2558 = vmatpush1.msra.mxu0 0.0
  %2559 = vmatprep.mubr.f32.mxu0 0.0
  %v2560 = vand.u32 %v2474, 4294901760
  %v2561 = vsub.f32 %v2474, %v2560
  %v2562 = vand.u32 %v2561, 4294901760
  %v2563 = vsub.f32 %v2561, %v2562
  %v2564 = vand.u32 %v2563, 4294901760
  %2565 = vmatmul.mubr.f32.gmra.mrb[0].mxu0 %v2564
  %v2566 = vpop.f32.mrb[0].mxu0
  %v2567 = vadd.f32 %v2471, %v2566
  %v2568 = vpop.f32.mrb[0].mxu0
  %2569 = vmatprep.mubr.f32.mxu0 0.0
  %v2570 = vand.u32 %v2477, 4294901760
  %v2571 = vsub.f32 %v2477, %v2570
  %v2572 = vand.u32 %v2571, 4294901760
  %v2573 = vsub.f32 %v2571, %v2572
  %v2574 = vand.u32 %v2573, 4294901760
  %2575 = vmatmul.mubr.f32.gmra.mrb[0].mxu0 %v2574
  %v2576 = vpop.f32.mrb[0].mxu0
  %v2577 = vadd.f32 %v2471, %v2576
  %v2578 = vpop.f32.mrb[0].mxu0
  %2579 = vmatprep.mubr.f32.mxu0 0.0
  %v2580 = vand.u32 %v2480, 4294901760
  %v2581 = vsub.f32 %v2480, %v2580
  %v2582 = vand.u32 %v2581, 4294901760
  %v2583 = vsub.f32 %v2581, %v2582
  %v2584 = vand.u32 %v2583, 4294901760
  %2585 = vmatmul.mubr.f32.gmra.mrb[0].mxu0 %v2584
  %v2586 = vpop.f32.mrb[0].mxu0
  %v2587 = vadd.f32 %v2471, %v2586
  %v2588 = vpop.f32.mrb[0].mxu0
  %2589 = vmatprep.mubr.f32.mxu0 0.0
  %v2590 = vand.u32 %v2483, 4294901760
  %v2591 = vsub.f32 %v2483, %v2590
  %v2592 = vand.u32 %v2591, 4294901760
  %v2593 = vsub.f32 %v2591, %v2592
  %v2594 = vand.u32 %v2593, 4294901760
  %2595 = vmatmul.mubr.f32.gmra.mrb[0].mxu0 %v2594
  %v2596 = vpop.f32.mrb[0].mxu0
  %v2597 = vadd.f32 %v2471, %v2596
  %v2598 = vpop.f32.mrb[0].mxu0
  %2599 = vmatprep.mubr.f32.mxu0 0.0
  %v2600 = vand.u32 %v2486, 4294901760
  %v2601 = vsub.f32 %v2486, %v2600
  %v2602 = vand.u32 %v2601, 4294901760
  %v2603 = vsub.f32 %v2601, %v2602
  %v2604 = vand.u32 %v2603, 4294901760
  %2605 = vmatmul.mubr.f32.gmra.mrb[0].mxu0 %v2604
  %v2606 = vpop.f32.mrb[0].mxu0
  %v2607 = vadd.f32 %v2471, %v2606
  %v2608 = vpop.f32.mrb[0].mxu0
  %2609 = vmatprep.mubr.f32.mxu0 0.0
  %v2610 = vand.u32 %v2489, 4294901760
  %v2611 = vsub.f32 %v2489, %v2610
  %v2612 = vand.u32 %v2611, 4294901760
  %v2613 = vsub.f32 %v2611, %v2612
  %v2614 = vand.u32 %v2613, 4294901760
  %2615 = vmatmul.mubr.f32.gmra.mrb[0].mxu0 %v2614
  %v2616 = vpop.f32.mrb[0].mxu0
  %v2617 = vadd.f32 %v2471, %v2616
  %v2618 = vpop.f32.mrb[0].mxu0
  %2619 = vdwg.mxu0
  %2620 = vmatprep.subr.mxu0 0.0
  %v2621 = vand.u32 %v2462, 4294901760
  %v2622 = vsub.f32 %v2462, %v2621
  %v2623 = vand.u32 %v2622, 4294901760
  %v2624 = vsub.f32 %v2622, %v2623
  %v2625 = vand.u32 %v2624, 4294901760
  %2626 = vmatpush1.msra.mxu0 %v2625
  %2627 = vmatprep.subr.mxu0 0.0
  %v2628 = vand.u32 %v2463, 4294901760
  %v2629 = vsub.f32 %v2463, %v2628
  %v2630 = vand.u32 %v2629, 4294901760
  %v2631 = vsub.f32 %v2629, %v2630
  %v2632 = vand.u32 %v2631, 4294901760
  %2633 = vmatpush1.msra.mxu0 %v2632
  %2634 = vmatprep.subr.mxu0 0.0
  %v2635 = vand.u32 %v2464, 4294901760
  %v2636 = vsub.f32 %v2464, %v2635
  %v2637 = vand.u32 %v2636, 4294901760
  %v2638 = vsub.f32 %v2636, %v2637
  %v2639 = vand.u32 %v2638, 4294901760
  %2640 = vmatpush1.msra.mxu0 %v2639
  %2641 = vmatprep.subr.mxu0 0.0
  %v2642 = vand.u32 %v2465, 4294901760
  %v2643 = vsub.f32 %v2465, %v2642
  %v2644 = vand.u32 %v2643, 4294901760
  %v2645 = vsub.f32 %v2643, %v2644
  %v2646 = vand.u32 %v2645, 4294901760
  %2647 = vmatpush1.msra.mxu0 %v2646
  %2648 = vmatprep.subr.mxu0 0.0
  %2649 = vmatpush1.msra.mxu0 0.0
  %2650 = vmatprep.subr.mxu0 0.0
  %2651 = vmatpush1.msra.mxu0 0.0
  %2652 = vmatprep.subr.mxu0 0.0
  %2653 = vmatpush1.msra.mxu0 0.0
  %2654 = vmatprep.subr.mxu0 0.0
  %2655 = vmatpush1.msra.mxu0 0.0
  %2656 = vmatprep.subr.mxu0 0.0
  %2657 = vmatpush1.msra.mxu0 0.0
  %2658 = vmatprep.subr.mxu0 0.0
  %2659 = vmatpush1.msra.mxu0 0.0
  %2660 = vmatprep.subr.mxu0 0.0
  %2661 = vmatpush1.msra.mxu0 0.0
  %2662 = vmatprep.subr.mxu0 0.0
  %2663 = vmatpush1.msra.mxu0 0.0
  %2664 = vmatprep.subr.mxu0 0.0
  %2665 = vmatpush1.msra.mxu0 0.0
  %2666 = vmatprep.subr.mxu0 0.0
  %2667 = vmatpush1.msra.mxu0 0.0
  %2668 = vmatprep.subr.mxu0 0.0
  %2669 = vmatpush1.msra.mxu0 0.0
  %2670 = vmatprep.subr.mxu0 0.0
  %2671 = vmatpush1.msra.mxu0 0.0
  %2672 = vmatprep.subr.mxu0 0.0
  %2673 = vmatpush1.msra.mxu0 0.0
  %2674 = vmatprep.subr.mxu0 0.0
  %2675 = vmatpush1.msra.mxu0 0.0
  %2676 = vmatprep.subr.mxu0 0.0
  %2677 = vmatpush1.msra.mxu0 0.0
  %2678 = vmatprep.subr.mxu0 0.0
  %2679 = vmatpush1.msra.mxu0 0.0
  %2680 = vmatprep.subr.mxu0 0.0
  %2681 = vmatpush1.msra.mxu0 0.0
  %2682 = vmatprep.subr.mxu0 0.0
  %2683 = vmatpush1.msra.mxu0 0.0
  %2684 = vmatprep.subr.mxu0 0.0
  %2685 = vmatpush1.msra.mxu0 0.0
  %2686 = vmatprep.subr.mxu0 0.0
  %2687 = vmatpush1.msra.mxu0 0.0
  %2688 = vmatprep.subr.mxu0 0.0
  %2689 = vmatpush1.msra.mxu0 0.0
  %2690 = vmatprep.subr.mxu0 0.0
  %2691 = vmatpush1.msra.mxu0 0.0
  %2692 = vmatprep.subr.mxu0 0.0
  %2693 = vmatpush1.msra.mxu0 0.0
  %2694 = vmatprep.subr.mxu0 0.0
  %2695 = vmatpush1.msra.mxu0 0.0
  %2696 = vmatprep.subr.mxu0 0.0
  %2697 = vmatpush1.msra.mxu0 0.0
  %2698 = vmatprep.subr.mxu0 0.0
  %2699 = vmatpush1.msra.mxu0 0.0
  %2700 = vmatprep.subr.mxu0 0.0
  %2701 = vmatpush1.msra.mxu0 0.0
  %2702 = vmatprep.subr.mxu0 0.0
  %2703 = vmatpush1.msra.mxu0 0.0
  %2704 = vmatprep.mubr.f32.mxu0 0.0
  %v2705 = vand.u32 %v2474, 4294901760
  %2706 = vmatmul.mubr.f32.gmra.mrb[0].mxu0 %v2705
  %v2707 = vpop.f32.mrb[0].mxu0
  %v2708 = vadd.f32 %v2567, %v2707
  %v2709 = vpop.f32.mrb[0].mxu0
  %2710 = vmatprep.mubr.f32.mxu0 0.0
  %v2711 = vand.u32 %v2477, 4294901760
  %2712 = vmatmul.mubr.f32.gmra.mrb[0].mxu0 %v2711
  %v2713 = vpop.f32.mrb[0].mxu0
  %v2714 = vadd.f32 %v2577, %v2713
  %v2715 = vpop.f32.mrb[0].mxu0
  %2716 = vmatprep.mubr.f32.mxu0 0.0
  %v2717 = vand.u32 %v2480, 4294901760
  %2718 = vmatmul.mubr.f32.gmra.mrb[0].mxu0 %v2717
  %v2719 = vpop.f32.mrb[0].mxu0
  %v2720 = vadd.f32 %v2587, %v2719
  %v2721 = vpop.f32.mrb[0].mxu0
  %2722 = vmatprep.mubr.f32.mxu0 0.0
  %v2723 = vand.u32 %v2483, 4294901760
  %2724 = vmatmul.mubr.f32.gmra.mrb[0].mxu0 %v2723
  %v2725 = vpop.f32.mrb[0].mxu0
  %v2726 = vadd.f32 %v2597, %v2725
  %v2727 = vpop.f32.mrb[0].mxu0
  %2728 = vmatprep.mubr.f32.mxu0 0.0
  %v2729 = vand.u32 %v2486, 4294901760
  %2730 = vmatmul.mubr.f32.gmra.mrb[0].mxu0 %v2729
  %v2731 = vpop.f32.mrb[0].mxu0
  %v2732 = vadd.f32 %v2607, %v2731
  %v2733 = vpop.f32.mrb[0].mxu0
  %2734 = vmatprep.mubr.f32.mxu0 0.0
  %v2735 = vand.u32 %v2489, 4294901760
  %2736 = vmatmul.mubr.f32.gmra.mrb[0].mxu0 %v2735
  %v2737 = vpop.f32.mrb[0].mxu0
  %v2738 = vadd.f32 %v2617, %v2737
  %v2739 = vpop.f32.mrb[0].mxu0
  %2740 = vdwg.mxu0
  %2741 = vmatprep.subr.mxu0 0.0
  %v2742 = vand.u32 %v2462, 4294901760
  %v2743 = vsub.f32 %v2462, %v2742
  %2744 = vmatpush1.msra.mxu0 %v2743
  %2745 = vmatprep.subr.mxu0 0.0
  %v2746 = vand.u32 %v2463, 4294901760
  %v2747 = vsub.f32 %v2463, %v2746
  %2748 = vmatpush1.msra.mxu0 %v2747
  %2749 = vmatprep.subr.mxu0 0.0
  %v2750 = vand.u32 %v2464, 4294901760
  %v2751 = vsub.f32 %v2464, %v2750
  %2752 = vmatpush1.msra.mxu0 %v2751
  %2753 = vmatprep.subr.mxu0 0.0
  %v2754 = vand.u32 %v2465, 4294901760
  %v2755 = vsub.f32 %v2465, %v2754
  %2756 = vmatpush1.msra.mxu0 %v2755
  %2757 = vmatprep.subr.mxu0 0.0
  %2758 = vmatpush1.msra.mxu0 0.0
  %2759 = vmatprep.subr.mxu0 0.0
  %2760 = vmatpush1.msra.mxu0 0.0
  %2761 = vmatprep.subr.mxu0 0.0
  %2762 = vmatpush1.msra.mxu0 0.0
  %2763 = vmatprep.subr.mxu0 0.0
  %2764 = vmatpush1.msra.mxu0 0.0
  %2765 = vmatprep.subr.mxu0 0.0
  %2766 = vmatpush1.msra.mxu0 0.0
  %2767 = vmatprep.subr.mxu0 0.0
  %2768 = vmatpush1.msra.mxu0 0.0
  %2769 = vmatprep.subr.mxu0 0.0
  %2770 = vmatpush1.msra.mxu0 0.0
  %2771 = vmatprep.subr.mxu0 0.0
  %2772 = vmatpush1.msra.mxu0 0.0
  %2773 = vmatprep.subr.mxu0 0.0
  %2774 = vmatpush1.msra.mxu0 0.0
  %2775 = vmatprep.subr.mxu0 0.0
  %2776 = vmatpush1.msra.mxu0 0.0
  %2777 = vmatprep.subr.mxu0 0.0
  %2778 = vmatpush1.msra.mxu0 0.0
  %2779 = vmatprep.subr.mxu0 0.0
  %2780 = vmatpush1.msra.mxu0 0.0
  %2781 = vmatprep.subr.mxu0 0.0
  %2782 = vmatpush1.msra.mxu0 0.0
  %2783 = vmatprep.subr.mxu0 0.0
  %2784 = vmatpush1.msra.mxu0 0.0
  %2785 = vmatprep.subr.mxu0 0.0
  %2786 = vmatpush1.msra.mxu0 0.0
  %2787 = vmatprep.subr.mxu0 0.0
  %2788 = vmatpush1.msra.mxu0 0.0
  %2789 = vmatprep.subr.mxu0 0.0
  %2790 = vmatpush1.msra.mxu0 0.0
  %2791 = vmatprep.subr.mxu0 0.0
  %2792 = vmatpush1.msra.mxu0 0.0
  %2793 = vmatprep.subr.mxu0 0.0
  %2794 = vmatpush1.msra.mxu0 0.0
  %2795 = vmatprep.subr.mxu0 0.0
  %2796 = vmatpush1.msra.mxu0 0.0
  %2797 = vmatprep.subr.mxu0 0.0
  %2798 = vmatpush1.msra.mxu0 0.0
  %2799 = vmatprep.subr.mxu0 0.0
  %2800 = vmatpush1.msra.mxu0 0.0
  %2801 = vmatprep.subr.mxu0 0.0
  %2802 = vmatpush1.msra.mxu0 0.0
  %2803 = vmatprep.subr.mxu0 0.0
  %2804 = vmatpush1.msra.mxu0 0.0
  %2805 = vmatprep.subr.mxu0 0.0
  %2806 = vmatpush1.msra.mxu0 0.0
  %2807 = vmatprep.subr.mxu0 0.0
  %2808 = vmatpush1.msra.mxu0 0.0
  %2809 = vmatprep.subr.mxu0 0.0
  %2810 = vmatpush1.msra.mxu0 0.0
  %2811 = vmatprep.subr.mxu0 0.0
  %2812 = vmatpush1.msra.mxu0 0.0
  %2813 = vmatprep.mubr.f32.mxu0 0.0
  %v2814 = vand.u32 %v2474, 4294901760
  %v2815 = vsub.f32 %v2474, %v2814
  %2816 = vmatmul.mubr.f32.gmra.mrb[0].mxu0 %v2815
  %v2817 = vpop.f32.mrb[0].mxu0
  %v2818 = vadd.f32 %v2708, %v2817
  %v2819 = vpop.f32.mrb[0].mxu0
  %2820 = vmatprep.mubr.f32.mxu0 0.0
  %v2821 = vand.u32 %v2477, 4294901760
  %v2822 = vsub.f32 %v2477, %v2821
  %2823 = vmatmul.mubr.f32.gmra.mrb[0].mxu0 %v2822
  %v2824 = vpop.f32.mrb[0].mxu0
  %v2825 = vadd.f32 %v2714, %v2824
  %v2826 = vpop.f32.mrb[0].mxu0
  %2827 = vmatprep.mubr.f32.mxu0 0.0
  %v2828 = vand.u32 %v2480, 4294901760
  %v2829 = vsub.f32 %v2480, %v2828
  %2830 = vmatmul.mubr.f32.gmra.mrb[0].mxu0 %v2829
  %v2831 = vpop.f32.mrb[0].mxu0
  %v2832 = vadd.f32 %v2720, %v2831
  %v2833 = vpop.f32.mrb[0].mxu0
  %2834 = vmatprep.mubr.f32.mxu0 0.0
  %v2835 = vand.u32 %v2483, 4294901760
  %v2836 = vsub.f32 %v2483, %v2835
  %2837 = vmatmul.mubr.f32.gmra.mrb[0].mxu0 %v2836
  %v2838 = vpop.f32.mrb[0].mxu0
  %v2839 = vadd.f32 %v2726, %v2838
  %v2840 = vpop.f32.mrb[0].mxu0
  %2841 = vmatprep.mubr.f32.mxu0 0.0
  %v2842 = vand.u32 %v2486, 4294901760
  %v2843 = vsub.f32 %v2486, %v2842
  %2844 = vmatmul.mubr.f32.gmra.mrb[0].mxu0 %v2843
  %v2845 = vpop.f32.mrb[0].mxu0
  %v2846 = vadd.f32 %v2732, %v2845
  %v2847 = vpop.f32.mrb[0].mxu0
  %2848 = vmatprep.mubr.f32.mxu0 0.0
  %v2849 = vand.u32 %v2489, 4294901760
  %v2850 = vsub.f32 %v2489, %v2849
  %2851 = vmatmul.mubr.f32.gmra.mrb[0].mxu0 %v2850
  %v2852 = vpop.f32.mrb[0].mxu0
  %v2853 = vadd.f32 %v2738, %v2852
  %v2854 = vpop.f32.mrb[0].mxu0
  %2855 = vdwg.mxu0
  %2856 = vmatprep.subr.mxu0 0.0
  %v2857 = vand.u32 %v2462, 4294901760
  %2858 = vmatpush1.msra.mxu0 %v2857
  %2859 = vmatprep.subr.mxu0 0.0
  %v2860 = vand.u32 %v2463, 4294901760
  %2861 = vmatpush1.msra.mxu0 %v2860
  %2862 = vmatprep.subr.mxu0 0.0
  %v2863 = vand.u32 %v2464, 4294901760
  %2864 = vmatpush1.msra.mxu0 %v2863
  %2865 = vmatprep.subr.mxu0 0.0
  %v2866 = vand.u32 %v2465, 4294901760
  %2867 = vmatpush1.msra.mxu0 %v2866
  %2868 = vmatprep.subr.mxu0 0.0
  %2869 = vmatpush1.msra.mxu0 0.0
  %2870 = vmatprep.subr.mxu0 0.0
  %2871 = vmatpush1.msra.mxu0 0.0
  %2872 = vmatprep.subr.mxu0 0.0
  %2873 = vmatpush1.msra.mxu0 0.0
  %2874 = vmatprep.subr.mxu0 0.0
  %2875 = vmatpush1.msra.mxu0 0.0
  %2876 = vmatprep.subr.mxu0 0.0
  %2877 = vmatpush1.msra.mxu0 0.0
  %2878 = vmatprep.subr.mxu0 0.0
  %2879 = vmatpush1.msra.mxu0 0.0
  %2880 = vmatprep.subr.mxu0 0.0
  %2881 = vmatpush1.msra.mxu0 0.0
  %2882 = vmatprep.subr.mxu0 0.0
  %2883 = vmatpush1.msra.mxu0 0.0
  %2884 = vmatprep.subr.mxu0 0.0
  %2885 = vmatpush1.msra.mxu0 0.0
  %2886 = vmatprep.subr.mxu0 0.0
  %2887 = vmatpush1.msra.mxu0 0.0
  %2888 = vmatprep.subr.mxu0 0.0
  %2889 = vmatpush1.msra.mxu0 0.0
  %2890 = vmatprep.subr.mxu0 0.0
  %2891 = vmatpush1.msra.mxu0 0.0
  %2892 = vmatprep.subr.mxu0 0.0
  %2893 = vmatpush1.msra.mxu0 0.0
  %2894 = vmatprep.subr.mxu0 0.0
  %2895 = vmatpush1.msra.mxu0 0.0
  %2896 = vmatprep.subr.mxu0 0.0
  %2897 = vmatpush1.msra.mxu0 0.0
  %2898 = vmatprep.subr.mxu0 0.0
  %2899 = vmatpush1.msra.mxu0 0.0
  %2900 = vmatprep.subr.mxu0 0.0
  %2901 = vmatpush1.msra.mxu0 0.0
  %2902 = vmatprep.subr.mxu0 0.0
  %2903 = vmatpush1.msra.mxu0 0.0
  %2904 = vmatprep.subr.mxu0 0.0
  %2905 = vmatpush1.msra.mxu0 0.0
  %2906 = vmatprep.subr.mxu0 0.0
  %2907 = vmatpush1.msra.mxu0 0.0
  %2908 = vmatprep.subr.mxu0 0.0
  %2909 = vmatpush1.msra.mxu0 0.0
  %2910 = vmatprep.subr.mxu0 0.0
  %2911 = vmatpush1.msra.mxu0 0.0
  %2912 = vmatprep.subr.mxu0 0.0
  %2913 = vmatpush1.msra.mxu0 0.0
  %2914 = vmatprep.subr.mxu0 0.0
  %2915 = vmatpush1.msra.mxu0 0.0
  %2916 = vmatprep.subr.mxu0 0.0
  %2917 = vmatpush1.msra.mxu0 0.0
  %2918 = vmatprep.subr.mxu0 0.0
  %2919 = vmatpush1.msra.mxu0 0.0
  %2920 = vmatprep.subr.mxu0 0.0
  %2921 = vmatpush1.msra.mxu0 0.0
  %2922 = vmatprep.subr.mxu0 0.0
  %2923 = vmatpush1.msra.mxu0 0.0
  %2924 = vmatprep.mubr.f32.mxu0 0.0
  %v2925 = vand.u32 %v2474, 4294901760
  %v2926 = vsub.f32 %v2474, %v2925
  %v2927 = vand.u32 %v2926, 4294901760
  %2928 = vmatmul.mubr.f32.gmra.mrb[0].mxu0 %v2927
  %v2929 = vpop.f32.mrb[0].mxu0
  %v2930 = vadd.f32 %v2818, %v2929
  %v2931 = vpop.f32.mrb[0].mxu0
  %2932 = vmatprep.mubr.f32.mxu0 0.0
  %v2933 = vand.u32 %v2477, 4294901760
  %v2934 = vsub.f32 %v2477, %v2933
  %v2935 = vand.u32 %v2934, 4294901760
  %2936 = vmatmul.mubr.f32.gmra.mrb[0].mxu0 %v2935
  %v2937 = vpop.f32.mrb[0].mxu0
  %v2938 = vadd.f32 %v2825, %v2937
  %v2939 = vpop.f32.mrb[0].mxu0
  %2940 = vmatprep.mubr.f32.mxu0 0.0
  %v2941 = vand.u32 %v2480, 4294901760
  %v2942 = vsub.f32 %v2480, %v2941
  %v2943 = vand.u32 %v2942, 4294901760
  %2944 = vmatmul.mubr.f32.gmra.mrb[0].mxu0 %v2943
  %v2945 = vpop.f32.mrb[0].mxu0
  %v2946 = vadd.f32 %v2832, %v2945
  %v2947 = vpop.f32.mrb[0].mxu0
  %2948 = vmatprep.mubr.f32.mxu0 0.0
  %v2949 = vand.u32 %v2483, 4294901760
  %v2950 = vsub.f32 %v2483, %v2949
  %v2951 = vand.u32 %v2950, 4294901760
  %2952 = vmatmul.mubr.f32.gmra.mrb[0].mxu0 %v2951
  %v2953 = vpop.f32.mrb[0].mxu0
  %v2954 = vadd.f32 %v2839, %v2953
  %v2955 = vpop.f32.mrb[0].mxu0
  %2956 = vmatprep.mubr.f32.mxu0 0.0
  %v2957 = vand.u32 %v2486, 4294901760
  %v2958 = vsub.f32 %v2486, %v2957
  %v2959 = vand.u32 %v2958, 4294901760
  %2960 = vmatmul.mubr.f32.gmra.mrb[0].mxu0 %v2959
  %v2961 = vpop.f32.mrb[0].mxu0
  %v2962 = vadd.f32 %v2846, %v2961
  %v2963 = vpop.f32.mrb[0].mxu0
  %2964 = vmatprep.mubr.f32.mxu0 0.0
  %v2965 = vand.u32 %v2489, 4294901760
  %v2966 = vsub.f32 %v2489, %v2965
  %v2967 = vand.u32 %v2966, 4294901760
  %2968 = vmatmul.mubr.f32.gmra.mrb[0].mxu0 %v2967
  %v2969 = vpop.f32.mrb[0].mxu0
  %v2970 = vadd.f32 %v2853, %v2969
  %v2971 = vpop.f32.mrb[0].mxu0
  %2972 = vdwg.mxu0
  %2973 = vmatprep.subr.mxu0 0.0
  %v2974 = vand.u32 %v2462, 4294901760
  %v2975 = vsub.f32 %v2462, %v2974
  %v2976 = vand.u32 %v2975, 4294901760
  %2977 = vmatpush1.msra.mxu0 %v2976
  %2978 = vmatprep.subr.mxu0 0.0
  %v2979 = vand.u32 %v2463, 4294901760
  %v2980 = vsub.f32 %v2463, %v2979
  %v2981 = vand.u32 %v2980, 4294901760
  %2982 = vmatpush1.msra.mxu0 %v2981
  %2983 = vmatprep.subr.mxu0 0.0
  %v2984 = vand.u32 %v2464, 4294901760
  %v2985 = vsub.f32 %v2464, %v2984
  %v2986 = vand.u32 %v2985, 4294901760
  %2987 = vmatpush1.msra.mxu0 %v2986
  %2988 = vmatprep.subr.mxu0 0.0
  %v2989 = vand.u32 %v2465, 4294901760
  %v2990 = vsub.f32 %v2465, %v2989
  %v2991 = vand.u32 %v2990, 4294901760
  %2992 = vmatpush1.msra.mxu0 %v2991
  %2993 = vmatprep.subr.mxu0 0.0
  %2994 = vmatpush1.msra.mxu0 0.0
  %2995 = vmatprep.subr.mxu0 0.0
  %2996 = vmatpush1.msra.mxu0 0.0
  %2997 = vmatprep.subr.mxu0 0.0
  %2998 = vmatpush1.msra.mxu0 0.0
  %2999 = vmatprep.subr.mxu0 0.0
  %3000 = vmatpush1.msra.mxu0 0.0
  %3001 = vmatprep.subr.mxu0 0.0
  %3002 = vmatpush1.msra.mxu0 0.0
  %3003 = vmatprep.subr.mxu0 0.0
  %3004 = vmatpush1.msra.mxu0 0.0
  %3005 = vmatprep.subr.mxu0 0.0
  %3006 = vmatpush1.msra.mxu0 0.0
  %3007 = vmatprep.subr.mxu0 0.0
  %3008 = vmatpush1.msra.mxu0 0.0
  %3009 = vmatprep.subr.mxu0 0.0
  %3010 = vmatpush1.msra.mxu0 0.0
  %3011 = vmatprep.subr.mxu0 0.0
  %3012 = vmatpush1.msra.mxu0 0.0
  %3013 = vmatprep.subr.mxu0 0.0
  %3014 = vmatpush1.msra.mxu0 0.0
  %3015 = vmatprep.subr.mxu0 0.0
  %3016 = vmatpush1.msra.mxu0 0.0
  %3017 = vmatprep.subr.mxu0 0.0
  %3018 = vmatpush1.msra.mxu0 0.0
  %3019 = vmatprep.subr.mxu0 0.0
  %3020 = vmatpush1.msra.mxu0 0.0
  %3021 = vmatprep.subr.mxu0 0.0
  %3022 = vmatpush1.msra.mxu0 0.0
  %3023 = vmatprep.subr.mxu0 0.0
  %3024 = vmatpush1.msra.mxu0 0.0
  %3025 = vmatprep.subr.mxu0 0.0
  %3026 = vmatpush1.msra.mxu0 0.0
  %3027 = vmatprep.subr.mxu0 0.0
  %3028 = vmatpush1.msra.mxu0 0.0
  %3029 = vmatprep.subr.mxu0 0.0
  %3030 = vmatpush1.msra.mxu0 0.0
  %3031 = vmatprep.subr.mxu0 0.0
  %3032 = vmatpush1.msra.mxu0 0.0
  %3033 = vmatprep.subr.mxu0 0.0
  %3034 = vmatpush1.msra.mxu0 0.0
  %3035 = vmatprep.subr.mxu0 0.0
  %3036 = vmatpush1.msra.mxu0 0.0
  %3037 = vmatprep.subr.mxu0 0.0
  %3038 = vmatpush1.msra.mxu0 0.0
  %3039 = vmatprep.subr.mxu0 0.0
  %3040 = vmatpush1.msra.mxu0 0.0
  %3041 = vmatprep.subr.mxu0 0.0
  %3042 = vmatpush1.msra.mxu0 0.0
  %3043 = vmatprep.subr.mxu0 0.0
  %3044 = vmatpush1.msra.mxu0 0.0
  %3045 = vmatprep.subr.mxu0 0.0
  %3046 = vmatpush1.msra.mxu0 0.0
  %3047 = vmatprep.subr.mxu0 0.0
  %3048 = vmatpush1.msra.mxu0 0.0
  %3049 = vmatprep.mubr.f32.mxu0 0.0
  %v3050 = vand.u32 %v2474, 4294901760
  %3051 = vmatmul.mubr.f32.gmra.mrb[0].mxu0 %v3050
  %v3052 = vpop.f32.mrb[0].mxu0
  %v3053 = vadd.f32 %v2930, %v3052
  %v3054 = vpop.f32.mrb[0].mxu0
  %3055 = vmatprep.mubr.f32.mxu0 0.0
  %v3056 = vand.u32 %v2477, 4294901760
  %3057 = vmatmul.mubr.f32.gmra.mrb[0].mxu0 %v3056
  %v3058 = vpop.f32.mrb[0].mxu0
  %v3059 = vadd.f32 %v2938, %v3058
  %v3060 = vpop.f32.mrb[0].mxu0
  %3061 = vmatprep.mubr.f32.mxu0 0.0
  %v3062 = vand.u32 %v2480, 4294901760
  %3063 = vmatmul.mubr.f32.gmra.mrb[0].mxu0 %v3062
  %v3064 = vpop.f32.mrb[0].mxu0
  %v3065 = vadd.f32 %v2946, %v3064
  %v3066 = vpop.f32.mrb[0].mxu0
  %3067 = vmatprep.mubr.f32.mxu0 0.0
  %v3068 = vand.u32 %v2483, 4294901760
  %3069 = vmatmul.mubr.f32.gmra.mrb[0].mxu0 %v3068
  %v3070 = vpop.f32.mrb[0].mxu0
  %v3071 = vadd.f32 %v2954, %v3070
  %v3072 = vpop.f32.mrb[0].mxu0
  %3073 = vmatprep.mubr.f32.mxu0 0.0
  %v3074 = vand.u32 %v2486, 4294901760
  %3075 = vmatmul.mubr.f32.gmra.mrb[0].mxu0 %v3074
  %v3076 = vpop.f32.mrb[0].mxu0
  %v3077 = vadd.f32 %v2962, %v3076
  %v3078 = vpop.f32.mrb[0].mxu0
  %3079 = vmatprep.mubr.f32.mxu0 0.0
  %v3080 = vand.u32 %v2489, 4294901760
  %3081 = vmatmul.mubr.f32.gmra.mrb[0].mxu0 %v3080
  %v3082 = vpop.f32.mrb[0].mxu0
  %v3083 = vadd.f32 %v2970, %v3082
  %v3084 = vpop.f32.mrb[0].mxu0
  %3085 = vdwg.mxu0
  %3086 = vmatprep.subr.mxu0 0.0
  %v3087 = vand.u32 %v2462, 4294901760
  %3088 = vmatpush1.msra.mxu0 %v3087
  %3089 = vmatprep.subr.mxu0 0.0
  %v3090 = vand.u32 %v2463, 4294901760
  %3091 = vmatpush1.msra.mxu0 %v3090
  %3092 = vmatprep.subr.mxu0 0.0
  %v3093 = vand.u32 %v2464, 4294901760
  %3094 = vmatpush1.msra.mxu0 %v3093
  %3095 = vmatprep.subr.mxu0 0.0
  %v3096 = vand.u32 %v2465, 4294901760
  %3097 = vmatpush1.msra.mxu0 %v3096
  %3098 = vmatprep.subr.mxu0 0.0
  %3099 = vmatpush1.msra.mxu0 0.0
  %3100 = vmatprep.subr.mxu0 0.0
  %3101 = vmatpush1.msra.mxu0 0.0
  %3102 = vmatprep.subr.mxu0 0.0
  %3103 = vmatpush1.msra.mxu0 0.0
  %3104 = vmatprep.subr.mxu0 0.0
  %3105 = vmatpush1.msra.mxu0 0.0
  %3106 = vmatprep.subr.mxu0 0.0
  %3107 = vmatpush1.msra.mxu0 0.0
  %3108 = vmatprep.subr.mxu0 0.0
  %3109 = vmatpush1.msra.mxu0 0.0
  %3110 = vmatprep.subr.mxu0 0.0
  %3111 = vmatpush1.msra.mxu0 0.0
  %3112 = vmatprep.subr.mxu0 0.0
  %3113 = vmatpush1.msra.mxu0 0.0
  %3114 = vmatprep.subr.mxu0 0.0
  %3115 = vmatpush1.msra.mxu0 0.0
  %3116 = vmatprep.subr.mxu0 0.0
  %3117 = vmatpush1.msra.mxu0 0.0
  %3118 = vmatprep.subr.mxu0 0.0
  %3119 = vmatpush1.msra.mxu0 0.0
  %3120 = vmatprep.subr.mxu0 0.0
  %3121 = vmatpush1.msra.mxu0 0.0
  %3122 = vmatprep.subr.mxu0 0.0
  %3123 = vmatpush1.msra.mxu0 0.0
  %3124 = vmatprep.subr.mxu0 0.0
  %3125 = vmatpush1.msra.mxu0 0.0
  %3126 = vmatprep.subr.mxu0 0.0
  %3127 = vmatpush1.msra.mxu0 0.0
  %3128 = vmatprep.subr.mxu0 0.0
  %3129 = vmatpush1.msra.mxu0 0.0
  %3130 = vmatprep.subr.mxu0 0.0
  %3131 = vmatpush1.msra.mxu0 0.0
  %3132 = vmatprep.subr.mxu0 0.0
  %3133 = vmatpush1.msra.mxu0 0.0
  %3134 = vmatprep.subr.mxu0 0.0
  %3135 = vmatpush1.msra.mxu0 0.0
  %3136 = vmatprep.subr.mxu0 0.0
  %3137 = vmatpush1.msra.mxu0 0.0
  %3138 = vmatprep.subr.mxu0 0.0
  %3139 = vmatpush1.msra.mxu0 0.0
  %3140 = vmatprep.subr.mxu0 0.0
  %3141 = vmatpush1.msra.mxu0 0.0
  %3142 = vmatprep.subr.mxu0 0.0
  %3143 = vmatpush1.msra.mxu0 0.0
  %3144 = vmatprep.subr.mxu0 0.0
  %3145 = vmatpush1.msra.mxu0 0.0
  %3146 = vmatprep.subr.mxu0 0.0
  %3147 = vmatpush1.msra.mxu0 0.0
  %3148 = vmatprep.subr.mxu0 0.0
  %3149 = vmatpush1.msra.mxu0 0.0
  %3150 = vmatprep.subr.mxu0 0.0
  %3151 = vmatpush1.msra.mxu0 0.0
  %3152 = vmatprep.subr.mxu0 0.0
  %3153 = vmatpush1.msra.mxu0 0.0
  %3154 = vmatprep.mubr.f32.mxu0 0.0
  %v3155 = vand.u32 %v2474, 4294901760
  %3156 = vmatmul.mubr.f32.gmra.mrb[0].mxu0 %v3155
  %v3157 = vpop.f32.mrb[0].mxu0
  %v3158 = vadd.f32 %v3053, %v3157
  %v3159 = vpop.f32.mrb[0].mxu0
  %3160 = vmatprep.mubr.f32.mxu0 0.0
  %v3161 = vand.u32 %v2477, 4294901760
  %3162 = vmatmul.mubr.f32.gmra.mrb[0].mxu0 %v3161
  %v3163 = vpop.f32.mrb[0].mxu0
  %v3164 = vadd.f32 %v3059, %v3163
  %v3165 = vpop.f32.mrb[0].mxu0
  %3166 = vmatprep.mubr.f32.mxu0 0.0
  %v3167 = vand.u32 %v2480, 4294901760
  %3168 = vmatmul.mubr.f32.gmra.mrb[0].mxu0 %v3167
  %v3169 = vpop.f32.mrb[0].mxu0
  %v3170 = vadd.f32 %v3065, %v3169
  %v3171 = vpop.f32.mrb[0].mxu0
  %3172 = vmatprep.mubr.f32.mxu0 0.0
  %v3173 = vand.u32 %v2483, 4294901760
  %3174 = vmatmul.mubr.f32.gmra.mrb[0].mxu0 %v3173
  %v3175 = vpop.f32.mrb[0].mxu0
  %v3176 = vadd.f32 %v3071, %v3175
  %v3177 = vpop.f32.mrb[0].mxu0
  %3178 = vmatprep.mubr.f32.mxu0 0.0
  %v3179 = vand.u32 %v2486, 4294901760
  %3180 = vmatmul.mubr.f32.gmra.mrb[0].mxu0 %v3179
  %v3181 = vpop.f32.mrb[0].mxu0
  %v3182 = vadd.f32 %v3077, %v3181
  %v3183 = vpop.f32.mrb[0].mxu0
  %3184 = vmatprep.mubr.f32.mxu0 0.0
  %v3185 = vand.u32 %v2489, 4294901760
  %3186 = vmatmul.mubr.f32.gmra.mrb[0].mxu0 %v3185
  %v3187 = vpop.f32.mrb[0].mxu0
  %v3188 = vadd.f32 %v3083, %v3187
  %v3189 = vpop.f32.mrb[0].mxu0
  %3190 = vdwg.mxu0
  %v3191 = vmax.f32 %v3158, 0.0
  %v3192 = vmax.f32 %v3164, 0.0
  %v3193 = vmax.f32 %v3170, 0.0
  %v3194 = vmax.f32 %v3176, 0.0
  %v3195 = vmax.f32 %v3182, 0.0
  %v3196 = vmax.f32 %v3188, 0.0
  %v3197 = vld [vmem:[%s10] sm:$0x1]
  %v3198 = vld [vmem:[%s11] sm:$0x1]
  %v3199 = vsel %vm1558, %v3191, 0.0
  %3200 = vadd.xlane.f32.xlu0 %v3199
  %v3201 = vpop.xlane.xlu0 %3200
  %v3202 = vsel %vm1558, %v3192, 0.0
  %3203 = vadd.xlane.f32.xlu0 %v3202
  %v3204 = vpop.xlane.xlu0 %3203
  %v3205 = vsel %vm1558, %v3193, 0.0
  %3206 = vadd.xlane.f32.xlu0 %v3205
  %v3207 = vpop.xlane.xlu0 %3206
  %v3208 = vsel %vm1558, %v3194, 0.0
  %3209 = vadd.xlane.f32.xlu0 %v3208
  %v3210 = vpop.xlane.xlu0 %3209
  %v3211 = vsel %vm1558, %v3195, 0.0
  %3212 = vadd.xlane.f32.xlu0 %v3211
  %v3213 = vpop.xlane.xlu0 %3212
  %v3214 = vsel %vm1558, %v3196, 0.0
  %3215 = vadd.xlane.f32.xlu0 %v3214
  %v3216 = vpop.xlane.xlu0 %3215
  %v3217 = vmul.f32 %v3201, %v2377
  %v3218 = vmul.f32 %v3204, %v2377
  %v3219 = vmul.f32 %v3207, %v2377
  %v3220 = vmul.f32 %v3210, %v2377
  %v3221 = vmul.f32 %v3213, %v2377
  %v3222 = vmul.f32 %v3216, %v2377
  %v3223 = vsub.f32 %v3191, %v3217
  %v3224 = vsub.f32 %v3192, %v3218
  %v3225 = vsub.f32 %v3193, %v3219
  %v3226 = vsub.f32 %v3194, %v3220
  %v3227 = vsub.f32 %v3195, %v3221
  %v3228 = vsub.f32 %v3196, %v3222
  %v3229 = vmul.f32 %v3223, %v3223
  %v3230 = vmul.f32 %v3224, %v3224
  %v3231 = vmul.f32 %v3225, %v3225
  %v3232 = vmul.f32 %v3226, %v3226
  %v3233 = vmul.f32 %v3227, %v3227
  %v3234 = vmul.f32 %v3228, %v3228
  %v3235 = vsel %vm1558, %v3229, 0.0
  %3236 = vadd.xlane.f32.xlu0 %v3235
  %v3237 = vpop.xlane.xlu0 %3236
  %v3238 = vsel %vm1558, %v3230, 0.0
  %3239 = vadd.xlane.f32.xlu0 %v3238
  %v3240 = vpop.xlane.xlu0 %3239
  %v3241 = vsel %vm1558, %v3231, 0.0
  %3242 = vadd.xlane.f32.xlu0 %v3241
  %v3243 = vpop.xlane.xlu0 %3242
  %v3244 = vsel %vm1558, %v3232, 0.0
  %3245 = vadd.xlane.f32.xlu0 %v3244
  %v3246 = vpop.xlane.xlu0 %3245
  %v3247 = vsel %vm1558, %v3233, 0.0
  %3248 = vadd.xlane.f32.xlu0 %v3247
  %v3249 = vpop.xlane.xlu0 %3248
  %v3250 = vsel %vm1558, %v3234, 0.0
  %3251 = vadd.xlane.f32.xlu0 %v3250
  %v3252 = vpop.xlane.xlu0 %3251
  %v3253 = vmul.f32 %v3237, %v2377
  %v3254 = vmul.f32 %v3240, %v2377
  %v3255 = vmul.f32 %v3243, %v2377
  %v3256 = vmul.f32 %v3246, %v2377
  %v3257 = vmul.f32 %v3249, %v2377
  %v3258 = vmul.f32 %v3252, %v2377
  %v3259 = vadd.f32 %v3253, 1e-05
  %v3260 = vadd.f32 %v3254, 1e-05
  %v3261 = vadd.f32 %v3255, 1e-05
  %v3262 = vadd.f32 %v3256, 1e-05
  %v3263 = vadd.f32 %v3257, 1e-05
  %v3264 = vadd.f32 %v3258, 1e-05
  %v3265 = vrsqrt.pop %v3259
  %v3266 = vrsqrt.pop %v3260
  %v3267 = vrsqrt.pop %v3261
  %v3268 = vrsqrt.pop %v3262
  %v3269 = vrsqrt.pop %v3263
  %v3270 = vrsqrt.pop %v3264
  %v3271 = vmul.f32 %v3223, %v3265
  %v3272 = vmul.f32 %v3224, %v3266
  %v3273 = vmul.f32 %v3225, %v3267
  %v3274 = vmul.f32 %v3226, %v3268
  %v3275 = vmul.f32 %v3227, %v3269
  %v3276 = vmul.f32 %v3228, %v3270
  %v3278 = vlaneseq
  %v3279 = vshrl.u32 %v3278, 7
  %v3280 = vsub.s32 0, %v3279
  %v3281 = vrot.slane %v3197, %v3280
  %v3283 = vmul.f32 %v3271, %v3281
  %v3284 = vmul.f32 %v3272, %v3281
  %v3285 = vmul.f32 %v3273, %v3281
  %v3286 = vmul.f32 %v3274, %v3281
  %v3287 = vmul.f32 %v3275, %v3281
  %v3288 = vmul.f32 %v3276, %v3281
  %v3290 = vlaneseq
  %v3291 = vshrl.u32 %v3290, 7
  %v3292 = vsub.s32 0, %v3291
  %v3293 = vrot.slane %v3198, %v3292
  %v3295 = vadd.f32 %v3283, %v3293
  %v3296 = vadd.f32 %v3284, %v3293
  %v3297 = vadd.f32 %v3285, %v3293
  %v3298 = vadd.f32 %v3286, %v3293
  %v3299 = vadd.f32 %v3287, %v3293
  %v3300 = vadd.f32 %v3288, %v3293
  %s3301 = scalar_lea.vmem %s8, 32
  %v3302 = vld [vmem:[%s3301] sm:$0xff]
  %v3303 = vld [vmem:[%s3301 + $0x8] sm:$0xff]
  %v3304 = vld [vmem:[%s3301 + $0x10] sm:$0xff]
  %v3305 = vld [vmem:[%s3301 + $0x18] sm:$0xff]
  %s3306 = scalar_lea.vmem %s9, 1
  %v3307 = vld [vmem:[%s3306] sm:$0x1]
  %v3309 = vlaneseq
  %v3310 = vshrl.u32 %v3309, 7
  %v3311 = vsub.s32 0, %v3310
  %v3312 = vrot.slane %v3307, %v3311
  %v3315 = vsel %vm1558, %v3295, 0
  %v3318 = vsel %vm1558, %v3296, 0
  %v3321 = vsel %vm1558, %v3297, 0
  %v3324 = vsel %vm1558, %v3298, 0
  %v3327 = vsel %vm1558, %v3299, 0
  %v3330 = vsel %vm1558, %v3300, 0
  %3332 = vmatprep.subr.mxu0 0.0
  %v3333 = vand.u32 %v3302, 4294901760
  %3334 = vmatpush1.msra.mxu0 %v3333
  %3335 = vmatprep.subr.mxu0 0.0
  %v3336 = vand.u32 %v3303, 4294901760
  %3337 = vmatpush1.msra.mxu0 %v3336
  %3338 = vmatprep.subr.mxu0 0.0
  %v3339 = vand.u32 %v3304, 4294901760
  %3340 = vmatpush1.msra.mxu0 %v3339
  %3341 = vmatprep.subr.mxu0 0.0
  %v3342 = vand.u32 %v3305, 4294901760
  %3343 = vmatpush1.msra.mxu0 %v3342
  %3344 = vmatprep.subr.mxu0 0.0
  %3345 = vmatpush1.msra.mxu0 0.0
  %3346 = vmatprep.subr.mxu0 0.0
  %3347 = vmatpush1.msra.mxu0 0.0
  %3348 = vmatprep.subr.mxu0 0.0
  %3349 = vmatpush1.msra.mxu0 0.0
  %3350 = vmatprep.subr.mxu0 0.0
  %3351 = vmatpush1.msra.mxu0 0.0
  %3352 = vmatprep.subr.mxu0 0.0
  %3353 = vmatpush1.msra.mxu0 0.0
  %3354 = vmatprep.subr.mxu0 0.0
  %3355 = vmatpush1.msra.mxu0 0.0
  %3356 = vmatprep.subr.mxu0 0.0
  %3357 = vmatpush1.msra.mxu0 0.0
  %3358 = vmatprep.subr.mxu0 0.0
  %3359 = vmatpush1.msra.mxu0 0.0
  %3360 = vmatprep.subr.mxu0 0.0
  %3361 = vmatpush1.msra.mxu0 0.0
  %3362 = vmatprep.subr.mxu0 0.0
  %3363 = vmatpush1.msra.mxu0 0.0
  %3364 = vmatprep.subr.mxu0 0.0
  %3365 = vmatpush1.msra.mxu0 0.0
  %3366 = vmatprep.subr.mxu0 0.0
  %3367 = vmatpush1.msra.mxu0 0.0
  %3368 = vmatprep.subr.mxu0 0.0
  %3369 = vmatpush1.msra.mxu0 0.0
  %3370 = vmatprep.subr.mxu0 0.0
  %3371 = vmatpush1.msra.mxu0 0.0
  %3372 = vmatprep.subr.mxu0 0.0
  %3373 = vmatpush1.msra.mxu0 0.0
  %3374 = vmatprep.subr.mxu0 0.0
  %3375 = vmatpush1.msra.mxu0 0.0
  %3376 = vmatprep.subr.mxu0 0.0
  %3377 = vmatpush1.msra.mxu0 0.0
  %3378 = vmatprep.subr.mxu0 0.0
  %3379 = vmatpush1.msra.mxu0 0.0
  %3380 = vmatprep.subr.mxu0 0.0
  %3381 = vmatpush1.msra.mxu0 0.0
  %3382 = vmatprep.subr.mxu0 0.0
  %3383 = vmatpush1.msra.mxu0 0.0
  %3384 = vmatprep.subr.mxu0 0.0
  %3385 = vmatpush1.msra.mxu0 0.0
  %3386 = vmatprep.subr.mxu0 0.0
  %3387 = vmatpush1.msra.mxu0 0.0
  %3388 = vmatprep.subr.mxu0 0.0
  %3389 = vmatpush1.msra.mxu0 0.0
  %3390 = vmatprep.subr.mxu0 0.0
  %3391 = vmatpush1.msra.mxu0 0.0
  %3392 = vmatprep.subr.mxu0 0.0
  %3393 = vmatpush1.msra.mxu0 0.0
  %3394 = vmatprep.subr.mxu0 0.0
  %3395 = vmatpush1.msra.mxu0 0.0
  %3396 = vmatprep.subr.mxu0 0.0
  %3397 = vmatpush1.msra.mxu0 0.0
  %3398 = vmatprep.subr.mxu0 0.0
  %3399 = vmatpush1.msra.mxu0 0.0
  %3400 = vmatprep.mubr.f32.mxu0 0.0
  %v3401 = vand.u32 %v3315, 4294901760
  %v3402 = vsub.f32 %v3315, %v3401
  %v3403 = vand.u32 %v3402, 4294901760
  %v3404 = vsub.f32 %v3402, %v3403
  %v3405 = vand.u32 %v3404, 4294901760
  %3406 = vmatmul.mubr.f32.gmra.mrb[0].mxu0 %v3405
  %v3407 = vpop.f32.mrb[0].mxu0
  %v3408 = vadd.f32 %v3312, %v3407
  %v3409 = vpop.f32.mrb[0].mxu0
  %3410 = vmatprep.mubr.f32.mxu0 0.0
  %v3411 = vand.u32 %v3318, 4294901760
  %v3412 = vsub.f32 %v3318, %v3411
  %v3413 = vand.u32 %v3412, 4294901760
  %v3414 = vsub.f32 %v3412, %v3413
  %v3415 = vand.u32 %v3414, 4294901760
  %3416 = vmatmul.mubr.f32.gmra.mrb[0].mxu0 %v3415
  %v3417 = vpop.f32.mrb[0].mxu0
  %v3418 = vadd.f32 %v3312, %v3417
  %v3419 = vpop.f32.mrb[0].mxu0
  %3420 = vmatprep.mubr.f32.mxu0 0.0
  %v3421 = vand.u32 %v3321, 4294901760
  %v3422 = vsub.f32 %v3321, %v3421
  %v3423 = vand.u32 %v3422, 4294901760
  %v3424 = vsub.f32 %v3422, %v3423
  %v3425 = vand.u32 %v3424, 4294901760
  %3426 = vmatmul.mubr.f32.gmra.mrb[0].mxu0 %v3425
  %v3427 = vpop.f32.mrb[0].mxu0
  %v3428 = vadd.f32 %v3312, %v3427
  %v3429 = vpop.f32.mrb[0].mxu0
  %3430 = vmatprep.mubr.f32.mxu0 0.0
  %v3431 = vand.u32 %v3324, 4294901760
  %v3432 = vsub.f32 %v3324, %v3431
  %v3433 = vand.u32 %v3432, 4294901760
  %v3434 = vsub.f32 %v3432, %v3433
  %v3435 = vand.u32 %v3434, 4294901760
  %3436 = vmatmul.mubr.f32.gmra.mrb[0].mxu0 %v3435
  %v3437 = vpop.f32.mrb[0].mxu0
  %v3438 = vadd.f32 %v3312, %v3437
  %v3439 = vpop.f32.mrb[0].mxu0
  %3440 = vmatprep.mubr.f32.mxu0 0.0
  %v3441 = vand.u32 %v3327, 4294901760
  %v3442 = vsub.f32 %v3327, %v3441
  %v3443 = vand.u32 %v3442, 4294901760
  %v3444 = vsub.f32 %v3442, %v3443
  %v3445 = vand.u32 %v3444, 4294901760
  %3446 = vmatmul.mubr.f32.gmra.mrb[0].mxu0 %v3445
  %v3447 = vpop.f32.mrb[0].mxu0
  %v3448 = vadd.f32 %v3312, %v3447
  %v3449 = vpop.f32.mrb[0].mxu0
  %3450 = vmatprep.mubr.f32.mxu0 0.0
  %v3451 = vand.u32 %v3330, 4294901760
  %v3452 = vsub.f32 %v3330, %v3451
  %v3453 = vand.u32 %v3452, 4294901760
  %v3454 = vsub.f32 %v3452, %v3453
  %v3455 = vand.u32 %v3454, 4294901760
  %3456 = vmatmul.mubr.f32.gmra.mrb[0].mxu0 %v3455
  %v3457 = vpop.f32.mrb[0].mxu0
  %v3458 = vadd.f32 %v3312, %v3457
  %v3459 = vpop.f32.mrb[0].mxu0
  %3460 = vdwg.mxu0
  %3461 = vmatprep.subr.mxu0 0.0
  %v3462 = vand.u32 %v3302, 4294901760
  %v3463 = vsub.f32 %v3302, %v3462
  %v3464 = vand.u32 %v3463, 4294901760
  %v3465 = vsub.f32 %v3463, %v3464
  %v3466 = vand.u32 %v3465, 4294901760
  %3467 = vmatpush1.msra.mxu0 %v3466
  %3468 = vmatprep.subr.mxu0 0.0
  %v3469 = vand.u32 %v3303, 4294901760
  %v3470 = vsub.f32 %v3303, %v3469
  %v3471 = vand.u32 %v3470, 4294901760
  %v3472 = vsub.f32 %v3470, %v3471
  %v3473 = vand.u32 %v3472, 4294901760
  %3474 = vmatpush1.msra.mxu0 %v3473
  %3475 = vmatprep.subr.mxu0 0.0
  %v3476 = vand.u32 %v3304, 4294901760
  %v3477 = vsub.f32 %v3304, %v3476
  %v3478 = vand.u32 %v3477, 4294901760
  %v3479 = vsub.f32 %v3477, %v3478
  %v3480 = vand.u32 %v3479, 4294901760
  %3481 = vmatpush1.msra.mxu0 %v3480
  %3482 = vmatprep.subr.mxu0 0.0
  %v3483 = vand.u32 %v3305, 4294901760
  %v3484 = vsub.f32 %v3305, %v3483
  %v3485 = vand.u32 %v3484, 4294901760
  %v3486 = vsub.f32 %v3484, %v3485
  %v3487 = vand.u32 %v3486, 4294901760
  %3488 = vmatpush1.msra.mxu0 %v3487
  %3489 = vmatprep.subr.mxu0 0.0
  %3490 = vmatpush1.msra.mxu0 0.0
  %3491 = vmatprep.subr.mxu0 0.0
  %3492 = vmatpush1.msra.mxu0 0.0
  %3493 = vmatprep.subr.mxu0 0.0
  %3494 = vmatpush1.msra.mxu0 0.0
  %3495 = vmatprep.subr.mxu0 0.0
  %3496 = vmatpush1.msra.mxu0 0.0
  %3497 = vmatprep.subr.mxu0 0.0
  %3498 = vmatpush1.msra.mxu0 0.0
  %3499 = vmatprep.subr.mxu0 0.0
  %3500 = vmatpush1.msra.mxu0 0.0
  %3501 = vmatprep.subr.mxu0 0.0
  %3502 = vmatpush1.msra.mxu0 0.0
  %3503 = vmatprep.subr.mxu0 0.0
  %3504 = vmatpush1.msra.mxu0 0.0
  %3505 = vmatprep.subr.mxu0 0.0
  %3506 = vmatpush1.msra.mxu0 0.0
  %3507 = vmatprep.subr.mxu0 0.0
  %3508 = vmatpush1.msra.mxu0 0.0
  %3509 = vmatprep.subr.mxu0 0.0
  %3510 = vmatpush1.msra.mxu0 0.0
  %3511 = vmatprep.subr.mxu0 0.0
  %3512 = vmatpush1.msra.mxu0 0.0
  %3513 = vmatprep.subr.mxu0 0.0
  %3514 = vmatpush1.msra.mxu0 0.0
  %3515 = vmatprep.subr.mxu0 0.0
  %3516 = vmatpush1.msra.mxu0 0.0
  %3517 = vmatprep.subr.mxu0 0.0
  %3518 = vmatpush1.msra.mxu0 0.0
  %3519 = vmatprep.subr.mxu0 0.0
  %3520 = vmatpush1.msra.mxu0 0.0
  %3521 = vmatprep.subr.mxu0 0.0
  %3522 = vmatpush1.msra.mxu0 0.0
  %3523 = vmatprep.subr.mxu0 0.0
  %3524 = vmatpush1.msra.mxu0 0.0
  %3525 = vmatprep.subr.mxu0 0.0
  %3526 = vmatpush1.msra.mxu0 0.0
  %3527 = vmatprep.subr.mxu0 0.0
  %3528 = vmatpush1.msra.mxu0 0.0
  %3529 = vmatprep.subr.mxu0 0.0
  %3530 = vmatpush1.msra.mxu0 0.0
  %3531 = vmatprep.subr.mxu0 0.0
  %3532 = vmatpush1.msra.mxu0 0.0
  %3533 = vmatprep.subr.mxu0 0.0
  %3534 = vmatpush1.msra.mxu0 0.0
  %3535 = vmatprep.subr.mxu0 0.0
  %3536 = vmatpush1.msra.mxu0 0.0
  %3537 = vmatprep.subr.mxu0 0.0
  %3538 = vmatpush1.msra.mxu0 0.0
  %3539 = vmatprep.subr.mxu0 0.0
  %3540 = vmatpush1.msra.mxu0 0.0
  %3541 = vmatprep.subr.mxu0 0.0
  %3542 = vmatpush1.msra.mxu0 0.0
  %3543 = vmatprep.subr.mxu0 0.0
  %3544 = vmatpush1.msra.mxu0 0.0
  %3545 = vmatprep.mubr.f32.mxu0 0.0
  %v3546 = vand.u32 %v3315, 4294901760
  %3547 = vmatmul.mubr.f32.gmra.mrb[0].mxu0 %v3546
  %v3548 = vpop.f32.mrb[0].mxu0
  %v3549 = vadd.f32 %v3408, %v3548
  %v3550 = vpop.f32.mrb[0].mxu0
  %3551 = vmatprep.mubr.f32.mxu0 0.0
  %v3552 = vand.u32 %v3318, 4294901760
  %3553 = vmatmul.mubr.f32.gmra.mrb[0].mxu0 %v3552
  %v3554 = vpop.f32.mrb[0].mxu0
  %v3555 = vadd.f32 %v3418, %v3554
  %v3556 = vpop.f32.mrb[0].mxu0
  %3557 = vmatprep.mubr.f32.mxu0 0.0
  %v3558 = vand.u32 %v3321, 4294901760
  %3559 = vmatmul.mubr.f32.gmra.mrb[0].mxu0 %v3558
  %v3560 = vpop.f32.mrb[0].mxu0
  %v3561 = vadd.f32 %v3428, %v3560
  %v3562 = vpop.f32.mrb[0].mxu0
  %3563 = vmatprep.mubr.f32.mxu0 0.0
  %v3564 = vand.u32 %v3324, 4294901760
  %3565 = vmatmul.mubr.f32.gmra.mrb[0].mxu0 %v3564
  %v3566 = vpop.f32.mrb[0].mxu0
  %v3567 = vadd.f32 %v3438, %v3566
  %v3568 = vpop.f32.mrb[0].mxu0
  %3569 = vmatprep.mubr.f32.mxu0 0.0
  %v3570 = vand.u32 %v3327, 4294901760
  %3571 = vmatmul.mubr.f32.gmra.mrb[0].mxu0 %v3570
  %v3572 = vpop.f32.mrb[0].mxu0
  %v3573 = vadd.f32 %v3448, %v3572
  %v3574 = vpop.f32.mrb[0].mxu0
  %3575 = vmatprep.mubr.f32.mxu0 0.0
  %v3576 = vand.u32 %v3330, 4294901760
  %3577 = vmatmul.mubr.f32.gmra.mrb[0].mxu0 %v3576
  %v3578 = vpop.f32.mrb[0].mxu0
  %v3579 = vadd.f32 %v3458, %v3578
  %v3580 = vpop.f32.mrb[0].mxu0
  %3581 = vdwg.mxu0
  %3582 = vmatprep.subr.mxu0 0.0
  %v3583 = vand.u32 %v3302, 4294901760
  %v3584 = vsub.f32 %v3302, %v3583
  %3585 = vmatpush1.msra.mxu0 %v3584
  %3586 = vmatprep.subr.mxu0 0.0
  %v3587 = vand.u32 %v3303, 4294901760
  %v3588 = vsub.f32 %v3303, %v3587
  %3589 = vmatpush1.msra.mxu0 %v3588
  %3590 = vmatprep.subr.mxu0 0.0
  %v3591 = vand.u32 %v3304, 4294901760
  %v3592 = vsub.f32 %v3304, %v3591
  %3593 = vmatpush1.msra.mxu0 %v3592
  %3594 = vmatprep.subr.mxu0 0.0
  %v3595 = vand.u32 %v3305, 4294901760
  %v3596 = vsub.f32 %v3305, %v3595
  %3597 = vmatpush1.msra.mxu0 %v3596
  %3598 = vmatprep.subr.mxu0 0.0
  %3599 = vmatpush1.msra.mxu0 0.0
  %3600 = vmatprep.subr.mxu0 0.0
  %3601 = vmatpush1.msra.mxu0 0.0
  %3602 = vmatprep.subr.mxu0 0.0
  %3603 = vmatpush1.msra.mxu0 0.0
  %3604 = vmatprep.subr.mxu0 0.0
  %3605 = vmatpush1.msra.mxu0 0.0
  %3606 = vmatprep.subr.mxu0 0.0
  %3607 = vmatpush1.msra.mxu0 0.0
  %3608 = vmatprep.subr.mxu0 0.0
  %3609 = vmatpush1.msra.mxu0 0.0
  %3610 = vmatprep.subr.mxu0 0.0
  %3611 = vmatpush1.msra.mxu0 0.0
  %3612 = vmatprep.subr.mxu0 0.0
  %3613 = vmatpush1.msra.mxu0 0.0
  %3614 = vmatprep.subr.mxu0 0.0
  %3615 = vmatpush1.msra.mxu0 0.0
  %3616 = vmatprep.subr.mxu0 0.0
  %3617 = vmatpush1.msra.mxu0 0.0
  %3618 = vmatprep.subr.mxu0 0.0
  %3619 = vmatpush1.msra.mxu0 0.0
  %3620 = vmatprep.subr.mxu0 0.0
  %3621 = vmatpush1.msra.mxu0 0.0
  %3622 = vmatprep.subr.mxu0 0.0
  %3623 = vmatpush1.msra.mxu0 0.0
  %3624 = vmatprep.subr.mxu0 0.0
  %3625 = vmatpush1.msra.mxu0 0.0
  %3626 = vmatprep.subr.mxu0 0.0
  %3627 = vmatpush1.msra.mxu0 0.0
  %3628 = vmatprep.subr.mxu0 0.0
  %3629 = vmatpush1.msra.mxu0 0.0
  %3630 = vmatprep.subr.mxu0 0.0
  %3631 = vmatpush1.msra.mxu0 0.0
  %3632 = vmatprep.subr.mxu0 0.0
  %3633 = vmatpush1.msra.mxu0 0.0
  %3634 = vmatprep.subr.mxu0 0.0
  %3635 = vmatpush1.msra.mxu0 0.0
  %3636 = vmatprep.subr.mxu0 0.0
  %3637 = vmatpush1.msra.mxu0 0.0
  %3638 = vmatprep.subr.mxu0 0.0
  %3639 = vmatpush1.msra.mxu0 0.0
  %3640 = vmatprep.subr.mxu0 0.0
  %3641 = vmatpush1.msra.mxu0 0.0
  %3642 = vmatprep.subr.mxu0 0.0
  %3643 = vmatpush1.msra.mxu0 0.0
  %3644 = vmatprep.subr.mxu0 0.0
  %3645 = vmatpush1.msra.mxu0 0.0
  %3646 = vmatprep.subr.mxu0 0.0
  %3647 = vmatpush1.msra.mxu0 0.0
  %3648 = vmatprep.subr.mxu0 0.0
  %3649 = vmatpush1.msra.mxu0 0.0
  %3650 = vmatprep.subr.mxu0 0.0
  %3651 = vmatpush1.msra.mxu0 0.0
  %3652 = vmatprep.subr.mxu0 0.0
  %3653 = vmatpush1.msra.mxu0 0.0
  %3654 = vmatprep.mubr.f32.mxu0 0.0
  %v3655 = vand.u32 %v3315, 4294901760
  %v3656 = vsub.f32 %v3315, %v3655
  %3657 = vmatmul.mubr.f32.gmra.mrb[0].mxu0 %v3656
  %v3658 = vpop.f32.mrb[0].mxu0
  %v3659 = vadd.f32 %v3549, %v3658
  %v3660 = vpop.f32.mrb[0].mxu0
  %3661 = vmatprep.mubr.f32.mxu0 0.0
  %v3662 = vand.u32 %v3318, 4294901760
  %v3663 = vsub.f32 %v3318, %v3662
  %3664 = vmatmul.mubr.f32.gmra.mrb[0].mxu0 %v3663
  %v3665 = vpop.f32.mrb[0].mxu0
  %v3666 = vadd.f32 %v3555, %v3665
  %v3667 = vpop.f32.mrb[0].mxu0
  %3668 = vmatprep.mubr.f32.mxu0 0.0
  %v3669 = vand.u32 %v3321, 4294901760
  %v3670 = vsub.f32 %v3321, %v3669
  %3671 = vmatmul.mubr.f32.gmra.mrb[0].mxu0 %v3670
  %v3672 = vpop.f32.mrb[0].mxu0
  %v3673 = vadd.f32 %v3561, %v3672
  %v3674 = vpop.f32.mrb[0].mxu0
  %3675 = vmatprep.mubr.f32.mxu0 0.0
  %v3676 = vand.u32 %v3324, 4294901760
  %v3677 = vsub.f32 %v3324, %v3676
  %3678 = vmatmul.mubr.f32.gmra.mrb[0].mxu0 %v3677
  %v3679 = vpop.f32.mrb[0].mxu0
  %v3680 = vadd.f32 %v3567, %v3679
  %v3681 = vpop.f32.mrb[0].mxu0
  %3682 = vmatprep.mubr.f32.mxu0 0.0
  %v3683 = vand.u32 %v3327, 4294901760
  %v3684 = vsub.f32 %v3327, %v3683
  %3685 = vmatmul.mubr.f32.gmra.mrb[0].mxu0 %v3684
  %v3686 = vpop.f32.mrb[0].mxu0
  %v3687 = vadd.f32 %v3573, %v3686
  %v3688 = vpop.f32.mrb[0].mxu0
  %3689 = vmatprep.mubr.f32.mxu0 0.0
  %v3690 = vand.u32 %v3330, 4294901760
  %v3691 = vsub.f32 %v3330, %v3690
  %3692 = vmatmul.mubr.f32.gmra.mrb[0].mxu0 %v3691
  %v3693 = vpop.f32.mrb[0].mxu0
  %v3694 = vadd.f32 %v3579, %v3693
  %v3695 = vpop.f32.mrb[0].mxu0
  %3696 = vdwg.mxu0
  %3697 = vmatprep.subr.mxu0 0.0
  %v3698 = vand.u32 %v3302, 4294901760
  %3699 = vmatpush1.msra.mxu0 %v3698
  %3700 = vmatprep.subr.mxu0 0.0
  %v3701 = vand.u32 %v3303, 4294901760
  %3702 = vmatpush1.msra.mxu0 %v3701
  %3703 = vmatprep.subr.mxu0 0.0
  %v3704 = vand.u32 %v3304, 4294901760
  %3705 = vmatpush1.msra.mxu0 %v3704
  %3706 = vmatprep.subr.mxu0 0.0
  %v3707 = vand.u32 %v3305, 4294901760
  %3708 = vmatpush1.msra.mxu0 %v3707
  %3709 = vmatprep.subr.mxu0 0.0
  %3710 = vmatpush1.msra.mxu0 0.0
  %3711 = vmatprep.subr.mxu0 0.0
  %3712 = vmatpush1.msra.mxu0 0.0
  %3713 = vmatprep.subr.mxu0 0.0
  %3714 = vmatpush1.msra.mxu0 0.0
  %3715 = vmatprep.subr.mxu0 0.0
  %3716 = vmatpush1.msra.mxu0 0.0
  %3717 = vmatprep.subr.mxu0 0.0
  %3718 = vmatpush1.msra.mxu0 0.0
  %3719 = vmatprep.subr.mxu0 0.0
  %3720 = vmatpush1.msra.mxu0 0.0
  %3721 = vmatprep.subr.mxu0 0.0
  %3722 = vmatpush1.msra.mxu0 0.0
  %3723 = vmatprep.subr.mxu0 0.0
  %3724 = vmatpush1.msra.mxu0 0.0
  %3725 = vmatprep.subr.mxu0 0.0
  %3726 = vmatpush1.msra.mxu0 0.0
  %3727 = vmatprep.subr.mxu0 0.0
  %3728 = vmatpush1.msra.mxu0 0.0
  %3729 = vmatprep.subr.mxu0 0.0
  %3730 = vmatpush1.msra.mxu0 0.0
  %3731 = vmatprep.subr.mxu0 0.0
  %3732 = vmatpush1.msra.mxu0 0.0
  %3733 = vmatprep.subr.mxu0 0.0
  %3734 = vmatpush1.msra.mxu0 0.0
  %3735 = vmatprep.subr.mxu0 0.0
  %3736 = vmatpush1.msra.mxu0 0.0
  %3737 = vmatprep.subr.mxu0 0.0
  %3738 = vmatpush1.msra.mxu0 0.0
  %3739 = vmatprep.subr.mxu0 0.0
  %3740 = vmatpush1.msra.mxu0 0.0
  %3741 = vmatprep.subr.mxu0 0.0
  %3742 = vmatpush1.msra.mxu0 0.0
  %3743 = vmatprep.subr.mxu0 0.0
  %3744 = vmatpush1.msra.mxu0 0.0
  %3745 = vmatprep.subr.mxu0 0.0
  %3746 = vmatpush1.msra.mxu0 0.0
  %3747 = vmatprep.subr.mxu0 0.0
  %3748 = vmatpush1.msra.mxu0 0.0
  %3749 = vmatprep.subr.mxu0 0.0
  %3750 = vmatpush1.msra.mxu0 0.0
  %3751 = vmatprep.subr.mxu0 0.0
  %3752 = vmatpush1.msra.mxu0 0.0
  %3753 = vmatprep.subr.mxu0 0.0
  %3754 = vmatpush1.msra.mxu0 0.0
  %3755 = vmatprep.subr.mxu0 0.0
  %3756 = vmatpush1.msra.mxu0 0.0
  %3757 = vmatprep.subr.mxu0 0.0
  %3758 = vmatpush1.msra.mxu0 0.0
  %3759 = vmatprep.subr.mxu0 0.0
  %3760 = vmatpush1.msra.mxu0 0.0
  %3761 = vmatprep.subr.mxu0 0.0
  %3762 = vmatpush1.msra.mxu0 0.0
  %3763 = vmatprep.subr.mxu0 0.0
  %3764 = vmatpush1.msra.mxu0 0.0
  %3765 = vmatprep.mubr.f32.mxu0 0.0
  %v3766 = vand.u32 %v3315, 4294901760
  %v3767 = vsub.f32 %v3315, %v3766
  %v3768 = vand.u32 %v3767, 4294901760
  %3769 = vmatmul.mubr.f32.gmra.mrb[0].mxu0 %v3768
  %v3770 = vpop.f32.mrb[0].mxu0
  %v3771 = vadd.f32 %v3659, %v3770
  %v3772 = vpop.f32.mrb[0].mxu0
  %3773 = vmatprep.mubr.f32.mxu0 0.0
  %v3774 = vand.u32 %v3318, 4294901760
  %v3775 = vsub.f32 %v3318, %v3774
  %v3776 = vand.u32 %v3775, 4294901760
  %3777 = vmatmul.mubr.f32.gmra.mrb[0].mxu0 %v3776
  %v3778 = vpop.f32.mrb[0].mxu0
  %v3779 = vadd.f32 %v3666, %v3778
  %v3780 = vpop.f32.mrb[0].mxu0
  %3781 = vmatprep.mubr.f32.mxu0 0.0
  %v3782 = vand.u32 %v3321, 4294901760
  %v3783 = vsub.f32 %v3321, %v3782
  %v3784 = vand.u32 %v3783, 4294901760
  %3785 = vmatmul.mubr.f32.gmra.mrb[0].mxu0 %v3784
  %v3786 = vpop.f32.mrb[0].mxu0
  %v3787 = vadd.f32 %v3673, %v3786
  %v3788 = vpop.f32.mrb[0].mxu0
  %3789 = vmatprep.mubr.f32.mxu0 0.0
  %v3790 = vand.u32 %v3324, 4294901760
  %v3791 = vsub.f32 %v3324, %v3790
  %v3792 = vand.u32 %v3791, 4294901760
  %3793 = vmatmul.mubr.f32.gmra.mrb[0].mxu0 %v3792
  %v3794 = vpop.f32.mrb[0].mxu0
  %v3795 = vadd.f32 %v3680, %v3794
  %v3796 = vpop.f32.mrb[0].mxu0
  %3797 = vmatprep.mubr.f32.mxu0 0.0
  %v3798 = vand.u32 %v3327, 4294901760
  %v3799 = vsub.f32 %v3327, %v3798
  %v3800 = vand.u32 %v3799, 4294901760
  %3801 = vmatmul.mubr.f32.gmra.mrb[0].mxu0 %v3800
  %v3802 = vpop.f32.mrb[0].mxu0
  %v3803 = vadd.f32 %v3687, %v3802
  %v3804 = vpop.f32.mrb[0].mxu0
  %3805 = vmatprep.mubr.f32.mxu0 0.0
  %v3806 = vand.u32 %v3330, 4294901760
  %v3807 = vsub.f32 %v3330, %v3806
  %v3808 = vand.u32 %v3807, 4294901760
  %3809 = vmatmul.mubr.f32.gmra.mrb[0].mxu0 %v3808
  %v3810 = vpop.f32.mrb[0].mxu0
  %v3811 = vadd.f32 %v3694, %v3810
  %v3812 = vpop.f32.mrb[0].mxu0
  %3813 = vdwg.mxu0
  %3814 = vmatprep.subr.mxu0 0.0
  %v3815 = vand.u32 %v3302, 4294901760
  %v3816 = vsub.f32 %v3302, %v3815
  %v3817 = vand.u32 %v3816, 4294901760
  %3818 = vmatpush1.msra.mxu0 %v3817
  %3819 = vmatprep.subr.mxu0 0.0
  %v3820 = vand.u32 %v3303, 4294901760
  %v3821 = vsub.f32 %v3303, %v3820
  %v3822 = vand.u32 %v3821, 4294901760
  %3823 = vmatpush1.msra.mxu0 %v3822
  %3824 = vmatprep.subr.mxu0 0.0
  %v3825 = vand.u32 %v3304, 4294901760
  %v3826 = vsub.f32 %v3304, %v3825
  %v3827 = vand.u32 %v3826, 4294901760
  %3828 = vmatpush1.msra.mxu0 %v3827
  %3829 = vmatprep.subr.mxu0 0.0
  %v3830 = vand.u32 %v3305, 4294901760
  %v3831 = vsub.f32 %v3305, %v3830
  %v3832 = vand.u32 %v3831, 4294901760
  %3833 = vmatpush1.msra.mxu0 %v3832
  %3834 = vmatprep.subr.mxu0 0.0
  %3835 = vmatpush1.msra.mxu0 0.0
  %3836 = vmatprep.subr.mxu0 0.0
  %3837 = vmatpush1.msra.mxu0 0.0
  %3838 = vmatprep.subr.mxu0 0.0
  %3839 = vmatpush1.msra.mxu0 0.0
  %3840 = vmatprep.subr.mxu0 0.0
  %3841 = vmatpush1.msra.mxu0 0.0
  %3842 = vmatprep.subr.mxu0 0.0
  %3843 = vmatpush1.msra.mxu0 0.0
  %3844 = vmatprep.subr.mxu0 0.0
  %3845 = vmatpush1.msra.mxu0 0.0
  %3846 = vmatprep.subr.mxu0 0.0
  %3847 = vmatpush1.msra.mxu0 0.0
  %3848 = vmatprep.subr.mxu0 0.0
  %3849 = vmatpush1.msra.mxu0 0.0
  %3850 = vmatprep.subr.mxu0 0.0
  %3851 = vmatpush1.msra.mxu0 0.0
  %3852 = vmatprep.subr.mxu0 0.0
  %3853 = vmatpush1.msra.mxu0 0.0
  %3854 = vmatprep.subr.mxu0 0.0
  %3855 = vmatpush1.msra.mxu0 0.0
  %3856 = vmatprep.subr.mxu0 0.0
  %3857 = vmatpush1.msra.mxu0 0.0
  %3858 = vmatprep.subr.mxu0 0.0
  %3859 = vmatpush1.msra.mxu0 0.0
  %3860 = vmatprep.subr.mxu0 0.0
  %3861 = vmatpush1.msra.mxu0 0.0
  %3862 = vmatprep.subr.mxu0 0.0
  %3863 = vmatpush1.msra.mxu0 0.0
  %3864 = vmatprep.subr.mxu0 0.0
  %3865 = vmatpush1.msra.mxu0 0.0
  %3866 = vmatprep.subr.mxu0 0.0
  %3867 = vmatpush1.msra.mxu0 0.0
  %3868 = vmatprep.subr.mxu0 0.0
  %3869 = vmatpush1.msra.mxu0 0.0
  %3870 = vmatprep.subr.mxu0 0.0
  %3871 = vmatpush1.msra.mxu0 0.0
  %3872 = vmatprep.subr.mxu0 0.0
  %3873 = vmatpush1.msra.mxu0 0.0
  %3874 = vmatprep.subr.mxu0 0.0
  %3875 = vmatpush1.msra.mxu0 0.0
  %3876 = vmatprep.subr.mxu0 0.0
  %3877 = vmatpush1.msra.mxu0 0.0
  %3878 = vmatprep.subr.mxu0 0.0
  %3879 = vmatpush1.msra.mxu0 0.0
  %3880 = vmatprep.subr.mxu0 0.0
  %3881 = vmatpush1.msra.mxu0 0.0
  %3882 = vmatprep.subr.mxu0 0.0
  %3883 = vmatpush1.msra.mxu0 0.0
  %3884 = vmatprep.subr.mxu0 0.0
  %3885 = vmatpush1.msra.mxu0 0.0
  %3886 = vmatprep.subr.mxu0 0.0
  %3887 = vmatpush1.msra.mxu0 0.0
  %3888 = vmatprep.subr.mxu0 0.0
  %3889 = vmatpush1.msra.mxu0 0.0
  %3890 = vmatprep.mubr.f32.mxu0 0.0
  %v3891 = vand.u32 %v3315, 4294901760
  %3892 = vmatmul.mubr.f32.gmra.mrb[0].mxu0 %v3891
  %v3893 = vpop.f32.mrb[0].mxu0
  %v3894 = vadd.f32 %v3771, %v3893
  %v3895 = vpop.f32.mrb[0].mxu0
  %3896 = vmatprep.mubr.f32.mxu0 0.0
  %v3897 = vand.u32 %v3318, 4294901760
  %3898 = vmatmul.mubr.f32.gmra.mrb[0].mxu0 %v3897
  %v3899 = vpop.f32.mrb[0].mxu0
  %v3900 = vadd.f32 %v3779, %v3899
  %v3901 = vpop.f32.mrb[0].mxu0
  %3902 = vmatprep.mubr.f32.mxu0 0.0
  %v3903 = vand.u32 %v3321, 4294901760
  %3904 = vmatmul.mubr.f32.gmra.mrb[0].mxu0 %v3903
  %v3905 = vpop.f32.mrb[0].mxu0
  %v3906 = vadd.f32 %v3787, %v3905
  %v3907 = vpop.f32.mrb[0].mxu0
  %3908 = vmatprep.mubr.f32.mxu0 0.0
  %v3909 = vand.u32 %v3324, 4294901760
  %3910 = vmatmul.mubr.f32.gmra.mrb[0].mxu0 %v3909
  %v3911 = vpop.f32.mrb[0].mxu0
  %v3912 = vadd.f32 %v3795, %v3911
  %v3913 = vpop.f32.mrb[0].mxu0
  %3914 = vmatprep.mubr.f32.mxu0 0.0
  %v3915 = vand.u32 %v3327, 4294901760
  %3916 = vmatmul.mubr.f32.gmra.mrb[0].mxu0 %v3915
  %v3917 = vpop.f32.mrb[0].mxu0
  %v3918 = vadd.f32 %v3803, %v3917
  %v3919 = vpop.f32.mrb[0].mxu0
  %3920 = vmatprep.mubr.f32.mxu0 0.0
  %v3921 = vand.u32 %v3330, 4294901760
  %3922 = vmatmul.mubr.f32.gmra.mrb[0].mxu0 %v3921
  %v3923 = vpop.f32.mrb[0].mxu0
  %v3924 = vadd.f32 %v3811, %v3923
  %v3925 = vpop.f32.mrb[0].mxu0
  %3926 = vdwg.mxu0
  %3927 = vmatprep.subr.mxu0 0.0
  %v3928 = vand.u32 %v3302, 4294901760
  %3929 = vmatpush1.msra.mxu0 %v3928
  %3930 = vmatprep.subr.mxu0 0.0
  %v3931 = vand.u32 %v3303, 4294901760
  %3932 = vmatpush1.msra.mxu0 %v3931
  %3933 = vmatprep.subr.mxu0 0.0
  %v3934 = vand.u32 %v3304, 4294901760
  %3935 = vmatpush1.msra.mxu0 %v3934
  %3936 = vmatprep.subr.mxu0 0.0
  %v3937 = vand.u32 %v3305, 4294901760
  %3938 = vmatpush1.msra.mxu0 %v3937
  %3939 = vmatprep.subr.mxu0 0.0
  %3940 = vmatpush1.msra.mxu0 0.0
  %3941 = vmatprep.subr.mxu0 0.0
  %3942 = vmatpush1.msra.mxu0 0.0
  %3943 = vmatprep.subr.mxu0 0.0
  %3944 = vmatpush1.msra.mxu0 0.0
  %3945 = vmatprep.subr.mxu0 0.0
  %3946 = vmatpush1.msra.mxu0 0.0
  %3947 = vmatprep.subr.mxu0 0.0
  %3948 = vmatpush1.msra.mxu0 0.0
  %3949 = vmatprep.subr.mxu0 0.0
  %3950 = vmatpush1.msra.mxu0 0.0
  %3951 = vmatprep.subr.mxu0 0.0
  %3952 = vmatpush1.msra.mxu0 0.0
  %3953 = vmatprep.subr.mxu0 0.0
  %3954 = vmatpush1.msra.mxu0 0.0
  %3955 = vmatprep.subr.mxu0 0.0
  %3956 = vmatpush1.msra.mxu0 0.0
  %3957 = vmatprep.subr.mxu0 0.0
  %3958 = vmatpush1.msra.mxu0 0.0
  %3959 = vmatprep.subr.mxu0 0.0
  %3960 = vmatpush1.msra.mxu0 0.0
  %3961 = vmatprep.subr.mxu0 0.0
  %3962 = vmatpush1.msra.mxu0 0.0
  %3963 = vmatprep.subr.mxu0 0.0
  %3964 = vmatpush1.msra.mxu0 0.0
  %3965 = vmatprep.subr.mxu0 0.0
  %3966 = vmatpush1.msra.mxu0 0.0
  %3967 = vmatprep.subr.mxu0 0.0
  %3968 = vmatpush1.msra.mxu0 0.0
  %3969 = vmatprep.subr.mxu0 0.0
  %3970 = vmatpush1.msra.mxu0 0.0
  %3971 = vmatprep.subr.mxu0 0.0
  %3972 = vmatpush1.msra.mxu0 0.0
  %3973 = vmatprep.subr.mxu0 0.0
  %3974 = vmatpush1.msra.mxu0 0.0
  %3975 = vmatprep.subr.mxu0 0.0
  %3976 = vmatpush1.msra.mxu0 0.0
  %3977 = vmatprep.subr.mxu0 0.0
  %3978 = vmatpush1.msra.mxu0 0.0
  %3979 = vmatprep.subr.mxu0 0.0
  %3980 = vmatpush1.msra.mxu0 0.0
  %3981 = vmatprep.subr.mxu0 0.0
  %3982 = vmatpush1.msra.mxu0 0.0
  %3983 = vmatprep.subr.mxu0 0.0
  %3984 = vmatpush1.msra.mxu0 0.0
  %3985 = vmatprep.subr.mxu0 0.0
  %3986 = vmatpush1.msra.mxu0 0.0
  %3987 = vmatprep.subr.mxu0 0.0
  %3988 = vmatpush1.msra.mxu0 0.0
  %3989 = vmatprep.subr.mxu0 0.0
  %3990 = vmatpush1.msra.mxu0 0.0
  %3991 = vmatprep.subr.mxu0 0.0
  %3992 = vmatpush1.msra.mxu0 0.0
  %3993 = vmatprep.subr.mxu0 0.0
  %3994 = vmatpush1.msra.mxu0 0.0
  %3995 = vmatprep.mubr.f32.mxu0 0.0
  %v3996 = vand.u32 %v3315, 4294901760
  %3997 = vmatmul.mubr.f32.gmra.mrb[0].mxu0 %v3996
  %v3998 = vpop.f32.mrb[0].mxu0
  %v3999 = vadd.f32 %v3894, %v3998
  %v4000 = vpop.f32.mrb[0].mxu0
  %4001 = vmatprep.mubr.f32.mxu0 0.0
  %v4002 = vand.u32 %v3318, 4294901760
  %4003 = vmatmul.mubr.f32.gmra.mrb[0].mxu0 %v4002
  %v4004 = vpop.f32.mrb[0].mxu0
  %v4005 = vadd.f32 %v3900, %v4004
  %v4006 = vpop.f32.mrb[0].mxu0
  %4007 = vmatprep.mubr.f32.mxu0 0.0
  %v4008 = vand.u32 %v3321, 4294901760
  %4009 = vmatmul.mubr.f32.gmra.mrb[0].mxu0 %v4008
  %v4010 = vpop.f32.mrb[0].mxu0
  %v4011 = vadd.f32 %v3906, %v4010
  %v4012 = vpop.f32.mrb[0].mxu0
  %4013 = vmatprep.mubr.f32.mxu0 0.0
  %v4014 = vand.u32 %v3324, 4294901760
  %4015 = vmatmul.mubr.f32.gmra.mrb[0].mxu0 %v4014
  %v4016 = vpop.f32.mrb[0].mxu0
  %v4017 = vadd.f32 %v3912, %v4016
  %v4018 = vpop.f32.mrb[0].mxu0
  %4019 = vmatprep.mubr.f32.mxu0 0.0
  %v4020 = vand.u32 %v3327, 4294901760
  %4021 = vmatmul.mubr.f32.gmra.mrb[0].mxu0 %v4020
  %v4022 = vpop.f32.mrb[0].mxu0
  %v4023 = vadd.f32 %v3918, %v4022
  %v4024 = vpop.f32.mrb[0].mxu0
  %4025 = vmatprep.mubr.f32.mxu0 0.0
  %v4026 = vand.u32 %v3330, 4294901760
  %4027 = vmatmul.mubr.f32.gmra.mrb[0].mxu0 %v4026
  %v4028 = vpop.f32.mrb[0].mxu0
  %v4029 = vadd.f32 %v3924, %v4028
  %v4030 = vpop.f32.mrb[0].mxu0
  %4031 = vdwg.mxu0
  %v4032 = vmax.f32 %v3999, 0.0
  %v4033 = vmax.f32 %v4005, 0.0
  %v4034 = vmax.f32 %v4011, 0.0
  %v4035 = vmax.f32 %v4017, 0.0
  %v4036 = vmax.f32 %v4023, 0.0
  %v4037 = vmax.f32 %v4029, 0.0
  %s4038 = scalar_lea.vmem %s10, 1
  %v4039 = vld [vmem:[%s4038] sm:$0x1]
  %s4040 = scalar_lea.vmem %s11, 1
  %v4041 = vld [vmem:[%s4040] sm:$0x1]
  %v4042 = vsel %vm1558, %v4032, 0.0
  %4043 = vadd.xlane.f32.xlu0 %v4042
  %v4044 = vpop.xlane.xlu0 %4043
  %v4045 = vsel %vm1558, %v4033, 0.0
  %4046 = vadd.xlane.f32.xlu0 %v4045
  %v4047 = vpop.xlane.xlu0 %4046
  %v4048 = vsel %vm1558, %v4034, 0.0
  %4049 = vadd.xlane.f32.xlu0 %v4048
  %v4050 = vpop.xlane.xlu0 %4049
  %v4051 = vsel %vm1558, %v4035, 0.0
  %4052 = vadd.xlane.f32.xlu0 %v4051
  %v4053 = vpop.xlane.xlu0 %4052
  %v4054 = vsel %vm1558, %v4036, 0.0
  %4055 = vadd.xlane.f32.xlu0 %v4054
  %v4056 = vpop.xlane.xlu0 %4055
  %v4057 = vsel %vm1558, %v4037, 0.0
  %4058 = vadd.xlane.f32.xlu0 %v4057
  %v4059 = vpop.xlane.xlu0 %4058
  %v4060 = vmul.f32 %v4044, %v2377
  %v4061 = vmul.f32 %v4047, %v2377
  %v4062 = vmul.f32 %v4050, %v2377
  %v4063 = vmul.f32 %v4053, %v2377
  %v4064 = vmul.f32 %v4056, %v2377
  %v4065 = vmul.f32 %v4059, %v2377
  %v4066 = vsub.f32 %v4032, %v4060
  %v4067 = vsub.f32 %v4033, %v4061
  %v4068 = vsub.f32 %v4034, %v4062
  %v4069 = vsub.f32 %v4035, %v4063
  %v4070 = vsub.f32 %v4036, %v4064
  %v4071 = vsub.f32 %v4037, %v4065
  %v4072 = vmul.f32 %v4066, %v4066
  %v4073 = vmul.f32 %v4067, %v4067
  %v4074 = vmul.f32 %v4068, %v4068
  %v4075 = vmul.f32 %v4069, %v4069
  %v4076 = vmul.f32 %v4070, %v4070
  %v4077 = vmul.f32 %v4071, %v4071
  %v4078 = vsel %vm1558, %v4072, 0.0
  %4079 = vadd.xlane.f32.xlu0 %v4078
  %v4080 = vpop.xlane.xlu0 %4079
  %v4081 = vsel %vm1558, %v4073, 0.0
  %4082 = vadd.xlane.f32.xlu0 %v4081
  %v4083 = vpop.xlane.xlu0 %4082
  %v4084 = vsel %vm1558, %v4074, 0.0
  %4085 = vadd.xlane.f32.xlu0 %v4084
  %v4086 = vpop.xlane.xlu0 %4085
  %v4087 = vsel %vm1558, %v4075, 0.0
  %4088 = vadd.xlane.f32.xlu0 %v4087
  %v4089 = vpop.xlane.xlu0 %4088
  %v4090 = vsel %vm1558, %v4076, 0.0
  %4091 = vadd.xlane.f32.xlu0 %v4090
  %v4092 = vpop.xlane.xlu0 %4091
  %v4093 = vsel %vm1558, %v4077, 0.0
  %4094 = vadd.xlane.f32.xlu0 %v4093
  %v4095 = vpop.xlane.xlu0 %4094
  %v4096 = vmul.f32 %v4080, %v2377
  %v4097 = vmul.f32 %v4083, %v2377
  %v4098 = vmul.f32 %v4086, %v2377
  %v4099 = vmul.f32 %v4089, %v2377
  %v4100 = vmul.f32 %v4092, %v2377
  %v4101 = vmul.f32 %v4095, %v2377
  %v4102 = vadd.f32 %v4096, 1e-05
  %v4103 = vadd.f32 %v4097, 1e-05
  %v4104 = vadd.f32 %v4098, 1e-05
  %v4105 = vadd.f32 %v4099, 1e-05
  %v4106 = vadd.f32 %v4100, 1e-05
  %v4107 = vadd.f32 %v4101, 1e-05
  %v4108 = vrsqrt.pop %v4102
  %v4109 = vrsqrt.pop %v4103
  %v4110 = vrsqrt.pop %v4104
  %v4111 = vrsqrt.pop %v4105
  %v4112 = vrsqrt.pop %v4106
  %v4113 = vrsqrt.pop %v4107
  %v4114 = vmul.f32 %v4066, %v4108
  %v4115 = vmul.f32 %v4067, %v4109
  %v4116 = vmul.f32 %v4068, %v4110
  %v4117 = vmul.f32 %v4069, %v4111
  %v4118 = vmul.f32 %v4070, %v4112
  %v4119 = vmul.f32 %v4071, %v4113
  %v4121 = vlaneseq
  %v4122 = vshrl.u32 %v4121, 7
  %v4123 = vsub.s32 0, %v4122
  %v4124 = vrot.slane %v4039, %v4123
  %v4126 = vmul.f32 %v4114, %v4124
  %v4127 = vmul.f32 %v4115, %v4124
  %v4128 = vmul.f32 %v4116, %v4124
  %v4129 = vmul.f32 %v4117, %v4124
  %v4130 = vmul.f32 %v4118, %v4124
  %v4131 = vmul.f32 %v4119, %v4124
  %v4133 = vlaneseq
  %v4134 = vshrl.u32 %v4133, 7
  %v4135 = vsub.s32 0, %v4134
  %v4136 = vrot.slane %v4041, %v4135
  %v4138 = vadd.f32 %v4126, %v4136
  %v4139 = vadd.f32 %v4127, %v4136
  %v4140 = vadd.f32 %v4128, %v4136
  %v4141 = vadd.f32 %v4129, %v4136
  %v4142 = vadd.f32 %v4130, %v4136
  %v4143 = vadd.f32 %v4131, %v4136
  %4144 = vst.msk [vmem:[%s17] sm:$0xff] %vm1558, %v4138
  %4145 = vst.msk [vmem:[%s17 + $0x8] sm:$0xff] %vm1558, %v4139
  %4146 = vst.msk [vmem:[%s17 + $0x10] sm:$0xff] %vm1558, %v4140
  %4147 = vst.msk [vmem:[%s17 + $0x18] sm:$0xff] %vm1558, %v4141
  %4148 = vst.msk [vmem:[%s17 + $0x20] sm:$0xff] %vm1558, %v4142
  %4149 = vst.msk [vmem:[%s17 + $0x28] sm:$0xff] %vm1558, %v4143
  %v4150 = vld [vmem:[#allocation2] sm:$0x1]
  %v4151 = vlaneseq
  %v4152 = vshrl.u32 %v4151, 7
  %v4153 = vadd.s32 %v4152, 8
  %v4154 = vlaneseq
  %v4155 = vand.u32 %v4154, 127
  %vm4156 = vcmp.eq.s32.totalorder %v4152, %v4155
  %vm4157 = vcmp.eq.s32.totalorder %v4153, %v4155
  %v4158 = vsel %vm4156, 1.0, 0.0
  %v4159 = vsel %vm4157, 1.0, 0.0
  %v4161 = vsel %vm1558, %v4138, 0
  %v4164 = vsel %vm1558, %v4139, 0
  %4166 = vmatprep.subr.mxu0 0.0
  %v4167 = vand.u32 %v4161, 4294901760
  %4168 = vmatpush1.xpose.msra.mxu0 %v4167
  %4169 = vmatprep.subr.mxu0 0.0
  %v4170 = vand.u32 %v4164, 4294901760
  %4171 = vmatpush1.xpose.msra.mxu0 %v4170
  %4172 = vmatprep.subr.mxu0 0.0
  %4173 = vmatpush1.xpose.msra.mxu0 0.0
  %4174 = vmatprep.subr.mxu0 0.0
  %4175 = vmatpush1.xpose.msra.mxu0 0.0
  %4176 = vmatprep.subr.mxu0 0.0
  %4177 = vmatpush1.xpose.msra.mxu0 0.0
  %4178 = vmatprep.subr.mxu0 0.0
  %4179 = vmatpush1.xpose.msra.mxu0 0.0
  %4180 = vmatprep.subr.mxu0 0.0
  %4181 = vmatpush1.xpose.msra.mxu0 0.0
  %4182 = vmatprep.subr.mxu0 0.0
  %4183 = vmatpush1.xpose.msra.mxu0 0.0
  %4184 = vmatprep.subr.mxu0 0.0
  %4185 = vmatpush1.xpose.msra.mxu0 0.0
  %4186 = vmatprep.subr.mxu0 0.0
  %4187 = vmatpush1.xpose.msra.mxu0 0.0
  %4188 = vmatprep.subr.mxu0 0.0
  %4189 = vmatpush1.xpose.msra.mxu0 0.0
  %4190 = vmatprep.subr.mxu0 0.0
  %4191 = vmatpush1.xpose.msra.mxu0 0.0
  %4192 = vmatprep.subr.mxu0 0.0
  %4193 = vmatpush1.xpose.msra.mxu0 0.0
  %4194 = vmatprep.subr.mxu0 0.0
  %4195 = vmatpush1.xpose.msra.mxu0 0.0
  %4196 = vmatprep.subr.mxu0 0.0
  %4197 = vmatpush1.xpose.msra.mxu0 0.0
  %4198 = vmatprep.subr.mxu0 0.0
  %4199 = vmatpush1.xpose.msra.mxu0 0.0
  %4200 = vmatprep.subr.mxu0 0.0
  %4201 = vmatpush1.xpose.msra.mxu0 0.0
  %4202 = vmatprep.subr.mxu0 0.0
  %4203 = vmatpush1.xpose.msra.mxu0 0.0
  %4204 = vmatprep.subr.mxu0 0.0
  %4205 = vmatpush1.xpose.msra.mxu0 0.0
  %4206 = vmatprep.subr.mxu0 0.0
  %4207 = vmatpush1.xpose.msra.mxu0 0.0
  %4208 = vmatprep.subr.mxu0 0.0
  %4209 = vmatpush1.xpose.msra.mxu0 0.0
  %4210 = vmatprep.subr.mxu0 0.0
  %4211 = vmatpush1.xpose.msra.mxu0 0.0
  %4212 = vmatprep.subr.mxu0 0.0
  %4213 = vmatpush1.xpose.msra.mxu0 0.0
  %4214 = vmatprep.subr.mxu0 0.0
  %4215 = vmatpush1.xpose.msra.mxu0 0.0
  %4216 = vmatprep.subr.mxu0 0.0
  %4217 = vmatpush1.xpose.msra.mxu0 0.0
  %4218 = vmatprep.subr.mxu0 0.0
  %4219 = vmatpush1.xpose.msra.mxu0 0.0
  %4220 = vmatprep.subr.mxu0 0.0
  %4221 = vmatpush1.xpose.msra.mxu0 0.0
  %4222 = vmatprep.subr.mxu0 0.0
  %4223 = vmatpush1.xpose.msra.mxu0 0.0
  %4224 = vmatprep.subr.mxu0 0.0
  %4225 = vmatpush1.xpose.msra.mxu0 0.0
  %4226 = vmatprep.subr.mxu0 0.0
  %4227 = vmatpush1.xpose.msra.mxu0 0.0
  %4228 = vmatprep.subr.mxu0 0.0
  %4229 = vmatpush1.xpose.msra.mxu0 0.0
  %4230 = vmatprep.subr.mxu0 0.0
  %4231 = vmatpush1.xpose.msra.mxu0 0.0
  %4232 = vmatprep.mubr.f32.mxu0 0.0
  %v4233 = vand.u32 %v4161, 4294901760
  %v4234 = vsub.f32 %v4161, %v4233
  %v4235 = vand.u32 %v4234, 4294901760
  %v4236 = vsub.f32 %v4234, %v4235
  %v4237 = vand.u32 %v4236, 4294901760
  %4238 = vmatmul.mubr.f32.gmra.mrb[0].mxu0 %v4237
  %v4239 = vpop.f32.mrb[0].mxu0
  %v4240 = vadd.f32 1.0, %v4239
  %v4241 = vpop.f32.mrb[0].mxu0
  %4242 = vmatprep.mubr.f32.mxu0 0.0
  %v4243 = vand.u32 %v4164, 4294901760
  %v4244 = vsub.f32 %v4164, %v4243
  %v4245 = vand.u32 %v4244, 4294901760
  %v4246 = vsub.f32 %v4244, %v4245
  %v4247 = vand.u32 %v4246, 4294901760
  %4248 = vmatmul.mubr.f32.gmra.mrb[0].mxu0 %v4247
  %v4249 = vpop.f32.mrb[0].mxu0
  %v4250 = vadd.f32 1.0, %v4249
  %v4251 = vpop.f32.mrb[0].mxu0
  %4252 = vdwg.mxu0
  %4253 = vmatprep.subr.mxu0 0.0
  %v4254 = vand.u32 %v4161, 4294901760
  %v4255 = vsub.f32 %v4161, %v4254
  %v4256 = vand.u32 %v4255, 4294901760
  %v4257 = vsub.f32 %v4255, %v4256
  %v4258 = vand.u32 %v4257, 4294901760
  %4259 = vmatpush1.xpose.msra.mxu0 %v4258
  %4260 = vmatprep.subr.mxu0 0.0
  %v4261 = vand.u32 %v4164, 4294901760
  %v4262 = vsub.f32 %v4164, %v4261
  %v4263 = vand.u32 %v4262, 4294901760
  %v4264 = vsub.f32 %v4262, %v4263
  %v4265 = vand.u32 %v4264, 4294901760
  %4266 = vmatpush1.xpose.msra.mxu0 %v4265
  %4267 = vmatprep.subr.mxu0 0.0
  %4268 = vmatpush1.xpose.msra.mxu0 0.0
  %4269 = vmatprep.subr.mxu0 0.0
  %4270 = vmatpush1.xpose.msra.mxu0 0.0
  %4271 = vmatprep.subr.mxu0 0.0
  %4272 = vmatpush1.xpose.msra.mxu0 0.0
  %4273 = vmatprep.subr.mxu0 0.0
  %4274 = vmatpush1.xpose.msra.mxu0 0.0
  %4275 = vmatprep.subr.mxu0 0.0
  %4276 = vmatpush1.xpose.msra.mxu0 0.0
  %4277 = vmatprep.subr.mxu0 0.0
  %4278 = vmatpush1.xpose.msra.mxu0 0.0
  %4279 = vmatprep.subr.mxu0 0.0
  %4280 = vmatpush1.xpose.msra.mxu0 0.0
  %4281 = vmatprep.subr.mxu0 0.0
  %4282 = vmatpush1.xpose.msra.mxu0 0.0
  %4283 = vmatprep.subr.mxu0 0.0
  %4284 = vmatpush1.xpose.msra.mxu0 0.0
  %4285 = vmatprep.subr.mxu0 0.0
  %4286 = vmatpush1.xpose.msra.mxu0 0.0
  %4287 = vmatprep.subr.mxu0 0.0
  %4288 = vmatpush1.xpose.msra.mxu0 0.0
  %4289 = vmatprep.subr.mxu0 0.0
  %4290 = vmatpush1.xpose.msra.mxu0 0.0
  %4291 = vmatprep.subr.mxu0 0.0
  %4292 = vmatpush1.xpose.msra.mxu0 0.0
  %4293 = vmatprep.subr.mxu0 0.0
  %4294 = vmatpush1.xpose.msra.mxu0 0.0
  %4295 = vmatprep.subr.mxu0 0.0
  %4296 = vmatpush1.xpose.msra.mxu0 0.0
  %4297 = vmatprep.subr.mxu0 0.0
  %4298 = vmatpush1.xpose.msra.mxu0 0.0
  %4299 = vmatprep.subr.mxu0 0.0
  %4300 = vmatpush1.xpose.msra.mxu0 0.0
  %4301 = vmatprep.subr.mxu0 0.0
  %4302 = vmatpush1.xpose.msra.mxu0 0.0
  %4303 = vmatprep.subr.mxu0 0.0
  %4304 = vmatpush1.xpose.msra.mxu0 0.0
  %4305 = vmatprep.subr.mxu0 0.0
  %4306 = vmatpush1.xpose.msra.mxu0 0.0
  %4307 = vmatprep.subr.mxu0 0.0
  %4308 = vmatpush1.xpose.msra.mxu0 0.0
  %4309 = vmatprep.subr.mxu0 0.0
  %4310 = vmatpush1.xpose.msra.mxu0 0.0
  %4311 = vmatprep.subr.mxu0 0.0
  %4312 = vmatpush1.xpose.msra.mxu0 0.0
  %4313 = vmatprep.subr.mxu0 0.0
  %4314 = vmatpush1.xpose.msra.mxu0 0.0
  %4315 = vmatprep.subr.mxu0 0.0
  %4316 = vmatpush1.xpose.msra.mxu0 0.0
  %4317 = vmatprep.subr.mxu0 0.0
  %4318 = vmatpush1.xpose.msra.mxu0 0.0
  %4319 = vmatprep.subr.mxu0 0.0
  %4320 = vmatpush1.xpose.msra.mxu0 0.0
  %4321 = vmatprep.subr.mxu0 0.0
  %4322 = vmatpush1.xpose.msra.mxu0 0.0
  %4323 = vmatprep.subr.mxu0 0.0
  %4324 = vmatpush1.xpose.msra.mxu0 0.0
  %4325 = vmatprep.subr.mxu0 0.0
  %4326 = vmatpush1.xpose.msra.mxu0 0.0
  %4327 = vmatprep.mubr.f32.mxu0 0.0
  %v4328 = vand.u32 %v4161, 4294901760
  %4329 = vmatmul.mubr.f32.gmra.mrb[0].mxu0 %v4328
  %v4330 = vpop.f32.mrb[0].mxu0
  %v4331 = vadd.f32 %v4240, %v4330
  %v4332 = vpop.f32.mrb[0].mxu0
  %4333 = vmatprep.mubr.f32.mxu0 0.0
  %v4334 = vand.u32 %v4164, 4294901760
  %4335 = vmatmul.mubr.f32.gmra.mrb[0].mxu0 %v4334
  %v4336 = vpop.f32.mrb[0].mxu0
  %v4337 = vadd.f32 %v4250, %v4336
  %v4338 = vpop.f32.mrb[0].mxu0
  %4339 = vdwg.mxu0
  %4340 = vmatprep.subr.mxu0 0.0
  %v4341 = vand.u32 %v4161, 4294901760
  %v4342 = vsub.f32 %v4161, %v4341
  %4343 = vmatpush1.xpose.msra.mxu0 %v4342
  %4344 = vmatprep.subr.mxu0 0.0
  %v4345 = vand.u32 %v4164, 4294901760
  %v4346 = vsub.f32 %v4164, %v4345
  %4347 = vmatpush1.xpose.msra.mxu0 %v4346
  %4348 = vmatprep.subr.mxu0 0.0
  %4349 = vmatpush1.xpose.msra.mxu0 0.0
  %4350 = vmatprep.subr.mxu0 0.0
  %4351 = vmatpush1.xpose.msra.mxu0 0.0
  %4352 = vmatprep.subr.mxu0 0.0
  %4353 = vmatpush1.xpose.msra.mxu0 0.0
  %4354 = vmatprep.subr.mxu0 0.0
  %4355 = vmatpush1.xpose.msra.mxu0 0.0
  %4356 = vmatprep.subr.mxu0 0.0
  %4357 = vmatpush1.xpose.msra.mxu0 0.0
  %4358 = vmatprep.subr.mxu0 0.0
  %4359 = vmatpush1.xpose.msra.mxu0 0.0
  %4360 = vmatprep.subr.mxu0 0.0
  %4361 = vmatpush1.xpose.msra.mxu0 0.0
  %4362 = vmatprep.subr.mxu0 0.0
  %4363 = vmatpush1.xpose.msra.mxu0 0.0
  %4364 = vmatprep.subr.mxu0 0.0
  %4365 = vmatpush1.xpose.msra.mxu0 0.0
  %4366 = vmatprep.subr.mxu0 0.0
  %4367 = vmatpush1.xpose.msra.mxu0 0.0
  %4368 = vmatprep.subr.mxu0 0.0
  %4369 = vmatpush1.xpose.msra.mxu0 0.0
  %4370 = vmatprep.subr.mxu0 0.0
  %4371 = vmatpush1.xpose.msra.mxu0 0.0
  %4372 = vmatprep.subr.mxu0 0.0
  %4373 = vmatpush1.xpose.msra.mxu0 0.0
  %4374 = vmatprep.subr.mxu0 0.0
  %4375 = vmatpush1.xpose.msra.mxu0 0.0
  %4376 = vmatprep.subr.mxu0 0.0
  %4377 = vmatpush1.xpose.msra.mxu0 0.0
  %4378 = vmatprep.subr.mxu0 0.0
  %4379 = vmatpush1.xpose.msra.mxu0 0.0
  %4380 = vmatprep.subr.mxu0 0.0
  %4381 = vmatpush1.xpose.msra.mxu0 0.0
  %4382 = vmatprep.subr.mxu0 0.0
  %4383 = vmatpush1.xpose.msra.mxu0 0.0
  %4384 = vmatprep.subr.mxu0 0.0
  %4385 = vmatpush1.xpose.msra.mxu0 0.0
  %4386 = vmatprep.subr.mxu0 0.0
  %4387 = vmatpush1.xpose.msra.mxu0 0.0
  %4388 = vmatprep.subr.mxu0 0.0
  %4389 = vmatpush1.xpose.msra.mxu0 0.0
  %4390 = vmatprep.subr.mxu0 0.0
  %4391 = vmatpush1.xpose.msra.mxu0 0.0
  %4392 = vmatprep.subr.mxu0 0.0
  %4393 = vmatpush1.xpose.msra.mxu0 0.0
  %4394 = vmatprep.subr.mxu0 0.0
  %4395 = vmatpush1.xpose.msra.mxu0 0.0
  %4396 = vmatprep.subr.mxu0 0.0
  %4397 = vmatpush1.xpose.msra.mxu0 0.0
  %4398 = vmatprep.subr.mxu0 0.0
  %4399 = vmatpush1.xpose.msra.mxu0 0.0
  %4400 = vmatprep.subr.mxu0 0.0
  %4401 = vmatpush1.xpose.msra.mxu0 0.0
  %4402 = vmatprep.subr.mxu0 0.0
  %4403 = vmatpush1.xpose.msra.mxu0 0.0
  %4404 = vmatprep.subr.mxu0 0.0
  %4405 = vmatpush1.xpose.msra.mxu0 0.0
  %4406 = vmatprep.subr.mxu0 0.0
  %4407 = vmatpush1.xpose.msra.mxu0 0.0
  %4408 = vmatprep.mubr.f32.mxu0 0.0
  %v4409 = vand.u32 %v4161, 4294901760
  %v4410 = vsub.f32 %v4161, %v4409
  %4411 = vmatmul.mubr.f32.gmra.mrb[0].mxu0 %v4410
  %v4412 = vpop.f32.mrb[0].mxu0
  %v4413 = vadd.f32 %v4331, %v4412
  %v4414 = vpop.f32.mrb[0].mxu0
  %4415 = vmatprep.mubr.f32.mxu0 0.0
  %v4416 = vand.u32 %v4164, 4294901760
  %v4417 = vsub.f32 %v4164, %v4416
  %4418 = vmatmul.mubr.f32.gmra.mrb[0].mxu0 %v4417
  %v4419 = vpop.f32.mrb[0].mxu0
  %v4420 = vadd.f32 %v4337, %v4419
  %v4421 = vpop.f32.mrb[0].mxu0
  %4422 = vdwg.mxu0
  %4423 = vmatprep.subr.mxu0 0.0
  %v4424 = vand.u32 %v4161, 4294901760
  %4425 = vmatpush1.xpose.msra.mxu0 %v4424
  %4426 = vmatprep.subr.mxu0 0.0
  %v4427 = vand.u32 %v4164, 4294901760
  %4428 = vmatpush1.xpose.msra.mxu0 %v4427
  %4429 = vmatprep.subr.mxu0 0.0
  %4430 = vmatpush1.xpose.msra.mxu0 0.0
  %4431 = vmatprep.subr.mxu0 0.0
  %4432 = vmatpush1.xpose.msra.mxu0 0.0
  %4433 = vmatprep.subr.mxu0 0.0
  %4434 = vmatpush1.xpose.msra.mxu0 0.0
  %4435 = vmatprep.subr.mxu0 0.0
  %4436 = vmatpush1.xpose.msra.mxu0 0.0
  %4437 = vmatprep.subr.mxu0 0.0
  %4438 = vmatpush1.xpose.msra.mxu0 0.0
  %4439 = vmatprep.subr.mxu0 0.0
  %4440 = vmatpush1.xpose.msra.mxu0 0.0
  %4441 = vmatprep.subr.mxu0 0.0
  %4442 = vmatpush1.xpose.msra.mxu0 0.0
  %4443 = vmatprep.subr.mxu0 0.0
  %4444 = vmatpush1.xpose.msra.mxu0 0.0
  %4445 = vmatprep.subr.mxu0 0.0
  %4446 = vmatpush1.xpose.msra.mxu0 0.0
  %4447 = vmatprep.subr.mxu0 0.0
  %4448 = vmatpush1.xpose.msra.mxu0 0.0
  %4449 = vmatprep.subr.mxu0 0.0
  %4450 = vmatpush1.xpose.msra.mxu0 0.0
  %4451 = vmatprep.subr.mxu0 0.0
  %4452 = vmatpush1.xpose.msra.mxu0 0.0
  %4453 = vmatprep.subr.mxu0 0.0
  %4454 = vmatpush1.xpose.msra.mxu0 0.0
  %4455 = vmatprep.subr.mxu0 0.0
  %4456 = vmatpush1.xpose.msra.mxu0 0.0
  %4457 = vmatprep.subr.mxu0 0.0
  %4458 = vmatpush1.xpose.msra.mxu0 0.0
  %4459 = vmatprep.subr.mxu0 0.0
  %4460 = vmatpush1.xpose.msra.mxu0 0.0
  %4461 = vmatprep.subr.mxu0 0.0
  %4462 = vmatpush1.xpose.msra.mxu0 0.0
  %4463 = vmatprep.subr.mxu0 0.0
  %4464 = vmatpush1.xpose.msra.mxu0 0.0
  %4465 = vmatprep.subr.mxu0 0.0
  %4466 = vmatpush1.xpose.msra.mxu0 0.0
  %4467 = vmatprep.subr.mxu0 0.0
  %4468 = vmatpush1.xpose.msra.mxu0 0.0
  %4469 = vmatprep.subr.mxu0 0.0
  %4470 = vmatpush1.xpose.msra.mxu0 0.0
  %4471 = vmatprep.subr.mxu0 0.0
  %4472 = vmatpush1.xpose.msra.mxu0 0.0
  %4473 = vmatprep.subr.mxu0 0.0
  %4474 = vmatpush1.xpose.msra.mxu0 0.0
  %4475 = vmatprep.subr.mxu0 0.0
  %4476 = vmatpush1.xpose.msra.mxu0 0.0
  %4477 = vmatprep.subr.mxu0 0.0
  %4478 = vmatpush1.xpose.msra.mxu0 0.0
  %4479 = vmatprep.subr.mxu0 0.0
  %4480 = vmatpush1.xpose.msra.mxu0 0.0
  %4481 = vmatprep.subr.mxu0 0.0
  %4482 = vmatpush1.xpose.msra.mxu0 0.0
  %4483 = vmatprep.subr.mxu0 0.0
  %4484 = vmatpush1.xpose.msra.mxu0 0.0
  %4485 = vmatprep.subr.mxu0 0.0
  %4486 = vmatpush1.xpose.msra.mxu0 0.0
  %4487 = vmatprep.subr.mxu0 0.0
  %4488 = vmatpush1.xpose.msra.mxu0 0.0
  %4489 = vmatprep.mubr.f32.mxu0 0.0
  %v4490 = vand.u32 %v4161, 4294901760
  %v4491 = vsub.f32 %v4161, %v4490
  %v4492 = vand.u32 %v4491, 4294901760
  %4493 = vmatmul.mubr.f32.gmra.mrb[0].mxu0 %v4492
  %v4494 = vpop.f32.mrb[0].mxu0
  %v4495 = vadd.f32 %v4413, %v4494
  %v4496 = vpop.f32.mrb[0].mxu0
  %4497 = vmatprep.mubr.f32.mxu0 0.0
  %v4498 = vand.u32 %v4164, 4294901760
  %v4499 = vsub.f32 %v4164, %v4498
  %v4500 = vand.u32 %v4499, 4294901760
  %4501 = vmatmul.mubr.f32.gmra.mrb[0].mxu0 %v4500
  %v4502 = vpop.f32.mrb[0].mxu0
  %v4503 = vadd.f32 %v4420, %v4502
  %v4504 = vpop.f32.mrb[0].mxu0
  %4505 = vdwg.mxu0
  %4506 = vmatprep.subr.mxu0 0.0
  %v4507 = vand.u32 %v4161, 4294901760
  %v4508 = vsub.f32 %v4161, %v4507
  %v4509 = vand.u32 %v4508, 4294901760
  %4510 = vmatpush1.xpose.msra.mxu0 %v4509
  %4511 = vmatprep.subr.mxu0 0.0
  %v4512 = vand.u32 %v4164, 4294901760
  %v4513 = vsub.f32 %v4164, %v4512
  %v4514 = vand.u32 %v4513, 4294901760
  %4515 = vmatpush1.xpose.msra.mxu0 %v4514
  %4516 = vmatprep.subr.mxu0 0.0
  %4517 = vmatpush1.xpose.msra.mxu0 0.0
  %4518 = vmatprep.subr.mxu0 0.0
  %4519 = vmatpush1.xpose.msra.mxu0 0.0
  %4520 = vmatprep.subr.mxu0 0.0
  %4521 = vmatpush1.xpose.msra.mxu0 0.0
  %4522 = vmatprep.subr.mxu0 0.0
  %4523 = vmatpush1.xpose.msra.mxu0 0.0
  %4524 = vmatprep.subr.mxu0 0.0
  %4525 = vmatpush1.xpose.msra.mxu0 0.0
  %4526 = vmatprep.subr.mxu0 0.0
  %4527 = vmatpush1.xpose.msra.mxu0 0.0
  %4528 = vmatprep.subr.mxu0 0.0
  %4529 = vmatpush1.xpose.msra.mxu0 0.0
  %4530 = vmatprep.subr.mxu0 0.0
  %4531 = vmatpush1.xpose.msra.mxu0 0.0
  %4532 = vmatprep.subr.mxu0 0.0
  %4533 = vmatpush1.xpose.msra.mxu0 0.0
  %4534 = vmatprep.subr.mxu0 0.0
  %4535 = vmatpush1.xpose.msra.mxu0 0.0
  %4536 = vmatprep.subr.mxu0 0.0
  %4537 = vmatpush1.xpose.msra.mxu0 0.0
  %4538 = vmatprep.subr.mxu0 0.0
  %4539 = vmatpush1.xpose.msra.mxu0 0.0
  %4540 = vmatprep.subr.mxu0 0.0
  %4541 = vmatpush1.xpose.msra.mxu0 0.0
  %4542 = vmatprep.subr.mxu0 0.0
  %4543 = vmatpush1.xpose.msra.mxu0 0.0
  %4544 = vmatprep.subr.mxu0 0.0
  %4545 = vmatpush1.xpose.msra.mxu0 0.0
  %4546 = vmatprep.subr.mxu0 0.0
  %4547 = vmatpush1.xpose.msra.mxu0 0.0
  %4548 = vmatprep.subr.mxu0 0.0
  %4549 = vmatpush1.xpose.msra.mxu0 0.0
  %4550 = vmatprep.subr.mxu0 0.0
  %4551 = vmatpush1.xpose.msra.mxu0 0.0
  %4552 = vmatprep.subr.mxu0 0.0
  %4553 = vmatpush1.xpose.msra.mxu0 0.0
  %4554 = vmatprep.subr.mxu0 0.0
  %4555 = vmatpush1.xpose.msra.mxu0 0.0
  %4556 = vmatprep.subr.mxu0 0.0
  %4557 = vmatpush1.xpose.msra.mxu0 0.0
  %4558 = vmatprep.subr.mxu0 0.0
  %4559 = vmatpush1.xpose.msra.mxu0 0.0
  %4560 = vmatprep.subr.mxu0 0.0
  %4561 = vmatpush1.xpose.msra.mxu0 0.0
  %4562 = vmatprep.subr.mxu0 0.0
  %4563 = vmatpush1.xpose.msra.mxu0 0.0
  %4564 = vmatprep.subr.mxu0 0.0
  %4565 = vmatpush1.xpose.msra.mxu0 0.0
  %4566 = vmatprep.subr.mxu0 0.0
  %4567 = vmatpush1.xpose.msra.mxu0 0.0
  %4568 = vmatprep.subr.mxu0 0.0
  %4569 = vmatpush1.xpose.msra.mxu0 0.0
  %4570 = vmatprep.subr.mxu0 0.0
  %4571 = vmatpush1.xpose.msra.mxu0 0.0
  %4572 = vmatprep.subr.mxu0 0.0
  %4573 = vmatpush1.xpose.msra.mxu0 0.0
  %4574 = vmatprep.subr.mxu0 0.0
  %4575 = vmatpush1.xpose.msra.mxu0 0.0
  %4576 = vmatprep.mubr.f32.mxu0 0.0
  %v4577 = vand.u32 %v4161, 4294901760
  %4578 = vmatmul.mubr.f32.gmra.mrb[0].mxu0 %v4577
  %v4579 = vpop.f32.mrb[0].mxu0
  %v4580 = vadd.f32 %v4495, %v4579
  %v4581 = vpop.f32.mrb[0].mxu0
  %4582 = vmatprep.mubr.f32.mxu0 0.0
  %v4583 = vand.u32 %v4164, 4294901760
  %4584 = vmatmul.mubr.f32.gmra.mrb[0].mxu0 %v4583
  %v4585 = vpop.f32.mrb[0].mxu0
  %v4586 = vadd.f32 %v4503, %v4585
  %v4587 = vpop.f32.mrb[0].mxu0
  %4588 = vdwg.mxu0
  %4589 = vmatprep.subr.mxu0 0.0
  %v4590 = vand.u32 %v4161, 4294901760
  %4591 = vmatpush1.xpose.msra.mxu0 %v4590
  %4592 = vmatprep.subr.mxu0 0.0
  %v4593 = vand.u32 %v4164, 4294901760
  %4594 = vmatpush1.xpose.msra.mxu0 %v4593
  %4595 = vmatprep.subr.mxu0 0.0
  %4596 = vmatpush1.xpose.msra.mxu0 0.0
  %4597 = vmatprep.subr.mxu0 0.0
  %4598 = vmatpush1.xpose.msra.mxu0 0.0
  %4599 = vmatprep.subr.mxu0 0.0
  %4600 = vmatpush1.xpose.msra.mxu0 0.0
  %4601 = vmatprep.subr.mxu0 0.0
  %4602 = vmatpush1.xpose.msra.mxu0 0.0
  %4603 = vmatprep.subr.mxu0 0.0
  %4604 = vmatpush1.xpose.msra.mxu0 0.0
  %4605 = vmatprep.subr.mxu0 0.0
  %4606 = vmatpush1.xpose.msra.mxu0 0.0
  %4607 = vmatprep.subr.mxu0 0.0
  %4608 = vmatpush1.xpose.msra.mxu0 0.0
  %4609 = vmatprep.subr.mxu0 0.0
  %4610 = vmatpush1.xpose.msra.mxu0 0.0
  %4611 = vmatprep.subr.mxu0 0.0
  %4612 = vmatpush1.xpose.msra.mxu0 0.0
  %4613 = vmatprep.subr.mxu0 0.0
  %4614 = vmatpush1.xpose.msra.mxu0 0.0
  %4615 = vmatprep.subr.mxu0 0.0
  %4616 = vmatpush1.xpose.msra.mxu0 0.0
  %4617 = vmatprep.subr.mxu0 0.0
  %4618 = vmatpush1.xpose.msra.mxu0 0.0
  %4619 = vmatprep.subr.mxu0 0.0
  %4620 = vmatpush1.xpose.msra.mxu0 0.0
  %4621 = vmatprep.subr.mxu0 0.0
  %4622 = vmatpush1.xpose.msra.mxu0 0.0
  %4623 = vmatprep.subr.mxu0 0.0
  %4624 = vmatpush1.xpose.msra.mxu0 0.0
  %4625 = vmatprep.subr.mxu0 0.0
  %4626 = vmatpush1.xpose.msra.mxu0 0.0
  %4627 = vmatprep.subr.mxu0 0.0
  %4628 = vmatpush1.xpose.msra.mxu0 0.0
  %4629 = vmatprep.subr.mxu0 0.0
  %4630 = vmatpush1.xpose.msra.mxu0 0.0
  %4631 = vmatprep.subr.mxu0 0.0
  %4632 = vmatpush1.xpose.msra.mxu0 0.0
  %4633 = vmatprep.subr.mxu0 0.0
  %4634 = vmatpush1.xpose.msra.mxu0 0.0
  %4635 = vmatprep.subr.mxu0 0.0
  %4636 = vmatpush1.xpose.msra.mxu0 0.0
  %4637 = vmatprep.subr.mxu0 0.0
  %4638 = vmatpush1.xpose.msra.mxu0 0.0
  %4639 = vmatprep.subr.mxu0 0.0
  %4640 = vmatpush1.xpose.msra.mxu0 0.0
  %4641 = vmatprep.subr.mxu0 0.0
  %4642 = vmatpush1.xpose.msra.mxu0 0.0
  %4643 = vmatprep.subr.mxu0 0.0
  %4644 = vmatpush1.xpose.msra.mxu0 0.0
  %4645 = vmatprep.subr.mxu0 0.0
  %4646 = vmatpush1.xpose.msra.mxu0 0.0
  %4647 = vmatprep.subr.mxu0 0.0
  %4648 = vmatpush1.xpose.msra.mxu0 0.0
  %4649 = vmatprep.subr.mxu0 0.0
  %4650 = vmatpush1.xpose.msra.mxu0 0.0
  %4651 = vmatprep.subr.mxu0 0.0
  %4652 = vmatpush1.xpose.msra.mxu0 0.0
  %4653 = vmatprep.subr.mxu0 0.0
  %4654 = vmatpush1.xpose.msra.mxu0 0.0
  %4655 = vmatprep.mubr.f32.mxu0 0.0
  %v4656 = vand.u32 %v4161, 4294901760
  %4657 = vmatmul.mubr.f32.gmra.mrb[0].mxu0 %v4656
  %v4658 = vpop.f32.mrb[0].mxu0
  %v4659 = vadd.f32 %v4580, %v4658
  %v4660 = vpop.f32.mrb[0].mxu0
  %4661 = vmatprep.mubr.f32.mxu0 0.0
  %v4662 = vand.u32 %v4164, 4294901760
  %4663 = vmatmul.mubr.f32.gmra.mrb[0].mxu0 %v4662
  %v4664 = vpop.f32.mrb[0].mxu0
  %v4665 = vadd.f32 %v4586, %v4664
  %v4666 = vpop.f32.mrb[0].mxu0
  %4667 = vdwg.mxu0
  %v4669 = vlaneseq
  %v4670 = vshrl.u32 %v4669, 7
  %v4671 = vsub.s32 0, %v4670
  %v4672 = vrot.slane %v4150, %v4671
  %4673 = vset.pattern.permute.xlu0 0
  %4674 = vperm.xlu0 %4673, %v4672
  %v4675 = vpop.permute.xlu0 %4674
  %v4677 = vmul.f32 %v4675, %v4158
  %v4678 = vmul.f32 %v4675, %v4159
  %v4679 = vadd.f32 %v4659, %v4677
  %v4680 = vadd.f32 %v4665, %v4678
  %vm4681 = vcmask 130048
  %4682 = vst.msk [vmem:[%s16] sm:$0xff] %vm4681, %v4679
  %4683 = vst.msk [vmem:[%s16 + $0x8] sm:$0xff] %vm4681, %v4680
  %v4685 = vsel %vm1558, %v4140, 0
  %v4688 = vsel %vm1558, %v4141, 0
  %4690 = vmatprep.subr.mxu0 0.0
  %v4691 = vand.u32 %v4685, 4294901760
  %4692 = vmatpush1.xpose.msra.mxu0 %v4691
  %4693 = vmatprep.subr.mxu0 0.0
  %v4694 = vand.u32 %v4688, 4294901760
  %4695 = vmatpush1.xpose.msra.mxu0 %v4694
  %4696 = vmatprep.subr.mxu0 0.0
  %4697 = vmatpush1.xpose.msra.mxu0 0.0
  %4698 = vmatprep.subr.mxu0 0.0
  %4699 = vmatpush1.xpose.msra.mxu0 0.0
  %4700 = vmatprep.subr.mxu0 0.0
  %4701 = vmatpush1.xpose.msra.mxu0 0.0
  %4702 = vmatprep.subr.mxu0 0.0
  %4703 = vmatpush1.xpose.msra.mxu0 0.0
  %4704 = vmatprep.subr.mxu0 0.0
  %4705 = vmatpush1.xpose.msra.mxu0 0.0
  %4706 = vmatprep.subr.mxu0 0.0
  %4707 = vmatpush1.xpose.msra.mxu0 0.0
  %4708 = vmatprep.subr.mxu0 0.0
  %4709 = vmatpush1.xpose.msra.mxu0 0.0
  %4710 = vmatprep.subr.mxu0 0.0
  %4711 = vmatpush1.xpose.msra.mxu0 0.0
  %4712 = vmatprep.subr.mxu0 0.0
  %4713 = vmatpush1.xpose.msra.mxu0 0.0
  %4714 = vmatprep.subr.mxu0 0.0
  %4715 = vmatpush1.xpose.msra.mxu0 0.0
  %4716 = vmatprep.subr.mxu0 0.0
  %4717 = vmatpush1.xpose.msra.mxu0 0.0
  %4718 = vmatprep.subr.mxu0 0.0
  %4719 = vmatpush1.xpose.msra.mxu0 0.0
  %4720 = vmatprep.subr.mxu0 0.0
  %4721 = vmatpush1.xpose.msra.mxu0 0.0
  %4722 = vmatprep.subr.mxu0 0.0
  %4723 = vmatpush1.xpose.msra.mxu0 0.0
  %4724 = vmatprep.subr.mxu0 0.0
  %4725 = vmatpush1.xpose.msra.mxu0 0.0
  %4726 = vmatprep.subr.mxu0 0.0
  %4727 = vmatpush1.xpose.msra.mxu0 0.0
  %4728 = vmatprep.subr.mxu0 0.0
  %4729 = vmatpush1.xpose.msra.mxu0 0.0
  %4730 = vmatprep.subr.mxu0 0.0
  %4731 = vmatpush1.xpose.msra.mxu0 0.0
  %4732 = vmatprep.subr.mxu0 0.0
  %4733 = vmatpush1.xpose.msra.mxu0 0.0
  %4734 = vmatprep.subr.mxu0 0.0
  %4735 = vmatpush1.xpose.msra.mxu0 0.0
  %4736 = vmatprep.subr.mxu0 0.0
  %4737 = vmatpush1.xpose.msra.mxu0 0.0
  %4738 = vmatprep.subr.mxu0 0.0
  %4739 = vmatpush1.xpose.msra.mxu0 0.0
  %4740 = vmatprep.subr.mxu0 0.0
  %4741 = vmatpush1.xpose.msra.mxu0 0.0
  %4742 = vmatprep.subr.mxu0 0.0
  %4743 = vmatpush1.xpose.msra.mxu0 0.0
  %4744 = vmatprep.subr.mxu0 0.0
  %4745 = vmatpush1.xpose.msra.mxu0 0.0
  %4746 = vmatprep.subr.mxu0 0.0
  %4747 = vmatpush1.xpose.msra.mxu0 0.0
  %4748 = vmatprep.subr.mxu0 0.0
  %4749 = vmatpush1.xpose.msra.mxu0 0.0
  %4750 = vmatprep.subr.mxu0 0.0
  %4751 = vmatpush1.xpose.msra.mxu0 0.0
  %4752 = vmatprep.subr.mxu0 0.0
  %4753 = vmatpush1.xpose.msra.mxu0 0.0
  %4754 = vmatprep.subr.mxu0 0.0
  %4755 = vmatpush1.xpose.msra.mxu0 0.0
  %4756 = vmatprep.mubr.f32.mxu0 0.0
  %v4757 = vand.u32 %v4685, 4294901760
  %v4758 = vsub.f32 %v4685, %v4757
  %v4759 = vand.u32 %v4758, 4294901760
  %v4760 = vsub.f32 %v4758, %v4759
  %v4761 = vand.u32 %v4760, 4294901760
  %4762 = vmatmul.mubr.f32.gmra.mrb[0].mxu0 %v4761
  %v4763 = vpop.f32.mrb[0].mxu0
  %v4764 = vadd.f32 1.0, %v4763
  %v4765 = vpop.f32.mrb[0].mxu0
  %4766 = vmatprep.mubr.f32.mxu0 0.0
  %v4767 = vand.u32 %v4688, 4294901760
  %v4768 = vsub.f32 %v4688, %v4767
  %v4769 = vand.u32 %v4768, 4294901760
  %v4770 = vsub.f32 %v4768, %v4769
  %v4771 = vand.u32 %v4770, 4294901760
  %4772 = vmatmul.mubr.f32.gmra.mrb[0].mxu0 %v4771
  %v4773 = vpop.f32.mrb[0].mxu0
  %v4774 = vadd.f32 1.0, %v4773
  %v4775 = vpop.f32.mrb[0].mxu0
  %4776 = vdwg.mxu0
  %4777 = vmatprep.subr.mxu0 0.0
  %v4778 = vand.u32 %v4685, 4294901760
  %v4779 = vsub.f32 %v4685, %v4778
  %v4780 = vand.u32 %v4779, 4294901760
  %v4781 = vsub.f32 %v4779, %v4780
  %v4782 = vand.u32 %v4781, 4294901760
  %4783 = vmatpush1.xpose.msra.mxu0 %v4782
  %4784 = vmatprep.subr.mxu0 0.0
  %v4785 = vand.u32 %v4688, 4294901760
  %v4786 = vsub.f32 %v4688, %v4785
  %v4787 = vand.u32 %v4786, 4294901760
  %v4788 = vsub.f32 %v4786, %v4787
  %v4789 = vand.u32 %v4788, 4294901760
  %4790 = vmatpush1.xpose.msra.mxu0 %v4789
  %4791 = vmatprep.subr.mxu0 0.0
  %4792 = vmatpush1.xpose.msra.mxu0 0.0
  %4793 = vmatprep.subr.mxu0 0.0
  %4794 = vmatpush1.xpose.msra.mxu0 0.0
  %4795 = vmatprep.subr.mxu0 0.0
  %4796 = vmatpush1.xpose.msra.mxu0 0.0
  %4797 = vmatprep.subr.mxu0 0.0
  %4798 = vmatpush1.xpose.msra.mxu0 0.0
  %4799 = vmatprep.subr.mxu0 0.0
  %4800 = vmatpush1.xpose.msra.mxu0 0.0
  %4801 = vmatprep.subr.mxu0 0.0
  %4802 = vmatpush1.xpose.msra.mxu0 0.0
  %4803 = vmatprep.subr.mxu0 0.0
  %4804 = vmatpush1.xpose.msra.mxu0 0.0
  %4805 = vmatprep.subr.mxu0 0.0
  %4806 = vmatpush1.xpose.msra.mxu0 0.0
  %4807 = vmatprep.subr.mxu0 0.0
  %4808 = vmatpush1.xpose.msra.mxu0 0.0
  %4809 = vmatprep.subr.mxu0 0.0
  %4810 = vmatpush1.xpose.msra.mxu0 0.0
  %4811 = vmatprep.subr.mxu0 0.0
  %4812 = vmatpush1.xpose.msra.mxu0 0.0
  %4813 = vmatprep.subr.mxu0 0.0
  %4814 = vmatpush1.xpose.msra.mxu0 0.0
  %4815 = vmatprep.subr.mxu0 0.0
  %4816 = vmatpush1.xpose.msra.mxu0 0.0
  %4817 = vmatprep.subr.mxu0 0.0
  %4818 = vmatpush1.xpose.msra.mxu0 0.0
  %4819 = vmatprep.subr.mxu0 0.0
  %4820 = vmatpush1.xpose.msra.mxu0 0.0
  %4821 = vmatprep.subr.mxu0 0.0
  %4822 = vmatpush1.xpose.msra.mxu0 0.0
  %4823 = vmatprep.subr.mxu0 0.0
  %4824 = vmatpush1.xpose.msra.mxu0 0.0
  %4825 = vmatprep.subr.mxu0 0.0
  %4826 = vmatpush1.xpose.msra.mxu0 0.0
  %4827 = vmatprep.subr.mxu0 0.0
  %4828 = vmatpush1.xpose.msra.mxu0 0.0
  %4829 = vmatprep.subr.mxu0 0.0
  %4830 = vmatpush1.xpose.msra.mxu0 0.0
  %4831 = vmatprep.subr.mxu0 0.0
  %4832 = vmatpush1.xpose.msra.mxu0 0.0
  %4833 = vmatprep.subr.mxu0 0.0
  %4834 = vmatpush1.xpose.msra.mxu0 0.0
  %4835 = vmatprep.subr.mxu0 0.0
  %4836 = vmatpush1.xpose.msra.mxu0 0.0
  %4837 = vmatprep.subr.mxu0 0.0
  %4838 = vmatpush1.xpose.msra.mxu0 0.0
  %4839 = vmatprep.subr.mxu0 0.0
  %4840 = vmatpush1.xpose.msra.mxu0 0.0
  %4841 = vmatprep.subr.mxu0 0.0
  %4842 = vmatpush1.xpose.msra.mxu0 0.0
  %4843 = vmatprep.subr.mxu0 0.0
  %4844 = vmatpush1.xpose.msra.mxu0 0.0
  %4845 = vmatprep.subr.mxu0 0.0
  %4846 = vmatpush1.xpose.msra.mxu0 0.0
  %4847 = vmatprep.subr.mxu0 0.0
  %4848 = vmatpush1.xpose.msra.mxu0 0.0
  %4849 = vmatprep.subr.mxu0 0.0
  %4850 = vmatpush1.xpose.msra.mxu0 0.0
  %4851 = vmatprep.mubr.f32.mxu0 0.0
  %v4852 = vand.u32 %v4685, 4294901760
  %4853 = vmatmul.mubr.f32.gmra.mrb[0].mxu0 %v4852
  %v4854 = vpop.f32.mrb[0].mxu0
  %v4855 = vadd.f32 %v4764, %v4854
  %v4856 = vpop.f32.mrb[0].mxu0
  %4857 = vmatprep.mubr.f32.mxu0 0.0
  %v4858 = vand.u32 %v4688, 4294901760
  %4859 = vmatmul.mubr.f32.gmra.mrb[0].mxu0 %v4858
  %v4860 = vpop.f32.mrb[0].mxu0
  %v4861 = vadd.f32 %v4774, %v4860
  %v4862 = vpop.f32.mrb[0].mxu0
  %4863 = vdwg.mxu0
  %4864 = vmatprep.subr.mxu0 0.0
  %v4865 = vand.u32 %v4685, 4294901760
  %v4866 = vsub.f32 %v4685, %v4865
  %4867 = vmatpush1.xpose.msra.mxu0 %v4866
  %4868 = vmatprep.subr.mxu0 0.0
  %v4869 = vand.u32 %v4688, 4294901760
  %v4870 = vsub.f32 %v4688, %v4869
  %4871 = vmatpush1.xpose.msra.mxu0 %v4870
  %4872 = vmatprep.subr.mxu0 0.0
  %4873 = vmatpush1.xpose.msra.mxu0 0.0
  %4874 = vmatprep.subr.mxu0 0.0
  %4875 = vmatpush1.xpose.msra.mxu0 0.0
  %4876 = vmatprep.subr.mxu0 0.0
  %4877 = vmatpush1.xpose.msra.mxu0 0.0
  %4878 = vmatprep.subr.mxu0 0.0
  %4879 = vmatpush1.xpose.msra.mxu0 0.0
  %4880 = vmatprep.subr.mxu0 0.0
  %4881 = vmatpush1.xpose.msra.mxu0 0.0
  %4882 = vmatprep.subr.mxu0 0.0
  %4883 = vmatpush1.xpose.msra.mxu0 0.0
  %4884 = vmatprep.subr.mxu0 0.0
  %4885 = vmatpush1.xpose.msra.mxu0 0.0
  %4886 = vmatprep.subr.mxu0 0.0
  %4887 = vmatpush1.xpose.msra.mxu0 0.0
  %4888 = vmatprep.subr.mxu0 0.0
  %4889 = vmatpush1.xpose.msra.mxu0 0.0
  %4890 = vmatprep.subr.mxu0 0.0
  %4891 = vmatpush1.xpose.msra.mxu0 0.0
  %4892 = vmatprep.subr.mxu0 0.0
  %4893 = vmatpush1.xpose.msra.mxu0 0.0
  %4894 = vmatprep.subr.mxu0 0.0
  %4895 = vmatpush1.xpose.msra.mxu0 0.0
  %4896 = vmatprep.subr.mxu0 0.0
  %4897 = vmatpush1.xpose.msra.mxu0 0.0
  %4898 = vmatprep.subr.mxu0 0.0
  %4899 = vmatpush1.xpose.msra.mxu0 0.0
  %4900 = vmatprep.subr.mxu0 0.0
  %4901 = vmatpush1.xpose.msra.mxu0 0.0
  %4902 = vmatprep.subr.mxu0 0.0
  %4903 = vmatpush1.xpose.msra.mxu0 0.0
  %4904 = vmatprep.subr.mxu0 0.0
  %4905 = vmatpush1.xpose.msra.mxu0 0.0
  %4906 = vmatprep.subr.mxu0 0.0
  %4907 = vmatpush1.xpose.msra.mxu0 0.0
  %4908 = vmatprep.subr.mxu0 0.0
  %4909 = vmatpush1.xpose.msra.mxu0 0.0
  %4910 = vmatprep.subr.mxu0 0.0
  %4911 = vmatpush1.xpose.msra.mxu0 0.0
  %4912 = vmatprep.subr.mxu0 0.0
  %4913 = vmatpush1.xpose.msra.mxu0 0.0
  %4914 = vmatprep.subr.mxu0 0.0
  %4915 = vmatpush1.xpose.msra.mxu0 0.0
  %4916 = vmatprep.subr.mxu0 0.0
  %4917 = vmatpush1.xpose.msra.mxu0 0.0
  %4918 = vmatprep.subr.mxu0 0.0
  %4919 = vmatpush1.xpose.msra.mxu0 0.0
  %4920 = vmatprep.subr.mxu0 0.0
  %4921 = vmatpush1.xpose.msra.mxu0 0.0
  %4922 = vmatprep.subr.mxu0 0.0
  %4923 = vmatpush1.xpose.msra.mxu0 0.0
  %4924 = vmatprep.subr.mxu0 0.0
  %4925 = vmatpush1.xpose.msra.mxu0 0.0
  %4926 = vmatprep.subr.mxu0 0.0
  %4927 = vmatpush1.xpose.msra.mxu0 0.0
  %4928 = vmatprep.subr.mxu0 0.0
  %4929 = vmatpush1.xpose.msra.mxu0 0.0
  %4930 = vmatprep.subr.mxu0 0.0
  %4931 = vmatpush1.xpose.msra.mxu0 0.0
  %4932 = vmatprep.mubr.f32.mxu0 0.0
  %v4933 = vand.u32 %v4685, 4294901760
  %v4934 = vsub.f32 %v4685, %v4933
  %4935 = vmatmul.mubr.f32.gmra.mrb[0].mxu0 %v4934
  %v4936 = vpop.f32.mrb[0].mxu0
  %v4937 = vadd.f32 %v4855, %v4936
  %v4938 = vpop.f32.mrb[0].mxu0
  %4939 = vmatprep.mubr.f32.mxu0 0.0
  %v4940 = vand.u32 %v4688, 4294901760
  %v4941 = vsub.f32 %v4688, %v4940
  %4942 = vmatmul.mubr.f32.gmra.mrb[0].mxu0 %v4941
  %v4943 = vpop.f32.mrb[0].mxu0
  %v4944 = vadd.f32 %v4861, %v4943
  %v4945 = vpop.f32.mrb[0].mxu0
  %4946 = vdwg.mxu0
  %4947 = vmatprep.subr.mxu0 0.0
  %v4948 = vand.u32 %v4685, 4294901760
  %4949 = vmatpush1.xpose.msra.mxu0 %v4948
  %4950 = vmatprep.subr.mxu0 0.0
  %v4951 = vand.u32 %v4688, 4294901760
  %4952 = vmatpush1.xpose.msra.mxu0 %v4951
  %4953 = vmatprep.subr.mxu0 0.0
  %4954 = vmatpush1.xpose.msra.mxu0 0.0
  %4955 = vmatprep.subr.mxu0 0.0
  %4956 = vmatpush1.xpose.msra.mxu0 0.0
  %4957 = vmatprep.subr.mxu0 0.0
  %4958 = vmatpush1.xpose.msra.mxu0 0.0
  %4959 = vmatprep.subr.mxu0 0.0
  %4960 = vmatpush1.xpose.msra.mxu0 0.0
  %4961 = vmatprep.subr.mxu0 0.0
  %4962 = vmatpush1.xpose.msra.mxu0 0.0
  %4963 = vmatprep.subr.mxu0 0.0
  %4964 = vmatpush1.xpose.msra.mxu0 0.0
  %4965 = vmatprep.subr.mxu0 0.0
  %4966 = vmatpush1.xpose.msra.mxu0 0.0
  %4967 = vmatprep.subr.mxu0 0.0
  %4968 = vmatpush1.xpose.msra.mxu0 0.0
  %4969 = vmatprep.subr.mxu0 0.0
  %4970 = vmatpush1.xpose.msra.mxu0 0.0
  %4971 = vmatprep.subr.mxu0 0.0
  %4972 = vmatpush1.xpose.msra.mxu0 0.0
  %4973 = vmatprep.subr.mxu0 0.0
  %4974 = vmatpush1.xpose.msra.mxu0 0.0
  %4975 = vmatprep.subr.mxu0 0.0
  %4976 = vmatpush1.xpose.msra.mxu0 0.0
  %4977 = vmatprep.subr.mxu0 0.0
  %4978 = vmatpush1.xpose.msra.mxu0 0.0
  %4979 = vmatprep.subr.mxu0 0.0
  %4980 = vmatpush1.xpose.msra.mxu0 0.0
  %4981 = vmatprep.subr.mxu0 0.0
  %4982 = vmatpush1.xpose.msra.mxu0 0.0
  %4983 = vmatprep.subr.mxu0 0.0
  %4984 = vmatpush1.xpose.msra.mxu0 0.0
  %4985 = vmatprep.subr.mxu0 0.0
  %4986 = vmatpush1.xpose.msra.mxu0 0.0
  %4987 = vmatprep.subr.mxu0 0.0
  %4988 = vmatpush1.xpose.msra.mxu0 0.0
  %4989 = vmatprep.subr.mxu0 0.0
  %4990 = vmatpush1.xpose.msra.mxu0 0.0
  %4991 = vmatprep.subr.mxu0 0.0
  %4992 = vmatpush1.xpose.msra.mxu0 0.0
  %4993 = vmatprep.subr.mxu0 0.0
  %4994 = vmatpush1.xpose.msra.mxu0 0.0
  %4995 = vmatprep.subr.mxu0 0.0
  %4996 = vmatpush1.xpose.msra.mxu0 0.0
  %4997 = vmatprep.subr.mxu0 0.0
  %4998 = vmatpush1.xpose.msra.mxu0 0.0
  %4999 = vmatprep.subr.mxu0 0.0
  %5000 = vmatpush1.xpose.msra.mxu0 0.0
  %5001 = vmatprep.subr.mxu0 0.0
  %5002 = vmatpush1.xpose.msra.mxu0 0.0
  %5003 = vmatprep.subr.mxu0 0.0
  %5004 = vmatpush1.xpose.msra.mxu0 0.0
  %5005 = vmatprep.subr.mxu0 0.0
  %5006 = vmatpush1.xpose.msra.mxu0 0.0
  %5007 = vmatprep.subr.mxu0 0.0
  %5008 = vmatpush1.xpose.msra.mxu0 0.0
  %5009 = vmatprep.subr.mxu0 0.0
  %5010 = vmatpush1.xpose.msra.mxu0 0.0
  %5011 = vmatprep.subr.mxu0 0.0
  %5012 = vmatpush1.xpose.msra.mxu0 0.0
  %5013 = vmatprep.mubr.f32.mxu0 0.0
  %v5014 = vand.u32 %v4685, 4294901760
  %v5015 = vsub.f32 %v4685, %v5014
  %v5016 = vand.u32 %v5015, 4294901760
  %5017 = vmatmul.mubr.f32.gmra.mrb[0].mxu0 %v5016
  %v5018 = vpop.f32.mrb[0].mxu0
  %v5019 = vadd.f32 %v4937, %v5018
  %v5020 = vpop.f32.mrb[0].mxu0
  %5021 = vmatprep.mubr.f32.mxu0 0.0
  %v5022 = vand.u32 %v4688, 4294901760
  %v5023 = vsub.f32 %v4688, %v5022
  %v5024 = vand.u32 %v5023, 4294901760
  %5025 = vmatmul.mubr.f32.gmra.mrb[0].mxu0 %v5024
  %v5026 = vpop.f32.mrb[0].mxu0
  %v5027 = vadd.f32 %v4944, %v5026
  %v5028 = vpop.f32.mrb[0].mxu0
  %5029 = vdwg.mxu0
  %5030 = vmatprep.subr.mxu0 0.0
  %v5031 = vand.u32 %v4685, 4294901760
  %v5032 = vsub.f32 %v4685, %v5031
  %v5033 = vand.u32 %v5032, 4294901760
  %5034 = vmatpush1.xpose.msra.mxu0 %v5033
  %5035 = vmatprep.subr.mxu0 0.0
  %v5036 = vand.u32 %v4688, 4294901760
  %v5037 = vsub.f32 %v4688, %v5036
  %v5038 = vand.u32 %v5037, 4294901760
  %5039 = vmatpush1.xpose.msra.mxu0 %v5038
  %5040 = vmatprep.subr.mxu0 0.0
  %5041 = vmatpush1.xpose.msra.mxu0 0.0
  %5042 = vmatprep.subr.mxu0 0.0
  %5043 = vmatpush1.xpose.msra.mxu0 0.0
  %5044 = vmatprep.subr.mxu0 0.0
  %5045 = vmatpush1.xpose.msra.mxu0 0.0
  %5046 = vmatprep.subr.mxu0 0.0
  %5047 = vmatpush1.xpose.msra.mxu0 0.0
  %5048 = vmatprep.subr.mxu0 0.0
  %5049 = vmatpush1.xpose.msra.mxu0 0.0
  %5050 = vmatprep.subr.mxu0 0.0
  %5051 = vmatpush1.xpose.msra.mxu0 0.0
  %5052 = vmatprep.subr.mxu0 0.0
  %5053 = vmatpush1.xpose.msra.mxu0 0.0
  %5054 = vmatprep.subr.mxu0 0.0
  %5055 = vmatpush1.xpose.msra.mxu0 0.0
  %5056 = vmatprep.subr.mxu0 0.0
  %5057 = vmatpush1.xpose.msra.mxu0 0.0
  %5058 = vmatprep.subr.mxu0 0.0
  %5059 = vmatpush1.xpose.msra.mxu0 0.0
  %5060 = vmatprep.subr.mxu0 0.0
  %5061 = vmatpush1.xpose.msra.mxu0 0.0
  %5062 = vmatprep.subr.mxu0 0.0
  %5063 = vmatpush1.xpose.msra.mxu0 0.0
  %5064 = vmatprep.subr.mxu0 0.0
  %5065 = vmatpush1.xpose.msra.mxu0 0.0
  %5066 = vmatprep.subr.mxu0 0.0
  %5067 = vmatpush1.xpose.msra.mxu0 0.0
  %5068 = vmatprep.subr.mxu0 0.0
  %5069 = vmatpush1.xpose.msra.mxu0 0.0
  %5070 = vmatprep.subr.mxu0 0.0
  %5071 = vmatpush1.xpose.msra.mxu0 0.0
  %5072 = vmatprep.subr.mxu0 0.0
  %5073 = vmatpush1.xpose.msra.mxu0 0.0
  %5074 = vmatprep.subr.mxu0 0.0
  %5075 = vmatpush1.xpose.msra.mxu0 0.0
  %5076 = vmatprep.subr.mxu0 0.0
  %5077 = vmatpush1.xpose.msra.mxu0 0.0
  %5078 = vmatprep.subr.mxu0 0.0
  %5079 = vmatpush1.xpose.msra.mxu0 0.0
  %5080 = vmatprep.subr.mxu0 0.0
  %5081 = vmatpush1.xpose.msra.mxu0 0.0
  %5082 = vmatprep.subr.mxu0 0.0
  %5083 = vmatpush1.xpose.msra.mxu0 0.0
  %5084 = vmatprep.subr.mxu0 0.0
  %5085 = vmatpush1.xpose.msra.mxu0 0.0
  %5086 = vmatprep.subr.mxu0 0.0
  %5087 = vmatpush1.xpose.msra.mxu0 0.0
  %5088 = vmatprep.subr.mxu0 0.0
  %5089 = vmatpush1.xpose.msra.mxu0 0.0
  %5090 = vmatprep.subr.mxu0 0.0
  %5091 = vmatpush1.xpose.msra.mxu0 0.0
  %5092 = vmatprep.subr.mxu0 0.0
  %5093 = vmatpush1.xpose.msra.mxu0 0.0
  %5094 = vmatprep.subr.mxu0 0.0
  %5095 = vmatpush1.xpose.msra.mxu0 0.0
  %5096 = vmatprep.subr.mxu0 0.0
  %5097 = vmatpush1.xpose.msra.mxu0 0.0
  %5098 = vmatprep.subr.mxu0 0.0
  %5099 = vmatpush1.xpose.msra.mxu0 0.0
  %5100 = vmatprep.mubr.f32.mxu0 0.0
  %v5101 = vand.u32 %v4685, 4294901760
  %5102 = vmatmul.mubr.f32.gmra.mrb[0].mxu0 %v5101
  %v5103 = vpop.f32.mrb[0].mxu0
  %v5104 = vadd.f32 %v5019, %v5103
  %v5105 = vpop.f32.mrb[0].mxu0
  %5106 = vmatprep.mubr.f32.mxu0 0.0
  %v5107 = vand.u32 %v4688, 4294901760
  %5108 = vmatmul.mubr.f32.gmra.mrb[0].mxu0 %v5107
  %v5109 = vpop.f32.mrb[0].mxu0
  %v5110 = vadd.f32 %v5027, %v5109
  %v5111 = vpop.f32.mrb[0].mxu0
  %5112 = vdwg.mxu0
  %5113 = vmatprep.subr.mxu0 0.0
  %v5114 = vand.u32 %v4685, 4294901760
  %5115 = vmatpush1.xpose.msra.mxu0 %v5114
  %5116 = vmatprep.subr.mxu0 0.0
  %v5117 = vand.u32 %v4688, 4294901760
  %5118 = vmatpush1.xpose.msra.mxu0 %v5117
  %5119 = vmatprep.subr.mxu0 0.0
  %5120 = vmatpush1.xpose.msra.mxu0 0.0
  %5121 = vmatprep.subr.mxu0 0.0
  %5122 = vmatpush1.xpose.msra.mxu0 0.0
  %5123 = vmatprep.subr.mxu0 0.0
  %5124 = vmatpush1.xpose.msra.mxu0 0.0
  %5125 = vmatprep.subr.mxu0 0.0
  %5126 = vmatpush1.xpose.msra.mxu0 0.0
  %5127 = vmatprep.subr.mxu0 0.0
  %5128 = vmatpush1.xpose.msra.mxu0 0.0
  %5129 = vmatprep.subr.mxu0 0.0
  %5130 = vmatpush1.xpose.msra.mxu0 0.0
  %5131 = vmatprep.subr.mxu0 0.0
  %5132 = vmatpush1.xpose.msra.mxu0 0.0
  %5133 = vmatprep.subr.mxu0 0.0
  %5134 = vmatpush1.xpose.msra.mxu0 0.0
  %5135 = vmatprep.subr.mxu0 0.0
  %5136 = vmatpush1.xpose.msra.mxu0 0.0
  %5137 = vmatprep.subr.mxu0 0.0
  %5138 = vmatpush1.xpose.msra.mxu0 0.0
  %5139 = vmatprep.subr.mxu0 0.0
  %5140 = vmatpush1.xpose.msra.mxu0 0.0
  %5141 = vmatprep.subr.mxu0 0.0
  %5142 = vmatpush1.xpose.msra.mxu0 0.0
  %5143 = vmatprep.subr.mxu0 0.0
  %5144 = vmatpush1.xpose.msra.mxu0 0.0
  %5145 = vmatprep.subr.mxu0 0.0
  %5146 = vmatpush1.xpose.msra.mxu0 0.0
  %5147 = vmatprep.subr.mxu0 0.0
  %5148 = vmatpush1.xpose.msra.mxu0 0.0
  %5149 = vmatprep.subr.mxu0 0.0
  %5150 = vmatpush1.xpose.msra.mxu0 0.0
  %5151 = vmatprep.subr.mxu0 0.0
  %5152 = vmatpush1.xpose.msra.mxu0 0.0
  %5153 = vmatprep.subr.mxu0 0.0
  %5154 = vmatpush1.xpose.msra.mxu0 0.0
  %5155 = vmatprep.subr.mxu0 0.0
  %5156 = vmatpush1.xpose.msra.mxu0 0.0
  %5157 = vmatprep.subr.mxu0 0.0
  %5158 = vmatpush1.xpose.msra.mxu0 0.0
  %5159 = vmatprep.subr.mxu0 0.0
  %5160 = vmatpush1.xpose.msra.mxu0 0.0
  %5161 = vmatprep.subr.mxu0 0.0
  %5162 = vmatpush1.xpose.msra.mxu0 0.0
  %5163 = vmatprep.subr.mxu0 0.0
  %5164 = vmatpush1.xpose.msra.mxu0 0.0
  %5165 = vmatprep.subr.mxu0 0.0
  %5166 = vmatpush1.xpose.msra.mxu0 0.0
  %5167 = vmatprep.subr.mxu0 0.0
  %5168 = vmatpush1.xpose.msra.mxu0 0.0
  %5169 = vmatprep.subr.mxu0 0.0
  %5170 = vmatpush1.xpose.msra.mxu0 0.0
  %5171 = vmatprep.subr.mxu0 0.0
  %5172 = vmatpush1.xpose.msra.mxu0 0.0
  %5173 = vmatprep.subr.mxu0 0.0
  %5174 = vmatpush1.xpose.msra.mxu0 0.0
  %5175 = vmatprep.subr.mxu0 0.0
  %5176 = vmatpush1.xpose.msra.mxu0 0.0
  %5177 = vmatprep.subr.mxu0 0.0
  %5178 = vmatpush1.xpose.msra.mxu0 0.0
  %5179 = vmatprep.mubr.f32.mxu0 0.0
  %v5180 = vand.u32 %v4685, 4294901760
  %5181 = vmatmul.mubr.f32.gmra.mrb[0].mxu0 %v5180
  %v5182 = vpop.f32.mrb[0].mxu0
  %v5183 = vadd.f32 %v5104, %v5182
  %v5184 = vpop.f32.mrb[0].mxu0
  %5185 = vmatprep.mubr.f32.mxu0 0.0
  %v5186 = vand.u32 %v4688, 4294901760
  %5187 = vmatmul.mubr.f32.gmra.mrb[0].mxu0 %v5186
  %v5188 = vpop.f32.mrb[0].mxu0
  %v5189 = vadd.f32 %v5110, %v5188
  %v5190 = vpop.f32.mrb[0].mxu0
  %5191 = vdwg.mxu0
  %v5192 = vadd.f32 %v5183, %v4677
  %v5193 = vadd.f32 %v5189, %v4678
  %s5194 = scalar_lea.vmem %s16, 16
  %5195 = vst.msk [vmem:[%s5194] sm:$0xff] %vm4681, %v5192
  %5196 = vst.msk [vmem:[%s5194 + $0x8] sm:$0xff] %vm4681, %v5193
  // Predicated region
  $region54: #{deep_time_forward.2} parent=0 // pred_check
    _
  $region55: #{deep_time_forward.2} parent=0 // pred_check_branch
    %5198 = sbr.rel (0) target = $region57
  $region56: #{deep_time_forward.2} parent=0 // pred_region
    _
  $region57: #{deep_time_forward.2} parent=0 // pred_fallthru
    _
  // Predicated region
  $region58: #{deep_time_forward.2} parent=0 // pred_check
    _
  $region59: #{deep_time_forward.2} parent=0 // pred_check_branch
    %5200 = sbr.rel (0) target = $region61
  $region60: #{deep_time_forward.2} parent=0 // pred_region
    _
  $region61: #{deep_time_forward.2} parent=0 // pred_fallthru
    _
  // Predicated region
  $region62: #{deep_time_forward.2} parent=0 // pred_check
    _
  $region63: #{deep_time_forward.2} parent=0 // pred_check_branch
    %5202 = sbr.rel (0) target = $region65
  $region64: #{deep_time_forward.2} parent=0 // pred_region
    _
  $region65: #{deep_time_forward.2} parent=0 // pred_fallthru
    _
  // Predicated region
  $region66: #{deep_time_forward.2} parent=0 // pred_check
    _
  $region67: #{deep_time_forward.2} parent=0 // pred_check_branch
    %5204 = sbr.rel (0) target = $region69
  $region68: #{deep_time_forward.2} parent=0 // pred_region
    _
  $region69: #{deep_time_forward.2} parent=0 // pred_fallthru
    _
  // Predicated region
  $region70: #{deep_time_forward.2} parent=0 // pred_check
    _
  $region71: #{deep_time_forward.2} parent=0 // pred_check_branch
    %5206 = sbr.rel (0) target = $region73
  $region72: #{deep_time_forward.2} parent=0 // pred_region
    _
  $region73: #{deep_time_forward.2} parent=0 // pred_fallthru
    _
  // Predicated region
  $region74: #{deep_time_forward.2} parent=0 // pred_check
    _
  $region75: #{deep_time_forward.2} parent=0 // pred_check_branch
    %5208 = sbr.rel (0) target = $region77
  $region76: #{deep_time_forward.2} parent=0 // pred_region
    _
  $region77: #{deep_time_forward.2} parent=0 // pred_fallthru
    _
  // Predicated region
  $region78: #{deep_time_forward.2} parent=0 // pred_check
    _
  $region79: #{deep_time_forward.2} parent=0 // pred_check_branch
    %5210 = sbr.rel (0) target = $region81
  $region80: #{deep_time_forward.2} parent=0 // pred_region
    _
  $region81: #{deep_time_forward.2} parent=0 // pred_fallthru
    _
  // Predicated region
  $region82: #{deep_time_forward.2} parent=0 // pred_check
    _
  $region83: #{deep_time_forward.2} parent=0 // pred_check_branch
    %5212 = sbr.rel (0) target = $region85
  $region84: #{deep_time_forward.2} parent=0 // pred_region
    _
  $region85: #{deep_time_forward.2} parent=0 // pred_fallthru
    _
  // Predicated region
  $region86: #{deep_time_forward.2} parent=0 // pred_check
    _
  $region87: #{deep_time_forward.2} parent=0 // pred_check_branch
    %5214 = sbr.rel (0) target = $region89
  $region88: #{deep_time_forward.2} parent=0 // pred_region
    _
  $region89: #{deep_time_forward.2} parent=0 // pred_fallthru
    _
  // Predicated region
  $region90: #{deep_time_forward.2} parent=0 // pred_check
    _
  $region91: #{deep_time_forward.2} parent=0 // pred_check_branch
    %5216 = sbr.rel (0) target = $region93
  $region92: #{deep_time_forward.2} parent=0 // pred_region
    _
  $region93: #{deep_time_forward.2} parent=0 // pred_fallthru
    _

</llo_original>
